<compile_context>
chip_gen: v5e
topology: v5e:2x2
jax: 0.10.0
libtpu: 0.0.40
codegen_flags: <defaults>
</compile_context>

<pallas_src>
import numpy as np

import jax
import jax.numpy as jnp
from jax import lax
from jax.experimental import pallas as pl
from jax.experimental.pallas import tpu as pltpu

F32 = jnp.float32
BF16 = jnp.bfloat16

C1 = 640   # conv1 per-pool-parity chunk: 600 valid lanes (10*10*6), pad to 5*128
C2 = 512   # conv2 per-pool-parity chunk: 400 valid lanes (5*5*16),  pad to 4*128


# ------------------------------ fused kernel --------------------------------

def _lenet_kernel(x_ref, m1_ref, b1_ref, m2_ref, b2_ref,
                  wfc1_ref, bfc1_ref, wfc2_ref, bfc2_ref,
                  wfc3_ref, bfc3_ref, out_ref):
    """Whole LeNet forward for a (B, 400) tile of flattened 20x20 images."""
    x = x_ref[...].astype(BF16)                                      # (B, 400)

    # conv1 (1->6, 5x5, pad 2) + bias + ReLU + 2x2 max-pool, as ONE matmul.
    # m1 columns = [pool parity (4)] x [ho*10+wo (100)] x [cout (6)], padded to
    # 4 chunks of C1 = 640 lanes so the pool max uses 128-aligned slices only.
    c1 = jnp.dot(x, m1_ref[...], preferred_element_type=F32)        # (B, 4*C1)
    p1 = jnp.maximum(jnp.maximum(c1[:, 0:C1], c1[:, C1:2 * C1]),
                     jnp.maximum(c1[:, 2 * C1:3 * C1], c1[:, 3 * C1:4 * C1]))
    p1 = jnp.maximum(p1 + b1_ref[...], 0.0)                          # (B, C1)

    # conv2 (6->16, 5x5, pad 2) + bias + ReLU + 2x2 max-pool, as ONE matmul.
    c2 = jnp.dot(p1.astype(BF16), m2_ref[...],
                 preferred_element_type=F32)                         # (B, 4*C2)
    p2 = jnp.maximum(jnp.maximum(c2[:, 0:C2], c2[:, C2:2 * C2]),
                     jnp.maximum(c2[:, 2 * C2:3 * C2], c2[:, 3 * C2:4 * C2]))
    p2 = jnp.maximum(p2 + b2_ref[...], 0.0)                          # (B, C2)

    # fc1 (400 -> 120) + ReLU: PyTorch flatten order absorbed into wfc1.
    h1 = jnp.maximum(jnp.dot(p2.astype(BF16), wfc1_ref[...],
                             preferred_element_type=F32) + bfc1_ref[...], 0.0)
    # fc2 (120 -> 84) + ReLU.
    h2 = jnp.maximum(jnp.dot(h1.astype(BF16), wfc2_ref[...],
                             preferred_element_type=F32) + bfc2_ref[...], 0.0)
    # fc3 (84 -> 10) + softmax; padded classes masked via -1e30 bias.
    logits = jnp.dot(h2.astype(BF16), wfc3_ref[...],
                     preferred_element_type=F32) + bfc3_ref[...]     # (B, 128)
    mx = jnp.max(logits, axis=-1, keepdims=True)
    e = jnp.exp(logits - mx)
    denom = jnp.sum(e, axis=-1, keepdims=True)
    out_ref[...] = e * pl.reciprocal(denom, approx=True)             # (B, 128)


# ------------------------- host-side weight prep ----------------------------

def prepare_params(params):
    """One-time prep: unroll convs (window + padding + pool parities) into
    lane-dense matmul weights; absorb flatten order; pad FC lanes to 128."""
    w1 = np.asarray(params["conv1_w"], np.float32)       # (6, 1, 5, 5)
    b1 = np.asarray(params["conv1_b"], np.float32)
    w2 = np.asarray(params["conv2_w"], np.float32)       # (16, 6, 5, 5)
    b2 = np.asarray(params["conv2_b"], np.float32)
    fw1 = np.asarray(params["fc1_w"], np.float32)        # (120, 400)
    fb1 = np.asarray(params["fc1_b"], np.float32)
    fw2 = np.asarray(params["fc2_w"], np.float32)        # (84, 120)
    fb2 = np.asarray(params["fc2_b"], np.float32)
    fw3 = np.asarray(params["fc3_w"], np.float32)        # (10, 84)
    fb3 = np.asarray(params["fc3_b"], np.float32)

    # conv1: rows = flattened 20x20 image (h*20+w), columns = parity chunk
    # (p*2+q)*C1 + (ho*10+wo)*6 + cout.  Out-of-range taps (the pad=2 border)
    # are simply omitted.
    m1 = np.zeros((400, 4 * C1), np.float32)
    for p in range(2):
        for q in range(2):
            for ho in range(10):
                for wo in range(10):
                    col = (p * 2 + q) * C1 + (ho * 10 + wo) * 6
                    for di in range(5):
                        for dj in range(5):
                            h = 2 * ho + p + di - 2
                            w = 2 * wo + q + dj - 2
                            if 0 <= h < 20 and 0 <= w < 20:
                                m1[h * 20 + w, col:col + 6] = w1[:, 0, di, dj]
    b1bc = np.zeros((1, C1), np.float32)
    b1bc[0, :600] = np.tile(b1, 100)

    # conv2: rows = pooled1 lanes (h1*10+w1)*6 + cin (600 valid of C1),
    # columns = (p*2+q)*C2 + (ho2*5+wo2)*16 + cout.
    m2 = np.zeros((C1, 4 * C2), np.float32)
    for p in range(2):
        for q in range(2):
            for ho in range(5):
                for wo in range(5):
                    col = (p * 2 + q) * C2 + (ho * 5 + wo) * 16
                    for di in range(5):
                        for dj in range(5):
                            h1 = 2 * ho + p + di - 2
                            w1c = 2 * wo + q + dj - 2
                            if 0 <= h1 < 10 and 0 <= w1c < 10:
                                row = (h1 * 10 + w1c) * 6
                                m2[row:row + 6, col:col + 16] = w2[:, :, di, dj].T
    b2bc = np.zeros((1, C2), np.float32)
    b2bc[0, :400] = np.tile(b2, 25)

    # fc1: kernel feature order is (ho2*5+wo2)*16 + cout; PyTorch flatten is
    # cout*25 + ho2*5 + wo2.  Pad input rows 400->C2 and output lanes 120->128.
    wfc1 = np.zeros((C2, 128), np.float32)
    wfc1[:400, :120] = fw1.reshape(120, 16, 25).transpose(2, 1, 0).reshape(400, 120)
    bfc1 = np.zeros((1, 128), np.float32)
    bfc1[0, :120] = fb1

    wfc2 = np.zeros((128, 128), np.float32)
    wfc2[:120, :84] = fw2.T
    bfc2 = np.zeros((1, 128), np.float32)
    bfc2[0, :84] = fb2

    wfc3 = np.zeros((128, 128), np.float32)
    wfc3[:84, :10] = fw3.T
    bfc3 = np.full((1, 128), -1e30, np.float32)          # mask padded classes
    bfc3[0, :10] = fb3

    bf = lambda a: jnp.asarray(a, BF16)
    f32 = lambda a: jnp.asarray(a, F32)
    return {
        "m1": bf(m1), "b1": f32(b1bc),
        "m2": bf(m2), "b2": f32(b2bc),
        "wfc1": bf(wfc1), "bfc1": f32(bfc1),
        "wfc2": bf(wfc2), "bfc2": f32(bfc2),
        "wfc3": bf(wfc3), "bfc3": f32(bfc3),
    }


# ------------------------------ forward pass --------------------------------

def _round_up(a, b):
    return (a + b - 1) // b * b


def _full_spec(a):
    idx = (0,) * a.ndim
    return pl.BlockSpec(a.shape, lambda g: idx)


def lenet_forward(prep, x, block_b=128):
    """x: (N, 1, 20, 20) float32 NCHW -> (N, 10) softmax probabilities.

    block_b = images per grid step (matmul M dimension).  On v7x pick block_b
    so that N / block_b >= 2 (multiple of 2) to keep both TensorCores busy.
    """
    n = x.shape[0]
    bb = _round_up(max(8, min(block_b, _round_up(n, 8))), 8)
    n_pad = _round_up(n, bb)

    x2d = x.reshape(n, 400).astype(F32)                  # flattened 20x20 image
    if n_pad != n:
        x2d = jnp.pad(x2d, ((0, n_pad - n), (0, 0)))

    weights = (prep["m1"], prep["b1"], prep["m2"], prep["b2"],
               prep["wfc1"], prep["bfc1"], prep["wfc2"], prep["bfc2"],
               prep["wfc3"], prep["bfc3"])

    in_specs = ([pl.BlockSpec((bb, 400), lambda g: (g, 0))]
                + [_full_spec(w) for w in weights])

    out = pl.pallas_call(
        _lenet_kernel,
        grid=(n_pad // bb,),
        in_specs=in_specs,
        out_specs=pl.BlockSpec((bb, 128), lambda g: (g, 0)),
        out_shape=jax.ShapeDtypeStruct((n_pad, 128), F32),
        compiler_params=pltpu.CompilerParams(
            dimension_semantics=("parallel",),
            vmem_limit_bytes=32 * 1024 * 1024),
    )(x2d, *weights)
    return out[:n, :10]


# ----------------------------- params & reference ---------------------------

def init_lenet_params(key):
    def uniform(k, shape, fan_in):
        bound = 1.0 / float(fan_in) ** 0.5
        return jax.random.uniform(k, shape, F32, -bound, bound)

    ks = jax.random.split(key, 10)
    return {
        "conv1_w": uniform(ks[0], (6, 1, 5, 5), 1 * 5 * 5),
        "conv1_b": uniform(ks[1], (6,), 1 * 5 * 5),
        "conv2_w": uniform(ks[2], (16, 6, 5, 5), 6 * 5 * 5),
        "conv2_b": uniform(ks[3], (16,), 6 * 5 * 5),
        "fc1_w": uniform(ks[4], (120, 400), 400),        # PyTorch (out, in)
        "fc1_b": uniform(ks[5], (120,), 400),
        "fc2_w": uniform(ks[6], (84, 120), 120),
        "fc2_b": uniform(ks[7], (84,), 120),
        "fc3_w": uniform(ks[8], (10, 84), 84),
        "fc3_b": uniform(ks[9], (10,), 84),
    }


def lenet_reference(params, x):
    """Pure-JAX (XLA) reference with identical semantics, for validation."""
    conv = lambda t, w, b: lax.conv_general_dilated(
        t, w, (1, 1), ((2, 2), (2, 2)),
        dimension_numbers=("NCHW", "OIHW", "NCHW")) + b.reshape(1, -1, 1, 1)
    relu = lambda t: jnp.maximum(t, 0.0)

    def pool(t):
        n, c, h, w = t.shape
        return t.reshape(n, c, h // 2, 2, w // 2, 2).max(axis=(3, 5))

    h = pool(relu(conv(x, params["conv1_w"], params["conv1_b"])))
    h = pool(relu(conv(h, params["conv2_w"], params["conv2_b"])))
    h = h.reshape(h.shape[0], -1)
    h = relu(h @ params["fc1_w"].T + params["fc1_b"])
    h = relu(h @ params["fc2_w"].T + params["fc2_b"])
    logits = h @ params["fc3_w"].T + params["fc3_b"]
    return jax.nn.softmax(logits, axis=-1)


if __name__ == "__main__":
    key = jax.random.PRNGKey(0)
    pkey, xkey = jax.random.split(key)
    params = init_lenet_params(pkey)
    prep = prepare_params(params)

    fwd = jax.jit(lenet_forward, static_argnames=("block_b",))

    # Small batch (pads up to one 8-row tile).
    x = jax.random.normal(xkey, (2, 1, 20, 20), dtype=F32)
    out = jax.block_until_ready(fwd(prep, x))
    ref = lenet_reference(params, x)
    assert out.shape == (2, 10)
    # approx reciprocal in the softmax denom -> slightly looser sum tolerance
    assert bool(jnp.allclose(out.sum(axis=-1), 1.0, atol=1e-2))
    assert bool(jnp.allclose(out, ref, atol=2e-2)), (
        f"max |pallas - reference| = {float(jnp.max(jnp.abs(out - ref)))}")

    # Larger batch exercising grid > 1 and the batched (M = block_b) matmuls.
    x2 = jax.random.normal(jax.random.PRNGKey(1), (32, 1, 20, 20), dtype=F32)
    out2 = jax.block_until_ready(fwd(prep, x2, block_b=16))
    ref2 = lenet_reference(params, x2)
    assert out2.shape == (32, 10)
    assert bool(jnp.allclose(out2, ref2, atol=2e-2)), (
        f"max |pallas - reference| = {float(jnp.max(jnp.abs(out2 - ref2)))}")

    print("KERNEL_OK")
</pallas_src>

<mosaic_0001>
module attributes {stable_mosaic.version = 11 : i64} {
  func.func @_lenet_kernel(%arg0: i32, %arg1: memref<8x400xf32, #tpu.memory_space<vmem>>, %arg2: memref<400x2560xbf16, #tpu.memory_space<vmem>>, %arg3: memref<1x640xf32, #tpu.memory_space<vmem>>, %arg4: memref<640x2048xbf16, #tpu.memory_space<vmem>>, %arg5: memref<1x512xf32, #tpu.memory_space<vmem>>, %arg6: memref<512x128xbf16, #tpu.memory_space<vmem>>, %arg7: memref<1x128xf32, #tpu.memory_space<vmem>>, %arg8: memref<128x128xbf16, #tpu.memory_space<vmem>>, %arg9: memref<1x128xf32, #tpu.memory_space<vmem>>, %arg10: memref<128x128xbf16, #tpu.memory_space<vmem>>, %arg11: memref<1x128xf32, #tpu.memory_space<vmem>>, %arg12: memref<8x128xf32, #tpu.memory_space<vmem>>) attributes {dimension_semantics = [#tpu.dimension_semantics<parallel>], iteration_bounds = array<i64: 1>, scalar_prefetch = 0 : i64, scratch_operands = 0 : i64, tpu.core_type = #tpu.core_type<tc>, window_params = [{transform_indices = @transform_0, window_bounds = array<i64: 8, 400>}, {pipeline_mode = #tpu.pipeline_mode<synchronous>, transform_indices = @transform_1, window_bounds = array<i64: 400, 2560>}, {pipeline_mode = #tpu.pipeline_mode<synchronous>, transform_indices = @transform_2, window_bounds = array<i64: 1, 640>}, {pipeline_mode = #tpu.pipeline_mode<synchronous>, transform_indices = @transform_3, window_bounds = array<i64: 640, 2048>}, {pipeline_mode = #tpu.pipeline_mode<synchronous>, transform_indices = @transform_4, window_bounds = array<i64: 1, 512>}, {pipeline_mode = #tpu.pipeline_mode<synchronous>, transform_indices = @transform_5, window_bounds = array<i64: 512, 128>}, {pipeline_mode = #tpu.pipeline_mode<synchronous>, transform_indices = @transform_6, window_bounds = array<i64: 1, 128>}, {pipeline_mode = #tpu.pipeline_mode<synchronous>, transform_indices = @transform_7, window_bounds = array<i64: 128, 128>}, {pipeline_mode = #tpu.pipeline_mode<synchronous>, transform_indices = @transform_8, window_bounds = array<i64: 1, 128>}, {pipeline_mode = #tpu.pipeline_mode<synchronous>, transform_indices = @transform_9, window_bounds = array<i64: 128, 128>}, {pipeline_mode = #tpu.pipeline_mode<synchronous>, transform_indices = @transform_10, window_bounds = array<i64: 1, 128>}, {transform_indices = @transform_11, window_bounds = array<i64: 8, 128>}]} {
    %c0 = arith.constant 0 : index
    %c0_0 = arith.constant 0 : index
    %0 = vector.load %arg1[%c0, %c0_0] : memref<8x400xf32, #tpu.memory_space<vmem>>, vector<8x400xf32>
    %1 = arith.truncf %0 : vector<8x400xf32> to vector<8x400xbf16>
    %c0_1 = arith.constant 0 : index
    %c0_2 = arith.constant 0 : index
    %2 = vector.load %arg2[%c0_1, %c0_2] : memref<400x2560xbf16, #tpu.memory_space<vmem>>, vector<400x2560xbf16>
    %cst = arith.constant dense<0.000000e+00> : vector<8x2560xf32>
    %3 = tpu.matmul %1, %2, %cst {dimension_numbers = #tpu.dot_dimension_numbers<[1], [0], [0], [1], [0, 0, 1, 1], [], []>} : vector<8x400xbf16>, vector<400x2560xbf16>, vector<8x2560xf32> -> vector<8x2560xf32>
    %4 = vector.extract_strided_slice %3 {offsets = [0, 0], sizes = [8, 640], strides = [1, 1]} : vector<8x2560xf32> to vector<8x640xf32>
    %5 = vector.extract_strided_slice %3 {offsets = [0, 640], sizes = [8, 640], strides = [1, 1]} : vector<8x2560xf32> to vector<8x640xf32>
    %6 = arith.maximumf %4, %5 : vector<8x640xf32>
    %7 = vector.extract_strided_slice %3 {offsets = [0, 1280], sizes = [8, 640], strides = [1, 1]} : vector<8x2560xf32> to vector<8x640xf32>
    %8 = vector.extract_strided_slice %3 {offsets = [0, 1920], sizes = [8, 640], strides = [1, 1]} : vector<8x2560xf32> to vector<8x640xf32>
    %9 = arith.maximumf %7, %8 : vector<8x640xf32>
    %10 = arith.maximumf %6, %9 : vector<8x640xf32>
    %c0_3 = arith.constant 0 : index
    %c0_4 = arith.constant 0 : index
    %11 = vector.load %arg3[%c0_3, %c0_4] : memref<1x640xf32, #tpu.memory_space<vmem>>, vector<1x640xf32>
    %12 = vector.broadcast %11 : vector<1x640xf32> to vector<8x640xf32>
    %13 = arith.addf %10, %12 : vector<8x640xf32>
    %cst_5 = arith.constant 0.000000e+00 : f32
    %14 = vector.broadcast %cst_5 : f32 to vector<8x640xf32>
    %15 = arith.maximumf %13, %14 : vector<8x640xf32>
    %16 = arith.truncf %15 : vector<8x640xf32> to vector<8x640xbf16>
    %c0_6 = arith.constant 0 : index
    %c0_7 = arith.constant 0 : index
    %17 = vector.load %arg4[%c0_6, %c0_7] : memref<640x2048xbf16, #tpu.memory_space<vmem>>, vector<640x2048xbf16>
    %cst_8 = arith.constant dense<0.000000e+00> : vector<8x2048xf32>
    %18 = tpu.matmul %16, %17, %cst_8 {dimension_numbers = #tpu.dot_dimension_numbers<[1], [0], [0], [1], [0, 0, 1, 1], [], []>} : vector<8x640xbf16>, vector<640x2048xbf16>, vector<8x2048xf32> -> vector<8x2048xf32>
    %19 = vector.extract_strided_slice %18 {offsets = [0, 0], sizes = [8, 512], strides = [1, 1]} : vector<8x2048xf32> to vector<8x512xf32>
    %20 = vector.extract_strided_slice %18 {offsets = [0, 512], sizes = [8, 512], strides = [1, 1]} : vector<8x2048xf32> to vector<8x512xf32>
    %21 = arith.maximumf %19, %20 : vector<8x512xf32>
    %22 = vector.extract_strided_slice %18 {offsets = [0, 1024], sizes = [8, 512], strides = [1, 1]} : vector<8x2048xf32> to vector<8x512xf32>
    %23 = vector.extract_strided_slice %18 {offsets = [0, 1536], sizes = [8, 512], strides = [1, 1]} : vector<8x2048xf32> to vector<8x512xf32>
    %24 = arith.maximumf %22, %23 : vector<8x512xf32>
    %25 = arith.maximumf %21, %24 : vector<8x512xf32>
    %c0_9 = arith.constant 0 : index
    %c0_10 = arith.constant 0 : index
    %26 = vector.load %arg5[%c0_9, %c0_10] : memref<1x512xf32, #tpu.memory_space<vmem>>, vector<1x512xf32>
    %27 = vector.broadcast %26 : vector<1x512xf32> to vector<8x512xf32>
    %28 = arith.addf %25, %27 : vector<8x512xf32>
    %cst_11 = arith.constant 0.000000e+00 : f32
    %29 = vector.broadcast %cst_11 : f32 to vector<8x512xf32>
    %30 = arith.maximumf %28, %29 : vector<8x512xf32>
    %31 = arith.truncf %30 : vector<8x512xf32> to vector<8x512xbf16>
    %c0_12 = arith.constant 0 : index
    %c0_13 = arith.constant 0 : index
    %32 = vector.load %arg6[%c0_12, %c0_13] : memref<512x128xbf16, #tpu.memory_space<vmem>>, vector<512x128xbf16>
    %cst_14 = arith.constant dense<0.000000e+00> : vector<8x128xf32>
    %33 = tpu.matmul %31, %32, %cst_14 {dimension_numbers = #tpu.dot_dimension_numbers<[1], [0], [0], [1], [0, 0, 1, 1], [], []>} : vector<8x512xbf16>, vector<512x128xbf16>, vector<8x128xf32> -> vector<8x128xf32>
    %c0_15 = arith.constant 0 : index
    %c0_16 = arith.constant 0 : index
    %34 = vector.load %arg7[%c0_15, %c0_16] : memref<1x128xf32, #tpu.memory_space<vmem>>, vector<1x128xf32>
    %35 = vector.broadcast %34 : vector<1x128xf32> to vector<8x128xf32>
    %36 = arith.addf %33, %35 : vector<8x128xf32>
    %cst_17 = arith.constant 0.000000e+00 : f32
    %37 = vector.broadcast %cst_17 : f32 to vector<8x128xf32>
    %38 = arith.maximumf %36, %37 : vector<8x128xf32>
    %39 = arith.truncf %38 : vector<8x128xf32> to vector<8x128xbf16>
    %c0_18 = arith.constant 0 : index
    %c0_19 = arith.constant 0 : index
    %40 = vector.load %arg8[%c0_18, %c0_19] : memref<128x128xbf16, #tpu.memory_space<vmem>>, vector<128x128xbf16>
    %cst_20 = arith.constant dense<0.000000e+00> : vector<8x128xf32>
    %41 = tpu.matmul %39, %40, %cst_20 {dimension_numbers = #tpu.dot_dimension_numbers<[1], [0], [0], [1], [0, 0, 1, 1], [], []>} : vector<8x128xbf16>, vector<128x128xbf16>, vector<8x128xf32> -> vector<8x128xf32>
    %c0_21 = arith.constant 0 : index
    %c0_22 = arith.constant 0 : index
    %42 = vector.load %arg9[%c0_21, %c0_22] : memref<1x128xf32, #tpu.memory_space<vmem>>, vector<1x128xf32>
    %43 = vector.broadcast %42 : vector<1x128xf32> to vector<8x128xf32>
    %44 = arith.addf %41, %43 : vector<8x128xf32>
    %cst_23 = arith.constant 0.000000e+00 : f32
    %45 = vector.broadcast %cst_23 : f32 to vector<8x128xf32>
    %46 = arith.maximumf %44, %45 : vector<8x128xf32>
    %47 = arith.truncf %46 : vector<8x128xf32> to vector<8x128xbf16>
    %c0_24 = arith.constant 0 : index
    %c0_25 = arith.constant 0 : index
    %48 = vector.load %arg10[%c0_24, %c0_25] : memref<128x128xbf16, #tpu.memory_space<vmem>>, vector<128x128xbf16>
    %cst_26 = arith.constant dense<0.000000e+00> : vector<8x128xf32>
    %49 = tpu.matmul %47, %48, %cst_26 {dimension_numbers = #tpu.dot_dimension_numbers<[1], [0], [0], [1], [0, 0, 1, 1], [], []>} : vector<8x128xbf16>, vector<128x128xbf16>, vector<8x128xf32> -> vector<8x128xf32>
    %c0_27 = arith.constant 0 : index
    %c0_28 = arith.constant 0 : index
    %50 = vector.load %arg11[%c0_27, %c0_28] : memref<1x128xf32, #tpu.memory_space<vmem>>, vector<1x128xf32>
    %51 = vector.broadcast %50 : vector<1x128xf32> to vector<8x128xf32>
    %52 = arith.addf %49, %51 : vector<8x128xf32>
    %cst_29 = arith.constant dense<0xFF800000> : vector<8xf32>
    %53 = vector.multi_reduction <maximumf>, %52, %cst_29 [1] : vector<8x128xf32> to vector<8xf32>
    %54 = vector.shape_cast %53 : vector<8xf32> to vector<8x1xf32>
    %55 = vector.broadcast %54 : vector<8x1xf32> to vector<8x128xf32>
    %56 = arith.subf %52, %55 : vector<8x128xf32>
    %57 = math.exp %56 : vector<8x128xf32>
    %cst_30 = arith.constant dense<0.000000e+00> : vector<8xf32>
    %58 = vector.multi_reduction <add>, %57, %cst_30 [1] : vector<8x128xf32> to vector<8xf32>
    %59 = vector.shape_cast %58 : vector<8xf32> to vector<8x1xf32>
    %60 = tpu.reciprocal %59 {approx = true} : vector<8x1xf32> -> vector<8x1xf32>
    %61 = vector.broadcast %60 : vector<8x1xf32> to vector<8x128xf32>
    %62 = arith.mulf %57, %61 : vector<8x128xf32>
    %c0_31 = arith.constant 0 : index
    %c0_32 = arith.constant 0 : index
    %63 = vector.load %arg12[%c0_31, %c0_32] : memref<8x128xf32, #tpu.memory_space<vmem>>, vector<8x128xf32>
    tpu.vector_store %arg12[%c0_31, %c0_32], %62 {strides = array<i32>} : memref<8x128xf32, #tpu.memory_space<vmem>>, vector<8x128xf32>,
    return
  }
  func.func @transform_0(%arg0: i32) -> (i32, i32) {
    %c0_i32 = arith.constant 0 : i32
    %c0_i32_0 = arith.constant 0 : i32
    return %arg0, %c0_i32 : i32, i32
  }
  func.func @transform_1(%arg0: i32) -> (i32, i32) {
    %c0_i32 = arith.constant 0 : i32
    %c0_i32_0 = arith.constant 0 : i32
    %c0_i32_1 = arith.constant 0 : i32
    return %c0_i32, %c0_i32_0 : i32, i32
  }
  func.func @transform_2(%arg0: i32) -> (i32, i32) {
    %c0_i32 = arith.constant 0 : i32
    %c0_i32_0 = arith.constant 0 : i32
    %c0_i32_1 = arith.constant 0 : i32
    return %c0_i32, %c0_i32_0 : i32, i32
  }
  func.func @transform_3(%arg0: i32) -> (i32, i32) {
    %c0_i32 = arith.constant 0 : i32
    %c0_i32_0 = arith.constant 0 : i32
    %c0_i32_1 = arith.constant 0 : i32
    return %c0_i32, %c0_i32_0 : i32, i32
  }
  func.func @transform_4(%arg0: i32) -> (i32, i32) {
    %c0_i32 = arith.constant 0 : i32
    %c0_i32_0 = arith.constant 0 : i32
    %c0_i32_1 = arith.constant 0 : i32
    return %c0_i32, %c0_i32_0 : i32, i32
  }
  func.func @transform_5(%arg0: i32) -> (i32, i32) {
    %c0_i32 = arith.constant 0 : i32
    %c0_i32_0 = arith.constant 0 : i32
    %c0_i32_1 = arith.constant 0 : i32
    return %c0_i32, %c0_i32_0 : i32, i32
  }
  func.func @transform_6(%arg0: i32) -> (i32, i32) {
    %c0_i32 = arith.constant 0 : i32
    %c0_i32_0 = arith.constant 0 : i32
    %c0_i32_1 = arith.constant 0 : i32
    return %c0_i32, %c0_i32_0 : i32, i32
  }
  func.func @transform_7(%arg0: i32) -> (i32, i32) {
    %c0_i32 = arith.constant 0 : i32
    %c0_i32_0 = arith.constant 0 : i32
    %c0_i32_1 = arith.constant 0 : i32
    return %c0_i32, %c0_i32_0 : i32, i32
  }
  func.func @transform_8(%arg0: i32) -> (i32, i32) {
    %c0_i32 = arith.constant 0 : i32
    %c0_i32_0 = arith.constant 0 : i32
    %c0_i32_1 = arith.constant 0 : i32
    return %c0_i32, %c0_i32_0 : i32, i32
  }
  func.func @transform_9(%arg0: i32) -> (i32, i32) {
    %c0_i32 = arith.constant 0 : i32
    %c0_i32_0 = arith.constant 0 : i32
    %c0_i32_1 = arith.constant 0 : i32
    return %c0_i32, %c0_i32_0 : i32, i32
  }
  func.func @transform_10(%arg0: i32) -> (i32, i32) {
    %c0_i32 = arith.constant 0 : i32
    %c0_i32_0 = arith.constant 0 : i32
    %c0_i32_1 = arith.constant 0 : i32
    return %c0_i32, %c0_i32_0 : i32, i32
  }
  func.func @transform_11(%arg0: i32) -> (i32, i32) {
    %c0_i32 = arith.constant 0 : i32
    %c0_i32_0 = arith.constant 0 : i32
    return %arg0, %c0_i32 : i32, i32
  }
}

</mosaic_0001>

<llo_original>
// kernel: lenet_forward.1
$region0: #{lenet_forward.1}
  #allocation0 [shape = 'u32[]', space=smem, size = 0x4, offset = 0x4, fixed_abs, tag = 'smem constant byte address 0x4 - core index']
  #allocation1 [shape = 'u32[72,128]{1,0:T(1,128)}', space=vmem, size = 0x9000, scoped, tag = 'internal scratch']
  %s0 = inlined_call_operand.vmem [shape: f32[8,400], index: 0, kind: input, shape index: {}]
  %s1 = inlined_call_operand.hbm [shape: bf16[400,2560], index: 1, kind: input, shape index: {}]
  %s2 = inlined_call_operand.hbm [shape: f32[1,640], index: 2, kind: input, shape index: {}]
  %s3 = inlined_call_operand.hbm [shape: bf16[640,2048], index: 3, kind: input, shape index: {}]
  %s4 = inlined_call_operand.hbm [shape: f32[1,512], index: 4, kind: input, shape index: {}]
  %s5 = inlined_call_operand.hbm [shape: bf16[512,128], index: 5, kind: input, shape index: {}]
  %s6 = inlined_call_operand.hbm [shape: f32[1,128], index: 6, kind: input, shape index: {}]
  %s7 = inlined_call_operand.hbm [shape: bf16[128,128], index: 7, kind: input, shape index: {}]
  %s8 = inlined_call_operand.hbm [shape: f32[1,128], index: 8, kind: input, shape index: {}]
  %s9 = inlined_call_operand.hbm [shape: bf16[128,128], index: 9, kind: input, shape index: {}]
  %s10 = inlined_call_operand.hbm [shape: f32[1,128], index: 10, kind: input, shape index: {}]
  %s11 = inlined_call_operand.vmem [shape: f32[8,128], index: 11, kind: output, shape index: {}]
  %s12 = sld [smem:[#allocation0]]
  $region94: #{lenet_forward.1} parent=0
    _
  %s14 = ssub.s32 1, %s12
  %s15 = scalar_select 0, %s14, %s12
  $region1: #{lenet_forward.1} parent=0
    #allocation2 [shape = 'u8[2048000]{0}', space=vmem, size = 0x1f4000, scoped, tag = 'input window, operand 1, single buffered']
    #allocation3 [shape = 's32[1]{0}', space=sflag, size = 0x4, scoped, tag = 'scoped memory for lenet_forward.1']
    #allocation4 [shape = 'u8[2560]{0}', space=vmem, size = 0xc00, scoped, tag = 'input window, operand 2, single buffered']
    #allocation5 [shape = 's32[1]{0}', space=sflag, size = 0x4, scoped, tag = 'scoped memory for lenet_forward.1']
    #allocation6 [shape = 'u8[2621440]{0}', space=vmem, size = 0x280000, scoped, tag = 'input window, operand 3, single buffered']
    #allocation7 [shape = 'u8[2048]{0}', space=vmem, size = 0x800, scoped, tag = 'input window, operand 4, single buffered']
    #allocation8 [shape = 's32[1]{0}', space=sflag, size = 0x4, scoped, tag = 'scoped memory for lenet_forward.1']
    #allocation9 [shape = 'u8[131072]{0}', space=vmem, size = 0x20000, scoped, tag = 'input window, operand 5, single buffered']
    #allocation10 [shape = 'u8[512]{0}', space=vmem, size = 0x400, scoped, tag = 'input window, operand 6, single buffered']
    #allocation11 [shape = 's32[1]{0}', space=sflag, size = 0x4, scoped, tag = 'scoped memory for lenet_forward.1']
    #allocation12 [shape = 'u8[32768]{0}', space=vmem, size = 0x8000, scoped, tag = 'input window, operand 7, single buffered']
    #allocation13 [shape = 'u8[512]{0}', space=vmem, size = 0x400, scoped, tag = 'input window, operand 8, single buffered']
    #allocation14 [shape = 's32[1]{0}', space=sflag, size = 0x4, scoped, tag = 'scoped memory for lenet_forward.1']
    #allocation15 [shape = 'u8[32768]{0}', space=vmem, size = 0x8000, scoped, tag = 'input window, operand 9, single buffered']
    #allocation16 [shape = 'u8[512]{0}', space=vmem, size = 0x400, scoped, tag = 'input window, operand 10, single buffered']
    #allocation17 [shape = 's32[1]{0}', space=sflag, size = 0x4, scoped, tag = 'scoped memory for lenet_forward.1']
    %16 = vsyncpa [#allocation3], 0
    %17 = vsyncpa [#allocation5], 0
    %18 = vsyncpa [#allocation8], 0
    %19 = vsyncpa [#allocation11], 0
    %20 = vsyncpa [#allocation14], 0
    %21 = vsyncpa [#allocation17], 0
    // Predicated region
    $region2: #{lenet_forward.1} parent=1 // pred_check
      _
    $region3: #{lenet_forward.1} parent=1 // pred_check_branch
      %23 = sbr.rel (0) target = $region5
    $region4: #{lenet_forward.1} parent=1 // pred_region
      _
    $region5: #{lenet_forward.1} parent=1 // pred_fallthru
      _
    // Predicated region
    $region6: #{lenet_forward.1} parent=1 // pred_check
      _
    $region7: #{lenet_forward.1} parent=1 // pred_check_branch
      %25 = sbr.rel (0) target = $region9
    $region8: #{lenet_forward.1} parent=1 // pred_region
      %27 = vsyncadd [#allocation3], 0
      %s28 = sshll.u32 %s1, 4
      %s29 = int_to_ptr.hbm [resolvable:$true] %s28
      %s30 = sshll.u32 [#allocation2], 4
      %s31 = int_to_ptr.vmem [resolvable:$true] %s30
      %36 = dma.hbm_to_vmem [thread:$0]  %s29, 64000, %s31, [#allocation3], 1280, 1280, 80
    $region9: #{lenet_forward.1} parent=1 // pred_fallthru
      _
    // Predicated region
    $region10: #{lenet_forward.1} parent=1 // pred_check
      _
    $region11: #{lenet_forward.1} parent=1 // pred_check_branch
      %38 = sbr.rel (0) target = $region13
    $region12: #{lenet_forward.1} parent=1 // pred_region
      %40 = vsyncadd [#allocation5], 0
      %s42 = sshll.u32 %s2, 4
      %s43 = int_to_ptr.hbm [resolvable:$true] %s42
      %s44 = sshll.u32 [#allocation4], 4
      %s45 = int_to_ptr.vmem [resolvable:$true] %s44
      %47 = dma.hbm_to_vmem [thread:$0]  %s43, 80, %s45, [#allocation5]
    $region13: #{lenet_forward.1} parent=1 // pred_fallthru
      _
    // Predicated region
    $region14: #{lenet_forward.1} parent=1 // pred_check
      _
    $region15: #{lenet_forward.1} parent=1 // pred_check_branch
      %49 = sbr.rel (0) target = $region17
    $region16: #{lenet_forward.1} parent=1 // pred_region
      %51 = vsyncadd [#allocation5], 0
      %s52 = sshll.u32 %s3, 4
      %s53 = int_to_ptr.hbm [resolvable:$true] %s52
      %s54 = sshll.u32 [#allocation6], 4
      %s55 = int_to_ptr.vmem [resolvable:$true] %s54
      %60 = dma.hbm_to_vmem [thread:$0]  %s53, 81920, %s55, [#allocation5], 1024, 1024, 64
    $region17: #{lenet_forward.1} parent=1 // pred_fallthru
      _
    // Predicated region
    $region18: #{lenet_forward.1} parent=1 // pred_check
      _
    $region19: #{lenet_forward.1} parent=1 // pred_check_branch
      %62 = sbr.rel (0) target = $region21
    $region20: #{lenet_forward.1} parent=1 // pred_region
      %64 = vsyncadd [#allocation8], 0
      %s66 = sshll.u32 %s4, 4
      %s67 = int_to_ptr.hbm [resolvable:$true] %s66
      %s68 = sshll.u32 [#allocation7], 4
      %s69 = int_to_ptr.vmem [resolvable:$true] %s68
      %71 = dma.hbm_to_vmem [thread:$0]  %s67, 64, %s69, [#allocation8]
    $region21: #{lenet_forward.1} parent=1 // pred_fallthru
      _
    // Predicated region
    $region22: #{lenet_forward.1} parent=1 // pred_check
      _
    $region23: #{lenet_forward.1} parent=1 // pred_check_branch
      %73 = sbr.rel (0) target = $region25
    $region24: #{lenet_forward.1} parent=1 // pred_region
      %75 = vsyncadd [#allocation8], 0
      %s76 = sshll.u32 %s5, 4
      %s77 = int_to_ptr.hbm [resolvable:$true] %s76
      %s78 = sshll.u32 [#allocation9], 4
      %s79 = int_to_ptr.vmem [resolvable:$true] %s78
      %84 = dma.hbm_to_vmem [thread:$0]  %s77, 4096, %s79, [#allocation8], 64, 64, 4
    $region25: #{lenet_forward.1} parent=1 // pred_fallthru
      _
    // Predicated region
    $region26: #{lenet_forward.1} parent=1 // pred_check
      _
    $region27: #{lenet_forward.1} parent=1 // pred_check_branch
      %86 = sbr.rel (0) target = $region29
    $region28: #{lenet_forward.1} parent=1 // pred_region
      %88 = vsyncadd [#allocation11], 0
      %s90 = sshll.u32 %s6, 4
      %s91 = int_to_ptr.hbm [resolvable:$true] %s90
      %s92 = sshll.u32 [#allocation10], 4
      %s93 = int_to_ptr.vmem [resolvable:$true] %s92
      %95 = dma.hbm_to_vmem [thread:$0]  %s91, 16, %s93, [#allocation11]
    $region29: #{lenet_forward.1} parent=1 // pred_fallthru
      _
    // Predicated region
    $region30: #{lenet_forward.1} parent=1 // pred_check
      _
    $region31: #{lenet_forward.1} parent=1 // pred_check_branch
      %97 = sbr.rel (0) target = $region33
    $region32: #{lenet_forward.1} parent=1 // pred_region
      %99 = vsyncadd [#allocation11], 0
      %s100 = sshll.u32 %s7, 4
      %s101 = int_to_ptr.hbm [resolvable:$true] %s100
      %s102 = sshll.u32 [#allocation12], 4
      %s103 = int_to_ptr.vmem [resolvable:$true] %s102
      %108 = dma.hbm_to_vmem [thread:$0]  %s101, 1024, %s103, [#allocation11], 64, 64, 4
    $region33: #{lenet_forward.1} parent=1 // pred_fallthru
      _
    // Predicated region
    $region34: #{lenet_forward.1} parent=1 // pred_check
      _
    $region35: #{lenet_forward.1} parent=1 // pred_check_branch
      %110 = sbr.rel (0) target = $region37
    $region36: #{lenet_forward.1} parent=1 // pred_region
      %112 = vsyncadd [#allocation14], 0
      %s114 = sshll.u32 %s8, 4
      %s115 = int_to_ptr.hbm [resolvable:$true] %s114
      %s116 = sshll.u32 [#allocation13], 4
      %s117 = int_to_ptr.vmem [resolvable:$true] %s116
      %119 = dma.hbm_to_vmem [thread:$0]  %s115, 16, %s117, [#allocation14]
    $region37: #{lenet_forward.1} parent=1 // pred_fallthru
      _
    // Predicated region
    $region38: #{lenet_forward.1} parent=1 // pred_check
      _
    $region39: #{lenet_forward.1} parent=1 // pred_check_branch
      %121 = sbr.rel (0) target = $region41
    $region40: #{lenet_forward.1} parent=1 // pred_region
      %123 = vsyncadd [#allocation14], 0
      %s124 = sshll.u32 %s9, 4
      %s125 = int_to_ptr.hbm [resolvable:$true] %s124
      %s126 = sshll.u32 [#allocation15], 4
      %s127 = int_to_ptr.vmem [resolvable:$true] %s126
      %132 = dma.hbm_to_vmem [thread:$0]  %s125, 1024, %s127, [#allocation14], 64, 64, 4
    $region41: #{lenet_forward.1} parent=1 // pred_fallthru
      _
    // Predicated region
    $region42: #{lenet_forward.1} parent=1 // pred_check
      _
    $region43: #{lenet_forward.1} parent=1 // pred_check_branch
      %134 = sbr.rel (0) target = $region45
    $region44: #{lenet_forward.1} parent=1 // pred_region
      %136 = vsyncadd [#allocation17], 0
      %s138 = sshll.u32 %s10, 4
      %s139 = int_to_ptr.hbm [resolvable:$true] %s138
      %s140 = sshll.u32 [#allocation16], 4
      %s141 = int_to_ptr.vmem [resolvable:$true] %s140
      %143 = dma.hbm_to_vmem [thread:$0]  %s139, 16, %s141, [#allocation17]
    $region45: #{lenet_forward.1} parent=1 // pred_fallthru
      _
    // Predicated region
    $region46: #{lenet_forward.1} parent=1 // pred_check
      _
    $region47: #{lenet_forward.1} parent=1 // pred_check_branch
      %145 = sbr.rel (0) target = $region49
    $region48: #{lenet_forward.1} parent=1 // pred_region
      %147 = dma.done [#allocation3], 64000
    $region49: #{lenet_forward.1} parent=1 // pred_fallthru
      _
    // Predicated region
    $region50: #{lenet_forward.1} parent=1 // pred_check
      _
    $region51: #{lenet_forward.1} parent=1 // pred_check_branch
      %149 = sbr.rel (0) target = $region53
    $region52: #{lenet_forward.1} parent=1 // pred_region
      %151 = dma.done [#allocation5], 80
    $region53: #{lenet_forward.1} parent=1 // pred_fallthru
      _
    // Predicated region
    $region54: #{lenet_forward.1} parent=1 // pred_check
      _
    $region55: #{lenet_forward.1} parent=1 // pred_check_branch
      %153 = sbr.rel (0) target = $region57
    $region56: #{lenet_forward.1} parent=1 // pred_region
      %155 = dma.done [#allocation5], 81920
    $region57: #{lenet_forward.1} parent=1 // pred_fallthru
      _
    // Predicated region
    $region58: #{lenet_forward.1} parent=1 // pred_check
      _
    $region59: #{lenet_forward.1} parent=1 // pred_check_branch
      %157 = sbr.rel (0) target = $region61
    $region60: #{lenet_forward.1} parent=1 // pred_region
      %159 = dma.done [#allocation8], 64
    $region61: #{lenet_forward.1} parent=1 // pred_fallthru
      _
    // Predicated region
    $region62: #{lenet_forward.1} parent=1 // pred_check
      _
    $region63: #{lenet_forward.1} parent=1 // pred_check_branch
      %161 = sbr.rel (0) target = $region65
    $region64: #{lenet_forward.1} parent=1 // pred_region
      %163 = dma.done [#allocation8], 4096
    $region65: #{lenet_forward.1} parent=1 // pred_fallthru
      _
    // Predicated region
    $region66: #{lenet_forward.1} parent=1 // pred_check
      _
    $region67: #{lenet_forward.1} parent=1 // pred_check_branch
      %165 = sbr.rel (0) target = $region69
    $region68: #{lenet_forward.1} parent=1 // pred_region
      %167 = dma.done [#allocation11], 16
    $region69: #{lenet_forward.1} parent=1 // pred_fallthru
      _
    // Predicated region
    $region70: #{lenet_forward.1} parent=1 // pred_check
      _
    $region71: #{lenet_forward.1} parent=1 // pred_check_branch
      %169 = sbr.rel (0) target = $region73
    $region72: #{lenet_forward.1} parent=1 // pred_region
      %171 = dma.done [#allocation11], 1024
    $region73: #{lenet_forward.1} parent=1 // pred_fallthru
      _
    // Predicated region
    $region74: #{lenet_forward.1} parent=1 // pred_check
      _
    $region75: #{lenet_forward.1} parent=1 // pred_check_branch
      %173 = sbr.rel (0) target = $region77
    $region76: #{lenet_forward.1} parent=1 // pred_region
      %175 = dma.done [#allocation14], 16
    $region77: #{lenet_forward.1} parent=1 // pred_fallthru
      _
    // Predicated region
    $region78: #{lenet_forward.1} parent=1 // pred_check
      _
    $region79: #{lenet_forward.1} parent=1 // pred_check_branch
      %177 = sbr.rel (0) target = $region81
    $region80: #{lenet_forward.1} parent=1 // pred_region
      %179 = dma.done [#allocation14], 1024
    $region81: #{lenet_forward.1} parent=1 // pred_fallthru
      _
    // Predicated region
    $region82: #{lenet_forward.1} parent=1 // pred_check
      _
    $region83: #{lenet_forward.1} parent=1 // pred_check_branch
      %181 = sbr.rel (0) target = $region85
    $region84: #{lenet_forward.1} parent=1 // pred_region
      %183 = dma.done [#allocation17], 16
    $region85: #{lenet_forward.1} parent=1 // pred_fallthru
      _
    %v185 = vld [vmem:[%s0] sm:$0xff]
    %v186 = vld [vmem:[%s0 + $0x8] sm:$0xff]
    %v187 = vld [vmem:[%s0 + $0x10] sm:$0xff]
    %v188 = vld [vmem:[%s0 + $0x18] sm:$0xff]
    %v189 = vpack.c.bf16 %v185, %v185
    %v190 = vpack.c.bf16 %v186, %v186
    %v191 = vpack.c.bf16 %v187, %v187
    %v192 = vpack.c.bf16 %v188, %v188
    %v193 = vld [vmem:[#allocation2] sm:$0xff]
    %v194 = vld [vmem:[#allocation2 + $0x8] sm:$0xff]
    %v195 = vld [vmem:[#allocation2 + $0x10] sm:$0xff]
    %v196 = vld [vmem:[#allocation2 + $0x18] sm:$0xff]
    %v197 = vld [vmem:[#allocation2 + $0x20] sm:$0xff]
    %v198 = vld [vmem:[#allocation2 + $0x28] sm:$0xff]
    %v199 = vld [vmem:[#allocation2 + $0x30] sm:$0xff]
    %v200 = vld [vmem:[#allocation2 + $0x38] sm:$0xff]
    %v201 = vld [vmem:[#allocation2 + $0x40] sm:$0xff]
    %v202 = vld [vmem:[#allocation2 + $0x48] sm:$0xff]
    %v203 = vld [vmem:[#allocation2 + $0x50] sm:$0xff]
    %v204 = vld [vmem:[#allocation2 + $0x58] sm:$0xff]
    %v205 = vld [vmem:[#allocation2 + $0x60] sm:$0xff]
    %v206 = vld [vmem:[#allocation2 + $0x68] sm:$0xff]
    %v207 = vld [vmem:[#allocation2 + $0x70] sm:$0xff]
    %v208 = vld [vmem:[#allocation2 + $0x78] sm:$0xff]
    %v209 = vld [vmem:[#allocation2 + $0x80] sm:$0xff]
    %v210 = vld [vmem:[#allocation2 + $0x88] sm:$0xff]
    %v211 = vld [vmem:[#allocation2 + $0x90] sm:$0xff]
    %v212 = vld [vmem:[#allocation2 + $0x98] sm:$0xff]
    %v213 = vld [vmem:[#allocation2 + $0xa0] sm:$0xff]
    %v214 = vld [vmem:[#allocation2 + $0xa8] sm:$0xff]
    %v215 = vld [vmem:[#allocation2 + $0xb0] sm:$0xff]
    %v216 = vld [vmem:[#allocation2 + $0xb8] sm:$0xff]
    %v217 = vld [vmem:[#allocation2 + $0xc0] sm:$0xff]
    %v218 = vld [vmem:[#allocation2 + $0xc8] sm:$0xff]
    %v219 = vld [vmem:[#allocation2 + $0xd0] sm:$0xff]
    %v220 = vld [vmem:[#allocation2 + $0xd8] sm:$0xff]
    %v221 = vld [vmem:[#allocation2 + $0xe0] sm:$0xff]
    %v222 = vld [vmem:[#allocation2 + $0xe8] sm:$0xff]
    %v223 = vld [vmem:[#allocation2 + $0xf0] sm:$0xff]
    %v224 = vld [vmem:[#allocation2 + $0xf8] sm:$0xff]
    %v225 = vld [vmem:[#allocation2 + $0x100] sm:$0xff]
    %v226 = vld [vmem:[#allocation2 + $0x108] sm:$0xff]
    %v227 = vld [vmem:[#allocation2 + $0x110] sm:$0xff]
    %v228 = vld [vmem:[#allocation2 + $0x118] sm:$0xff]
    %v229 = vld [vmem:[#allocation2 + $0x120] sm:$0xff]
    %v230 = vld [vmem:[#allocation2 + $0x128] sm:$0xff]
    %v231 = vld [vmem:[#allocation2 + $0x130] sm:$0xff]
    %v232 = vld [vmem:[#allocation2 + $0x138] sm:$0xff]
    %v233 = vld [vmem:[#allocation2 + $0x140] sm:$0xff]
    %v234 = vld [vmem:[#allocation2 + $0x148] sm:$0xff]
    %v235 = vld [vmem:[#allocation2 + $0x150] sm:$0xff]
    %v236 = vld [vmem:[#allocation2 + $0x158] sm:$0xff]
    %v237 = vld [vmem:[#allocation2 + $0x160] sm:$0xff]
    %v238 = vld [vmem:[#allocation2 + $0x168] sm:$0xff]
    %v239 = vld [vmem:[#allocation2 + $0x170] sm:$0xff]
    %v240 = vld [vmem:[#allocation2 + $0x178] sm:$0xff]
    %v241 = vld [vmem:[#allocation2 + $0x180] sm:$0xff]
    %v242 = vld [vmem:[#allocation2 + $0x188] sm:$0xff]
    %v243 = vld [vmem:[#allocation2 + $0x190] sm:$0xff]
    %v244 = vld [vmem:[#allocation2 + $0x198] sm:$0xff]
    %v245 = vld [vmem:[#allocation2 + $0x1a0] sm:$0xff]
    %v246 = vld [vmem:[#allocation2 + $0x1a8] sm:$0xff]
    %v247 = vld [vmem:[#allocation2 + $0x1b0] sm:$0xff]
    %v248 = vld [vmem:[#allocation2 + $0x1b8] sm:$0xff]
    %v249 = vld [vmem:[#allocation2 + $0x1c0] sm:$0xff]
    %v250 = vld [vmem:[#allocation2 + $0x1c8] sm:$0xff]
    %v251 = vld [vmem:[#allocation2 + $0x1d0] sm:$0xff]
    %v252 = vld [vmem:[#allocation2 + $0x1d8] sm:$0xff]
    %v253 = vld [vmem:[#allocation2 + $0x1e0] sm:$0xff]
    %v254 = vld [vmem:[#allocation2 + $0x1e8] sm:$0xff]
    %v255 = vld [vmem:[#allocation2 + $0x1f0] sm:$0xff]
    %v256 = vld [vmem:[#allocation2 + $0x1f8] sm:$0xff]
    %v257 = vld [vmem:[#allocation2 + $0x200] sm:$0xff]
    %v258 = vld [vmem:[#allocation2 + $0x208] sm:$0xff]
    %v259 = vld [vmem:[#allocation2 + $0x210] sm:$0xff]
    %v260 = vld [vmem:[#allocation2 + $0x218] sm:$0xff]
    %v261 = vld [vmem:[#allocation2 + $0x220] sm:$0xff]
    %v262 = vld [vmem:[#allocation2 + $0x228] sm:$0xff]
    %v263 = vld [vmem:[#allocation2 + $0x230] sm:$0xff]
    %v264 = vld [vmem:[#allocation2 + $0x238] sm:$0xff]
    %v265 = vld [vmem:[#allocation2 + $0x240] sm:$0xff]
    %v266 = vld [vmem:[#allocation2 + $0x248] sm:$0xff]
    %v267 = vld [vmem:[#allocation2 + $0x250] sm:$0xff]
    %v268 = vld [vmem:[#allocation2 + $0x258] sm:$0xff]
    %v269 = vld [vmem:[#allocation2 + $0x260] sm:$0xff]
    %v270 = vld [vmem:[#allocation2 + $0x268] sm:$0xff]
    %v271 = vld [vmem:[#allocation2 + $0x270] sm:$0xff]
    %v272 = vld [vmem:[#allocation2 + $0x278] sm:$0xff]
    %v273 = vld [vmem:[#allocation2 + $0x280] sm:$0xff]
    %v274 = vld [vmem:[#allocation2 + $0x288] sm:$0xff]
    %v275 = vld [vmem:[#allocation2 + $0x290] sm:$0xff]
    %v276 = vld [vmem:[#allocation2 + $0x298] sm:$0xff]
    %v277 = vld [vmem:[#allocation2 + $0x2a0] sm:$0xff]
    %v278 = vld [vmem:[#allocation2 + $0x2a8] sm:$0xff]
    %v279 = vld [vmem:[#allocation2 + $0x2b0] sm:$0xff]
    %v280 = vld [vmem:[#allocation2 + $0x2b8] sm:$0xff]
    %v281 = vld [vmem:[#allocation2 + $0x2c0] sm:$0xff]
    %v282 = vld [vmem:[#allocation2 + $0x2c8] sm:$0xff]
    %v283 = vld [vmem:[#allocation2 + $0x2d0] sm:$0xff]
    %v284 = vld [vmem:[#allocation2 + $0x2d8] sm:$0xff]
    %v285 = vld [vmem:[#allocation2 + $0x2e0] sm:$0xff]
    %v286 = vld [vmem:[#allocation2 + $0x2e8] sm:$0xff]
    %v287 = vld [vmem:[#allocation2 + $0x2f0] sm:$0xff]
    %v288 = vld [vmem:[#allocation2 + $0x2f8] sm:$0xff]
    %v289 = vld [vmem:[#allocation2 + $0x300] sm:$0xff]
    %v290 = vld [vmem:[#allocation2 + $0x308] sm:$0xff]
    %v291 = vld [vmem:[#allocation2 + $0x310] sm:$0xff]
    %v292 = vld [vmem:[#allocation2 + $0x318] sm:$0xff]
    %v293 = vld [vmem:[#allocation2 + $0x320] sm:$0xff]
    %v294 = vld [vmem:[#allocation2 + $0x328] sm:$0xff]
    %v295 = vld [vmem:[#allocation2 + $0x330] sm:$0xff]
    %v296 = vld [vmem:[#allocation2 + $0x338] sm:$0xff]
    %v297 = vld [vmem:[#allocation2 + $0x340] sm:$0xff]
    %v298 = vld [vmem:[#allocation2 + $0x348] sm:$0xff]
    %v299 = vld [vmem:[#allocation2 + $0x350] sm:$0xff]
    %v300 = vld [vmem:[#allocation2 + $0x358] sm:$0xff]
    %v301 = vld [vmem:[#allocation2 + $0x360] sm:$0xff]
    %v302 = vld [vmem:[#allocation2 + $0x368] sm:$0xff]
    %v303 = vld [vmem:[#allocation2 + $0x370] sm:$0xff]
    %v304 = vld [vmem:[#allocation2 + $0x378] sm:$0xff]
    %v305 = vld [vmem:[#allocation2 + $0x380] sm:$0xff]
    %v306 = vld [vmem:[#allocation2 + $0x388] sm:$0xff]
    %v307 = vld [vmem:[#allocation2 + $0x390] sm:$0xff]
    %v308 = vld [vmem:[#allocation2 + $0x398] sm:$0xff]
    %v309 = vld [vmem:[#allocation2 + $0x3a0] sm:$0xff]
    %v310 = vld [vmem:[#allocation2 + $0x3a8] sm:$0xff]
    %v311 = vld [vmem:[#allocation2 + $0x3b0] sm:$0xff]
    %v312 = vld [vmem:[#allocation2 + $0x3b8] sm:$0xff]
    %v313 = vld [vmem:[#allocation2 + $0x3c0] sm:$0xff]
    %v314 = vld [vmem:[#allocation2 + $0x3c8] sm:$0xff]
    %v315 = vld [vmem:[#allocation2 + $0x3d0] sm:$0xff]
    %v316 = vld [vmem:[#allocation2 + $0x3d8] sm:$0xff]
    %v317 = vld [vmem:[#allocation2 + $0x3e0] sm:$0xff]
    %v318 = vld [vmem:[#allocation2 + $0x3e8] sm:$0xff]
    %v319 = vld [vmem:[#allocation2 + $0x3f0] sm:$0xff]
    %v320 = vld [vmem:[#allocation2 + $0x3f8] sm:$0xff]
    %v321 = vld [vmem:[#allocation2 + $0x400] sm:$0xff]
    %v322 = vld [vmem:[#allocation2 + $0x408] sm:$0xff]
    %v323 = vld [vmem:[#allocation2 + $0x410] sm:$0xff]
    %v324 = vld [vmem:[#allocation2 + $0x418] sm:$0xff]
    %v325 = vld [vmem:[#allocation2 + $0x420] sm:$0xff]
    %v326 = vld [vmem:[#allocation2 + $0x428] sm:$0xff]
    %v327 = vld [vmem:[#allocation2 + $0x430] sm:$0xff]
    %v328 = vld [vmem:[#allocation2 + $0x438] sm:$0xff]
    %v329 = vld [vmem:[#allocation2 + $0x440] sm:$0xff]
    %v330 = vld [vmem:[#allocation2 + $0x448] sm:$0xff]
    %v331 = vld [vmem:[#allocation2 + $0x450] sm:$0xff]
    %v332 = vld [vmem:[#allocation2 + $0x458] sm:$0xff]
    %v333 = vld [vmem:[#allocation2 + $0x460] sm:$0xff]
    %v334 = vld [vmem:[#allocation2 + $0x468] sm:$0xff]
    %v335 = vld [vmem:[#allocation2 + $0x470] sm:$0xff]
    %v336 = vld [vmem:[#allocation2 + $0x478] sm:$0xff]
    %v337 = vld [vmem:[#allocation2 + $0x480] sm:$0xff]
    %v338 = vld [vmem:[#allocation2 + $0x488] sm:$0xff]
    %v339 = vld [vmem:[#allocation2 + $0x490] sm:$0xff]
    %v340 = vld [vmem:[#allocation2 + $0x498] sm:$0xff]
    %v341 = vld [vmem:[#allocation2 + $0x4a0] sm:$0xff]
    %v342 = vld [vmem:[#allocation2 + $0x4a8] sm:$0xff]
    %v343 = vld [vmem:[#allocation2 + $0x4b0] sm:$0xff]
    %v344 = vld [vmem:[#allocation2 + $0x4b8] sm:$0xff]
    %v345 = vld [vmem:[#allocation2 + $0x4c0] sm:$0xff]
    %v346 = vld [vmem:[#allocation2 + $0x4c8] sm:$0xff]
    %v347 = vld [vmem:[#allocation2 + $0x4d0] sm:$0xff]
    %v348 = vld [vmem:[#allocation2 + $0x4d8] sm:$0xff]
    %v349 = vld [vmem:[#allocation2 + $0x4e0] sm:$0xff]
    %v350 = vld [vmem:[#allocation2 + $0x4e8] sm:$0xff]
    %v351 = vld [vmem:[#allocation2 + $0x4f0] sm:$0xff]
    %v352 = vld [vmem:[#allocation2 + $0x4f8] sm:$0xff]
    %v353 = vld [vmem:[#allocation2 + $0x500] sm:$0xff]
    %v354 = vld [vmem:[#allocation2 + $0x508] sm:$0xff]
    %v355 = vld [vmem:[#allocation2 + $0x510] sm:$0xff]
    %v356 = vld [vmem:[#allocation2 + $0x518] sm:$0xff]
    %v357 = vld [vmem:[#allocation2 + $0x520] sm:$0xff]
    %v358 = vld [vmem:[#allocation2 + $0x528] sm:$0xff]
    %v359 = vld [vmem:[#allocation2 + $0x530] sm:$0xff]
    %v360 = vld [vmem:[#allocation2 + $0x538] sm:$0xff]
    %v361 = vld [vmem:[#allocation2 + $0x540] sm:$0xff]
    %v362 = vld [vmem:[#allocation2 + $0x548] sm:$0xff]
    %v363 = vld [vmem:[#allocation2 + $0x550] sm:$0xff]
    %v364 = vld [vmem:[#allocation2 + $0x558] sm:$0xff]
    %v365 = vld [vmem:[#allocation2 + $0x560] sm:$0xff]
    %v366 = vld [vmem:[#allocation2 + $0x568] sm:$0xff]
    %v367 = vld [vmem:[#allocation2 + $0x570] sm:$0xff]
    %v368 = vld [vmem:[#allocation2 + $0x578] sm:$0xff]
    %v369 = vld [vmem:[#allocation2 + $0x580] sm:$0xff]
    %v370 = vld [vmem:[#allocation2 + $0x588] sm:$0xff]
    %v371 = vld [vmem:[#allocation2 + $0x590] sm:$0xff]
    %v372 = vld [vmem:[#allocation2 + $0x598] sm:$0xff]
    %v373 = vld [vmem:[#allocation2 + $0x5a0] sm:$0xff]
    %v374 = vld [vmem:[#allocation2 + $0x5a8] sm:$0xff]
    %v375 = vld [vmem:[#allocation2 + $0x5b0] sm:$0xff]
    %v376 = vld [vmem:[#allocation2 + $0x5b8] sm:$0xff]
    %v377 = vld [vmem:[#allocation2 + $0x5c0] sm:$0xff]
    %v378 = vld [vmem:[#allocation2 + $0x5c8] sm:$0xff]
    %v379 = vld [vmem:[#allocation2 + $0x5d0] sm:$0xff]
    %v380 = vld [vmem:[#allocation2 + $0x5d8] sm:$0xff]
    %v381 = vld [vmem:[#allocation2 + $0x5e0] sm:$0xff]
    %v382 = vld [vmem:[#allocation2 + $0x5e8] sm:$0xff]
    %v383 = vld [vmem:[#allocation2 + $0x5f0] sm:$0xff]
    %v384 = vld [vmem:[#allocation2 + $0x5f8] sm:$0xff]
    %v385 = vld [vmem:[#allocation2 + $0x600] sm:$0xff]
    %v386 = vld [vmem:[#allocation2 + $0x608] sm:$0xff]
    %v387 = vld [vmem:[#allocation2 + $0x610] sm:$0xff]
    %v388 = vld [vmem:[#allocation2 + $0x618] sm:$0xff]
    %v389 = vld [vmem:[#allocation2 + $0x620] sm:$0xff]
    %v390 = vld [vmem:[#allocation2 + $0x628] sm:$0xff]
    %v391 = vld [vmem:[#allocation2 + $0x630] sm:$0xff]
    %v392 = vld [vmem:[#allocation2 + $0x638] sm:$0xff]
    %v393 = vld [vmem:[#allocation2 + $0x640] sm:$0xff]
    %v394 = vld [vmem:[#allocation2 + $0x648] sm:$0xff]
    %v395 = vld [vmem:[#allocation2 + $0x650] sm:$0xff]
    %v396 = vld [vmem:[#allocation2 + $0x658] sm:$0xff]
    %v397 = vld [vmem:[#allocation2 + $0x660] sm:$0xff]
    %v398 = vld [vmem:[#allocation2 + $0x668] sm:$0xff]
    %v399 = vld [vmem:[#allocation2 + $0x670] sm:$0xff]
    %v400 = vld [vmem:[#allocation2 + $0x678] sm:$0xff]
    %v401 = vld [vmem:[#allocation2 + $0x680] sm:$0xff]
    %v402 = vld [vmem:[#allocation2 + $0x688] sm:$0xff]
    %v403 = vld [vmem:[#allocation2 + $0x690] sm:$0xff]
    %v404 = vld [vmem:[#allocation2 + $0x698] sm:$0xff]
    %v405 = vld [vmem:[#allocation2 + $0x6a0] sm:$0xff]
    %v406 = vld [vmem:[#allocation2 + $0x6a8] sm:$0xff]
    %v407 = vld [vmem:[#allocation2 + $0x6b0] sm:$0xff]
    %v408 = vld [vmem:[#allocation2 + $0x6b8] sm:$0xff]
    %v409 = vld [vmem:[#allocation2 + $0x6c0] sm:$0xff]
    %v410 = vld [vmem:[#allocation2 + $0x6c8] sm:$0xff]
    %v411 = vld [vmem:[#allocation2 + $0x6d0] sm:$0xff]
    %v412 = vld [vmem:[#allocation2 + $0x6d8] sm:$0xff]
    %v413 = vld [vmem:[#allocation2 + $0x6e0] sm:$0xff]
    %v414 = vld [vmem:[#allocation2 + $0x6e8] sm:$0xff]
    %v415 = vld [vmem:[#allocation2 + $0x6f0] sm:$0xff]
    %v416 = vld [vmem:[#allocation2 + $0x6f8] sm:$0xff]
    %v417 = vld [vmem:[#allocation2 + $0x700] sm:$0xff]
    %v418 = vld [vmem:[#allocation2 + $0x708] sm:$0xff]
    %v419 = vld [vmem:[#allocation2 + $0x710] sm:$0xff]
    %v420 = vld [vmem:[#allocation2 + $0x718] sm:$0xff]
    %v421 = vld [vmem:[#allocation2 + $0x720] sm:$0xff]
    %v422 = vld [vmem:[#allocation2 + $0x728] sm:$0xff]
    %v423 = vld [vmem:[#allocation2 + $0x730] sm:$0xff]
    %v424 = vld [vmem:[#allocation2 + $0x738] sm:$0xff]
    %v425 = vld [vmem:[#allocation2 + $0x740] sm:$0xff]
    %v426 = vld [vmem:[#allocation2 + $0x748] sm:$0xff]
    %v427 = vld [vmem:[#allocation2 + $0x750] sm:$0xff]
    %v428 = vld [vmem:[#allocation2 + $0x758] sm:$0xff]
    %v429 = vld [vmem:[#allocation2 + $0x760] sm:$0xff]
    %v430 = vld [vmem:[#allocation2 + $0x768] sm:$0xff]
    %v431 = vld [vmem:[#allocation2 + $0x770] sm:$0xff]
    %v432 = vld [vmem:[#allocation2 + $0x778] sm:$0xff]
    %v433 = vld [vmem:[#allocation2 + $0x780] sm:$0xff]
    %v434 = vld [vmem:[#allocation2 + $0x788] sm:$0xff]
    %v435 = vld [vmem:[#allocation2 + $0x790] sm:$0xff]
    %v436 = vld [vmem:[#allocation2 + $0x798] sm:$0xff]
    %v437 = vld [vmem:[#allocation2 + $0x7a0] sm:$0xff]
    %v438 = vld [vmem:[#allocation2 + $0x7a8] sm:$0xff]
    %v439 = vld [vmem:[#allocation2 + $0x7b0] sm:$0xff]
    %v440 = vld [vmem:[#allocation2 + $0x7b8] sm:$0xff]
    %v441 = vld [vmem:[#allocation2 + $0x7c0] sm:$0xff]
    %v442 = vld [vmem:[#allocation2 + $0x7c8] sm:$0xff]
    %v443 = vld [vmem:[#allocation2 + $0x7d0] sm:$0xff]
    %v444 = vld [vmem:[#allocation2 + $0x7d8] sm:$0xff]
    %v445 = vld [vmem:[#allocation2 + $0x7e0] sm:$0xff]
    %v446 = vld [vmem:[#allocation2 + $0x7e8] sm:$0xff]
    %v447 = vld [vmem:[#allocation2 + $0x7f0] sm:$0xff]
    %v448 = vld [vmem:[#allocation2 + $0x7f8] sm:$0xff]
    %v449 = vld [vmem:[#allocation2 + $0x800] sm:$0xff]
    %v450 = vld [vmem:[#allocation2 + $0x808] sm:$0xff]
    %v451 = vld [vmem:[#allocation2 + $0x810] sm:$0xff]
    %v452 = vld [vmem:[#allocation2 + $0x818] sm:$0xff]
    %v453 = vld [vmem:[#allocation2 + $0x820] sm:$0xff]
    %v454 = vld [vmem:[#allocation2 + $0x828] sm:$0xff]
    %v455 = vld [vmem:[#allocation2 + $0x830] sm:$0xff]
    %v456 = vld [vmem:[#allocation2 + $0x838] sm:$0xff]
    %v457 = vld [vmem:[#allocation2 + $0x840] sm:$0xff]
    %v458 = vld [vmem:[#allocation2 + $0x848] sm:$0xff]
    %v459 = vld [vmem:[#allocation2 + $0x850] sm:$0xff]
    %v460 = vld [vmem:[#allocation2 + $0x858] sm:$0xff]
    %v461 = vld [vmem:[#allocation2 + $0x860] sm:$0xff]
    %v462 = vld [vmem:[#allocation2 + $0x868] sm:$0xff]
    %v463 = vld [vmem:[#allocation2 + $0x870] sm:$0xff]
    %v464 = vld [vmem:[#allocation2 + $0x878] sm:$0xff]
    %v465 = vld [vmem:[#allocation2 + $0x880] sm:$0xff]
    %v466 = vld [vmem:[#allocation2 + $0x888] sm:$0xff]
    %v467 = vld [vmem:[#allocation2 + $0x890] sm:$0xff]
    %v468 = vld [vmem:[#allocation2 + $0x898] sm:$0xff]
    %v469 = vld [vmem:[#allocation2 + $0x8a0] sm:$0xff]
    %v470 = vld [vmem:[#allocation2 + $0x8a8] sm:$0xff]
    %v471 = vld [vmem:[#allocation2 + $0x8b0] sm:$0xff]
    %v472 = vld [vmem:[#allocation2 + $0x8b8] sm:$0xff]
    %v473 = vld [vmem:[#allocation2 + $0x8c0] sm:$0xff]
    %v474 = vld [vmem:[#allocation2 + $0x8c8] sm:$0xff]
    %v475 = vld [vmem:[#allocation2 + $0x8d0] sm:$0xff]
    %v476 = vld [vmem:[#allocation2 + $0x8d8] sm:$0xff]
    %v477 = vld [vmem:[#allocation2 + $0x8e0] sm:$0xff]
    %v478 = vld [vmem:[#allocation2 + $0x8e8] sm:$0xff]
    %v479 = vld [vmem:[#allocation2 + $0x8f0] sm:$0xff]
    %v480 = vld [vmem:[#allocation2 + $0x8f8] sm:$0xff]
    %v481 = vld [vmem:[#allocation2 + $0x900] sm:$0xff]
    %v482 = vld [vmem:[#allocation2 + $0x908] sm:$0xff]
    %v483 = vld [vmem:[#allocation2 + $0x910] sm:$0xff]
    %v484 = vld [vmem:[#allocation2 + $0x918] sm:$0xff]
    %v485 = vld [vmem:[#allocation2 + $0x920] sm:$0xff]
    %v486 = vld [vmem:[#allocation2 + $0x928] sm:$0xff]
    %v487 = vld [vmem:[#allocation2 + $0x930] sm:$0xff]
    %v488 = vld [vmem:[#allocation2 + $0x938] sm:$0xff]
    %v489 = vld [vmem:[#allocation2 + $0x940] sm:$0xff]
    %v490 = vld [vmem:[#allocation2 + $0x948] sm:$0xff]
    %v491 = vld [vmem:[#allocation2 + $0x950] sm:$0xff]
    %v492 = vld [vmem:[#allocation2 + $0x958] sm:$0xff]
    %v493 = vld [vmem:[#allocation2 + $0x960] sm:$0xff]
    %v494 = vld [vmem:[#allocation2 + $0x968] sm:$0xff]
    %v495 = vld [vmem:[#allocation2 + $0x970] sm:$0xff]
    %v496 = vld [vmem:[#allocation2 + $0x978] sm:$0xff]
    %v497 = vld [vmem:[#allocation2 + $0x980] sm:$0xff]
    %v498 = vld [vmem:[#allocation2 + $0x988] sm:$0xff]
    %v499 = vld [vmem:[#allocation2 + $0x990] sm:$0xff]
    %v500 = vld [vmem:[#allocation2 + $0x998] sm:$0xff]
    %v501 = vld [vmem:[#allocation2 + $0x9a0] sm:$0xff]
    %v502 = vld [vmem:[#allocation2 + $0x9a8] sm:$0xff]
    %v503 = vld [vmem:[#allocation2 + $0x9b0] sm:$0xff]
    %v504 = vld [vmem:[#allocation2 + $0x9b8] sm:$0xff]
    %v505 = vld [vmem:[#allocation2 + $0x9c0] sm:$0xff]
    %v506 = vld [vmem:[#allocation2 + $0x9c8] sm:$0xff]
    %v507 = vld [vmem:[#allocation2 + $0x9d0] sm:$0xff]
    %v508 = vld [vmem:[#allocation2 + $0x9d8] sm:$0xff]
    %v509 = vld [vmem:[#allocation2 + $0x9e0] sm:$0xff]
    %v510 = vld [vmem:[#allocation2 + $0x9e8] sm:$0xff]
    %v511 = vld [vmem:[#allocation2 + $0x9f0] sm:$0xff]
    %v512 = vld [vmem:[#allocation2 + $0x9f8] sm:$0xff]
    %v513 = vld [vmem:[#allocation2 + $0xa00] sm:$0xff]
    %v514 = vld [vmem:[#allocation2 + $0xa08] sm:$0xff]
    %v515 = vld [vmem:[#allocation2 + $0xa10] sm:$0xff]
    %v516 = vld [vmem:[#allocation2 + $0xa18] sm:$0xff]
    %v517 = vld [vmem:[#allocation2 + $0xa20] sm:$0xff]
    %v518 = vld [vmem:[#allocation2 + $0xa28] sm:$0xff]
    %v519 = vld [vmem:[#allocation2 + $0xa30] sm:$0xff]
    %v520 = vld [vmem:[#allocation2 + $0xa38] sm:$0xff]
    %v521 = vld [vmem:[#allocation2 + $0xa40] sm:$0xff]
    %v522 = vld [vmem:[#allocation2 + $0xa48] sm:$0xff]
    %v523 = vld [vmem:[#allocation2 + $0xa50] sm:$0xff]
    %v524 = vld [vmem:[#allocation2 + $0xa58] sm:$0xff]
    %v525 = vld [vmem:[#allocation2 + $0xa60] sm:$0xff]
    %v526 = vld [vmem:[#allocation2 + $0xa68] sm:$0xff]
    %v527 = vld [vmem:[#allocation2 + $0xa70] sm:$0xff]
    %v528 = vld [vmem:[#allocation2 + $0xa78] sm:$0xff]
    %v529 = vld [vmem:[#allocation2 + $0xa80] sm:$0xff]
    %v530 = vld [vmem:[#allocation2 + $0xa88] sm:$0xff]
    %v531 = vld [vmem:[#allocation2 + $0xa90] sm:$0xff]
    %v532 = vld [vmem:[#allocation2 + $0xa98] sm:$0xff]
    %v533 = vld [vmem:[#allocation2 + $0xaa0] sm:$0xff]
    %v534 = vld [vmem:[#allocation2 + $0xaa8] sm:$0xff]
    %v535 = vld [vmem:[#allocation2 + $0xab0] sm:$0xff]
    %v536 = vld [vmem:[#allocation2 + $0xab8] sm:$0xff]
    %v537 = vld [vmem:[#allocation2 + $0xac0] sm:$0xff]
    %v538 = vld [vmem:[#allocation2 + $0xac8] sm:$0xff]
    %v539 = vld [vmem:[#allocation2 + $0xad0] sm:$0xff]
    %v540 = vld [vmem:[#allocation2 + $0xad8] sm:$0xff]
    %v541 = vld [vmem:[#allocation2 + $0xae0] sm:$0xff]
    %v542 = vld [vmem:[#allocation2 + $0xae8] sm:$0xff]
    %v543 = vld [vmem:[#allocation2 + $0xaf0] sm:$0xff]
    %v544 = vld [vmem:[#allocation2 + $0xaf8] sm:$0xff]
    %v545 = vld [vmem:[#allocation2 + $0xb00] sm:$0xff]
    %v546 = vld [vmem:[#allocation2 + $0xb08] sm:$0xff]
    %v547 = vld [vmem:[#allocation2 + $0xb10] sm:$0xff]
    %v548 = vld [vmem:[#allocation2 + $0xb18] sm:$0xff]
    %v549 = vld [vmem:[#allocation2 + $0xb20] sm:$0xff]
    %v550 = vld [vmem:[#allocation2 + $0xb28] sm:$0xff]
    %v551 = vld [vmem:[#allocation2 + $0xb30] sm:$0xff]
    %v552 = vld [vmem:[#allocation2 + $0xb38] sm:$0xff]
    %v553 = vld [vmem:[#allocation2 + $0xb40] sm:$0xff]
    %v554 = vld [vmem:[#allocation2 + $0xb48] sm:$0xff]
    %v555 = vld [vmem:[#allocation2 + $0xb50] sm:$0xff]
    %v556 = vld [vmem:[#allocation2 + $0xb58] sm:$0xff]
    %v557 = vld [vmem:[#allocation2 + $0xb60] sm:$0xff]
    %v558 = vld [vmem:[#allocation2 + $0xb68] sm:$0xff]
    %v559 = vld [vmem:[#allocation2 + $0xb70] sm:$0xff]
    %v560 = vld [vmem:[#allocation2 + $0xb78] sm:$0xff]
    %v561 = vld [vmem:[#allocation2 + $0xb80] sm:$0xff]
    %v562 = vld [vmem:[#allocation2 + $0xb88] sm:$0xff]
    %v563 = vld [vmem:[#allocation2 + $0xb90] sm:$0xff]
    %v564 = vld [vmem:[#allocation2 + $0xb98] sm:$0xff]
    %v565 = vld [vmem:[#allocation2 + $0xba0] sm:$0xff]
    %v566 = vld [vmem:[#allocation2 + $0xba8] sm:$0xff]
    %v567 = vld [vmem:[#allocation2 + $0xbb0] sm:$0xff]
    %v568 = vld [vmem:[#allocation2 + $0xbb8] sm:$0xff]
    %v569 = vld [vmem:[#allocation2 + $0xbc0] sm:$0xff]
    %v570 = vld [vmem:[#allocation2 + $0xbc8] sm:$0xff]
    %v571 = vld [vmem:[#allocation2 + $0xbd0] sm:$0xff]
    %v572 = vld [vmem:[#allocation2 + $0xbd8] sm:$0xff]
    %v573 = vld [vmem:[#allocation2 + $0xbe0] sm:$0xff]
    %v574 = vld [vmem:[#allocation2 + $0xbe8] sm:$0xff]
    %v575 = vld [vmem:[#allocation2 + $0xbf0] sm:$0xff]
    %v576 = vld [vmem:[#allocation2 + $0xbf8] sm:$0xff]
    %v577 = vld [vmem:[#allocation2 + $0xc00] sm:$0xff]
    %v578 = vld [vmem:[#allocation2 + $0xc08] sm:$0xff]
    %v579 = vld [vmem:[#allocation2 + $0xc10] sm:$0xff]
    %v580 = vld [vmem:[#allocation2 + $0xc18] sm:$0xff]
    %v581 = vld [vmem:[#allocation2 + $0xc20] sm:$0xff]
    %v582 = vld [vmem:[#allocation2 + $0xc28] sm:$0xff]
    %v583 = vld [vmem:[#allocation2 + $0xc30] sm:$0xff]
    %v584 = vld [vmem:[#allocation2 + $0xc38] sm:$0xff]
    %v585 = vld [vmem:[#allocation2 + $0xc40] sm:$0xff]
    %v586 = vld [vmem:[#allocation2 + $0xc48] sm:$0xff]
    %v587 = vld [vmem:[#allocation2 + $0xc50] sm:$0xff]
    %v588 = vld [vmem:[#allocation2 + $0xc58] sm:$0xff]
    %v589 = vld [vmem:[#allocation2 + $0xc60] sm:$0xff]
    %v590 = vld [vmem:[#allocation2 + $0xc68] sm:$0xff]
    %v591 = vld [vmem:[#allocation2 + $0xc70] sm:$0xff]
    %v592 = vld [vmem:[#allocation2 + $0xc78] sm:$0xff]
    %v593 = vld [vmem:[#allocation2 + $0xc80] sm:$0xff]
    %v594 = vld [vmem:[#allocation2 + $0xc88] sm:$0xff]
    %v595 = vld [vmem:[#allocation2 + $0xc90] sm:$0xff]
    %v596 = vld [vmem:[#allocation2 + $0xc98] sm:$0xff]
    %v597 = vld [vmem:[#allocation2 + $0xca0] sm:$0xff]
    %v598 = vld [vmem:[#allocation2 + $0xca8] sm:$0xff]
    %v599 = vld [vmem:[#allocation2 + $0xcb0] sm:$0xff]
    %v600 = vld [vmem:[#allocation2 + $0xcb8] sm:$0xff]
    %v601 = vld [vmem:[#allocation2 + $0xcc0] sm:$0xff]
    %v602 = vld [vmem:[#allocation2 + $0xcc8] sm:$0xff]
    %v603 = vld [vmem:[#allocation2 + $0xcd0] sm:$0xff]
    %v604 = vld [vmem:[#allocation2 + $0xcd8] sm:$0xff]
    %v605 = vld [vmem:[#allocation2 + $0xce0] sm:$0xff]
    %v606 = vld [vmem:[#allocation2 + $0xce8] sm:$0xff]
    %v607 = vld [vmem:[#allocation2 + $0xcf0] sm:$0xff]
    %v608 = vld [vmem:[#allocation2 + $0xcf8] sm:$0xff]
    %v609 = vld [vmem:[#allocation2 + $0xd00] sm:$0xff]
    %v610 = vld [vmem:[#allocation2 + $0xd08] sm:$0xff]
    %v611 = vld [vmem:[#allocation2 + $0xd10] sm:$0xff]
    %v612 = vld [vmem:[#allocation2 + $0xd18] sm:$0xff]
    %v613 = vld [vmem:[#allocation2 + $0xd20] sm:$0xff]
    %v614 = vld [vmem:[#allocation2 + $0xd28] sm:$0xff]
    %v615 = vld [vmem:[#allocation2 + $0xd30] sm:$0xff]
    %v616 = vld [vmem:[#allocation2 + $0xd38] sm:$0xff]
    %v617 = vld [vmem:[#allocation2 + $0xd40] sm:$0xff]
    %v618 = vld [vmem:[#allocation2 + $0xd48] sm:$0xff]
    %v619 = vld [vmem:[#allocation2 + $0xd50] sm:$0xff]
    %v620 = vld [vmem:[#allocation2 + $0xd58] sm:$0xff]
    %v621 = vld [vmem:[#allocation2 + $0xd60] sm:$0xff]
    %v622 = vld [vmem:[#allocation2 + $0xd68] sm:$0xff]
    %v623 = vld [vmem:[#allocation2 + $0xd70] sm:$0xff]
    %v624 = vld [vmem:[#allocation2 + $0xd78] sm:$0xff]
    %v625 = vld [vmem:[#allocation2 + $0xd80] sm:$0xff]
    %v626 = vld [vmem:[#allocation2 + $0xd88] sm:$0xff]
    %v627 = vld [vmem:[#allocation2 + $0xd90] sm:$0xff]
    %v628 = vld [vmem:[#allocation2 + $0xd98] sm:$0xff]
    %v629 = vld [vmem:[#allocation2 + $0xda0] sm:$0xff]
    %v630 = vld [vmem:[#allocation2 + $0xda8] sm:$0xff]
    %v631 = vld [vmem:[#allocation2 + $0xdb0] sm:$0xff]
    %v632 = vld [vmem:[#allocation2 + $0xdb8] sm:$0xff]
    %v633 = vld [vmem:[#allocation2 + $0xdc0] sm:$0xff]
    %v634 = vld [vmem:[#allocation2 + $0xdc8] sm:$0xff]
    %v635 = vld [vmem:[#allocation2 + $0xdd0] sm:$0xff]
    %v636 = vld [vmem:[#allocation2 + $0xdd8] sm:$0xff]
    %v637 = vld [vmem:[#allocation2 + $0xde0] sm:$0xff]
    %v638 = vld [vmem:[#allocation2 + $0xde8] sm:$0xff]
    %v639 = vld [vmem:[#allocation2 + $0xdf0] sm:$0xff]
    %v640 = vld [vmem:[#allocation2 + $0xdf8] sm:$0xff]
    %v641 = vld [vmem:[#allocation2 + $0xe00] sm:$0xff]
    %v642 = vld [vmem:[#allocation2 + $0xe08] sm:$0xff]
    %v643 = vld [vmem:[#allocation2 + $0xe10] sm:$0xff]
    %v644 = vld [vmem:[#allocation2 + $0xe18] sm:$0xff]
    %v645 = vld [vmem:[#allocation2 + $0xe20] sm:$0xff]
    %v646 = vld [vmem:[#allocation2 + $0xe28] sm:$0xff]
    %v647 = vld [vmem:[#allocation2 + $0xe30] sm:$0xff]
    %v648 = vld [vmem:[#allocation2 + $0xe38] sm:$0xff]
    %v649 = vld [vmem:[#allocation2 + $0xe40] sm:$0xff]
    %v650 = vld [vmem:[#allocation2 + $0xe48] sm:$0xff]
    %v651 = vld [vmem:[#allocation2 + $0xe50] sm:$0xff]
    %v652 = vld [vmem:[#allocation2 + $0xe58] sm:$0xff]
    %v653 = vld [vmem:[#allocation2 + $0xe60] sm:$0xff]
    %v654 = vld [vmem:[#allocation2 + $0xe68] sm:$0xff]
    %v655 = vld [vmem:[#allocation2 + $0xe70] sm:$0xff]
    %v656 = vld [vmem:[#allocation2 + $0xe78] sm:$0xff]
    %v657 = vld [vmem:[#allocation2 + $0xe80] sm:$0xff]
    %v658 = vld [vmem:[#allocation2 + $0xe88] sm:$0xff]
    %v659 = vld [vmem:[#allocation2 + $0xe90] sm:$0xff]
    %v660 = vld [vmem:[#allocation2 + $0xe98] sm:$0xff]
    %v661 = vld [vmem:[#allocation2 + $0xea0] sm:$0xff]
    %v662 = vld [vmem:[#allocation2 + $0xea8] sm:$0xff]
    %v663 = vld [vmem:[#allocation2 + $0xeb0] sm:$0xff]
    %v664 = vld [vmem:[#allocation2 + $0xeb8] sm:$0xff]
    %v665 = vld [vmem:[#allocation2 + $0xec0] sm:$0xff]
    %v666 = vld [vmem:[#allocation2 + $0xec8] sm:$0xff]
    %v667 = vld [vmem:[#allocation2 + $0xed0] sm:$0xff]
    %v668 = vld [vmem:[#allocation2 + $0xed8] sm:$0xff]
    %v669 = vld [vmem:[#allocation2 + $0xee0] sm:$0xff]
    %v670 = vld [vmem:[#allocation2 + $0xee8] sm:$0xff]
    %v671 = vld [vmem:[#allocation2 + $0xef0] sm:$0xff]
    %v672 = vld [vmem:[#allocation2 + $0xef8] sm:$0xff]
    %v673 = vld [vmem:[#allocation2 + $0xf00] sm:$0xff]
    %v674 = vld [vmem:[#allocation2 + $0xf08] sm:$0xff]
    %v675 = vld [vmem:[#allocation2 + $0xf10] sm:$0xff]
    %v676 = vld [vmem:[#allocation2 + $0xf18] sm:$0xff]
    %v677 = vld [vmem:[#allocation2 + $0xf20] sm:$0xff]
    %v678 = vld [vmem:[#allocation2 + $0xf28] sm:$0xff]
    %v679 = vld [vmem:[#allocation2 + $0xf30] sm:$0xff]
    %v680 = vld [vmem:[#allocation2 + $0xf38] sm:$0xff]
    %v681 = vld [vmem:[#allocation2 + $0xf40] sm:$0xff]
    %v682 = vld [vmem:[#allocation2 + $0xf48] sm:$0xff]
    %v683 = vld [vmem:[#allocation2 + $0xf50] sm:$0xff]
    %v684 = vld [vmem:[#allocation2 + $0xf58] sm:$0xff]
    %v685 = vld [vmem:[#allocation2 + $0xf60] sm:$0xff]
    %v686 = vld [vmem:[#allocation2 + $0xf68] sm:$0xff]
    %v687 = vld [vmem:[#allocation2 + $0xf70] sm:$0xff]
    %v688 = vld [vmem:[#allocation2 + $0xf78] sm:$0xff]
    %v689 = vld [vmem:[#allocation2 + $0xf80] sm:$0xff]
    %v690 = vld [vmem:[#allocation2 + $0xf88] sm:$0xff]
    %v691 = vld [vmem:[#allocation2 + $0xf90] sm:$0xff]
    %v692 = vld [vmem:[#allocation2 + $0xf98] sm:$0xff]
    %v1193 = vunpack.c.l.b16 %v193
    %v1194 = vunpack.c.h.b16 %v193
    %v1195 = vunpack.c.l.b16 %v194
    %v1196 = vunpack.c.h.b16 %v194
    %v1197 = vunpack.c.l.b16 %v195
    %v1198 = vunpack.c.h.b16 %v195
    %v1199 = vunpack.c.l.b16 %v196
    %v1200 = vunpack.c.h.b16 %v196
    %v1201 = vunpack.c.l.b16 %v197
    %v1202 = vunpack.c.h.b16 %v197
    %v1203 = vunpack.c.l.b16 %v198
    %v1204 = vunpack.c.h.b16 %v198
    %v1205 = vunpack.c.l.b16 %v199
    %v1206 = vunpack.c.h.b16 %v199
    %v1207 = vunpack.c.l.b16 %v200
    %v1208 = vunpack.c.h.b16 %v200
    %v1209 = vunpack.c.l.b16 %v201
    %v1210 = vunpack.c.h.b16 %v201
    %v1211 = vunpack.c.l.b16 %v202
    %v1212 = vunpack.c.h.b16 %v202
    %v1213 = vunpack.c.l.b16 %v203
    %v1214 = vunpack.c.h.b16 %v203
    %v1215 = vunpack.c.l.b16 %v204
    %v1216 = vunpack.c.h.b16 %v204
    %v1217 = vunpack.c.l.b16 %v205
    %v1218 = vunpack.c.h.b16 %v205
    %v1219 = vunpack.c.l.b16 %v206
    %v1220 = vunpack.c.h.b16 %v206
    %v1221 = vunpack.c.l.b16 %v207
    %v1222 = vunpack.c.h.b16 %v207
    %v1223 = vunpack.c.l.b16 %v208
    %v1224 = vunpack.c.h.b16 %v208
    %v1225 = vunpack.c.l.b16 %v209
    %v1226 = vunpack.c.h.b16 %v209
    %v1227 = vunpack.c.l.b16 %v210
    %v1228 = vunpack.c.h.b16 %v210
    %v1229 = vunpack.c.l.b16 %v211
    %v1230 = vunpack.c.h.b16 %v211
    %v1231 = vunpack.c.l.b16 %v212
    %v1232 = vunpack.c.h.b16 %v212
    %v1233 = vunpack.c.l.b16 %v213
    %v1234 = vunpack.c.h.b16 %v213
    %v1235 = vunpack.c.l.b16 %v214
    %v1236 = vunpack.c.h.b16 %v214
    %v1237 = vunpack.c.l.b16 %v215
    %v1238 = vunpack.c.h.b16 %v215
    %v1239 = vunpack.c.l.b16 %v216
    %v1240 = vunpack.c.h.b16 %v216
    %v1241 = vunpack.c.l.b16 %v217
    %v1242 = vunpack.c.h.b16 %v217
    %v1243 = vunpack.c.l.b16 %v218
    %v1244 = vunpack.c.h.b16 %v218
    %v1245 = vunpack.c.l.b16 %v219
    %v1246 = vunpack.c.h.b16 %v219
    %v1247 = vunpack.c.l.b16 %v220
    %v1248 = vunpack.c.h.b16 %v220
    %v1249 = vunpack.c.l.b16 %v221
    %v1250 = vunpack.c.h.b16 %v221
    %v1251 = vunpack.c.l.b16 %v222
    %v1252 = vunpack.c.h.b16 %v222
    %v1253 = vunpack.c.l.b16 %v223
    %v1254 = vunpack.c.h.b16 %v223
    %v1255 = vunpack.c.l.b16 %v224
    %v1256 = vunpack.c.h.b16 %v224
    %v1257 = vunpack.c.l.b16 %v225
    %v1258 = vunpack.c.h.b16 %v225
    %v1259 = vunpack.c.l.b16 %v226
    %v1260 = vunpack.c.h.b16 %v226
    %v1261 = vunpack.c.l.b16 %v227
    %v1262 = vunpack.c.h.b16 %v227
    %v1263 = vunpack.c.l.b16 %v228
    %v1264 = vunpack.c.h.b16 %v228
    %v1265 = vunpack.c.l.b16 %v229
    %v1266 = vunpack.c.h.b16 %v229
    %v1267 = vunpack.c.l.b16 %v230
    %v1268 = vunpack.c.h.b16 %v230
    %v1269 = vunpack.c.l.b16 %v231
    %v1270 = vunpack.c.h.b16 %v231
    %v1271 = vunpack.c.l.b16 %v232
    %v1272 = vunpack.c.h.b16 %v232
    %v1273 = vunpack.c.l.b16 %v233
    %v1274 = vunpack.c.h.b16 %v233
    %v1275 = vunpack.c.l.b16 %v234
    %v1276 = vunpack.c.h.b16 %v234
    %v1277 = vunpack.c.l.b16 %v235
    %v1278 = vunpack.c.h.b16 %v235
    %v1279 = vunpack.c.l.b16 %v236
    %v1280 = vunpack.c.h.b16 %v236
    %v1281 = vunpack.c.l.b16 %v237
    %v1282 = vunpack.c.h.b16 %v237
    %v1283 = vunpack.c.l.b16 %v238
    %v1284 = vunpack.c.h.b16 %v238
    %v1285 = vunpack.c.l.b16 %v239
    %v1286 = vunpack.c.h.b16 %v239
    %v1287 = vunpack.c.l.b16 %v240
    %v1288 = vunpack.c.h.b16 %v240
    %v1289 = vunpack.c.l.b16 %v241
    %v1290 = vunpack.c.h.b16 %v241
    %v1291 = vunpack.c.l.b16 %v242
    %v1292 = vunpack.c.h.b16 %v242
    %v1293 = vunpack.c.l.b16 %v243
    %v1294 = vunpack.c.h.b16 %v243
    %v1295 = vunpack.c.l.b16 %v244
    %v1296 = vunpack.c.h.b16 %v244
    %v1297 = vunpack.c.l.b16 %v245
    %v1298 = vunpack.c.h.b16 %v245
    %v1299 = vunpack.c.l.b16 %v246
    %v1300 = vunpack.c.h.b16 %v246
    %v1301 = vunpack.c.l.b16 %v247
    %v1302 = vunpack.c.h.b16 %v247
    %v1303 = vunpack.c.l.b16 %v248
    %v1304 = vunpack.c.h.b16 %v248
    %v1305 = vunpack.c.l.b16 %v249
    %v1306 = vunpack.c.h.b16 %v249
    %v1307 = vunpack.c.l.b16 %v250
    %v1308 = vunpack.c.h.b16 %v250
    %v1309 = vunpack.c.l.b16 %v251
    %v1310 = vunpack.c.h.b16 %v251
    %v1311 = vunpack.c.l.b16 %v252
    %v1312 = vunpack.c.h.b16 %v252
    %v1313 = vunpack.c.l.b16 %v253
    %v1314 = vunpack.c.h.b16 %v253
    %v1315 = vunpack.c.l.b16 %v254
    %v1316 = vunpack.c.h.b16 %v254
    %v1317 = vunpack.c.l.b16 %v255
    %v1318 = vunpack.c.h.b16 %v255
    %v1319 = vunpack.c.l.b16 %v256
    %v1320 = vunpack.c.h.b16 %v256
    %v1321 = vunpack.c.l.b16 %v257
    %v1322 = vunpack.c.h.b16 %v257
    %v1323 = vunpack.c.l.b16 %v258
    %v1324 = vunpack.c.h.b16 %v258
    %v1325 = vunpack.c.l.b16 %v259
    %v1326 = vunpack.c.h.b16 %v259
    %v1327 = vunpack.c.l.b16 %v260
    %v1328 = vunpack.c.h.b16 %v260
    %v1329 = vunpack.c.l.b16 %v261
    %v1330 = vunpack.c.h.b16 %v261
    %v1331 = vunpack.c.l.b16 %v262
    %v1332 = vunpack.c.h.b16 %v262
    %v1333 = vunpack.c.l.b16 %v263
    %v1334 = vunpack.c.h.b16 %v263
    %v1335 = vunpack.c.l.b16 %v264
    %v1336 = vunpack.c.h.b16 %v264
    %v1337 = vunpack.c.l.b16 %v265
    %v1338 = vunpack.c.h.b16 %v265
    %v1339 = vunpack.c.l.b16 %v266
    %v1340 = vunpack.c.h.b16 %v266
    %v1341 = vunpack.c.l.b16 %v267
    %v1342 = vunpack.c.h.b16 %v267
    %v1343 = vunpack.c.l.b16 %v268
    %v1344 = vunpack.c.h.b16 %v268
    %v1345 = vunpack.c.l.b16 %v269
    %v1346 = vunpack.c.h.b16 %v269
    %v1347 = vunpack.c.l.b16 %v270
    %v1348 = vunpack.c.h.b16 %v270
    %v1349 = vunpack.c.l.b16 %v271
    %v1350 = vunpack.c.h.b16 %v271
    %v1351 = vunpack.c.l.b16 %v272
    %v1352 = vunpack.c.h.b16 %v272
    %v1353 = vunpack.c.l.b16 %v273
    %v1354 = vunpack.c.h.b16 %v273
    %v1355 = vunpack.c.l.b16 %v274
    %v1356 = vunpack.c.h.b16 %v274
    %v1357 = vunpack.c.l.b16 %v275
    %v1358 = vunpack.c.h.b16 %v275
    %v1359 = vunpack.c.l.b16 %v276
    %v1360 = vunpack.c.h.b16 %v276
    %v1361 = vunpack.c.l.b16 %v277
    %v1362 = vunpack.c.h.b16 %v277
    %v1363 = vunpack.c.l.b16 %v278
    %v1364 = vunpack.c.h.b16 %v278
    %v1365 = vunpack.c.l.b16 %v279
    %v1366 = vunpack.c.h.b16 %v279
    %v1367 = vunpack.c.l.b16 %v280
    %v1368 = vunpack.c.h.b16 %v280
    %v1369 = vunpack.c.l.b16 %v281
    %v1370 = vunpack.c.h.b16 %v281
    %v1371 = vunpack.c.l.b16 %v282
    %v1372 = vunpack.c.h.b16 %v282
    %v1373 = vunpack.c.l.b16 %v283
    %v1374 = vunpack.c.h.b16 %v283
    %v1375 = vunpack.c.l.b16 %v284
    %v1376 = vunpack.c.h.b16 %v284
    %v1377 = vunpack.c.l.b16 %v285
    %v1378 = vunpack.c.h.b16 %v285
    %v1379 = vunpack.c.l.b16 %v286
    %v1380 = vunpack.c.h.b16 %v286
    %v1381 = vunpack.c.l.b16 %v287
    %v1382 = vunpack.c.h.b16 %v287
    %v1383 = vunpack.c.l.b16 %v288
    %v1384 = vunpack.c.h.b16 %v288
    %v1385 = vunpack.c.l.b16 %v289
    %v1386 = vunpack.c.h.b16 %v289
    %v1387 = vunpack.c.l.b16 %v290
    %v1388 = vunpack.c.h.b16 %v290
    %v1389 = vunpack.c.l.b16 %v291
    %v1390 = vunpack.c.h.b16 %v291
    %v1391 = vunpack.c.l.b16 %v292
    %v1392 = vunpack.c.h.b16 %v292
    %v1393 = vunpack.c.l.b16 %v293
    %v1394 = vunpack.c.h.b16 %v293
    %v1395 = vunpack.c.l.b16 %v294
    %v1396 = vunpack.c.h.b16 %v294
    %v1397 = vunpack.c.l.b16 %v295
    %v1398 = vunpack.c.h.b16 %v295
    %v1399 = vunpack.c.l.b16 %v296
    %v1400 = vunpack.c.h.b16 %v296
    %v1401 = vunpack.c.l.b16 %v297
    %v1402 = vunpack.c.h.b16 %v297
    %v1403 = vunpack.c.l.b16 %v298
    %v1404 = vunpack.c.h.b16 %v298
    %v1405 = vunpack.c.l.b16 %v299
    %v1406 = vunpack.c.h.b16 %v299
    %v1407 = vunpack.c.l.b16 %v300
    %v1408 = vunpack.c.h.b16 %v300
    %v1409 = vunpack.c.l.b16 %v301
    %v1410 = vunpack.c.h.b16 %v301
    %v1411 = vunpack.c.l.b16 %v302
    %v1412 = vunpack.c.h.b16 %v302
    %v1413 = vunpack.c.l.b16 %v303
    %v1414 = vunpack.c.h.b16 %v303
    %v1415 = vunpack.c.l.b16 %v304
    %v1416 = vunpack.c.h.b16 %v304
    %v1417 = vunpack.c.l.b16 %v305
    %v1418 = vunpack.c.h.b16 %v305
    %v1419 = vunpack.c.l.b16 %v306
    %v1420 = vunpack.c.h.b16 %v306
    %v1421 = vunpack.c.l.b16 %v307
    %v1422 = vunpack.c.h.b16 %v307
    %v1423 = vunpack.c.l.b16 %v308
    %v1424 = vunpack.c.h.b16 %v308
    %v1425 = vunpack.c.l.b16 %v309
    %v1426 = vunpack.c.h.b16 %v309
    %v1427 = vunpack.c.l.b16 %v310
    %v1428 = vunpack.c.h.b16 %v310
    %v1429 = vunpack.c.l.b16 %v311
    %v1430 = vunpack.c.h.b16 %v311
    %v1431 = vunpack.c.l.b16 %v312
    %v1432 = vunpack.c.h.b16 %v312
    %v1433 = vunpack.c.l.b16 %v313
    %v1434 = vunpack.c.h.b16 %v313
    %v1435 = vunpack.c.l.b16 %v314
    %v1436 = vunpack.c.h.b16 %v314
    %v1437 = vunpack.c.l.b16 %v315
    %v1438 = vunpack.c.h.b16 %v315
    %v1439 = vunpack.c.l.b16 %v316
    %v1440 = vunpack.c.h.b16 %v316
    %v1441 = vunpack.c.l.b16 %v317
    %v1442 = vunpack.c.h.b16 %v317
    %v1443 = vunpack.c.l.b16 %v318
    %v1444 = vunpack.c.h.b16 %v318
    %v1445 = vunpack.c.l.b16 %v319
    %v1446 = vunpack.c.h.b16 %v319
    %v1447 = vunpack.c.l.b16 %v320
    %v1448 = vunpack.c.h.b16 %v320
    %v1449 = vunpack.c.l.b16 %v321
    %v1450 = vunpack.c.h.b16 %v321
    %v1451 = vunpack.c.l.b16 %v322
    %v1452 = vunpack.c.h.b16 %v322
    %v1453 = vunpack.c.l.b16 %v323
    %v1454 = vunpack.c.h.b16 %v323
    %v1455 = vunpack.c.l.b16 %v324
    %v1456 = vunpack.c.h.b16 %v324
    %v1457 = vunpack.c.l.b16 %v325
    %v1458 = vunpack.c.h.b16 %v325
    %v1459 = vunpack.c.l.b16 %v326
    %v1460 = vunpack.c.h.b16 %v326
    %v1461 = vunpack.c.l.b16 %v327
    %v1462 = vunpack.c.h.b16 %v327
    %v1463 = vunpack.c.l.b16 %v328
    %v1464 = vunpack.c.h.b16 %v328
    %v1465 = vunpack.c.l.b16 %v329
    %v1466 = vunpack.c.h.b16 %v329
    %v1467 = vunpack.c.l.b16 %v330
    %v1468 = vunpack.c.h.b16 %v330
    %v1469 = vunpack.c.l.b16 %v331
    %v1470 = vunpack.c.h.b16 %v331
    %v1471 = vunpack.c.l.b16 %v332
    %v1472 = vunpack.c.h.b16 %v332
    %v1473 = vunpack.c.l.b16 %v333
    %v1474 = vunpack.c.h.b16 %v333
    %v1475 = vunpack.c.l.b16 %v334
    %v1476 = vunpack.c.h.b16 %v334
    %v1477 = vunpack.c.l.b16 %v335
    %v1478 = vunpack.c.h.b16 %v335
    %v1479 = vunpack.c.l.b16 %v336
    %v1480 = vunpack.c.h.b16 %v336
    %v1481 = vunpack.c.l.b16 %v337
    %v1482 = vunpack.c.h.b16 %v337
    %v1483 = vunpack.c.l.b16 %v338
    %v1484 = vunpack.c.h.b16 %v338
    %v1485 = vunpack.c.l.b16 %v339
    %v1486 = vunpack.c.h.b16 %v339
    %v1487 = vunpack.c.l.b16 %v340
    %v1488 = vunpack.c.h.b16 %v340
    %v1489 = vunpack.c.l.b16 %v341
    %v1490 = vunpack.c.h.b16 %v341
    %v1491 = vunpack.c.l.b16 %v342
    %v1492 = vunpack.c.h.b16 %v342
    %v1493 = vunpack.c.l.b16 %v343
    %v1494 = vunpack.c.h.b16 %v343
    %v1495 = vunpack.c.l.b16 %v344
    %v1496 = vunpack.c.h.b16 %v344
    %v1497 = vunpack.c.l.b16 %v345
    %v1498 = vunpack.c.h.b16 %v345
    %v1499 = vunpack.c.l.b16 %v346
    %v1500 = vunpack.c.h.b16 %v346
    %v1501 = vunpack.c.l.b16 %v347
    %v1502 = vunpack.c.h.b16 %v347
    %v1503 = vunpack.c.l.b16 %v348
    %v1504 = vunpack.c.h.b16 %v348
    %v1505 = vunpack.c.l.b16 %v349
    %v1506 = vunpack.c.h.b16 %v349
    %v1507 = vunpack.c.l.b16 %v350
    %v1508 = vunpack.c.h.b16 %v350
    %v1509 = vunpack.c.l.b16 %v351
    %v1510 = vunpack.c.h.b16 %v351
    %v1511 = vunpack.c.l.b16 %v352
    %v1512 = vunpack.c.h.b16 %v352
    %v1513 = vunpack.c.l.b16 %v353
    %v1514 = vunpack.c.h.b16 %v353
    %v1515 = vunpack.c.l.b16 %v354
    %v1516 = vunpack.c.h.b16 %v354
    %v1517 = vunpack.c.l.b16 %v355
    %v1518 = vunpack.c.h.b16 %v355
    %v1519 = vunpack.c.l.b16 %v356
    %v1520 = vunpack.c.h.b16 %v356
    %v1521 = vunpack.c.l.b16 %v357
    %v1522 = vunpack.c.h.b16 %v357
    %v1523 = vunpack.c.l.b16 %v358
    %v1524 = vunpack.c.h.b16 %v358
    %v1525 = vunpack.c.l.b16 %v359
    %v1526 = vunpack.c.h.b16 %v359
    %v1527 = vunpack.c.l.b16 %v360
    %v1528 = vunpack.c.h.b16 %v360
    %v1529 = vunpack.c.l.b16 %v361
    %v1530 = vunpack.c.h.b16 %v361
    %v1531 = vunpack.c.l.b16 %v362
    %v1532 = vunpack.c.h.b16 %v362
    %v1533 = vunpack.c.l.b16 %v363
    %v1534 = vunpack.c.h.b16 %v363
    %v1535 = vunpack.c.l.b16 %v364
    %v1536 = vunpack.c.h.b16 %v364
    %v1537 = vunpack.c.l.b16 %v365
    %v1538 = vunpack.c.h.b16 %v365
    %v1539 = vunpack.c.l.b16 %v366
    %v1540 = vunpack.c.h.b16 %v366
    %v1541 = vunpack.c.l.b16 %v367
    %v1542 = vunpack.c.h.b16 %v367
    %v1543 = vunpack.c.l.b16 %v368
    %v1544 = vunpack.c.h.b16 %v368
    %v1545 = vunpack.c.l.b16 %v369
    %v1546 = vunpack.c.h.b16 %v369
    %v1547 = vunpack.c.l.b16 %v370
    %v1548 = vunpack.c.h.b16 %v370
    %v1549 = vunpack.c.l.b16 %v371
    %v1550 = vunpack.c.h.b16 %v371
    %v1551 = vunpack.c.l.b16 %v372
    %v1552 = vunpack.c.h.b16 %v372
    %v1553 = vunpack.c.l.b16 %v373
    %v1554 = vunpack.c.h.b16 %v373
    %v1555 = vunpack.c.l.b16 %v374
    %v1556 = vunpack.c.h.b16 %v374
    %v1557 = vunpack.c.l.b16 %v375
    %v1558 = vunpack.c.h.b16 %v375
    %v1559 = vunpack.c.l.b16 %v376
    %v1560 = vunpack.c.h.b16 %v376
    %v1561 = vunpack.c.l.b16 %v377
    %v1562 = vunpack.c.h.b16 %v377
    %v1563 = vunpack.c.l.b16 %v378
    %v1564 = vunpack.c.h.b16 %v378
    %v1565 = vunpack.c.l.b16 %v379
    %v1566 = vunpack.c.h.b16 %v379
    %v1567 = vunpack.c.l.b16 %v380
    %v1568 = vunpack.c.h.b16 %v380
    %v1569 = vunpack.c.l.b16 %v381
    %v1570 = vunpack.c.h.b16 %v381
    %v1571 = vunpack.c.l.b16 %v382
    %v1572 = vunpack.c.h.b16 %v382
    %v1573 = vunpack.c.l.b16 %v383
    %v1574 = vunpack.c.h.b16 %v383
    %v1575 = vunpack.c.l.b16 %v384
    %v1576 = vunpack.c.h.b16 %v384
    %v1577 = vunpack.c.l.b16 %v385
    %v1578 = vunpack.c.h.b16 %v385
    %v1579 = vunpack.c.l.b16 %v386
    %v1580 = vunpack.c.h.b16 %v386
    %v1581 = vunpack.c.l.b16 %v387
    %v1582 = vunpack.c.h.b16 %v387
    %v1583 = vunpack.c.l.b16 %v388
    %v1584 = vunpack.c.h.b16 %v388
    %v1585 = vunpack.c.l.b16 %v389
    %v1586 = vunpack.c.h.b16 %v389
    %v1587 = vunpack.c.l.b16 %v390
    %v1588 = vunpack.c.h.b16 %v390
    %v1589 = vunpack.c.l.b16 %v391
    %v1590 = vunpack.c.h.b16 %v391
    %v1591 = vunpack.c.l.b16 %v392
    %v1592 = vunpack.c.h.b16 %v392
    %v1593 = vunpack.c.l.b16 %v393
    %v1594 = vunpack.c.h.b16 %v393
    %v1595 = vunpack.c.l.b16 %v394
    %v1596 = vunpack.c.h.b16 %v394
    %v1597 = vunpack.c.l.b16 %v395
    %v1598 = vunpack.c.h.b16 %v395
    %v1599 = vunpack.c.l.b16 %v396
    %v1600 = vunpack.c.h.b16 %v396
    %v1601 = vunpack.c.l.b16 %v397
    %v1602 = vunpack.c.h.b16 %v397
    %v1603 = vunpack.c.l.b16 %v398
    %v1604 = vunpack.c.h.b16 %v398
    %v1605 = vunpack.c.l.b16 %v399
    %v1606 = vunpack.c.h.b16 %v399
    %v1607 = vunpack.c.l.b16 %v400
    %v1608 = vunpack.c.h.b16 %v400
    %v1609 = vunpack.c.l.b16 %v401
    %v1610 = vunpack.c.h.b16 %v401
    %v1611 = vunpack.c.l.b16 %v402
    %v1612 = vunpack.c.h.b16 %v402
    %v1613 = vunpack.c.l.b16 %v403
    %v1614 = vunpack.c.h.b16 %v403
    %v1615 = vunpack.c.l.b16 %v404
    %v1616 = vunpack.c.h.b16 %v404
    %v1617 = vunpack.c.l.b16 %v405
    %v1618 = vunpack.c.h.b16 %v405
    %v1619 = vunpack.c.l.b16 %v406
    %v1620 = vunpack.c.h.b16 %v406
    %v1621 = vunpack.c.l.b16 %v407
    %v1622 = vunpack.c.h.b16 %v407
    %v1623 = vunpack.c.l.b16 %v408
    %v1624 = vunpack.c.h.b16 %v408
    %v1625 = vunpack.c.l.b16 %v409
    %v1626 = vunpack.c.h.b16 %v409
    %v1627 = vunpack.c.l.b16 %v410
    %v1628 = vunpack.c.h.b16 %v410
    %v1629 = vunpack.c.l.b16 %v411
    %v1630 = vunpack.c.h.b16 %v411
    %v1631 = vunpack.c.l.b16 %v412
    %v1632 = vunpack.c.h.b16 %v412
    %v1633 = vunpack.c.l.b16 %v413
    %v1634 = vunpack.c.h.b16 %v413
    %v1635 = vunpack.c.l.b16 %v414
    %v1636 = vunpack.c.h.b16 %v414
    %v1637 = vunpack.c.l.b16 %v415
    %v1638 = vunpack.c.h.b16 %v415
    %v1639 = vunpack.c.l.b16 %v416
    %v1640 = vunpack.c.h.b16 %v416
    %v1641 = vunpack.c.l.b16 %v417
    %v1642 = vunpack.c.h.b16 %v417
    %v1643 = vunpack.c.l.b16 %v418
    %v1644 = vunpack.c.h.b16 %v418
    %v1645 = vunpack.c.l.b16 %v419
    %v1646 = vunpack.c.h.b16 %v419
    %v1647 = vunpack.c.l.b16 %v420
    %v1648 = vunpack.c.h.b16 %v420
    %v1649 = vunpack.c.l.b16 %v421
    %v1650 = vunpack.c.h.b16 %v421
    %v1651 = vunpack.c.l.b16 %v422
    %v1652 = vunpack.c.h.b16 %v422
    %v1653 = vunpack.c.l.b16 %v423
    %v1654 = vunpack.c.h.b16 %v423
    %v1655 = vunpack.c.l.b16 %v424
    %v1656 = vunpack.c.h.b16 %v424
    %v1657 = vunpack.c.l.b16 %v425
    %v1658 = vunpack.c.h.b16 %v425
    %v1659 = vunpack.c.l.b16 %v426
    %v1660 = vunpack.c.h.b16 %v426
    %v1661 = vunpack.c.l.b16 %v427
    %v1662 = vunpack.c.h.b16 %v427
    %v1663 = vunpack.c.l.b16 %v428
    %v1664 = vunpack.c.h.b16 %v428
    %v1665 = vunpack.c.l.b16 %v429
    %v1666 = vunpack.c.h.b16 %v429
    %v1667 = vunpack.c.l.b16 %v430
    %v1668 = vunpack.c.h.b16 %v430
    %v1669 = vunpack.c.l.b16 %v431
    %v1670 = vunpack.c.h.b16 %v431
    %v1671 = vunpack.c.l.b16 %v432
    %v1672 = vunpack.c.h.b16 %v432
    %v1673 = vunpack.c.l.b16 %v433
    %v1674 = vunpack.c.h.b16 %v433
    %v1675 = vunpack.c.l.b16 %v434
    %v1676 = vunpack.c.h.b16 %v434
    %v1677 = vunpack.c.l.b16 %v435
    %v1678 = vunpack.c.h.b16 %v435
    %v1679 = vunpack.c.l.b16 %v436
    %v1680 = vunpack.c.h.b16 %v436
    %v1681 = vunpack.c.l.b16 %v437
    %v1682 = vunpack.c.h.b16 %v437
    %v1683 = vunpack.c.l.b16 %v438
    %v1684 = vunpack.c.h.b16 %v438
    %v1685 = vunpack.c.l.b16 %v439
    %v1686 = vunpack.c.h.b16 %v439
    %v1687 = vunpack.c.l.b16 %v440
    %v1688 = vunpack.c.h.b16 %v440
    %v1689 = vunpack.c.l.b16 %v441
    %v1690 = vunpack.c.h.b16 %v441
    %v1691 = vunpack.c.l.b16 %v442
    %v1692 = vunpack.c.h.b16 %v442
    %v1693 = vunpack.c.l.b16 %v443
    %v1694 = vunpack.c.h.b16 %v443
    %v1695 = vunpack.c.l.b16 %v444
    %v1696 = vunpack.c.h.b16 %v444
    %v1697 = vunpack.c.l.b16 %v445
    %v1698 = vunpack.c.h.b16 %v445
    %v1699 = vunpack.c.l.b16 %v446
    %v1700 = vunpack.c.h.b16 %v446
    %v1701 = vunpack.c.l.b16 %v447
    %v1702 = vunpack.c.h.b16 %v447
    %v1703 = vunpack.c.l.b16 %v448
    %v1704 = vunpack.c.h.b16 %v448
    %v1705 = vunpack.c.l.b16 %v449
    %v1706 = vunpack.c.h.b16 %v449
    %v1707 = vunpack.c.l.b16 %v450
    %v1708 = vunpack.c.h.b16 %v450
    %v1709 = vunpack.c.l.b16 %v451
    %v1710 = vunpack.c.h.b16 %v451
    %v1711 = vunpack.c.l.b16 %v452
    %v1712 = vunpack.c.h.b16 %v452
    %v1713 = vunpack.c.l.b16 %v453
    %v1714 = vunpack.c.h.b16 %v453
    %v1715 = vunpack.c.l.b16 %v454
    %v1716 = vunpack.c.h.b16 %v454
    %v1717 = vunpack.c.l.b16 %v455
    %v1718 = vunpack.c.h.b16 %v455
    %v1719 = vunpack.c.l.b16 %v456
    %v1720 = vunpack.c.h.b16 %v456
    %v1721 = vunpack.c.l.b16 %v457
    %v1722 = vunpack.c.h.b16 %v457
    %v1723 = vunpack.c.l.b16 %v458
    %v1724 = vunpack.c.h.b16 %v458
    %v1725 = vunpack.c.l.b16 %v459
    %v1726 = vunpack.c.h.b16 %v459
    %v1727 = vunpack.c.l.b16 %v460
    %v1728 = vunpack.c.h.b16 %v460
    %v1729 = vunpack.c.l.b16 %v461
    %v1730 = vunpack.c.h.b16 %v461
    %v1731 = vunpack.c.l.b16 %v462
    %v1732 = vunpack.c.h.b16 %v462
    %v1733 = vunpack.c.l.b16 %v463
    %v1734 = vunpack.c.h.b16 %v463
    %v1735 = vunpack.c.l.b16 %v464
    %v1736 = vunpack.c.h.b16 %v464
    %v1737 = vunpack.c.l.b16 %v465
    %v1738 = vunpack.c.h.b16 %v465
    %v1739 = vunpack.c.l.b16 %v466
    %v1740 = vunpack.c.h.b16 %v466
    %v1741 = vunpack.c.l.b16 %v467
    %v1742 = vunpack.c.h.b16 %v467
    %v1743 = vunpack.c.l.b16 %v468
    %v1744 = vunpack.c.h.b16 %v468
    %v1745 = vunpack.c.l.b16 %v469
    %v1746 = vunpack.c.h.b16 %v469
    %v1747 = vunpack.c.l.b16 %v470
    %v1748 = vunpack.c.h.b16 %v470
    %v1749 = vunpack.c.l.b16 %v471
    %v1750 = vunpack.c.h.b16 %v471
    %v1751 = vunpack.c.l.b16 %v472
    %v1752 = vunpack.c.h.b16 %v472
    %v1753 = vunpack.c.l.b16 %v473
    %v1754 = vunpack.c.h.b16 %v473
    %v1755 = vunpack.c.l.b16 %v474
    %v1756 = vunpack.c.h.b16 %v474
    %v1757 = vunpack.c.l.b16 %v475
    %v1758 = vunpack.c.h.b16 %v475
    %v1759 = vunpack.c.l.b16 %v476
    %v1760 = vunpack.c.h.b16 %v476
    %v1761 = vunpack.c.l.b16 %v477
    %v1762 = vunpack.c.h.b16 %v477
    %v1763 = vunpack.c.l.b16 %v478
    %v1764 = vunpack.c.h.b16 %v478
    %v1765 = vunpack.c.l.b16 %v479
    %v1766 = vunpack.c.h.b16 %v479
    %v1767 = vunpack.c.l.b16 %v480
    %v1768 = vunpack.c.h.b16 %v480
    %v1769 = vunpack.c.l.b16 %v481
    %v1770 = vunpack.c.h.b16 %v481
    %v1771 = vunpack.c.l.b16 %v482
    %v1772 = vunpack.c.h.b16 %v482
    %v1773 = vunpack.c.l.b16 %v483
    %v1774 = vunpack.c.h.b16 %v483
    %v1775 = vunpack.c.l.b16 %v484
    %v1776 = vunpack.c.h.b16 %v484
    %v1777 = vunpack.c.l.b16 %v485
    %v1778 = vunpack.c.h.b16 %v485
    %v1779 = vunpack.c.l.b16 %v486
    %v1780 = vunpack.c.h.b16 %v486
    %v1781 = vunpack.c.l.b16 %v487
    %v1782 = vunpack.c.h.b16 %v487
    %v1783 = vunpack.c.l.b16 %v488
    %v1784 = vunpack.c.h.b16 %v488
    %v1785 = vunpack.c.l.b16 %v489
    %v1786 = vunpack.c.h.b16 %v489
    %v1787 = vunpack.c.l.b16 %v490
    %v1788 = vunpack.c.h.b16 %v490
    %v1789 = vunpack.c.l.b16 %v491
    %v1790 = vunpack.c.h.b16 %v491
    %v1791 = vunpack.c.l.b16 %v492
    %v1792 = vunpack.c.h.b16 %v492
    %v1793 = vunpack.c.l.b16 %v493
    %v1794 = vunpack.c.h.b16 %v493
    %v1795 = vunpack.c.l.b16 %v494
    %v1796 = vunpack.c.h.b16 %v494
    %v1797 = vunpack.c.l.b16 %v495
    %v1798 = vunpack.c.h.b16 %v495
    %v1799 = vunpack.c.l.b16 %v496
    %v1800 = vunpack.c.h.b16 %v496
    %v1801 = vunpack.c.l.b16 %v497
    %v1802 = vunpack.c.h.b16 %v497
    %v1803 = vunpack.c.l.b16 %v498
    %v1804 = vunpack.c.h.b16 %v498
    %v1805 = vunpack.c.l.b16 %v499
    %v1806 = vunpack.c.h.b16 %v499
    %v1807 = vunpack.c.l.b16 %v500
    %v1808 = vunpack.c.h.b16 %v500
    %v1809 = vunpack.c.l.b16 %v501
    %v1810 = vunpack.c.h.b16 %v501
    %v1811 = vunpack.c.l.b16 %v502
    %v1812 = vunpack.c.h.b16 %v502
    %v1813 = vunpack.c.l.b16 %v503
    %v1814 = vunpack.c.h.b16 %v503
    %v1815 = vunpack.c.l.b16 %v504
    %v1816 = vunpack.c.h.b16 %v504
    %v1817 = vunpack.c.l.b16 %v505
    %v1818 = vunpack.c.h.b16 %v505
    %v1819 = vunpack.c.l.b16 %v506
    %v1820 = vunpack.c.h.b16 %v506
    %v1821 = vunpack.c.l.b16 %v507
    %v1822 = vunpack.c.h.b16 %v507
    %v1823 = vunpack.c.l.b16 %v508
    %v1824 = vunpack.c.h.b16 %v508
    %v1825 = vunpack.c.l.b16 %v509
    %v1826 = vunpack.c.h.b16 %v509
    %v1827 = vunpack.c.l.b16 %v510
    %v1828 = vunpack.c.h.b16 %v510
    %v1829 = vunpack.c.l.b16 %v511
    %v1830 = vunpack.c.h.b16 %v511
    %v1831 = vunpack.c.l.b16 %v512
    %v1832 = vunpack.c.h.b16 %v512
    %v1833 = vunpack.c.l.b16 %v513
    %v1834 = vunpack.c.h.b16 %v513
    %v1835 = vunpack.c.l.b16 %v514
    %v1836 = vunpack.c.h.b16 %v514
    %v1837 = vunpack.c.l.b16 %v515
    %v1838 = vunpack.c.h.b16 %v515
    %v1839 = vunpack.c.l.b16 %v516
    %v1840 = vunpack.c.h.b16 %v516
    %v1841 = vunpack.c.l.b16 %v517
    %v1842 = vunpack.c.h.b16 %v517
    %v1843 = vunpack.c.l.b16 %v518
    %v1844 = vunpack.c.h.b16 %v518
    %v1845 = vunpack.c.l.b16 %v519
    %v1846 = vunpack.c.h.b16 %v519
    %v1847 = vunpack.c.l.b16 %v520
    %v1848 = vunpack.c.h.b16 %v520
    %v1849 = vunpack.c.l.b16 %v521
    %v1850 = vunpack.c.h.b16 %v521
    %v1851 = vunpack.c.l.b16 %v522
    %v1852 = vunpack.c.h.b16 %v522
    %v1853 = vunpack.c.l.b16 %v523
    %v1854 = vunpack.c.h.b16 %v523
    %v1855 = vunpack.c.l.b16 %v524
    %v1856 = vunpack.c.h.b16 %v524
    %v1857 = vunpack.c.l.b16 %v525
    %v1858 = vunpack.c.h.b16 %v525
    %v1859 = vunpack.c.l.b16 %v526
    %v1860 = vunpack.c.h.b16 %v526
    %v1861 = vunpack.c.l.b16 %v527
    %v1862 = vunpack.c.h.b16 %v527
    %v1863 = vunpack.c.l.b16 %v528
    %v1864 = vunpack.c.h.b16 %v528
    %v1865 = vunpack.c.l.b16 %v529
    %v1866 = vunpack.c.h.b16 %v529
    %v1867 = vunpack.c.l.b16 %v530
    %v1868 = vunpack.c.h.b16 %v530
    %v1869 = vunpack.c.l.b16 %v531
    %v1870 = vunpack.c.h.b16 %v531
    %v1871 = vunpack.c.l.b16 %v532
    %v1872 = vunpack.c.h.b16 %v532
    %v1873 = vunpack.c.l.b16 %v533
    %v1874 = vunpack.c.h.b16 %v533
    %v1875 = vunpack.c.l.b16 %v534
    %v1876 = vunpack.c.h.b16 %v534
    %v1877 = vunpack.c.l.b16 %v535
    %v1878 = vunpack.c.h.b16 %v535
    %v1879 = vunpack.c.l.b16 %v536
    %v1880 = vunpack.c.h.b16 %v536
    %v1881 = vunpack.c.l.b16 %v537
    %v1882 = vunpack.c.h.b16 %v537
    %v1883 = vunpack.c.l.b16 %v538
    %v1884 = vunpack.c.h.b16 %v538
    %v1885 = vunpack.c.l.b16 %v539
    %v1886 = vunpack.c.h.b16 %v539
    %v1887 = vunpack.c.l.b16 %v540
    %v1888 = vunpack.c.h.b16 %v540
    %v1889 = vunpack.c.l.b16 %v541
    %v1890 = vunpack.c.h.b16 %v541
    %v1891 = vunpack.c.l.b16 %v542
    %v1892 = vunpack.c.h.b16 %v542
    %v1893 = vunpack.c.l.b16 %v543
    %v1894 = vunpack.c.h.b16 %v543
    %v1895 = vunpack.c.l.b16 %v544
    %v1896 = vunpack.c.h.b16 %v544
    %v1897 = vunpack.c.l.b16 %v545
    %v1898 = vunpack.c.h.b16 %v545
    %v1899 = vunpack.c.l.b16 %v546
    %v1900 = vunpack.c.h.b16 %v546
    %v1901 = vunpack.c.l.b16 %v547
    %v1902 = vunpack.c.h.b16 %v547
    %v1903 = vunpack.c.l.b16 %v548
    %v1904 = vunpack.c.h.b16 %v548
    %v1905 = vunpack.c.l.b16 %v549
    %v1906 = vunpack.c.h.b16 %v549
    %v1907 = vunpack.c.l.b16 %v550
    %v1908 = vunpack.c.h.b16 %v550
    %v1909 = vunpack.c.l.b16 %v551
    %v1910 = vunpack.c.h.b16 %v551
    %v1911 = vunpack.c.l.b16 %v552
    %v1912 = vunpack.c.h.b16 %v552
    %v1913 = vunpack.c.l.b16 %v553
    %v1914 = vunpack.c.h.b16 %v553
    %v1915 = vunpack.c.l.b16 %v554
    %v1916 = vunpack.c.h.b16 %v554
    %v1917 = vunpack.c.l.b16 %v555
    %v1918 = vunpack.c.h.b16 %v555
    %v1919 = vunpack.c.l.b16 %v556
    %v1920 = vunpack.c.h.b16 %v556
    %v1921 = vunpack.c.l.b16 %v557
    %v1922 = vunpack.c.h.b16 %v557
    %v1923 = vunpack.c.l.b16 %v558
    %v1924 = vunpack.c.h.b16 %v558
    %v1925 = vunpack.c.l.b16 %v559
    %v1926 = vunpack.c.h.b16 %v559
    %v1927 = vunpack.c.l.b16 %v560
    %v1928 = vunpack.c.h.b16 %v560
    %v1929 = vunpack.c.l.b16 %v561
    %v1930 = vunpack.c.h.b16 %v561
    %v1931 = vunpack.c.l.b16 %v562
    %v1932 = vunpack.c.h.b16 %v562
    %v1933 = vunpack.c.l.b16 %v563
    %v1934 = vunpack.c.h.b16 %v563
    %v1935 = vunpack.c.l.b16 %v564
    %v1936 = vunpack.c.h.b16 %v564
    %v1937 = vunpack.c.l.b16 %v565
    %v1938 = vunpack.c.h.b16 %v565
    %v1939 = vunpack.c.l.b16 %v566
    %v1940 = vunpack.c.h.b16 %v566
    %v1941 = vunpack.c.l.b16 %v567
    %v1942 = vunpack.c.h.b16 %v567
    %v1943 = vunpack.c.l.b16 %v568
    %v1944 = vunpack.c.h.b16 %v568
    %v1945 = vunpack.c.l.b16 %v569
    %v1946 = vunpack.c.h.b16 %v569
    %v1947 = vunpack.c.l.b16 %v570
    %v1948 = vunpack.c.h.b16 %v570
    %v1949 = vunpack.c.l.b16 %v571
    %v1950 = vunpack.c.h.b16 %v571
    %v1951 = vunpack.c.l.b16 %v572
    %v1952 = vunpack.c.h.b16 %v572
    %v1953 = vunpack.c.l.b16 %v573
    %v1954 = vunpack.c.h.b16 %v573
    %v1955 = vunpack.c.l.b16 %v574
    %v1956 = vunpack.c.h.b16 %v574
    %v1957 = vunpack.c.l.b16 %v575
    %v1958 = vunpack.c.h.b16 %v575
    %v1959 = vunpack.c.l.b16 %v576
    %v1960 = vunpack.c.h.b16 %v576
    %v1961 = vunpack.c.l.b16 %v577
    %v1962 = vunpack.c.h.b16 %v577
    %v1963 = vunpack.c.l.b16 %v578
    %v1964 = vunpack.c.h.b16 %v578
    %v1965 = vunpack.c.l.b16 %v579
    %v1966 = vunpack.c.h.b16 %v579
    %v1967 = vunpack.c.l.b16 %v580
    %v1968 = vunpack.c.h.b16 %v580
    %v1969 = vunpack.c.l.b16 %v581
    %v1970 = vunpack.c.h.b16 %v581
    %v1971 = vunpack.c.l.b16 %v582
    %v1972 = vunpack.c.h.b16 %v582
    %v1973 = vunpack.c.l.b16 %v583
    %v1974 = vunpack.c.h.b16 %v583
    %v1975 = vunpack.c.l.b16 %v584
    %v1976 = vunpack.c.h.b16 %v584
    %v1977 = vunpack.c.l.b16 %v585
    %v1978 = vunpack.c.h.b16 %v585
    %v1979 = vunpack.c.l.b16 %v586
    %v1980 = vunpack.c.h.b16 %v586
    %v1981 = vunpack.c.l.b16 %v587
    %v1982 = vunpack.c.h.b16 %v587
    %v1983 = vunpack.c.l.b16 %v588
    %v1984 = vunpack.c.h.b16 %v588
    %v1985 = vunpack.c.l.b16 %v589
    %v1986 = vunpack.c.h.b16 %v589
    %v1987 = vunpack.c.l.b16 %v590
    %v1988 = vunpack.c.h.b16 %v590
    %v1989 = vunpack.c.l.b16 %v591
    %v1990 = vunpack.c.h.b16 %v591
    %v1991 = vunpack.c.l.b16 %v592
    %v1992 = vunpack.c.h.b16 %v592
    %v1993 = vunpack.c.l.b16 %v593
    %v1994 = vunpack.c.h.b16 %v593
    %v1995 = vunpack.c.l.b16 %v594
    %v1996 = vunpack.c.h.b16 %v594
    %v1997 = vunpack.c.l.b16 %v595
    %v1998 = vunpack.c.h.b16 %v595
    %v1999 = vunpack.c.l.b16 %v596
    %v2000 = vunpack.c.h.b16 %v596
    %v2001 = vunpack.c.l.b16 %v597
    %v2002 = vunpack.c.h.b16 %v597
    %v2003 = vunpack.c.l.b16 %v598
    %v2004 = vunpack.c.h.b16 %v598
    %v2005 = vunpack.c.l.b16 %v599
    %v2006 = vunpack.c.h.b16 %v599
    %v2007 = vunpack.c.l.b16 %v600
    %v2008 = vunpack.c.h.b16 %v600
    %v2009 = vunpack.c.l.b16 %v601
    %v2010 = vunpack.c.h.b16 %v601
    %v2011 = vunpack.c.l.b16 %v602
    %v2012 = vunpack.c.h.b16 %v602
    %v2013 = vunpack.c.l.b16 %v603
    %v2014 = vunpack.c.h.b16 %v603
    %v2015 = vunpack.c.l.b16 %v604
    %v2016 = vunpack.c.h.b16 %v604
    %v2017 = vunpack.c.l.b16 %v605
    %v2018 = vunpack.c.h.b16 %v605
    %v2019 = vunpack.c.l.b16 %v606
    %v2020 = vunpack.c.h.b16 %v606
    %v2021 = vunpack.c.l.b16 %v607
    %v2022 = vunpack.c.h.b16 %v607
    %v2023 = vunpack.c.l.b16 %v608
    %v2024 = vunpack.c.h.b16 %v608
    %v2025 = vunpack.c.l.b16 %v609
    %v2026 = vunpack.c.h.b16 %v609
    %v2027 = vunpack.c.l.b16 %v610
    %v2028 = vunpack.c.h.b16 %v610
    %v2029 = vunpack.c.l.b16 %v611
    %v2030 = vunpack.c.h.b16 %v611
    %v2031 = vunpack.c.l.b16 %v612
    %v2032 = vunpack.c.h.b16 %v612
    %v2033 = vunpack.c.l.b16 %v613
    %v2034 = vunpack.c.h.b16 %v613
    %v2035 = vunpack.c.l.b16 %v614
    %v2036 = vunpack.c.h.b16 %v614
    %v2037 = vunpack.c.l.b16 %v615
    %v2038 = vunpack.c.h.b16 %v615
    %v2039 = vunpack.c.l.b16 %v616
    %v2040 = vunpack.c.h.b16 %v616
    %v2041 = vunpack.c.l.b16 %v617
    %v2042 = vunpack.c.h.b16 %v617
    %v2043 = vunpack.c.l.b16 %v618
    %v2044 = vunpack.c.h.b16 %v618
    %v2045 = vunpack.c.l.b16 %v619
    %v2046 = vunpack.c.h.b16 %v619
    %v2047 = vunpack.c.l.b16 %v620
    %v2048 = vunpack.c.h.b16 %v620
    %v2049 = vunpack.c.l.b16 %v621
    %v2050 = vunpack.c.h.b16 %v621
    %v2051 = vunpack.c.l.b16 %v622
    %v2052 = vunpack.c.h.b16 %v622
    %v2053 = vunpack.c.l.b16 %v623
    %v2054 = vunpack.c.h.b16 %v623
    %v2055 = vunpack.c.l.b16 %v624
    %v2056 = vunpack.c.h.b16 %v624
    %v2057 = vunpack.c.l.b16 %v625
    %v2058 = vunpack.c.h.b16 %v625
    %v2059 = vunpack.c.l.b16 %v626
    %v2060 = vunpack.c.h.b16 %v626
    %v2061 = vunpack.c.l.b16 %v627
    %v2062 = vunpack.c.h.b16 %v627
    %v2063 = vunpack.c.l.b16 %v628
    %v2064 = vunpack.c.h.b16 %v628
    %v2065 = vunpack.c.l.b16 %v629
    %v2066 = vunpack.c.h.b16 %v629
    %v2067 = vunpack.c.l.b16 %v630
    %v2068 = vunpack.c.h.b16 %v630
    %v2069 = vunpack.c.l.b16 %v631
    %v2070 = vunpack.c.h.b16 %v631
    %v2071 = vunpack.c.l.b16 %v632
    %v2072 = vunpack.c.h.b16 %v632
    %v2073 = vunpack.c.l.b16 %v633
    %v2074 = vunpack.c.h.b16 %v633
    %v2075 = vunpack.c.l.b16 %v634
    %v2076 = vunpack.c.h.b16 %v634
    %v2077 = vunpack.c.l.b16 %v635
    %v2078 = vunpack.c.h.b16 %v635
    %v2079 = vunpack.c.l.b16 %v636
    %v2080 = vunpack.c.h.b16 %v636
    %v2081 = vunpack.c.l.b16 %v637
    %v2082 = vunpack.c.h.b16 %v637
    %v2083 = vunpack.c.l.b16 %v638
    %v2084 = vunpack.c.h.b16 %v638
    %v2085 = vunpack.c.l.b16 %v639
    %v2086 = vunpack.c.h.b16 %v639
    %v2087 = vunpack.c.l.b16 %v640
    %v2088 = vunpack.c.h.b16 %v640
    %v2089 = vunpack.c.l.b16 %v641
    %v2090 = vunpack.c.h.b16 %v641
    %v2091 = vunpack.c.l.b16 %v642
    %v2092 = vunpack.c.h.b16 %v642
    %v2093 = vunpack.c.l.b16 %v643
    %v2094 = vunpack.c.h.b16 %v643
    %v2095 = vunpack.c.l.b16 %v644
    %v2096 = vunpack.c.h.b16 %v644
    %v2097 = vunpack.c.l.b16 %v645
    %v2098 = vunpack.c.h.b16 %v645
    %v2099 = vunpack.c.l.b16 %v646
    %v2100 = vunpack.c.h.b16 %v646
    %v2101 = vunpack.c.l.b16 %v647
    %v2102 = vunpack.c.h.b16 %v647
    %v2103 = vunpack.c.l.b16 %v648
    %v2104 = vunpack.c.h.b16 %v648
    %v2105 = vunpack.c.l.b16 %v649
    %v2106 = vunpack.c.h.b16 %v649
    %v2107 = vunpack.c.l.b16 %v650
    %v2108 = vunpack.c.h.b16 %v650
    %v2109 = vunpack.c.l.b16 %v651
    %v2110 = vunpack.c.h.b16 %v651
    %v2111 = vunpack.c.l.b16 %v652
    %v2112 = vunpack.c.h.b16 %v652
    %v2113 = vunpack.c.l.b16 %v653
    %v2114 = vunpack.c.h.b16 %v653
    %v2115 = vunpack.c.l.b16 %v654
    %v2116 = vunpack.c.h.b16 %v654
    %v2117 = vunpack.c.l.b16 %v655
    %v2118 = vunpack.c.h.b16 %v655
    %v2119 = vunpack.c.l.b16 %v656
    %v2120 = vunpack.c.h.b16 %v656
    %v2121 = vunpack.c.l.b16 %v657
    %v2122 = vunpack.c.h.b16 %v657
    %v2123 = vunpack.c.l.b16 %v658
    %v2124 = vunpack.c.h.b16 %v658
    %v2125 = vunpack.c.l.b16 %v659
    %v2126 = vunpack.c.h.b16 %v659
    %v2127 = vunpack.c.l.b16 %v660
    %v2128 = vunpack.c.h.b16 %v660
    %v2129 = vunpack.c.l.b16 %v661
    %v2130 = vunpack.c.h.b16 %v661
    %v2131 = vunpack.c.l.b16 %v662
    %v2132 = vunpack.c.h.b16 %v662
    %v2133 = vunpack.c.l.b16 %v663
    %v2134 = vunpack.c.h.b16 %v663
    %v2135 = vunpack.c.l.b16 %v664
    %v2136 = vunpack.c.h.b16 %v664
    %v2137 = vunpack.c.l.b16 %v665
    %v2138 = vunpack.c.h.b16 %v665
    %v2139 = vunpack.c.l.b16 %v666
    %v2140 = vunpack.c.h.b16 %v666
    %v2141 = vunpack.c.l.b16 %v667
    %v2142 = vunpack.c.h.b16 %v667
    %v2143 = vunpack.c.l.b16 %v668
    %v2144 = vunpack.c.h.b16 %v668
    %v2145 = vunpack.c.l.b16 %v669
    %v2146 = vunpack.c.h.b16 %v669
    %v2147 = vunpack.c.l.b16 %v670
    %v2148 = vunpack.c.h.b16 %v670
    %v2149 = vunpack.c.l.b16 %v671
    %v2150 = vunpack.c.h.b16 %v671
    %v2151 = vunpack.c.l.b16 %v672
    %v2152 = vunpack.c.h.b16 %v672
    %v2153 = vunpack.c.l.b16 %v673
    %v2154 = vunpack.c.h.b16 %v673
    %v2155 = vunpack.c.l.b16 %v674
    %v2156 = vunpack.c.h.b16 %v674
    %v2157 = vunpack.c.l.b16 %v675
    %v2158 = vunpack.c.h.b16 %v675
    %v2159 = vunpack.c.l.b16 %v676
    %v2160 = vunpack.c.h.b16 %v676
    %v2161 = vunpack.c.l.b16 %v677
    %v2162 = vunpack.c.h.b16 %v677
    %v2163 = vunpack.c.l.b16 %v678
    %v2164 = vunpack.c.h.b16 %v678
    %v2165 = vunpack.c.l.b16 %v679
    %v2166 = vunpack.c.h.b16 %v679
    %v2167 = vunpack.c.l.b16 %v680
    %v2168 = vunpack.c.h.b16 %v680
    %v2169 = vunpack.c.l.b16 %v681
    %v2170 = vunpack.c.h.b16 %v681
    %v2171 = vunpack.c.l.b16 %v682
    %v2172 = vunpack.c.h.b16 %v682
    %v2173 = vunpack.c.l.b16 %v683
    %v2174 = vunpack.c.h.b16 %v683
    %v2175 = vunpack.c.l.b16 %v684
    %v2176 = vunpack.c.h.b16 %v684
    %v2177 = vunpack.c.l.b16 %v685
    %v2178 = vunpack.c.h.b16 %v685
    %v2179 = vunpack.c.l.b16 %v686
    %v2180 = vunpack.c.h.b16 %v686
    %v2181 = vunpack.c.l.b16 %v687
    %v2182 = vunpack.c.h.b16 %v687
    %v2183 = vunpack.c.l.b16 %v688
    %v2184 = vunpack.c.h.b16 %v688
    %v2185 = vunpack.c.l.b16 %v689
    %v2186 = vunpack.c.h.b16 %v689
    %v2187 = vunpack.c.l.b16 %v690
    %v2188 = vunpack.c.h.b16 %v690
    %v2189 = vunpack.c.l.b16 %v691
    %v2190 = vunpack.c.h.b16 %v691
    %v2191 = vunpack.c.l.b16 %v692
    %v2192 = vunpack.c.h.b16 %v692
    %v2193 = vpack.c.b16 %v1213, %v1193
    %v2194 = vpack.c.b16 %v1214, %v1194
    %v2195 = vpack.c.b16 %v1215, %v1195
    %v2196 = vpack.c.b16 %v1216, %v1196
    %v2197 = vpack.c.b16 %v1217, %v1197
    %v2198 = vpack.c.b16 %v1218, %v1198
    %v2199 = vpack.c.b16 %v1219, %v1199
    %v2200 = vpack.c.b16 %v1220, %v1200
    %v2201 = vpack.c.b16 %v1221, %v1201
    %v2202 = vpack.c.b16 %v1222, %v1202
    %v2203 = vpack.c.b16 %v1223, %v1203
    %v2204 = vpack.c.b16 %v1224, %v1204
    %v2205 = vpack.c.b16 %v1225, %v1205
    %v2206 = vpack.c.b16 %v1226, %v1206
    %v2207 = vpack.c.b16 %v1227, %v1207
    %v2208 = vpack.c.b16 %v1228, %v1208
    %v2209 = vpack.c.b16 %v1229, %v1209
    %v2210 = vpack.c.b16 %v1230, %v1210
    %v2211 = vpack.c.b16 %v1231, %v1211
    %v2212 = vpack.c.b16 %v1232, %v1212
    %v2213 = vpack.c.b16 %v1253, %v1233
    %v2214 = vpack.c.b16 %v1254, %v1234
    %v2215 = vpack.c.b16 %v1255, %v1235
    %v2216 = vpack.c.b16 %v1256, %v1236
    %v2217 = vpack.c.b16 %v1257, %v1237
    %v2218 = vpack.c.b16 %v1258, %v1238
    %v2219 = vpack.c.b16 %v1259, %v1239
    %v2220 = vpack.c.b16 %v1260, %v1240
    %v2221 = vpack.c.b16 %v1261, %v1241
    %v2222 = vpack.c.b16 %v1262, %v1242
    %v2223 = vpack.c.b16 %v1263, %v1243
    %v2224 = vpack.c.b16 %v1264, %v1244
    %v2225 = vpack.c.b16 %v1265, %v1245
    %v2226 = vpack.c.b16 %v1266, %v1246
    %v2227 = vpack.c.b16 %v1267, %v1247
    %v2228 = vpack.c.b16 %v1268, %v1248
    %v2229 = vpack.c.b16 %v1269, %v1249
    %v2230 = vpack.c.b16 %v1270, %v1250
    %v2231 = vpack.c.b16 %v1271, %v1251
    %v2232 = vpack.c.b16 %v1272, %v1252
    %v2233 = vpack.c.b16 %v1293, %v1273
    %v2234 = vpack.c.b16 %v1294, %v1274
    %v2235 = vpack.c.b16 %v1295, %v1275
    %v2236 = vpack.c.b16 %v1296, %v1276
    %v2237 = vpack.c.b16 %v1297, %v1277
    %v2238 = vpack.c.b16 %v1298, %v1278
    %v2239 = vpack.c.b16 %v1299, %v1279
    %v2240 = vpack.c.b16 %v1300, %v1280
    %v2241 = vpack.c.b16 %v1301, %v1281
    %v2242 = vpack.c.b16 %v1302, %v1282
    %v2243 = vpack.c.b16 %v1303, %v1283
    %v2244 = vpack.c.b16 %v1304, %v1284
    %v2245 = vpack.c.b16 %v1305, %v1285
    %v2246 = vpack.c.b16 %v1306, %v1286
    %v2247 = vpack.c.b16 %v1307, %v1287
    %v2248 = vpack.c.b16 %v1308, %v1288
    %v2249 = vpack.c.b16 %v1309, %v1289
    %v2250 = vpack.c.b16 %v1310, %v1290
    %v2251 = vpack.c.b16 %v1311, %v1291
    %v2252 = vpack.c.b16 %v1312, %v1292
    %v2253 = vpack.c.b16 %v1333, %v1313
    %v2254 = vpack.c.b16 %v1334, %v1314
    %v2255 = vpack.c.b16 %v1335, %v1315
    %v2256 = vpack.c.b16 %v1336, %v1316
    %v2257 = vpack.c.b16 %v1337, %v1317
    %v2258 = vpack.c.b16 %v1338, %v1318
    %v2259 = vpack.c.b16 %v1339, %v1319
    %v2260 = vpack.c.b16 %v1340, %v1320
    %v2261 = vpack.c.b16 %v1341, %v1321
    %v2262 = vpack.c.b16 %v1342, %v1322
    %v2263 = vpack.c.b16 %v1343, %v1323
    %v2264 = vpack.c.b16 %v1344, %v1324
    %v2265 = vpack.c.b16 %v1345, %v1325
    %v2266 = vpack.c.b16 %v1346, %v1326
    %v2267 = vpack.c.b16 %v1347, %v1327
    %v2268 = vpack.c.b16 %v1348, %v1328
    %v2269 = vpack.c.b16 %v1349, %v1329
    %v2270 = vpack.c.b16 %v1350, %v1330
    %v2271 = vpack.c.b16 %v1351, %v1331
    %v2272 = vpack.c.b16 %v1352, %v1332
    %v2273 = vpack.c.b16 %v1373, %v1353
    %v2274 = vpack.c.b16 %v1374, %v1354
    %v2275 = vpack.c.b16 %v1375, %v1355
    %v2276 = vpack.c.b16 %v1376, %v1356
    %v2277 = vpack.c.b16 %v1377, %v1357
    %v2278 = vpack.c.b16 %v1378, %v1358
    %v2279 = vpack.c.b16 %v1379, %v1359
    %v2280 = vpack.c.b16 %v1380, %v1360
    %v2281 = vpack.c.b16 %v1381, %v1361
    %v2282 = vpack.c.b16 %v1382, %v1362
    %v2283 = vpack.c.b16 %v1383, %v1363
    %v2284 = vpack.c.b16 %v1384, %v1364
    %v2285 = vpack.c.b16 %v1385, %v1365
    %v2286 = vpack.c.b16 %v1386, %v1366
    %v2287 = vpack.c.b16 %v1387, %v1367
    %v2288 = vpack.c.b16 %v1388, %v1368
    %v2289 = vpack.c.b16 %v1389, %v1369
    %v2290 = vpack.c.b16 %v1390, %v1370
    %v2291 = vpack.c.b16 %v1391, %v1371
    %v2292 = vpack.c.b16 %v1392, %v1372
    %v2293 = vpack.c.b16 %v1413, %v1393
    %v2294 = vpack.c.b16 %v1414, %v1394
    %v2295 = vpack.c.b16 %v1415, %v1395
    %v2296 = vpack.c.b16 %v1416, %v1396
    %v2297 = vpack.c.b16 %v1417, %v1397
    %v2298 = vpack.c.b16 %v1418, %v1398
    %v2299 = vpack.c.b16 %v1419, %v1399
    %v2300 = vpack.c.b16 %v1420, %v1400
    %v2301 = vpack.c.b16 %v1421, %v1401
    %v2302 = vpack.c.b16 %v1422, %v1402
    %v2303 = vpack.c.b16 %v1423, %v1403
    %v2304 = vpack.c.b16 %v1424, %v1404
    %v2305 = vpack.c.b16 %v1425, %v1405
    %v2306 = vpack.c.b16 %v1426, %v1406
    %v2307 = vpack.c.b16 %v1427, %v1407
    %v2308 = vpack.c.b16 %v1428, %v1408
    %v2309 = vpack.c.b16 %v1429, %v1409
    %v2310 = vpack.c.b16 %v1430, %v1410
    %v2311 = vpack.c.b16 %v1431, %v1411
    %v2312 = vpack.c.b16 %v1432, %v1412
    %v2313 = vpack.c.b16 %v1453, %v1433
    %v2314 = vpack.c.b16 %v1454, %v1434
    %v2315 = vpack.c.b16 %v1455, %v1435
    %v2316 = vpack.c.b16 %v1456, %v1436
    %v2317 = vpack.c.b16 %v1457, %v1437
    %v2318 = vpack.c.b16 %v1458, %v1438
    %v2319 = vpack.c.b16 %v1459, %v1439
    %v2320 = vpack.c.b16 %v1460, %v1440
    %v2321 = vpack.c.b16 %v1461, %v1441
    %v2322 = vpack.c.b16 %v1462, %v1442
    %v2323 = vpack.c.b16 %v1463, %v1443
    %v2324 = vpack.c.b16 %v1464, %v1444
    %v2325 = vpack.c.b16 %v1465, %v1445
    %v2326 = vpack.c.b16 %v1466, %v1446
    %v2327 = vpack.c.b16 %v1467, %v1447
    %v2328 = vpack.c.b16 %v1468, %v1448
    %v2329 = vpack.c.b16 %v1469, %v1449
    %v2330 = vpack.c.b16 %v1470, %v1450
    %v2331 = vpack.c.b16 %v1471, %v1451
    %v2332 = vpack.c.b16 %v1472, %v1452
    %v2333 = vpack.c.b16 %v1493, %v1473
    %v2334 = vpack.c.b16 %v1494, %v1474
    %v2335 = vpack.c.b16 %v1495, %v1475
    %v2336 = vpack.c.b16 %v1496, %v1476
    %v2337 = vpack.c.b16 %v1497, %v1477
    %v2338 = vpack.c.b16 %v1498, %v1478
    %v2339 = vpack.c.b16 %v1499, %v1479
    %v2340 = vpack.c.b16 %v1500, %v1480
    %v2341 = vpack.c.b16 %v1501, %v1481
    %v2342 = vpack.c.b16 %v1502, %v1482
    %v2343 = vpack.c.b16 %v1503, %v1483
    %v2344 = vpack.c.b16 %v1504, %v1484
    %v2345 = vpack.c.b16 %v1505, %v1485
    %v2346 = vpack.c.b16 %v1506, %v1486
    %v2347 = vpack.c.b16 %v1507, %v1487
    %v2348 = vpack.c.b16 %v1508, %v1488
    %v2349 = vpack.c.b16 %v1509, %v1489
    %v2350 = vpack.c.b16 %v1510, %v1490
    %v2351 = vpack.c.b16 %v1511, %v1491
    %v2352 = vpack.c.b16 %v1512, %v1492
    %v2353 = vpack.c.b16 %v1533, %v1513
    %v2354 = vpack.c.b16 %v1534, %v1514
    %v2355 = vpack.c.b16 %v1535, %v1515
    %v2356 = vpack.c.b16 %v1536, %v1516
    %v2357 = vpack.c.b16 %v1537, %v1517
    %v2358 = vpack.c.b16 %v1538, %v1518
    %v2359 = vpack.c.b16 %v1539, %v1519
    %v2360 = vpack.c.b16 %v1540, %v1520
    %v2361 = vpack.c.b16 %v1541, %v1521
    %v2362 = vpack.c.b16 %v1542, %v1522
    %v2363 = vpack.c.b16 %v1543, %v1523
    %v2364 = vpack.c.b16 %v1544, %v1524
    %v2365 = vpack.c.b16 %v1545, %v1525
    %v2366 = vpack.c.b16 %v1546, %v1526
    %v2367 = vpack.c.b16 %v1547, %v1527
    %v2368 = vpack.c.b16 %v1548, %v1528
    %v2369 = vpack.c.b16 %v1549, %v1529
    %v2370 = vpack.c.b16 %v1550, %v1530
    %v2371 = vpack.c.b16 %v1551, %v1531
    %v2372 = vpack.c.b16 %v1552, %v1532
    %v2373 = vpack.c.b16 %v1573, %v1553
    %v2374 = vpack.c.b16 %v1574, %v1554
    %v2375 = vpack.c.b16 %v1575, %v1555
    %v2376 = vpack.c.b16 %v1576, %v1556
    %v2377 = vpack.c.b16 %v1577, %v1557
    %v2378 = vpack.c.b16 %v1578, %v1558
    %v2379 = vpack.c.b16 %v1579, %v1559
    %v2380 = vpack.c.b16 %v1580, %v1560
    %v2381 = vpack.c.b16 %v1581, %v1561
    %v2382 = vpack.c.b16 %v1582, %v1562
    %v2383 = vpack.c.b16 %v1583, %v1563
    %v2384 = vpack.c.b16 %v1584, %v1564
    %v2385 = vpack.c.b16 %v1585, %v1565
    %v2386 = vpack.c.b16 %v1586, %v1566
    %v2387 = vpack.c.b16 %v1587, %v1567
    %v2388 = vpack.c.b16 %v1588, %v1568
    %v2389 = vpack.c.b16 %v1589, %v1569
    %v2390 = vpack.c.b16 %v1590, %v1570
    %v2391 = vpack.c.b16 %v1591, %v1571
    %v2392 = vpack.c.b16 %v1592, %v1572
    %v2393 = vpack.c.b16 %v1613, %v1593
    %v2394 = vpack.c.b16 %v1614, %v1594
    %v2395 = vpack.c.b16 %v1615, %v1595
    %v2396 = vpack.c.b16 %v1616, %v1596
    %v2397 = vpack.c.b16 %v1617, %v1597
    %v2398 = vpack.c.b16 %v1618, %v1598
    %v2399 = vpack.c.b16 %v1619, %v1599
    %v2400 = vpack.c.b16 %v1620, %v1600
    %v2401 = vpack.c.b16 %v1621, %v1601
    %v2402 = vpack.c.b16 %v1622, %v1602
    %v2403 = vpack.c.b16 %v1623, %v1603
    %v2404 = vpack.c.b16 %v1624, %v1604
    %v2405 = vpack.c.b16 %v1625, %v1605
    %v2406 = vpack.c.b16 %v1626, %v1606
    %v2407 = vpack.c.b16 %v1627, %v1607
    %v2408 = vpack.c.b16 %v1628, %v1608
    %v2409 = vpack.c.b16 %v1629, %v1609
    %v2410 = vpack.c.b16 %v1630, %v1610
    %v2411 = vpack.c.b16 %v1631, %v1611
    %v2412 = vpack.c.b16 %v1632, %v1612
    %v2413 = vpack.c.b16 %v1653, %v1633
    %v2414 = vpack.c.b16 %v1654, %v1634
    %v2415 = vpack.c.b16 %v1655, %v1635
    %v2416 = vpack.c.b16 %v1656, %v1636
    %v2417 = vpack.c.b16 %v1657, %v1637
    %v2418 = vpack.c.b16 %v1658, %v1638
    %v2419 = vpack.c.b16 %v1659, %v1639
    %v2420 = vpack.c.b16 %v1660, %v1640
    %v2421 = vpack.c.b16 %v1661, %v1641
    %v2422 = vpack.c.b16 %v1662, %v1642
    %v2423 = vpack.c.b16 %v1663, %v1643
    %v2424 = vpack.c.b16 %v1664, %v1644
    %v2425 = vpack.c.b16 %v1665, %v1645
    %v2426 = vpack.c.b16 %v1666, %v1646
    %v2427 = vpack.c.b16 %v1667, %v1647
    %v2428 = vpack.c.b16 %v1668, %v1648
    %v2429 = vpack.c.b16 %v1669, %v1649
    %v2430 = vpack.c.b16 %v1670, %v1650
    %v2431 = vpack.c.b16 %v1671, %v1651
    %v2432 = vpack.c.b16 %v1672, %v1652
    %v2433 = vpack.c.b16 %v1693, %v1673
    %v2434 = vpack.c.b16 %v1694, %v1674
    %v2435 = vpack.c.b16 %v1695, %v1675
    %v2436 = vpack.c.b16 %v1696, %v1676
    %v2437 = vpack.c.b16 %v1697, %v1677
    %v2438 = vpack.c.b16 %v1698, %v1678
    %v2439 = vpack.c.b16 %v1699, %v1679
    %v2440 = vpack.c.b16 %v1700, %v1680
    %v2441 = vpack.c.b16 %v1701, %v1681
    %v2442 = vpack.c.b16 %v1702, %v1682
    %v2443 = vpack.c.b16 %v1703, %v1683
    %v2444 = vpack.c.b16 %v1704, %v1684
    %v2445 = vpack.c.b16 %v1705, %v1685
    %v2446 = vpack.c.b16 %v1706, %v1686
    %v2447 = vpack.c.b16 %v1707, %v1687
    %v2448 = vpack.c.b16 %v1708, %v1688
    %v2449 = vpack.c.b16 %v1709, %v1689
    %v2450 = vpack.c.b16 %v1710, %v1690
    %v2451 = vpack.c.b16 %v1711, %v1691
    %v2452 = vpack.c.b16 %v1712, %v1692
    %v2453 = vpack.c.b16 %v1733, %v1713
    %v2454 = vpack.c.b16 %v1734, %v1714
    %v2455 = vpack.c.b16 %v1735, %v1715
    %v2456 = vpack.c.b16 %v1736, %v1716
    %v2457 = vpack.c.b16 %v1737, %v1717
    %v2458 = vpack.c.b16 %v1738, %v1718
    %v2459 = vpack.c.b16 %v1739, %v1719
    %v2460 = vpack.c.b16 %v1740, %v1720
    %v2461 = vpack.c.b16 %v1741, %v1721
    %v2462 = vpack.c.b16 %v1742, %v1722
    %v2463 = vpack.c.b16 %v1743, %v1723
    %v2464 = vpack.c.b16 %v1744, %v1724
    %v2465 = vpack.c.b16 %v1745, %v1725
    %v2466 = vpack.c.b16 %v1746, %v1726
    %v2467 = vpack.c.b16 %v1747, %v1727
    %v2468 = vpack.c.b16 %v1748, %v1728
    %v2469 = vpack.c.b16 %v1749, %v1729
    %v2470 = vpack.c.b16 %v1750, %v1730
    %v2471 = vpack.c.b16 %v1751, %v1731
    %v2472 = vpack.c.b16 %v1752, %v1732
    %v2473 = vpack.c.b16 %v1773, %v1753
    %v2474 = vpack.c.b16 %v1774, %v1754
    %v2475 = vpack.c.b16 %v1775, %v1755
    %v2476 = vpack.c.b16 %v1776, %v1756
    %v2477 = vpack.c.b16 %v1777, %v1757
    %v2478 = vpack.c.b16 %v1778, %v1758
    %v2479 = vpack.c.b16 %v1779, %v1759
    %v2480 = vpack.c.b16 %v1780, %v1760
    %v2481 = vpack.c.b16 %v1781, %v1761
    %v2482 = vpack.c.b16 %v1782, %v1762
    %v2483 = vpack.c.b16 %v1783, %v1763
    %v2484 = vpack.c.b16 %v1784, %v1764
    %v2485 = vpack.c.b16 %v1785, %v1765
    %v2486 = vpack.c.b16 %v1786, %v1766
    %v2487 = vpack.c.b16 %v1787, %v1767
    %v2488 = vpack.c.b16 %v1788, %v1768
    %v2489 = vpack.c.b16 %v1789, %v1769
    %v2490 = vpack.c.b16 %v1790, %v1770
    %v2491 = vpack.c.b16 %v1791, %v1771
    %v2492 = vpack.c.b16 %v1792, %v1772
    %v2493 = vpack.c.b16 %v1813, %v1793
    %v2494 = vpack.c.b16 %v1814, %v1794
    %v2495 = vpack.c.b16 %v1815, %v1795
    %v2496 = vpack.c.b16 %v1816, %v1796
    %v2497 = vpack.c.b16 %v1817, %v1797
    %v2498 = vpack.c.b16 %v1818, %v1798
    %v2499 = vpack.c.b16 %v1819, %v1799
    %v2500 = vpack.c.b16 %v1820, %v1800
    %v2501 = vpack.c.b16 %v1821, %v1801
    %v2502 = vpack.c.b16 %v1822, %v1802
    %v2503 = vpack.c.b16 %v1823, %v1803
    %v2504 = vpack.c.b16 %v1824, %v1804
    %v2505 = vpack.c.b16 %v1825, %v1805
    %v2506 = vpack.c.b16 %v1826, %v1806
    %v2507 = vpack.c.b16 %v1827, %v1807
    %v2508 = vpack.c.b16 %v1828, %v1808
    %v2509 = vpack.c.b16 %v1829, %v1809
    %v2510 = vpack.c.b16 %v1830, %v1810
    %v2511 = vpack.c.b16 %v1831, %v1811
    %v2512 = vpack.c.b16 %v1832, %v1812
    %v2513 = vpack.c.b16 %v1853, %v1833
    %v2514 = vpack.c.b16 %v1854, %v1834
    %v2515 = vpack.c.b16 %v1855, %v1835
    %v2516 = vpack.c.b16 %v1856, %v1836
    %v2517 = vpack.c.b16 %v1857, %v1837
    %v2518 = vpack.c.b16 %v1858, %v1838
    %v2519 = vpack.c.b16 %v1859, %v1839
    %v2520 = vpack.c.b16 %v1860, %v1840
    %v2521 = vpack.c.b16 %v1861, %v1841
    %v2522 = vpack.c.b16 %v1862, %v1842
    %v2523 = vpack.c.b16 %v1863, %v1843
    %v2524 = vpack.c.b16 %v1864, %v1844
    %v2525 = vpack.c.b16 %v1865, %v1845
    %v2526 = vpack.c.b16 %v1866, %v1846
    %v2527 = vpack.c.b16 %v1867, %v1847
    %v2528 = vpack.c.b16 %v1868, %v1848
    %v2529 = vpack.c.b16 %v1869, %v1849
    %v2530 = vpack.c.b16 %v1870, %v1850
    %v2531 = vpack.c.b16 %v1871, %v1851
    %v2532 = vpack.c.b16 %v1872, %v1852
    %v2533 = vpack.c.b16 %v1893, %v1873
    %v2534 = vpack.c.b16 %v1894, %v1874
    %v2535 = vpack.c.b16 %v1895, %v1875
    %v2536 = vpack.c.b16 %v1896, %v1876
    %v2537 = vpack.c.b16 %v1897, %v1877
    %v2538 = vpack.c.b16 %v1898, %v1878
    %v2539 = vpack.c.b16 %v1899, %v1879
    %v2540 = vpack.c.b16 %v1900, %v1880
    %v2541 = vpack.c.b16 %v1901, %v1881
    %v2542 = vpack.c.b16 %v1902, %v1882
    %v2543 = vpack.c.b16 %v1903, %v1883
    %v2544 = vpack.c.b16 %v1904, %v1884
    %v2545 = vpack.c.b16 %v1905, %v1885
    %v2546 = vpack.c.b16 %v1906, %v1886
    %v2547 = vpack.c.b16 %v1907, %v1887
    %v2548 = vpack.c.b16 %v1908, %v1888
    %v2549 = vpack.c.b16 %v1909, %v1889
    %v2550 = vpack.c.b16 %v1910, %v1890
    %v2551 = vpack.c.b16 %v1911, %v1891
    %v2552 = vpack.c.b16 %v1912, %v1892
    %v2553 = vpack.c.b16 %v1933, %v1913
    %v2554 = vpack.c.b16 %v1934, %v1914
    %v2555 = vpack.c.b16 %v1935, %v1915
    %v2556 = vpack.c.b16 %v1936, %v1916
    %v2557 = vpack.c.b16 %v1937, %v1917
    %v2558 = vpack.c.b16 %v1938, %v1918
    %v2559 = vpack.c.b16 %v1939, %v1919
    %v2560 = vpack.c.b16 %v1940, %v1920
    %v2561 = vpack.c.b16 %v1941, %v1921
    %v2562 = vpack.c.b16 %v1942, %v1922
    %v2563 = vpack.c.b16 %v1943, %v1923
    %v2564 = vpack.c.b16 %v1944, %v1924
    %v2565 = vpack.c.b16 %v1945, %v1925
    %v2566 = vpack.c.b16 %v1946, %v1926
    %v2567 = vpack.c.b16 %v1947, %v1927
    %v2568 = vpack.c.b16 %v1948, %v1928
    %v2569 = vpack.c.b16 %v1949, %v1929
    %v2570 = vpack.c.b16 %v1950, %v1930
    %v2571 = vpack.c.b16 %v1951, %v1931
    %v2572 = vpack.c.b16 %v1952, %v1932
    %v2573 = vpack.c.b16 %v1973, %v1953
    %v2574 = vpack.c.b16 %v1974, %v1954
    %v2575 = vpack.c.b16 %v1975, %v1955
    %v2576 = vpack.c.b16 %v1976, %v1956
    %v2577 = vpack.c.b16 %v1977, %v1957
    %v2578 = vpack.c.b16 %v1978, %v1958
    %v2579 = vpack.c.b16 %v1979, %v1959
    %v2580 = vpack.c.b16 %v1980, %v1960
    %v2581 = vpack.c.b16 %v1981, %v1961
    %v2582 = vpack.c.b16 %v1982, %v1962
    %v2583 = vpack.c.b16 %v1983, %v1963
    %v2584 = vpack.c.b16 %v1984, %v1964
    %v2585 = vpack.c.b16 %v1985, %v1965
    %v2586 = vpack.c.b16 %v1986, %v1966
    %v2587 = vpack.c.b16 %v1987, %v1967
    %v2588 = vpack.c.b16 %v1988, %v1968
    %v2589 = vpack.c.b16 %v1989, %v1969
    %v2590 = vpack.c.b16 %v1990, %v1970
    %v2591 = vpack.c.b16 %v1991, %v1971
    %v2592 = vpack.c.b16 %v1992, %v1972
    %v2593 = vpack.c.b16 %v2013, %v1993
    %v2594 = vpack.c.b16 %v2014, %v1994
    %v2595 = vpack.c.b16 %v2015, %v1995
    %v2596 = vpack.c.b16 %v2016, %v1996
    %v2597 = vpack.c.b16 %v2017, %v1997
    %v2598 = vpack.c.b16 %v2018, %v1998
    %v2599 = vpack.c.b16 %v2019, %v1999
    %v2600 = vpack.c.b16 %v2020, %v2000
    %v2601 = vpack.c.b16 %v2021, %v2001
    %v2602 = vpack.c.b16 %v2022, %v2002
    %v2603 = vpack.c.b16 %v2023, %v2003
    %v2604 = vpack.c.b16 %v2024, %v2004
    %v2605 = vpack.c.b16 %v2025, %v2005
    %v2606 = vpack.c.b16 %v2026, %v2006
    %v2607 = vpack.c.b16 %v2027, %v2007
    %v2608 = vpack.c.b16 %v2028, %v2008
    %v2609 = vpack.c.b16 %v2029, %v2009
    %v2610 = vpack.c.b16 %v2030, %v2010
    %v2611 = vpack.c.b16 %v2031, %v2011
    %v2612 = vpack.c.b16 %v2032, %v2012
    %v2613 = vpack.c.b16 %v2053, %v2033
    %v2614 = vpack.c.b16 %v2054, %v2034
    %v2615 = vpack.c.b16 %v2055, %v2035
    %v2616 = vpack.c.b16 %v2056, %v2036
    %v2617 = vpack.c.b16 %v2057, %v2037
    %v2618 = vpack.c.b16 %v2058, %v2038
    %v2619 = vpack.c.b16 %v2059, %v2039
    %v2620 = vpack.c.b16 %v2060, %v2040
    %v2621 = vpack.c.b16 %v2061, %v2041
    %v2622 = vpack.c.b16 %v2062, %v2042
    %v2623 = vpack.c.b16 %v2063, %v2043
    %v2624 = vpack.c.b16 %v2064, %v2044
    %v2625 = vpack.c.b16 %v2065, %v2045
    %v2626 = vpack.c.b16 %v2066, %v2046
    %v2627 = vpack.c.b16 %v2067, %v2047
    %v2628 = vpack.c.b16 %v2068, %v2048
    %v2629 = vpack.c.b16 %v2069, %v2049
    %v2630 = vpack.c.b16 %v2070, %v2050
    %v2631 = vpack.c.b16 %v2071, %v2051
    %v2632 = vpack.c.b16 %v2072, %v2052
    %v2633 = vpack.c.b16 %v2093, %v2073
    %v2634 = vpack.c.b16 %v2094, %v2074
    %v2635 = vpack.c.b16 %v2095, %v2075
    %v2636 = vpack.c.b16 %v2096, %v2076
    %v2637 = vpack.c.b16 %v2097, %v2077
    %v2638 = vpack.c.b16 %v2098, %v2078
    %v2639 = vpack.c.b16 %v2099, %v2079
    %v2640 = vpack.c.b16 %v2100, %v2080
    %v2641 = vpack.c.b16 %v2101, %v2081
    %v2642 = vpack.c.b16 %v2102, %v2082
    %v2643 = vpack.c.b16 %v2103, %v2083
    %v2644 = vpack.c.b16 %v2104, %v2084
    %v2645 = vpack.c.b16 %v2105, %v2085
    %v2646 = vpack.c.b16 %v2106, %v2086
    %v2647 = vpack.c.b16 %v2107, %v2087
    %v2648 = vpack.c.b16 %v2108, %v2088
    %v2649 = vpack.c.b16 %v2109, %v2089
    %v2650 = vpack.c.b16 %v2110, %v2090
    %v2651 = vpack.c.b16 %v2111, %v2091
    %v2652 = vpack.c.b16 %v2112, %v2092
    %v2653 = vpack.c.b16 %v2133, %v2113
    %v2654 = vpack.c.b16 %v2134, %v2114
    %v2655 = vpack.c.b16 %v2135, %v2115
    %v2656 = vpack.c.b16 %v2136, %v2116
    %v2657 = vpack.c.b16 %v2137, %v2117
    %v2658 = vpack.c.b16 %v2138, %v2118
    %v2659 = vpack.c.b16 %v2139, %v2119
    %v2660 = vpack.c.b16 %v2140, %v2120
    %v2661 = vpack.c.b16 %v2141, %v2121
    %v2662 = vpack.c.b16 %v2142, %v2122
    %v2663 = vpack.c.b16 %v2143, %v2123
    %v2664 = vpack.c.b16 %v2144, %v2124
    %v2665 = vpack.c.b16 %v2145, %v2125
    %v2666 = vpack.c.b16 %v2146, %v2126
    %v2667 = vpack.c.b16 %v2147, %v2127
    %v2668 = vpack.c.b16 %v2148, %v2128
    %v2669 = vpack.c.b16 %v2149, %v2129
    %v2670 = vpack.c.b16 %v2150, %v2130
    %v2671 = vpack.c.b16 %v2151, %v2131
    %v2672 = vpack.c.b16 %v2152, %v2132
    %v2673 = vpack.c.b16 %v2173, %v2153
    %v2674 = vpack.c.b16 %v2174, %v2154
    %v2675 = vpack.c.b16 %v2175, %v2155
    %v2676 = vpack.c.b16 %v2176, %v2156
    %v2677 = vpack.c.b16 %v2177, %v2157
    %v2678 = vpack.c.b16 %v2178, %v2158
    %v2679 = vpack.c.b16 %v2179, %v2159
    %v2680 = vpack.c.b16 %v2180, %v2160
    %v2681 = vpack.c.b16 %v2181, %v2161
    %v2682 = vpack.c.b16 %v2182, %v2162
    %v2683 = vpack.c.b16 %v2183, %v2163
    %v2684 = vpack.c.b16 %v2184, %v2164
    %v2685 = vpack.c.b16 %v2185, %v2165
    %v2686 = vpack.c.b16 %v2186, %v2166
    %v2687 = vpack.c.b16 %v2187, %v2167
    %v2688 = vpack.c.b16 %v2188, %v2168
    %v2689 = vpack.c.b16 %v2189, %v2169
    %v2690 = vpack.c.b16 %v2190, %v2170
    %v2691 = vpack.c.b16 %v2191, %v2171
    %v2692 = vpack.c.b16 %v2192, %v2172
    %vm3193 = vcmask 130048
    %v3195 = vsel %vm3193, %v192, 0
    %3197 = vmatpush.bf16.msra.mxu0 %v2333
    %3198 = vmatpush.bf16.msra.mxu0 %v2313
    %3199 = vmatpush.bf16.msra.mxu0 %v2293
    %3200 = vmatpush.bf16.msra.mxu0 %v2273
    %3201 = vmatpush.bf16.msra.mxu0 %v2253
    %3202 = vmatpush.bf16.msra.mxu0 %v2233
    %3203 = vmatpush.bf16.msra.mxu0 %v2213
    %3204 = vmatpush.bf16.msra.mxu0 %v2193
    %3205 = vmatmul.bf16.gmra.mxu0 %v189
    %v3206 = vpop.f32.mrf.mxu0
    %v3207 = vadd.f32 0.0, %v3206
    %v3208 = vpop.f32.mrf.mxu0
    %3209 = vdwg.mxu0
    %3210 = vmatpush.bf16.msra.mxu0 %v2493
    %3211 = vmatpush.bf16.msra.mxu0 %v2473
    %3212 = vmatpush.bf16.msra.mxu0 %v2453
    %3213 = vmatpush.bf16.msra.mxu0 %v2433
    %3214 = vmatpush.bf16.msra.mxu0 %v2413
    %3215 = vmatpush.bf16.msra.mxu0 %v2393
    %3216 = vmatpush.bf16.msra.mxu0 %v2373
    %3217 = vmatpush.bf16.msra.mxu0 %v2353
    %3218 = vmatmul.bf16.gmra.mxu0 %v190
    %v3219 = vpop.f32.mrf.mxu0
    %v3220 = vadd.f32 %v3207, %v3219
    %v3221 = vpop.f32.mrf.mxu0
    %3222 = vdwg.mxu0
    %3223 = vmatpush.bf16.msra.mxu0 %v2653
    %3224 = vmatpush.bf16.msra.mxu0 %v2633
    %3225 = vmatpush.bf16.msra.mxu0 %v2613
    %3226 = vmatpush.bf16.msra.mxu0 %v2593
    %3227 = vmatpush.bf16.msra.mxu0 %v2573
    %3228 = vmatpush.bf16.msra.mxu0 %v2553
    %3229 = vmatpush.bf16.msra.mxu0 %v2533
    %3230 = vmatpush.bf16.msra.mxu0 %v2513
    %3231 = vmatmul.bf16.gmra.mxu0 %v191
    %v3232 = vpop.f32.mrf.mxu0
    %v3233 = vadd.f32 %v3220, %v3232
    %v3234 = vpop.f32.mrf.mxu0
    %3235 = vdwg.mxu0
    %3236 = vmatpush.bf16.msra.mxu0 0
    %3237 = vmatpush.bf16.msra.mxu0 0
    %3238 = vmatpush.bf16.msra.mxu0 0
    %3239 = vmatpush.bf16.msra.mxu0 0
    %3240 = vmatpush.bf16.msra.mxu0 0
    %3241 = vmatpush.bf16.msra.mxu0 0
    %3242 = vmatpush.bf16.msra.mxu0 0
    %3243 = vmatpush.bf16.msra.mxu0 %v2673
    %3244 = vmatmul.bf16.gmra.mxu0 %v3195
    %v3245 = vpop.f32.mrf.mxu0
    %v3246 = vadd.f32 %v3233, %v3245
    %v3247 = vpop.f32.mrf.mxu0
    %3248 = vdwg.mxu0
    %3249 = vmatpush.bf16.msra.mxu0 %v2334
    %3250 = vmatpush.bf16.msra.mxu0 %v2314
    %3251 = vmatpush.bf16.msra.mxu0 %v2294
    %3252 = vmatpush.bf16.msra.mxu0 %v2274
    %3253 = vmatpush.bf16.msra.mxu0 %v2254
    %3254 = vmatpush.bf16.msra.mxu0 %v2234
    %3255 = vmatpush.bf16.msra.mxu0 %v2214
    %3256 = vmatpush.bf16.msra.mxu0 %v2194
    %3257 = vmatmul.bf16.gmra.mxu0 %v189
    %v3258 = vpop.f32.mrf.mxu0
    %v3259 = vadd.f32 0.0, %v3258
    %v3260 = vpop.f32.mrf.mxu0
    %3261 = vdwg.mxu0
    %3262 = vmatpush.bf16.msra.mxu0 %v2494
    %3263 = vmatpush.bf16.msra.mxu0 %v2474
    %3264 = vmatpush.bf16.msra.mxu0 %v2454
    %3265 = vmatpush.bf16.msra.mxu0 %v2434
    %3266 = vmatpush.bf16.msra.mxu0 %v2414
    %3267 = vmatpush.bf16.msra.mxu0 %v2394
    %3268 = vmatpush.bf16.msra.mxu0 %v2374
    %3269 = vmatpush.bf16.msra.mxu0 %v2354
    %3270 = vmatmul.bf16.gmra.mxu0 %v190
    %v3271 = vpop.f32.mrf.mxu0
    %v3272 = vadd.f32 %v3259, %v3271
    %v3273 = vpop.f32.mrf.mxu0
    %3274 = vdwg.mxu0
    %3275 = vmatpush.bf16.msra.mxu0 %v2654
    %3276 = vmatpush.bf16.msra.mxu0 %v2634
    %3277 = vmatpush.bf16.msra.mxu0 %v2614
    %3278 = vmatpush.bf16.msra.mxu0 %v2594
    %3279 = vmatpush.bf16.msra.mxu0 %v2574
    %3280 = vmatpush.bf16.msra.mxu0 %v2554
    %3281 = vmatpush.bf16.msra.mxu0 %v2534
    %3282 = vmatpush.bf16.msra.mxu0 %v2514
    %3283 = vmatmul.bf16.gmra.mxu0 %v191
    %v3284 = vpop.f32.mrf.mxu0
    %v3285 = vadd.f32 %v3272, %v3284
    %v3286 = vpop.f32.mrf.mxu0
    %3287 = vdwg.mxu0
    %3288 = vmatpush.bf16.msra.mxu0 0
    %3289 = vmatpush.bf16.msra.mxu0 0
    %3290 = vmatpush.bf16.msra.mxu0 0
    %3291 = vmatpush.bf16.msra.mxu0 0
    %3292 = vmatpush.bf16.msra.mxu0 0
    %3293 = vmatpush.bf16.msra.mxu0 0
    %3294 = vmatpush.bf16.msra.mxu0 0
    %3295 = vmatpush.bf16.msra.mxu0 %v2674
    %3296 = vmatmul.bf16.gmra.mxu0 %v3195
    %v3297 = vpop.f32.mrf.mxu0
    %v3298 = vadd.f32 %v3285, %v3297
    %v3299 = vpop.f32.mrf.mxu0
    %3300 = vdwg.mxu0
    %3301 = vmatpush.bf16.msra.mxu0 %v2335
    %3302 = vmatpush.bf16.msra.mxu0 %v2315
    %3303 = vmatpush.bf16.msra.mxu0 %v2295
    %3304 = vmatpush.bf16.msra.mxu0 %v2275
    %3305 = vmatpush.bf16.msra.mxu0 %v2255
    %3306 = vmatpush.bf16.msra.mxu0 %v2235
    %3307 = vmatpush.bf16.msra.mxu0 %v2215
    %3308 = vmatpush.bf16.msra.mxu0 %v2195
    %3309 = vmatmul.bf16.gmra.mxu0 %v189
    %v3310 = vpop.f32.mrf.mxu0
    %v3311 = vadd.f32 0.0, %v3310
    %v3312 = vpop.f32.mrf.mxu0
    %3313 = vdwg.mxu0
    %3314 = vmatpush.bf16.msra.mxu0 %v2495
    %3315 = vmatpush.bf16.msra.mxu0 %v2475
    %3316 = vmatpush.bf16.msra.mxu0 %v2455
    %3317 = vmatpush.bf16.msra.mxu0 %v2435
    %3318 = vmatpush.bf16.msra.mxu0 %v2415
    %3319 = vmatpush.bf16.msra.mxu0 %v2395
    %3320 = vmatpush.bf16.msra.mxu0 %v2375
    %3321 = vmatpush.bf16.msra.mxu0 %v2355
    %3322 = vmatmul.bf16.gmra.mxu0 %v190
    %v3323 = vpop.f32.mrf.mxu0
    %v3324 = vadd.f32 %v3311, %v3323
    %v3325 = vpop.f32.mrf.mxu0
    %3326 = vdwg.mxu0
    %3327 = vmatpush.bf16.msra.mxu0 %v2655
    %3328 = vmatpush.bf16.msra.mxu0 %v2635
    %3329 = vmatpush.bf16.msra.mxu0 %v2615
    %3330 = vmatpush.bf16.msra.mxu0 %v2595
    %3331 = vmatpush.bf16.msra.mxu0 %v2575
    %3332 = vmatpush.bf16.msra.mxu0 %v2555
    %3333 = vmatpush.bf16.msra.mxu0 %v2535
    %3334 = vmatpush.bf16.msra.mxu0 %v2515
    %3335 = vmatmul.bf16.gmra.mxu0 %v191
    %v3336 = vpop.f32.mrf.mxu0
    %v3337 = vadd.f32 %v3324, %v3336
    %v3338 = vpop.f32.mrf.mxu0
    %3339 = vdwg.mxu0
    %3340 = vmatpush.bf16.msra.mxu0 0
    %3341 = vmatpush.bf16.msra.mxu0 0
    %3342 = vmatpush.bf16.msra.mxu0 0
    %3343 = vmatpush.bf16.msra.mxu0 0
    %3344 = vmatpush.bf16.msra.mxu0 0
    %3345 = vmatpush.bf16.msra.mxu0 0
    %3346 = vmatpush.bf16.msra.mxu0 0
    %3347 = vmatpush.bf16.msra.mxu0 %v2675
    %3348 = vmatmul.bf16.gmra.mxu0 %v3195
    %v3349 = vpop.f32.mrf.mxu0
    %v3350 = vadd.f32 %v3337, %v3349
    %v3351 = vpop.f32.mrf.mxu0
    %3352 = vdwg.mxu0
    %3353 = vmatpush.bf16.msra.mxu0 %v2336
    %3354 = vmatpush.bf16.msra.mxu0 %v2316
    %3355 = vmatpush.bf16.msra.mxu0 %v2296
    %3356 = vmatpush.bf16.msra.mxu0 %v2276
    %3357 = vmatpush.bf16.msra.mxu0 %v2256
    %3358 = vmatpush.bf16.msra.mxu0 %v2236
    %3359 = vmatpush.bf16.msra.mxu0 %v2216
    %3360 = vmatpush.bf16.msra.mxu0 %v2196
    %3361 = vmatmul.bf16.gmra.mxu0 %v189
    %v3362 = vpop.f32.mrf.mxu0
    %v3363 = vadd.f32 0.0, %v3362
    %v3364 = vpop.f32.mrf.mxu0
    %3365 = vdwg.mxu0
    %3366 = vmatpush.bf16.msra.mxu0 %v2496
    %3367 = vmatpush.bf16.msra.mxu0 %v2476
    %3368 = vmatpush.bf16.msra.mxu0 %v2456
    %3369 = vmatpush.bf16.msra.mxu0 %v2436
    %3370 = vmatpush.bf16.msra.mxu0 %v2416
    %3371 = vmatpush.bf16.msra.mxu0 %v2396
    %3372 = vmatpush.bf16.msra.mxu0 %v2376
    %3373 = vmatpush.bf16.msra.mxu0 %v2356
    %3374 = vmatmul.bf16.gmra.mxu0 %v190
    %v3375 = vpop.f32.mrf.mxu0
    %v3376 = vadd.f32 %v3363, %v3375
    %v3377 = vpop.f32.mrf.mxu0
    %3378 = vdwg.mxu0
    %3379 = vmatpush.bf16.msra.mxu0 %v2656
    %3380 = vmatpush.bf16.msra.mxu0 %v2636
    %3381 = vmatpush.bf16.msra.mxu0 %v2616
    %3382 = vmatpush.bf16.msra.mxu0 %v2596
    %3383 = vmatpush.bf16.msra.mxu0 %v2576
    %3384 = vmatpush.bf16.msra.mxu0 %v2556
    %3385 = vmatpush.bf16.msra.mxu0 %v2536
    %3386 = vmatpush.bf16.msra.mxu0 %v2516
    %3387 = vmatmul.bf16.gmra.mxu0 %v191
    %v3388 = vpop.f32.mrf.mxu0
    %v3389 = vadd.f32 %v3376, %v3388
    %v3390 = vpop.f32.mrf.mxu0
    %3391 = vdwg.mxu0
    %3392 = vmatpush.bf16.msra.mxu0 0
    %3393 = vmatpush.bf16.msra.mxu0 0
    %3394 = vmatpush.bf16.msra.mxu0 0
    %3395 = vmatpush.bf16.msra.mxu0 0
    %3396 = vmatpush.bf16.msra.mxu0 0
    %3397 = vmatpush.bf16.msra.mxu0 0
    %3398 = vmatpush.bf16.msra.mxu0 0
    %3399 = vmatpush.bf16.msra.mxu0 %v2676
    %3400 = vmatmul.bf16.gmra.mxu0 %v3195
    %v3401 = vpop.f32.mrf.mxu0
    %v3402 = vadd.f32 %v3389, %v3401
    %v3403 = vpop.f32.mrf.mxu0
    %3404 = vdwg.mxu0
    %3405 = vmatpush.bf16.msra.mxu0 %v2337
    %3406 = vmatpush.bf16.msra.mxu0 %v2317
    %3407 = vmatpush.bf16.msra.mxu0 %v2297
    %3408 = vmatpush.bf16.msra.mxu0 %v2277
    %3409 = vmatpush.bf16.msra.mxu0 %v2257
    %3410 = vmatpush.bf16.msra.mxu0 %v2237
    %3411 = vmatpush.bf16.msra.mxu0 %v2217
    %3412 = vmatpush.bf16.msra.mxu0 %v2197
    %3413 = vmatmul.bf16.gmra.mxu0 %v189
    %v3414 = vpop.f32.mrf.mxu0
    %v3415 = vadd.f32 0.0, %v3414
    %v3416 = vpop.f32.mrf.mxu0
    %3417 = vdwg.mxu0
    %3418 = vmatpush.bf16.msra.mxu0 %v2497
    %3419 = vmatpush.bf16.msra.mxu0 %v2477
    %3420 = vmatpush.bf16.msra.mxu0 %v2457
    %3421 = vmatpush.bf16.msra.mxu0 %v2437
    %3422 = vmatpush.bf16.msra.mxu0 %v2417
    %3423 = vmatpush.bf16.msra.mxu0 %v2397
    %3424 = vmatpush.bf16.msra.mxu0 %v2377
    %3425 = vmatpush.bf16.msra.mxu0 %v2357
    %3426 = vmatmul.bf16.gmra.mxu0 %v190
    %v3427 = vpop.f32.mrf.mxu0
    %v3428 = vadd.f32 %v3415, %v3427
    %v3429 = vpop.f32.mrf.mxu0
    %3430 = vdwg.mxu0
    %3431 = vmatpush.bf16.msra.mxu0 %v2657
    %3432 = vmatpush.bf16.msra.mxu0 %v2637
    %3433 = vmatpush.bf16.msra.mxu0 %v2617
    %3434 = vmatpush.bf16.msra.mxu0 %v2597
    %3435 = vmatpush.bf16.msra.mxu0 %v2577
    %3436 = vmatpush.bf16.msra.mxu0 %v2557
    %3437 = vmatpush.bf16.msra.mxu0 %v2537
    %3438 = vmatpush.bf16.msra.mxu0 %v2517
    %3439 = vmatmul.bf16.gmra.mxu0 %v191
    %v3440 = vpop.f32.mrf.mxu0
    %v3441 = vadd.f32 %v3428, %v3440
    %v3442 = vpop.f32.mrf.mxu0
    %3443 = vdwg.mxu0
    %3444 = vmatpush.bf16.msra.mxu0 0
    %3445 = vmatpush.bf16.msra.mxu0 0
    %3446 = vmatpush.bf16.msra.mxu0 0
    %3447 = vmatpush.bf16.msra.mxu0 0
    %3448 = vmatpush.bf16.msra.mxu0 0
    %3449 = vmatpush.bf16.msra.mxu0 0
    %3450 = vmatpush.bf16.msra.mxu0 0
    %3451 = vmatpush.bf16.msra.mxu0 %v2677
    %3452 = vmatmul.bf16.gmra.mxu0 %v3195
    %v3453 = vpop.f32.mrf.mxu0
    %v3454 = vadd.f32 %v3441, %v3453
    %v3455 = vpop.f32.mrf.mxu0
    %3456 = vdwg.mxu0
    %3457 = vmatpush.bf16.msra.mxu0 %v2338
    %3458 = vmatpush.bf16.msra.mxu0 %v2318
    %3459 = vmatpush.bf16.msra.mxu0 %v2298
    %3460 = vmatpush.bf16.msra.mxu0 %v2278
    %3461 = vmatpush.bf16.msra.mxu0 %v2258
    %3462 = vmatpush.bf16.msra.mxu0 %v2238
    %3463 = vmatpush.bf16.msra.mxu0 %v2218
    %3464 = vmatpush.bf16.msra.mxu0 %v2198
    %3465 = vmatmul.bf16.gmra.mxu0 %v189
    %v3466 = vpop.f32.mrf.mxu0
    %v3467 = vadd.f32 0.0, %v3466
    %v3468 = vpop.f32.mrf.mxu0
    %3469 = vdwg.mxu0
    %3470 = vmatpush.bf16.msra.mxu0 %v2498
    %3471 = vmatpush.bf16.msra.mxu0 %v2478
    %3472 = vmatpush.bf16.msra.mxu0 %v2458
    %3473 = vmatpush.bf16.msra.mxu0 %v2438
    %3474 = vmatpush.bf16.msra.mxu0 %v2418
    %3475 = vmatpush.bf16.msra.mxu0 %v2398
    %3476 = vmatpush.bf16.msra.mxu0 %v2378
    %3477 = vmatpush.bf16.msra.mxu0 %v2358
    %3478 = vmatmul.bf16.gmra.mxu0 %v190
    %v3479 = vpop.f32.mrf.mxu0
    %v3480 = vadd.f32 %v3467, %v3479
    %v3481 = vpop.f32.mrf.mxu0
    %3482 = vdwg.mxu0
    %3483 = vmatpush.bf16.msra.mxu0 %v2658
    %3484 = vmatpush.bf16.msra.mxu0 %v2638
    %3485 = vmatpush.bf16.msra.mxu0 %v2618
    %3486 = vmatpush.bf16.msra.mxu0 %v2598
    %3487 = vmatpush.bf16.msra.mxu0 %v2578
    %3488 = vmatpush.bf16.msra.mxu0 %v2558
    %3489 = vmatpush.bf16.msra.mxu0 %v2538
    %3490 = vmatpush.bf16.msra.mxu0 %v2518
    %3491 = vmatmul.bf16.gmra.mxu0 %v191
    %v3492 = vpop.f32.mrf.mxu0
    %v3493 = vadd.f32 %v3480, %v3492
    %v3494 = vpop.f32.mrf.mxu0
    %3495 = vdwg.mxu0
    %3496 = vmatpush.bf16.msra.mxu0 0
    %3497 = vmatpush.bf16.msra.mxu0 0
    %3498 = vmatpush.bf16.msra.mxu0 0
    %3499 = vmatpush.bf16.msra.mxu0 0
    %3500 = vmatpush.bf16.msra.mxu0 0
    %3501 = vmatpush.bf16.msra.mxu0 0
    %3502 = vmatpush.bf16.msra.mxu0 0
    %3503 = vmatpush.bf16.msra.mxu0 %v2678
    %3504 = vmatmul.bf16.gmra.mxu0 %v3195
    %v3505 = vpop.f32.mrf.mxu0
    %v3506 = vadd.f32 %v3493, %v3505
    %v3507 = vpop.f32.mrf.mxu0
    %3508 = vdwg.mxu0
    %3509 = vmatpush.bf16.msra.mxu0 %v2339
    %3510 = vmatpush.bf16.msra.mxu0 %v2319
    %3511 = vmatpush.bf16.msra.mxu0 %v2299
    %3512 = vmatpush.bf16.msra.mxu0 %v2279
    %3513 = vmatpush.bf16.msra.mxu0 %v2259
    %3514 = vmatpush.bf16.msra.mxu0 %v2239
    %3515 = vmatpush.bf16.msra.mxu0 %v2219
    %3516 = vmatpush.bf16.msra.mxu0 %v2199
    %3517 = vmatmul.bf16.gmra.mxu0 %v189
    %v3518 = vpop.f32.mrf.mxu0
    %v3519 = vadd.f32 0.0, %v3518
    %v3520 = vpop.f32.mrf.mxu0
    %3521 = vdwg.mxu0
    %3522 = vmatpush.bf16.msra.mxu0 %v2499
    %3523 = vmatpush.bf16.msra.mxu0 %v2479
    %3524 = vmatpush.bf16.msra.mxu0 %v2459
    %3525 = vmatpush.bf16.msra.mxu0 %v2439
    %3526 = vmatpush.bf16.msra.mxu0 %v2419
    %3527 = vmatpush.bf16.msra.mxu0 %v2399
    %3528 = vmatpush.bf16.msra.mxu0 %v2379
    %3529 = vmatpush.bf16.msra.mxu0 %v2359
    %3530 = vmatmul.bf16.gmra.mxu0 %v190
    %v3531 = vpop.f32.mrf.mxu0
    %v3532 = vadd.f32 %v3519, %v3531
    %v3533 = vpop.f32.mrf.mxu0
    %3534 = vdwg.mxu0
    %3535 = vmatpush.bf16.msra.mxu0 %v2659
    %3536 = vmatpush.bf16.msra.mxu0 %v2639
    %3537 = vmatpush.bf16.msra.mxu0 %v2619
    %3538 = vmatpush.bf16.msra.mxu0 %v2599
    %3539 = vmatpush.bf16.msra.mxu0 %v2579
    %3540 = vmatpush.bf16.msra.mxu0 %v2559
    %3541 = vmatpush.bf16.msra.mxu0 %v2539
    %3542 = vmatpush.bf16.msra.mxu0 %v2519
    %3543 = vmatmul.bf16.gmra.mxu0 %v191
    %v3544 = vpop.f32.mrf.mxu0
    %v3545 = vadd.f32 %v3532, %v3544
    %v3546 = vpop.f32.mrf.mxu0
    %3547 = vdwg.mxu0
    %3548 = vmatpush.bf16.msra.mxu0 0
    %3549 = vmatpush.bf16.msra.mxu0 0
    %3550 = vmatpush.bf16.msra.mxu0 0
    %3551 = vmatpush.bf16.msra.mxu0 0
    %3552 = vmatpush.bf16.msra.mxu0 0
    %3553 = vmatpush.bf16.msra.mxu0 0
    %3554 = vmatpush.bf16.msra.mxu0 0
    %3555 = vmatpush.bf16.msra.mxu0 %v2679
    %3556 = vmatmul.bf16.gmra.mxu0 %v3195
    %v3557 = vpop.f32.mrf.mxu0
    %v3558 = vadd.f32 %v3545, %v3557
    %v3559 = vpop.f32.mrf.mxu0
    %3560 = vdwg.mxu0
    %3561 = vmatpush.bf16.msra.mxu0 %v2340
    %3562 = vmatpush.bf16.msra.mxu0 %v2320
    %3563 = vmatpush.bf16.msra.mxu0 %v2300
    %3564 = vmatpush.bf16.msra.mxu0 %v2280
    %3565 = vmatpush.bf16.msra.mxu0 %v2260
    %3566 = vmatpush.bf16.msra.mxu0 %v2240
    %3567 = vmatpush.bf16.msra.mxu0 %v2220
    %3568 = vmatpush.bf16.msra.mxu0 %v2200
    %3569 = vmatmul.bf16.gmra.mxu0 %v189
    %v3570 = vpop.f32.mrf.mxu0
    %v3571 = vadd.f32 0.0, %v3570
    %v3572 = vpop.f32.mrf.mxu0
    %3573 = vdwg.mxu0
    %3574 = vmatpush.bf16.msra.mxu0 %v2500
    %3575 = vmatpush.bf16.msra.mxu0 %v2480
    %3576 = vmatpush.bf16.msra.mxu0 %v2460
    %3577 = vmatpush.bf16.msra.mxu0 %v2440
    %3578 = vmatpush.bf16.msra.mxu0 %v2420
    %3579 = vmatpush.bf16.msra.mxu0 %v2400
    %3580 = vmatpush.bf16.msra.mxu0 %v2380
    %3581 = vmatpush.bf16.msra.mxu0 %v2360
    %3582 = vmatmul.bf16.gmra.mxu0 %v190
    %v3583 = vpop.f32.mrf.mxu0
    %v3584 = vadd.f32 %v3571, %v3583
    %v3585 = vpop.f32.mrf.mxu0
    %3586 = vdwg.mxu0
    %3587 = vmatpush.bf16.msra.mxu0 %v2660
    %3588 = vmatpush.bf16.msra.mxu0 %v2640
    %3589 = vmatpush.bf16.msra.mxu0 %v2620
    %3590 = vmatpush.bf16.msra.mxu0 %v2600
    %3591 = vmatpush.bf16.msra.mxu0 %v2580
    %3592 = vmatpush.bf16.msra.mxu0 %v2560
    %3593 = vmatpush.bf16.msra.mxu0 %v2540
    %3594 = vmatpush.bf16.msra.mxu0 %v2520
    %3595 = vmatmul.bf16.gmra.mxu0 %v191
    %v3596 = vpop.f32.mrf.mxu0
    %v3597 = vadd.f32 %v3584, %v3596
    %v3598 = vpop.f32.mrf.mxu0
    %3599 = vdwg.mxu0
    %3600 = vmatpush.bf16.msra.mxu0 0
    %3601 = vmatpush.bf16.msra.mxu0 0
    %3602 = vmatpush.bf16.msra.mxu0 0
    %3603 = vmatpush.bf16.msra.mxu0 0
    %3604 = vmatpush.bf16.msra.mxu0 0
    %3605 = vmatpush.bf16.msra.mxu0 0
    %3606 = vmatpush.bf16.msra.mxu0 0
    %3607 = vmatpush.bf16.msra.mxu0 %v2680
    %3608 = vmatmul.bf16.gmra.mxu0 %v3195
    %v3609 = vpop.f32.mrf.mxu0
    %v3610 = vadd.f32 %v3597, %v3609
    %v3611 = vpop.f32.mrf.mxu0
    %3612 = vdwg.mxu0
    %3613 = vmatpush.bf16.msra.mxu0 %v2341
    %3614 = vmatpush.bf16.msra.mxu0 %v2321
    %3615 = vmatpush.bf16.msra.mxu0 %v2301
    %3616 = vmatpush.bf16.msra.mxu0 %v2281
    %3617 = vmatpush.bf16.msra.mxu0 %v2261
    %3618 = vmatpush.bf16.msra.mxu0 %v2241
    %3619 = vmatpush.bf16.msra.mxu0 %v2221
    %3620 = vmatpush.bf16.msra.mxu0 %v2201
    %3621 = vmatmul.bf16.gmra.mxu0 %v189
    %v3622 = vpop.f32.mrf.mxu0
    %v3623 = vadd.f32 0.0, %v3622
    %v3624 = vpop.f32.mrf.mxu0
    %3625 = vdwg.mxu0
    %3626 = vmatpush.bf16.msra.mxu0 %v2501
    %3627 = vmatpush.bf16.msra.mxu0 %v2481
    %3628 = vmatpush.bf16.msra.mxu0 %v2461
    %3629 = vmatpush.bf16.msra.mxu0 %v2441
    %3630 = vmatpush.bf16.msra.mxu0 %v2421
    %3631 = vmatpush.bf16.msra.mxu0 %v2401
    %3632 = vmatpush.bf16.msra.mxu0 %v2381
    %3633 = vmatpush.bf16.msra.mxu0 %v2361
    %3634 = vmatmul.bf16.gmra.mxu0 %v190
    %v3635 = vpop.f32.mrf.mxu0
    %v3636 = vadd.f32 %v3623, %v3635
    %v3637 = vpop.f32.mrf.mxu0
    %3638 = vdwg.mxu0
    %3639 = vmatpush.bf16.msra.mxu0 %v2661
    %3640 = vmatpush.bf16.msra.mxu0 %v2641
    %3641 = vmatpush.bf16.msra.mxu0 %v2621
    %3642 = vmatpush.bf16.msra.mxu0 %v2601
    %3643 = vmatpush.bf16.msra.mxu0 %v2581
    %3644 = vmatpush.bf16.msra.mxu0 %v2561
    %3645 = vmatpush.bf16.msra.mxu0 %v2541
    %3646 = vmatpush.bf16.msra.mxu0 %v2521
    %3647 = vmatmul.bf16.gmra.mxu0 %v191
    %v3648 = vpop.f32.mrf.mxu0
    %v3649 = vadd.f32 %v3636, %v3648
    %v3650 = vpop.f32.mrf.mxu0
    %3651 = vdwg.mxu0
    %3652 = vmatpush.bf16.msra.mxu0 0
    %3653 = vmatpush.bf16.msra.mxu0 0
    %3654 = vmatpush.bf16.msra.mxu0 0
    %3655 = vmatpush.bf16.msra.mxu0 0
    %3656 = vmatpush.bf16.msra.mxu0 0
    %3657 = vmatpush.bf16.msra.mxu0 0
    %3658 = vmatpush.bf16.msra.mxu0 0
    %3659 = vmatpush.bf16.msra.mxu0 %v2681
    %3660 = vmatmul.bf16.gmra.mxu0 %v3195
    %v3661 = vpop.f32.mrf.mxu0
    %v3662 = vadd.f32 %v3649, %v3661
    %v3663 = vpop.f32.mrf.mxu0
    %3664 = vdwg.mxu0
    %3665 = vmatpush.bf16.msra.mxu0 %v2342
    %3666 = vmatpush.bf16.msra.mxu0 %v2322
    %3667 = vmatpush.bf16.msra.mxu0 %v2302
    %3668 = vmatpush.bf16.msra.mxu0 %v2282
    %3669 = vmatpush.bf16.msra.mxu0 %v2262
    %3670 = vmatpush.bf16.msra.mxu0 %v2242
    %3671 = vmatpush.bf16.msra.mxu0 %v2222
    %3672 = vmatpush.bf16.msra.mxu0 %v2202
    %3673 = vmatmul.bf16.gmra.mxu0 %v189
    %v3674 = vpop.f32.mrf.mxu0
    %v3675 = vadd.f32 0.0, %v3674
    %v3676 = vpop.f32.mrf.mxu0
    %3677 = vdwg.mxu0
    %3678 = vmatpush.bf16.msra.mxu0 %v2502
    %3679 = vmatpush.bf16.msra.mxu0 %v2482
    %3680 = vmatpush.bf16.msra.mxu0 %v2462
    %3681 = vmatpush.bf16.msra.mxu0 %v2442
    %3682 = vmatpush.bf16.msra.mxu0 %v2422
    %3683 = vmatpush.bf16.msra.mxu0 %v2402
    %3684 = vmatpush.bf16.msra.mxu0 %v2382
    %3685 = vmatpush.bf16.msra.mxu0 %v2362
    %3686 = vmatmul.bf16.gmra.mxu0 %v190
    %v3687 = vpop.f32.mrf.mxu0
    %v3688 = vadd.f32 %v3675, %v3687
    %v3689 = vpop.f32.mrf.mxu0
    %3690 = vdwg.mxu0
    %3691 = vmatpush.bf16.msra.mxu0 %v2662
    %3692 = vmatpush.bf16.msra.mxu0 %v2642
    %3693 = vmatpush.bf16.msra.mxu0 %v2622
    %3694 = vmatpush.bf16.msra.mxu0 %v2602
    %3695 = vmatpush.bf16.msra.mxu0 %v2582
    %3696 = vmatpush.bf16.msra.mxu0 %v2562
    %3697 = vmatpush.bf16.msra.mxu0 %v2542
    %3698 = vmatpush.bf16.msra.mxu0 %v2522
    %3699 = vmatmul.bf16.gmra.mxu0 %v191
    %v3700 = vpop.f32.mrf.mxu0
    %v3701 = vadd.f32 %v3688, %v3700
    %v3702 = vpop.f32.mrf.mxu0
    %3703 = vdwg.mxu0
    %3704 = vmatpush.bf16.msra.mxu0 0
    %3705 = vmatpush.bf16.msra.mxu0 0
    %3706 = vmatpush.bf16.msra.mxu0 0
    %3707 = vmatpush.bf16.msra.mxu0 0
    %3708 = vmatpush.bf16.msra.mxu0 0
    %3709 = vmatpush.bf16.msra.mxu0 0
    %3710 = vmatpush.bf16.msra.mxu0 0
    %3711 = vmatpush.bf16.msra.mxu0 %v2682
    %3712 = vmatmul.bf16.gmra.mxu0 %v3195
    %v3713 = vpop.f32.mrf.mxu0
    %v3714 = vadd.f32 %v3701, %v3713
    %v3715 = vpop.f32.mrf.mxu0
    %3716 = vdwg.mxu0
    %3717 = vmatpush.bf16.msra.mxu0 %v2343
    %3718 = vmatpush.bf16.msra.mxu0 %v2323
    %3719 = vmatpush.bf16.msra.mxu0 %v2303
    %3720 = vmatpush.bf16.msra.mxu0 %v2283
    %3721 = vmatpush.bf16.msra.mxu0 %v2263
    %3722 = vmatpush.bf16.msra.mxu0 %v2243
    %3723 = vmatpush.bf16.msra.mxu0 %v2223
    %3724 = vmatpush.bf16.msra.mxu0 %v2203
    %3725 = vmatmul.bf16.gmra.mxu0 %v189
    %v3726 = vpop.f32.mrf.mxu0
    %v3727 = vadd.f32 0.0, %v3726
    %v3728 = vpop.f32.mrf.mxu0
    %3729 = vdwg.mxu0
    %3730 = vmatpush.bf16.msra.mxu0 %v2503
    %3731 = vmatpush.bf16.msra.mxu0 %v2483
    %3732 = vmatpush.bf16.msra.mxu0 %v2463
    %3733 = vmatpush.bf16.msra.mxu0 %v2443
    %3734 = vmatpush.bf16.msra.mxu0 %v2423
    %3735 = vmatpush.bf16.msra.mxu0 %v2403
    %3736 = vmatpush.bf16.msra.mxu0 %v2383
    %3737 = vmatpush.bf16.msra.mxu0 %v2363
    %3738 = vmatmul.bf16.gmra.mxu0 %v190
    %v3739 = vpop.f32.mrf.mxu0
    %v3740 = vadd.f32 %v3727, %v3739
    %v3741 = vpop.f32.mrf.mxu0
    %3742 = vdwg.mxu0
    %3743 = vmatpush.bf16.msra.mxu0 %v2663
    %3744 = vmatpush.bf16.msra.mxu0 %v2643
    %3745 = vmatpush.bf16.msra.mxu0 %v2623
    %3746 = vmatpush.bf16.msra.mxu0 %v2603
    %3747 = vmatpush.bf16.msra.mxu0 %v2583
    %3748 = vmatpush.bf16.msra.mxu0 %v2563
    %3749 = vmatpush.bf16.msra.mxu0 %v2543
    %3750 = vmatpush.bf16.msra.mxu0 %v2523
    %3751 = vmatmul.bf16.gmra.mxu0 %v191
    %v3752 = vpop.f32.mrf.mxu0
    %v3753 = vadd.f32 %v3740, %v3752
    %v3754 = vpop.f32.mrf.mxu0
    %3755 = vdwg.mxu0
    %3756 = vmatpush.bf16.msra.mxu0 0
    %3757 = vmatpush.bf16.msra.mxu0 0
    %3758 = vmatpush.bf16.msra.mxu0 0
    %3759 = vmatpush.bf16.msra.mxu0 0
    %3760 = vmatpush.bf16.msra.mxu0 0
    %3761 = vmatpush.bf16.msra.mxu0 0
    %3762 = vmatpush.bf16.msra.mxu0 0
    %3763 = vmatpush.bf16.msra.mxu0 %v2683
    %3764 = vmatmul.bf16.gmra.mxu0 %v3195
    %v3765 = vpop.f32.mrf.mxu0
    %v3766 = vadd.f32 %v3753, %v3765
    %v3767 = vpop.f32.mrf.mxu0
    %3768 = vdwg.mxu0
    %3769 = vmatpush.bf16.msra.mxu0 %v2344
    %3770 = vmatpush.bf16.msra.mxu0 %v2324
    %3771 = vmatpush.bf16.msra.mxu0 %v2304
    %3772 = vmatpush.bf16.msra.mxu0 %v2284
    %3773 = vmatpush.bf16.msra.mxu0 %v2264
    %3774 = vmatpush.bf16.msra.mxu0 %v2244
    %3775 = vmatpush.bf16.msra.mxu0 %v2224
    %3776 = vmatpush.bf16.msra.mxu0 %v2204
    %3777 = vmatmul.bf16.gmra.mxu0 %v189
    %v3778 = vpop.f32.mrf.mxu0
    %v3779 = vadd.f32 0.0, %v3778
    %v3780 = vpop.f32.mrf.mxu0
    %3781 = vdwg.mxu0
    %3782 = vmatpush.bf16.msra.mxu0 %v2504
    %3783 = vmatpush.bf16.msra.mxu0 %v2484
    %3784 = vmatpush.bf16.msra.mxu0 %v2464
    %3785 = vmatpush.bf16.msra.mxu0 %v2444
    %3786 = vmatpush.bf16.msra.mxu0 %v2424
    %3787 = vmatpush.bf16.msra.mxu0 %v2404
    %3788 = vmatpush.bf16.msra.mxu0 %v2384
    %3789 = vmatpush.bf16.msra.mxu0 %v2364
    %3790 = vmatmul.bf16.gmra.mxu0 %v190
    %v3791 = vpop.f32.mrf.mxu0
    %v3792 = vadd.f32 %v3779, %v3791
    %v3793 = vpop.f32.mrf.mxu0
    %3794 = vdwg.mxu0
    %3795 = vmatpush.bf16.msra.mxu0 %v2664
    %3796 = vmatpush.bf16.msra.mxu0 %v2644
    %3797 = vmatpush.bf16.msra.mxu0 %v2624
    %3798 = vmatpush.bf16.msra.mxu0 %v2604
    %3799 = vmatpush.bf16.msra.mxu0 %v2584
    %3800 = vmatpush.bf16.msra.mxu0 %v2564
    %3801 = vmatpush.bf16.msra.mxu0 %v2544
    %3802 = vmatpush.bf16.msra.mxu0 %v2524
    %3803 = vmatmul.bf16.gmra.mxu0 %v191
    %v3804 = vpop.f32.mrf.mxu0
    %v3805 = vadd.f32 %v3792, %v3804
    %v3806 = vpop.f32.mrf.mxu0
    %3807 = vdwg.mxu0
    %3808 = vmatpush.bf16.msra.mxu0 0
    %3809 = vmatpush.bf16.msra.mxu0 0
    %3810 = vmatpush.bf16.msra.mxu0 0
    %3811 = vmatpush.bf16.msra.mxu0 0
    %3812 = vmatpush.bf16.msra.mxu0 0
    %3813 = vmatpush.bf16.msra.mxu0 0
    %3814 = vmatpush.bf16.msra.mxu0 0
    %3815 = vmatpush.bf16.msra.mxu0 %v2684
    %3816 = vmatmul.bf16.gmra.mxu0 %v3195
    %v3817 = vpop.f32.mrf.mxu0
    %v3818 = vadd.f32 %v3805, %v3817
    %v3819 = vpop.f32.mrf.mxu0
    %3820 = vdwg.mxu0
    %3821 = vmatpush.bf16.msra.mxu0 %v2345
    %3822 = vmatpush.bf16.msra.mxu0 %v2325
    %3823 = vmatpush.bf16.msra.mxu0 %v2305
    %3824 = vmatpush.bf16.msra.mxu0 %v2285
    %3825 = vmatpush.bf16.msra.mxu0 %v2265
    %3826 = vmatpush.bf16.msra.mxu0 %v2245
    %3827 = vmatpush.bf16.msra.mxu0 %v2225
    %3828 = vmatpush.bf16.msra.mxu0 %v2205
    %3829 = vmatmul.bf16.gmra.mxu0 %v189
    %v3830 = vpop.f32.mrf.mxu0
    %v3831 = vadd.f32 0.0, %v3830
    %v3832 = vpop.f32.mrf.mxu0
    %3833 = vdwg.mxu0
    %3834 = vmatpush.bf16.msra.mxu0 %v2505
    %3835 = vmatpush.bf16.msra.mxu0 %v2485
    %3836 = vmatpush.bf16.msra.mxu0 %v2465
    %3837 = vmatpush.bf16.msra.mxu0 %v2445
    %3838 = vmatpush.bf16.msra.mxu0 %v2425
    %3839 = vmatpush.bf16.msra.mxu0 %v2405
    %3840 = vmatpush.bf16.msra.mxu0 %v2385
    %3841 = vmatpush.bf16.msra.mxu0 %v2365
    %3842 = vmatmul.bf16.gmra.mxu0 %v190
    %v3843 = vpop.f32.mrf.mxu0
    %v3844 = vadd.f32 %v3831, %v3843
    %v3845 = vpop.f32.mrf.mxu0
    %3846 = vdwg.mxu0
    %3847 = vmatpush.bf16.msra.mxu0 %v2665
    %3848 = vmatpush.bf16.msra.mxu0 %v2645
    %3849 = vmatpush.bf16.msra.mxu0 %v2625
    %3850 = vmatpush.bf16.msra.mxu0 %v2605
    %3851 = vmatpush.bf16.msra.mxu0 %v2585
    %3852 = vmatpush.bf16.msra.mxu0 %v2565
    %3853 = vmatpush.bf16.msra.mxu0 %v2545
    %3854 = vmatpush.bf16.msra.mxu0 %v2525
    %3855 = vmatmul.bf16.gmra.mxu0 %v191
    %v3856 = vpop.f32.mrf.mxu0
    %v3857 = vadd.f32 %v3844, %v3856
    %v3858 = vpop.f32.mrf.mxu0
    %3859 = vdwg.mxu0
    %3860 = vmatpush.bf16.msra.mxu0 0
    %3861 = vmatpush.bf16.msra.mxu0 0
    %3862 = vmatpush.bf16.msra.mxu0 0
    %3863 = vmatpush.bf16.msra.mxu0 0
    %3864 = vmatpush.bf16.msra.mxu0 0
    %3865 = vmatpush.bf16.msra.mxu0 0
    %3866 = vmatpush.bf16.msra.mxu0 0
    %3867 = vmatpush.bf16.msra.mxu0 %v2685
    %3868 = vmatmul.bf16.gmra.mxu0 %v3195
    %v3869 = vpop.f32.mrf.mxu0
    %v3870 = vadd.f32 %v3857, %v3869
    %v3871 = vpop.f32.mrf.mxu0
    %3872 = vdwg.mxu0
    %3873 = vmatpush.bf16.msra.mxu0 %v2346
    %3874 = vmatpush.bf16.msra.mxu0 %v2326
    %3875 = vmatpush.bf16.msra.mxu0 %v2306
    %3876 = vmatpush.bf16.msra.mxu0 %v2286
    %3877 = vmatpush.bf16.msra.mxu0 %v2266
    %3878 = vmatpush.bf16.msra.mxu0 %v2246
    %3879 = vmatpush.bf16.msra.mxu0 %v2226
    %3880 = vmatpush.bf16.msra.mxu0 %v2206
    %3881 = vmatmul.bf16.gmra.mxu0 %v189
    %v3882 = vpop.f32.mrf.mxu0
    %v3883 = vadd.f32 0.0, %v3882
    %v3884 = vpop.f32.mrf.mxu0
    %3885 = vdwg.mxu0
    %3886 = vmatpush.bf16.msra.mxu0 %v2506
    %3887 = vmatpush.bf16.msra.mxu0 %v2486
    %3888 = vmatpush.bf16.msra.mxu0 %v2466
    %3889 = vmatpush.bf16.msra.mxu0 %v2446
    %3890 = vmatpush.bf16.msra.mxu0 %v2426
    %3891 = vmatpush.bf16.msra.mxu0 %v2406
    %3892 = vmatpush.bf16.msra.mxu0 %v2386
    %3893 = vmatpush.bf16.msra.mxu0 %v2366
    %3894 = vmatmul.bf16.gmra.mxu0 %v190
    %v3895 = vpop.f32.mrf.mxu0
    %v3896 = vadd.f32 %v3883, %v3895
    %v3897 = vpop.f32.mrf.mxu0
    %3898 = vdwg.mxu0
    %3899 = vmatpush.bf16.msra.mxu0 %v2666
    %3900 = vmatpush.bf16.msra.mxu0 %v2646
    %3901 = vmatpush.bf16.msra.mxu0 %v2626
    %3902 = vmatpush.bf16.msra.mxu0 %v2606
    %3903 = vmatpush.bf16.msra.mxu0 %v2586
    %3904 = vmatpush.bf16.msra.mxu0 %v2566
    %3905 = vmatpush.bf16.msra.mxu0 %v2546
    %3906 = vmatpush.bf16.msra.mxu0 %v2526
    %3907 = vmatmul.bf16.gmra.mxu0 %v191
    %v3908 = vpop.f32.mrf.mxu0
    %v3909 = vadd.f32 %v3896, %v3908
    %v3910 = vpop.f32.mrf.mxu0
    %3911 = vdwg.mxu0
    %3912 = vmatpush.bf16.msra.mxu0 0
    %3913 = vmatpush.bf16.msra.mxu0 0
    %3914 = vmatpush.bf16.msra.mxu0 0
    %3915 = vmatpush.bf16.msra.mxu0 0
    %3916 = vmatpush.bf16.msra.mxu0 0
    %3917 = vmatpush.bf16.msra.mxu0 0
    %3918 = vmatpush.bf16.msra.mxu0 0
    %3919 = vmatpush.bf16.msra.mxu0 %v2686
    %3920 = vmatmul.bf16.gmra.mxu0 %v3195
    %v3921 = vpop.f32.mrf.mxu0
    %v3922 = vadd.f32 %v3909, %v3921
    %v3923 = vpop.f32.mrf.mxu0
    %3924 = vdwg.mxu0
    %3925 = vmatpush.bf16.msra.mxu0 %v2347
    %3926 = vmatpush.bf16.msra.mxu0 %v2327
    %3927 = vmatpush.bf16.msra.mxu0 %v2307
    %3928 = vmatpush.bf16.msra.mxu0 %v2287
    %3929 = vmatpush.bf16.msra.mxu0 %v2267
    %3930 = vmatpush.bf16.msra.mxu0 %v2247
    %3931 = vmatpush.bf16.msra.mxu0 %v2227
    %3932 = vmatpush.bf16.msra.mxu0 %v2207
    %3933 = vmatmul.bf16.gmra.mxu0 %v189
    %v3934 = vpop.f32.mrf.mxu0
    %v3935 = vadd.f32 0.0, %v3934
    %v3936 = vpop.f32.mrf.mxu0
    %3937 = vdwg.mxu0
    %3938 = vmatpush.bf16.msra.mxu0 %v2507
    %3939 = vmatpush.bf16.msra.mxu0 %v2487
    %3940 = vmatpush.bf16.msra.mxu0 %v2467
    %3941 = vmatpush.bf16.msra.mxu0 %v2447
    %3942 = vmatpush.bf16.msra.mxu0 %v2427
    %3943 = vmatpush.bf16.msra.mxu0 %v2407
    %3944 = vmatpush.bf16.msra.mxu0 %v2387
    %3945 = vmatpush.bf16.msra.mxu0 %v2367
    %3946 = vmatmul.bf16.gmra.mxu0 %v190
    %v3947 = vpop.f32.mrf.mxu0
    %v3948 = vadd.f32 %v3935, %v3947
    %v3949 = vpop.f32.mrf.mxu0
    %3950 = vdwg.mxu0
    %3951 = vmatpush.bf16.msra.mxu0 %v2667
    %3952 = vmatpush.bf16.msra.mxu0 %v2647
    %3953 = vmatpush.bf16.msra.mxu0 %v2627
    %3954 = vmatpush.bf16.msra.mxu0 %v2607
    %3955 = vmatpush.bf16.msra.mxu0 %v2587
    %3956 = vmatpush.bf16.msra.mxu0 %v2567
    %3957 = vmatpush.bf16.msra.mxu0 %v2547
    %3958 = vmatpush.bf16.msra.mxu0 %v2527
    %3959 = vmatmul.bf16.gmra.mxu0 %v191
    %v3960 = vpop.f32.mrf.mxu0
    %v3961 = vadd.f32 %v3948, %v3960
    %v3962 = vpop.f32.mrf.mxu0
    %3963 = vdwg.mxu0
    %3964 = vmatpush.bf16.msra.mxu0 0
    %3965 = vmatpush.bf16.msra.mxu0 0
    %3966 = vmatpush.bf16.msra.mxu0 0
    %3967 = vmatpush.bf16.msra.mxu0 0
    %3968 = vmatpush.bf16.msra.mxu0 0
    %3969 = vmatpush.bf16.msra.mxu0 0
    %3970 = vmatpush.bf16.msra.mxu0 0
    %3971 = vmatpush.bf16.msra.mxu0 %v2687
    %3972 = vmatmul.bf16.gmra.mxu0 %v3195
    %v3973 = vpop.f32.mrf.mxu0
    %v3974 = vadd.f32 %v3961, %v3973
    %v3975 = vpop.f32.mrf.mxu0
    %3976 = vdwg.mxu0
    %3977 = vmatpush.bf16.msra.mxu0 %v2348
    %3978 = vmatpush.bf16.msra.mxu0 %v2328
    %3979 = vmatpush.bf16.msra.mxu0 %v2308
    %3980 = vmatpush.bf16.msra.mxu0 %v2288
    %3981 = vmatpush.bf16.msra.mxu0 %v2268
    %3982 = vmatpush.bf16.msra.mxu0 %v2248
    %3983 = vmatpush.bf16.msra.mxu0 %v2228
    %3984 = vmatpush.bf16.msra.mxu0 %v2208
    %3985 = vmatmul.bf16.gmra.mxu0 %v189
    %v3986 = vpop.f32.mrf.mxu0
    %v3987 = vadd.f32 0.0, %v3986
    %v3988 = vpop.f32.mrf.mxu0
    %3989 = vdwg.mxu0
    %3990 = vmatpush.bf16.msra.mxu0 %v2508
    %3991 = vmatpush.bf16.msra.mxu0 %v2488
    %3992 = vmatpush.bf16.msra.mxu0 %v2468
    %3993 = vmatpush.bf16.msra.mxu0 %v2448
    %3994 = vmatpush.bf16.msra.mxu0 %v2428
    %3995 = vmatpush.bf16.msra.mxu0 %v2408
    %3996 = vmatpush.bf16.msra.mxu0 %v2388
    %3997 = vmatpush.bf16.msra.mxu0 %v2368
    %3998 = vmatmul.bf16.gmra.mxu0 %v190
    %v3999 = vpop.f32.mrf.mxu0
    %v4000 = vadd.f32 %v3987, %v3999
    %v4001 = vpop.f32.mrf.mxu0
    %4002 = vdwg.mxu0
    %4003 = vmatpush.bf16.msra.mxu0 %v2668
    %4004 = vmatpush.bf16.msra.mxu0 %v2648
    %4005 = vmatpush.bf16.msra.mxu0 %v2628
    %4006 = vmatpush.bf16.msra.mxu0 %v2608
    %4007 = vmatpush.bf16.msra.mxu0 %v2588
    %4008 = vmatpush.bf16.msra.mxu0 %v2568
    %4009 = vmatpush.bf16.msra.mxu0 %v2548
    %4010 = vmatpush.bf16.msra.mxu0 %v2528
    %4011 = vmatmul.bf16.gmra.mxu0 %v191
    %v4012 = vpop.f32.mrf.mxu0
    %v4013 = vadd.f32 %v4000, %v4012
    %v4014 = vpop.f32.mrf.mxu0
    %4015 = vdwg.mxu0
    %4016 = vmatpush.bf16.msra.mxu0 0
    %4017 = vmatpush.bf16.msra.mxu0 0
    %4018 = vmatpush.bf16.msra.mxu0 0
    %4019 = vmatpush.bf16.msra.mxu0 0
    %4020 = vmatpush.bf16.msra.mxu0 0
    %4021 = vmatpush.bf16.msra.mxu0 0
    %4022 = vmatpush.bf16.msra.mxu0 0
    %4023 = vmatpush.bf16.msra.mxu0 %v2688
    %4024 = vmatmul.bf16.gmra.mxu0 %v3195
    %v4025 = vpop.f32.mrf.mxu0
    %v4026 = vadd.f32 %v4013, %v4025
    %v4027 = vpop.f32.mrf.mxu0
    %4028 = vdwg.mxu0
    %4029 = vmatpush.bf16.msra.mxu0 %v2349
    %4030 = vmatpush.bf16.msra.mxu0 %v2329
    %4031 = vmatpush.bf16.msra.mxu0 %v2309
    %4032 = vmatpush.bf16.msra.mxu0 %v2289
    %4033 = vmatpush.bf16.msra.mxu0 %v2269
    %4034 = vmatpush.bf16.msra.mxu0 %v2249
    %4035 = vmatpush.bf16.msra.mxu0 %v2229
    %4036 = vmatpush.bf16.msra.mxu0 %v2209
    %4037 = vmatmul.bf16.gmra.mxu0 %v189
    %v4038 = vpop.f32.mrf.mxu0
    %v4039 = vadd.f32 0.0, %v4038
    %v4040 = vpop.f32.mrf.mxu0
    %4041 = vdwg.mxu0
    %4042 = vmatpush.bf16.msra.mxu0 %v2509
    %4043 = vmatpush.bf16.msra.mxu0 %v2489
    %4044 = vmatpush.bf16.msra.mxu0 %v2469
    %4045 = vmatpush.bf16.msra.mxu0 %v2449
    %4046 = vmatpush.bf16.msra.mxu0 %v2429
    %4047 = vmatpush.bf16.msra.mxu0 %v2409
    %4048 = vmatpush.bf16.msra.mxu0 %v2389
    %4049 = vmatpush.bf16.msra.mxu0 %v2369
    %4050 = vmatmul.bf16.gmra.mxu0 %v190
    %v4051 = vpop.f32.mrf.mxu0
    %v4052 = vadd.f32 %v4039, %v4051
    %v4053 = vpop.f32.mrf.mxu0
    %4054 = vdwg.mxu0
    %4055 = vmatpush.bf16.msra.mxu0 %v2669
    %4056 = vmatpush.bf16.msra.mxu0 %v2649
    %4057 = vmatpush.bf16.msra.mxu0 %v2629
    %4058 = vmatpush.bf16.msra.mxu0 %v2609
    %4059 = vmatpush.bf16.msra.mxu0 %v2589
    %4060 = vmatpush.bf16.msra.mxu0 %v2569
    %4061 = vmatpush.bf16.msra.mxu0 %v2549
    %4062 = vmatpush.bf16.msra.mxu0 %v2529
    %4063 = vmatmul.bf16.gmra.mxu0 %v191
    %v4064 = vpop.f32.mrf.mxu0
    %v4065 = vadd.f32 %v4052, %v4064
    %v4066 = vpop.f32.mrf.mxu0
    %4067 = vdwg.mxu0
    %4068 = vmatpush.bf16.msra.mxu0 0
    %4069 = vmatpush.bf16.msra.mxu0 0
    %4070 = vmatpush.bf16.msra.mxu0 0
    %4071 = vmatpush.bf16.msra.mxu0 0
    %4072 = vmatpush.bf16.msra.mxu0 0
    %4073 = vmatpush.bf16.msra.mxu0 0
    %4074 = vmatpush.bf16.msra.mxu0 0
    %4075 = vmatpush.bf16.msra.mxu0 %v2689
    %4076 = vmatmul.bf16.gmra.mxu0 %v3195
    %v4077 = vpop.f32.mrf.mxu0
    %v4078 = vadd.f32 %v4065, %v4077
    %v4079 = vpop.f32.mrf.mxu0
    %4080 = vdwg.mxu0
    %4081 = vmatpush.bf16.msra.mxu0 %v2350
    %4082 = vmatpush.bf16.msra.mxu0 %v2330
    %4083 = vmatpush.bf16.msra.mxu0 %v2310
    %4084 = vmatpush.bf16.msra.mxu0 %v2290
    %4085 = vmatpush.bf16.msra.mxu0 %v2270
    %4086 = vmatpush.bf16.msra.mxu0 %v2250
    %4087 = vmatpush.bf16.msra.mxu0 %v2230
    %4088 = vmatpush.bf16.msra.mxu0 %v2210
    %4089 = vmatmul.bf16.gmra.mxu0 %v189
    %v4090 = vpop.f32.mrf.mxu0
    %v4091 = vadd.f32 0.0, %v4090
    %v4092 = vpop.f32.mrf.mxu0
    %4093 = vdwg.mxu0
    %4094 = vmatpush.bf16.msra.mxu0 %v2510
    %4095 = vmatpush.bf16.msra.mxu0 %v2490
    %4096 = vmatpush.bf16.msra.mxu0 %v2470
    %4097 = vmatpush.bf16.msra.mxu0 %v2450
    %4098 = vmatpush.bf16.msra.mxu0 %v2430
    %4099 = vmatpush.bf16.msra.mxu0 %v2410
    %4100 = vmatpush.bf16.msra.mxu0 %v2390
    %4101 = vmatpush.bf16.msra.mxu0 %v2370
    %4102 = vmatmul.bf16.gmra.mxu0 %v190
    %v4103 = vpop.f32.mrf.mxu0
    %v4104 = vadd.f32 %v4091, %v4103
    %v4105 = vpop.f32.mrf.mxu0
    %4106 = vdwg.mxu0
    %4107 = vmatpush.bf16.msra.mxu0 %v2670
    %4108 = vmatpush.bf16.msra.mxu0 %v2650
    %4109 = vmatpush.bf16.msra.mxu0 %v2630
    %4110 = vmatpush.bf16.msra.mxu0 %v2610
    %4111 = vmatpush.bf16.msra.mxu0 %v2590
    %4112 = vmatpush.bf16.msra.mxu0 %v2570
    %4113 = vmatpush.bf16.msra.mxu0 %v2550
    %4114 = vmatpush.bf16.msra.mxu0 %v2530
    %4115 = vmatmul.bf16.gmra.mxu0 %v191
    %v4116 = vpop.f32.mrf.mxu0
    %v4117 = vadd.f32 %v4104, %v4116
    %v4118 = vpop.f32.mrf.mxu0
    %4119 = vdwg.mxu0
    %4120 = vmatpush.bf16.msra.mxu0 0
    %4121 = vmatpush.bf16.msra.mxu0 0
    %4122 = vmatpush.bf16.msra.mxu0 0
    %4123 = vmatpush.bf16.msra.mxu0 0
    %4124 = vmatpush.bf16.msra.mxu0 0
    %4125 = vmatpush.bf16.msra.mxu0 0
    %4126 = vmatpush.bf16.msra.mxu0 0
    %4127 = vmatpush.bf16.msra.mxu0 %v2690
    %4128 = vmatmul.bf16.gmra.mxu0 %v3195
    %v4129 = vpop.f32.mrf.mxu0
    %v4130 = vadd.f32 %v4117, %v4129
    %v4131 = vpop.f32.mrf.mxu0
    %4132 = vdwg.mxu0
    %4133 = vmatpush.bf16.msra.mxu0 %v2351
    %4134 = vmatpush.bf16.msra.mxu0 %v2331
    %4135 = vmatpush.bf16.msra.mxu0 %v2311
    %4136 = vmatpush.bf16.msra.mxu0 %v2291
    %4137 = vmatpush.bf16.msra.mxu0 %v2271
    %4138 = vmatpush.bf16.msra.mxu0 %v2251
    %4139 = vmatpush.bf16.msra.mxu0 %v2231
    %4140 = vmatpush.bf16.msra.mxu0 %v2211
    %4141 = vmatmul.bf16.gmra.mxu0 %v189
    %v4142 = vpop.f32.mrf.mxu0
    %v4143 = vadd.f32 0.0, %v4142
    %v4144 = vpop.f32.mrf.mxu0
    %4145 = vdwg.mxu0
    %4146 = vmatpush.bf16.msra.mxu0 %v2511
    %4147 = vmatpush.bf16.msra.mxu0 %v2491
    %4148 = vmatpush.bf16.msra.mxu0 %v2471
    %4149 = vmatpush.bf16.msra.mxu0 %v2451
    %4150 = vmatpush.bf16.msra.mxu0 %v2431
    %4151 = vmatpush.bf16.msra.mxu0 %v2411
    %4152 = vmatpush.bf16.msra.mxu0 %v2391
    %4153 = vmatpush.bf16.msra.mxu0 %v2371
    %4154 = vmatmul.bf16.gmra.mxu0 %v190
    %v4155 = vpop.f32.mrf.mxu0
    %v4156 = vadd.f32 %v4143, %v4155
    %v4157 = vpop.f32.mrf.mxu0
    %4158 = vdwg.mxu0
    %4159 = vmatpush.bf16.msra.mxu0 %v2671
    %4160 = vmatpush.bf16.msra.mxu0 %v2651
    %4161 = vmatpush.bf16.msra.mxu0 %v2631
    %4162 = vmatpush.bf16.msra.mxu0 %v2611
    %4163 = vmatpush.bf16.msra.mxu0 %v2591
    %4164 = vmatpush.bf16.msra.mxu0 %v2571
    %4165 = vmatpush.bf16.msra.mxu0 %v2551
    %4166 = vmatpush.bf16.msra.mxu0 %v2531
    %4167 = vmatmul.bf16.gmra.mxu0 %v191
    %v4168 = vpop.f32.mrf.mxu0
    %v4169 = vadd.f32 %v4156, %v4168
    %v4170 = vpop.f32.mrf.mxu0
    %4171 = vdwg.mxu0
    %4172 = vmatpush.bf16.msra.mxu0 0
    %4173 = vmatpush.bf16.msra.mxu0 0
    %4174 = vmatpush.bf16.msra.mxu0 0
    %4175 = vmatpush.bf16.msra.mxu0 0
    %4176 = vmatpush.bf16.msra.mxu0 0
    %4177 = vmatpush.bf16.msra.mxu0 0
    %4178 = vmatpush.bf16.msra.mxu0 0
    %4179 = vmatpush.bf16.msra.mxu0 %v2691
    %4180 = vmatmul.bf16.gmra.mxu0 %v3195
    %v4181 = vpop.f32.mrf.mxu0
    %v4182 = vadd.f32 %v4169, %v4181
    %v4183 = vpop.f32.mrf.mxu0
    %4184 = vdwg.mxu0
    %4185 = vmatpush.bf16.msra.mxu0 %v2352
    %4186 = vmatpush.bf16.msra.mxu0 %v2332
    %4187 = vmatpush.bf16.msra.mxu0 %v2312
    %4188 = vmatpush.bf16.msra.mxu0 %v2292
    %4189 = vmatpush.bf16.msra.mxu0 %v2272
    %4190 = vmatpush.bf16.msra.mxu0 %v2252
    %4191 = vmatpush.bf16.msra.mxu0 %v2232
    %4192 = vmatpush.bf16.msra.mxu0 %v2212
    %4193 = vmatmul.bf16.gmra.mxu0 %v189
    %v4194 = vpop.f32.mrf.mxu0
    %v4195 = vadd.f32 0.0, %v4194
    %v4196 = vpop.f32.mrf.mxu0
    %4197 = vdwg.mxu0
    %4198 = vmatpush.bf16.msra.mxu0 %v2512
    %4199 = vmatpush.bf16.msra.mxu0 %v2492
    %4200 = vmatpush.bf16.msra.mxu0 %v2472
    %4201 = vmatpush.bf16.msra.mxu0 %v2452
    %4202 = vmatpush.bf16.msra.mxu0 %v2432
    %4203 = vmatpush.bf16.msra.mxu0 %v2412
    %4204 = vmatpush.bf16.msra.mxu0 %v2392
    %4205 = vmatpush.bf16.msra.mxu0 %v2372
    %4206 = vmatmul.bf16.gmra.mxu0 %v190
    %v4207 = vpop.f32.mrf.mxu0
    %v4208 = vadd.f32 %v4195, %v4207
    %v4209 = vpop.f32.mrf.mxu0
    %4210 = vdwg.mxu0
    %4211 = vmatpush.bf16.msra.mxu0 %v2672
    %4212 = vmatpush.bf16.msra.mxu0 %v2652
    %4213 = vmatpush.bf16.msra.mxu0 %v2632
    %4214 = vmatpush.bf16.msra.mxu0 %v2612
    %4215 = vmatpush.bf16.msra.mxu0 %v2592
    %4216 = vmatpush.bf16.msra.mxu0 %v2572
    %4217 = vmatpush.bf16.msra.mxu0 %v2552
    %4218 = vmatpush.bf16.msra.mxu0 %v2532
    %4219 = vmatmul.bf16.gmra.mxu0 %v191
    %v4220 = vpop.f32.mrf.mxu0
    %v4221 = vadd.f32 %v4208, %v4220
    %v4222 = vpop.f32.mrf.mxu0
    %4223 = vdwg.mxu0
    %4224 = vmatpush.bf16.msra.mxu0 0
    %4225 = vmatpush.bf16.msra.mxu0 0
    %4226 = vmatpush.bf16.msra.mxu0 0
    %4227 = vmatpush.bf16.msra.mxu0 0
    %4228 = vmatpush.bf16.msra.mxu0 0
    %4229 = vmatpush.bf16.msra.mxu0 0
    %4230 = vmatpush.bf16.msra.mxu0 0
    %4231 = vmatpush.bf16.msra.mxu0 %v2692
    %4232 = vmatmul.bf16.gmra.mxu0 %v3195
    %v4233 = vpop.f32.mrf.mxu0
    %v4234 = vadd.f32 %v4221, %v4233
    %v4235 = vpop.f32.mrf.mxu0
    %4236 = vdwg.mxu0
    %v4237 = vmax.f32 %v3246, %v3506
    %v4238 = vmax.f32 %v3298, %v3558
    %v4239 = vmax.f32 %v3350, %v3610
    %v4240 = vmax.f32 %v3402, %v3662
    %v4241 = vmax.f32 %v3454, %v3714
    %v4242 = vmax.f32 %v3766, %v4026
    %v4243 = vmax.f32 %v3818, %v4078
    %v4244 = vmax.f32 %v3870, %v4130
    %v4245 = vmax.f32 %v3922, %v4182
    %v4246 = vmax.f32 %v3974, %v4234
    %v4247 = vmax.f32 %v4237, %v4242
    %v4248 = vmax.f32 %v4238, %v4243
    %v4249 = vmax.f32 %v4239, %v4244
    %v4250 = vmax.f32 %v4240, %v4245
    %v4251 = vmax.f32 %v4241, %v4246
    %v4252 = vld [vmem:[#allocation4] sm:$0x1f]
    %v4254 = vperm.slane %v4252, 0
    %v4255 = vperm.slane %v4252, 1
    %v4256 = vperm.slane %v4252, 2
    %v4257 = vperm.slane %v4252, 3
    %v4258 = vperm.slane %v4252, 4
    %v4264 = vadd.f32 %v4247, %v4254
    %v4265 = vadd.f32 %v4248, %v4255
    %v4266 = vadd.f32 %v4249, %v4256
    %v4267 = vadd.f32 %v4250, %v4257
    %v4268 = vadd.f32 %v4251, %v4258
    %v4269 = vmax.f32 %v4264, 0.0
    %v4270 = vmax.f32 %v4265, 0.0
    %v4271 = vmax.f32 %v4266, 0.0
    %v4272 = vmax.f32 %v4267, 0.0
    %v4273 = vmax.f32 %v4268, 0.0
    %v4274 = vpack.c.bf16 %v4269, %v4269
    %v4275 = vpack.c.bf16 %v4270, %v4270
    %v4276 = vpack.c.bf16 %v4271, %v4271
    %v4277 = vpack.c.bf16 %v4272, %v4272
    %v4278 = vpack.c.bf16 %v4273, %v4273
    %v4279 = vld [vmem:[#allocation6] sm:$0xff]
    %v4280 = vld [vmem:[#allocation6 + $0x8] sm:$0xff]
    %v4281 = vld [vmem:[#allocation6 + $0x10] sm:$0xff]
    %v4282 = vld [vmem:[#allocation6 + $0x18] sm:$0xff]
    %v4283 = vld [vmem:[#allocation6 + $0x20] sm:$0xff]
    %v4284 = vld [vmem:[#allocation6 + $0x28] sm:$0xff]
    %v4285 = vld [vmem:[#allocation6 + $0x30] sm:$0xff]
    %v4286 = vld [vmem:[#allocation6 + $0x38] sm:$0xff]
    %v4287 = vld [vmem:[#allocation6 + $0x40] sm:$0xff]
    %v4288 = vld [vmem:[#allocation6 + $0x48] sm:$0xff]
    %v4289 = vld [vmem:[#allocation6 + $0x50] sm:$0xff]
    %v4290 = vld [vmem:[#allocation6 + $0x58] sm:$0xff]
    %v4291 = vld [vmem:[#allocation6 + $0x60] sm:$0xff]
    %v4292 = vld [vmem:[#allocation6 + $0x68] sm:$0xff]
    %v4293 = vld [vmem:[#allocation6 + $0x70] sm:$0xff]
    %v4294 = vld [vmem:[#allocation6 + $0x78] sm:$0xff]
    %v4295 = vld [vmem:[#allocation6 + $0x80] sm:$0xff]
    %v4296 = vld [vmem:[#allocation6 + $0x88] sm:$0xff]
    %v4297 = vld [vmem:[#allocation6 + $0x90] sm:$0xff]
    %v4298 = vld [vmem:[#allocation6 + $0x98] sm:$0xff]
    %v4299 = vld [vmem:[#allocation6 + $0xa0] sm:$0xff]
    %v4300 = vld [vmem:[#allocation6 + $0xa8] sm:$0xff]
    %v4301 = vld [vmem:[#allocation6 + $0xb0] sm:$0xff]
    %v4302 = vld [vmem:[#allocation6 + $0xb8] sm:$0xff]
    %v4303 = vld [vmem:[#allocation6 + $0xc0] sm:$0xff]
    %v4304 = vld [vmem:[#allocation6 + $0xc8] sm:$0xff]
    %v4305 = vld [vmem:[#allocation6 + $0xd0] sm:$0xff]
    %v4306 = vld [vmem:[#allocation6 + $0xd8] sm:$0xff]
    %v4307 = vld [vmem:[#allocation6 + $0xe0] sm:$0xff]
    %v4308 = vld [vmem:[#allocation6 + $0xe8] sm:$0xff]
    %v4309 = vld [vmem:[#allocation6 + $0xf0] sm:$0xff]
    %v4310 = vld [vmem:[#allocation6 + $0xf8] sm:$0xff]
    %v4311 = vld [vmem:[#allocation6 + $0x100] sm:$0xff]
    %v4312 = vld [vmem:[#allocation6 + $0x108] sm:$0xff]
    %v4313 = vld [vmem:[#allocation6 + $0x110] sm:$0xff]
    %v4314 = vld [vmem:[#allocation6 + $0x118] sm:$0xff]
    %v4315 = vld [vmem:[#allocation6 + $0x120] sm:$0xff]
    %v4316 = vld [vmem:[#allocation6 + $0x128] sm:$0xff]
    %v4317 = vld [vmem:[#allocation6 + $0x130] sm:$0xff]
    %v4318 = vld [vmem:[#allocation6 + $0x138] sm:$0xff]
    %v4319 = vld [vmem:[#allocation6 + $0x140] sm:$0xff]
    %v4320 = vld [vmem:[#allocation6 + $0x148] sm:$0xff]
    %v4321 = vld [vmem:[#allocation6 + $0x150] sm:$0xff]
    %v4322 = vld [vmem:[#allocation6 + $0x158] sm:$0xff]
    %v4323 = vld [vmem:[#allocation6 + $0x160] sm:$0xff]
    %v4324 = vld [vmem:[#allocation6 + $0x168] sm:$0xff]
    %v4325 = vld [vmem:[#allocation6 + $0x170] sm:$0xff]
    %v4326 = vld [vmem:[#allocation6 + $0x178] sm:$0xff]
    %v4327 = vld [vmem:[#allocation6 + $0x180] sm:$0xff]
    %v4328 = vld [vmem:[#allocation6 + $0x188] sm:$0xff]
    %v4329 = vld [vmem:[#allocation6 + $0x190] sm:$0xff]
    %v4330 = vld [vmem:[#allocation6 + $0x198] sm:$0xff]
    %v4331 = vld [vmem:[#allocation6 + $0x1a0] sm:$0xff]
    %v4332 = vld [vmem:[#allocation6 + $0x1a8] sm:$0xff]
    %v4333 = vld [vmem:[#allocation6 + $0x1b0] sm:$0xff]
    %v4334 = vld [vmem:[#allocation6 + $0x1b8] sm:$0xff]
    %v4335 = vld [vmem:[#allocation6 + $0x1c0] sm:$0xff]
    %v4336 = vld [vmem:[#allocation6 + $0x1c8] sm:$0xff]
    %v4337 = vld [vmem:[#allocation6 + $0x1d0] sm:$0xff]
    %v4338 = vld [vmem:[#allocation6 + $0x1d8] sm:$0xff]
    %v4339 = vld [vmem:[#allocation6 + $0x1e0] sm:$0xff]
    %v4340 = vld [vmem:[#allocation6 + $0x1e8] sm:$0xff]
    %v4341 = vld [vmem:[#allocation6 + $0x1f0] sm:$0xff]
    %v4342 = vld [vmem:[#allocation6 + $0x1f8] sm:$0xff]
    %v4343 = vld [vmem:[#allocation6 + $0x200] sm:$0xff]
    %v4344 = vld [vmem:[#allocation6 + $0x208] sm:$0xff]
    %v4345 = vld [vmem:[#allocation6 + $0x210] sm:$0xff]
    %v4346 = vld [vmem:[#allocation6 + $0x218] sm:$0xff]
    %v4347 = vld [vmem:[#allocation6 + $0x220] sm:$0xff]
    %v4348 = vld [vmem:[#allocation6 + $0x228] sm:$0xff]
    %v4349 = vld [vmem:[#allocation6 + $0x230] sm:$0xff]
    %v4350 = vld [vmem:[#allocation6 + $0x238] sm:$0xff]
    %v4351 = vld [vmem:[#allocation6 + $0x240] sm:$0xff]
    %v4352 = vld [vmem:[#allocation6 + $0x248] sm:$0xff]
    %v4353 = vld [vmem:[#allocation6 + $0x250] sm:$0xff]
    %v4354 = vld [vmem:[#allocation6 + $0x258] sm:$0xff]
    %v4355 = vld [vmem:[#allocation6 + $0x260] sm:$0xff]
    %v4356 = vld [vmem:[#allocation6 + $0x268] sm:$0xff]
    %v4357 = vld [vmem:[#allocation6 + $0x270] sm:$0xff]
    %v4358 = vld [vmem:[#allocation6 + $0x278] sm:$0xff]
    %v4359 = vld [vmem:[#allocation6 + $0x280] sm:$0xff]
    %v4360 = vld [vmem:[#allocation6 + $0x288] sm:$0xff]
    %v4361 = vld [vmem:[#allocation6 + $0x290] sm:$0xff]
    %v4362 = vld [vmem:[#allocation6 + $0x298] sm:$0xff]
    %v4363 = vld [vmem:[#allocation6 + $0x2a0] sm:$0xff]
    %v4364 = vld [vmem:[#allocation6 + $0x2a8] sm:$0xff]
    %v4365 = vld [vmem:[#allocation6 + $0x2b0] sm:$0xff]
    %v4366 = vld [vmem:[#allocation6 + $0x2b8] sm:$0xff]
    %v4367 = vld [vmem:[#allocation6 + $0x2c0] sm:$0xff]
    %v4368 = vld [vmem:[#allocation6 + $0x2c8] sm:$0xff]
    %v4369 = vld [vmem:[#allocation6 + $0x2d0] sm:$0xff]
    %v4370 = vld [vmem:[#allocation6 + $0x2d8] sm:$0xff]
    %v4371 = vld [vmem:[#allocation6 + $0x2e0] sm:$0xff]
    %v4372 = vld [vmem:[#allocation6 + $0x2e8] sm:$0xff]
    %v4373 = vld [vmem:[#allocation6 + $0x2f0] sm:$0xff]
    %v4374 = vld [vmem:[#allocation6 + $0x2f8] sm:$0xff]
    %v4375 = vld [vmem:[#allocation6 + $0x300] sm:$0xff]
    %v4376 = vld [vmem:[#allocation6 + $0x308] sm:$0xff]
    %v4377 = vld [vmem:[#allocation6 + $0x310] sm:$0xff]
    %v4378 = vld [vmem:[#allocation6 + $0x318] sm:$0xff]
    %v4379 = vld [vmem:[#allocation6 + $0x320] sm:$0xff]
    %v4380 = vld [vmem:[#allocation6 + $0x328] sm:$0xff]
    %v4381 = vld [vmem:[#allocation6 + $0x330] sm:$0xff]
    %v4382 = vld [vmem:[#allocation6 + $0x338] sm:$0xff]
    %v4383 = vld [vmem:[#allocation6 + $0x340] sm:$0xff]
    %v4384 = vld [vmem:[#allocation6 + $0x348] sm:$0xff]
    %v4385 = vld [vmem:[#allocation6 + $0x350] sm:$0xff]
    %v4386 = vld [vmem:[#allocation6 + $0x358] sm:$0xff]
    %v4387 = vld [vmem:[#allocation6 + $0x360] sm:$0xff]
    %v4388 = vld [vmem:[#allocation6 + $0x368] sm:$0xff]
    %v4389 = vld [vmem:[#allocation6 + $0x370] sm:$0xff]
    %v4390 = vld [vmem:[#allocation6 + $0x378] sm:$0xff]
    %v4391 = vld [vmem:[#allocation6 + $0x380] sm:$0xff]
    %v4392 = vld [vmem:[#allocation6 + $0x388] sm:$0xff]
    %v4393 = vld [vmem:[#allocation6 + $0x390] sm:$0xff]
    %v4394 = vld [vmem:[#allocation6 + $0x398] sm:$0xff]
    %v4395 = vld [vmem:[#allocation6 + $0x3a0] sm:$0xff]
    %v4396 = vld [vmem:[#allocation6 + $0x3a8] sm:$0xff]
    %v4397 = vld [vmem:[#allocation6 + $0x3b0] sm:$0xff]
    %v4398 = vld [vmem:[#allocation6 + $0x3b8] sm:$0xff]
    %v4399 = vld [vmem:[#allocation6 + $0x3c0] sm:$0xff]
    %v4400 = vld [vmem:[#allocation6 + $0x3c8] sm:$0xff]
    %v4401 = vld [vmem:[#allocation6 + $0x3d0] sm:$0xff]
    %v4402 = vld [vmem:[#allocation6 + $0x3d8] sm:$0xff]
    %v4403 = vld [vmem:[#allocation6 + $0x3e0] sm:$0xff]
    %v4404 = vld [vmem:[#allocation6 + $0x3e8] sm:$0xff]
    %v4405 = vld [vmem:[#allocation6 + $0x3f0] sm:$0xff]
    %v4406 = vld [vmem:[#allocation6 + $0x3f8] sm:$0xff]
    %v4407 = vld [vmem:[#allocation6 + $0x400] sm:$0xff]
    %v4408 = vld [vmem:[#allocation6 + $0x408] sm:$0xff]
    %v4409 = vld [vmem:[#allocation6 + $0x410] sm:$0xff]
    %v4410 = vld [vmem:[#allocation6 + $0x418] sm:$0xff]
    %v4411 = vld [vmem:[#allocation6 + $0x420] sm:$0xff]
    %v4412 = vld [vmem:[#allocation6 + $0x428] sm:$0xff]
    %v4413 = vld [vmem:[#allocation6 + $0x430] sm:$0xff]
    %v4414 = vld [vmem:[#allocation6 + $0x438] sm:$0xff]
    %v4415 = vld [vmem:[#allocation6 + $0x440] sm:$0xff]
    %v4416 = vld [vmem:[#allocation6 + $0x448] sm:$0xff]
    %v4417 = vld [vmem:[#allocation6 + $0x450] sm:$0xff]
    %v4418 = vld [vmem:[#allocation6 + $0x458] sm:$0xff]
    %v4419 = vld [vmem:[#allocation6 + $0x460] sm:$0xff]
    %v4420 = vld [vmem:[#allocation6 + $0x468] sm:$0xff]
    %v4421 = vld [vmem:[#allocation6 + $0x470] sm:$0xff]
    %v4422 = vld [vmem:[#allocation6 + $0x478] sm:$0xff]
    %v4423 = vld [vmem:[#allocation6 + $0x480] sm:$0xff]
    %v4424 = vld [vmem:[#allocation6 + $0x488] sm:$0xff]
    %v4425 = vld [vmem:[#allocation6 + $0x490] sm:$0xff]
    %v4426 = vld [vmem:[#allocation6 + $0x498] sm:$0xff]
    %v4427 = vld [vmem:[#allocation6 + $0x4a0] sm:$0xff]
    %v4428 = vld [vmem:[#allocation6 + $0x4a8] sm:$0xff]
    %v4429 = vld [vmem:[#allocation6 + $0x4b0] sm:$0xff]
    %v4430 = vld [vmem:[#allocation6 + $0x4b8] sm:$0xff]
    %v4431 = vld [vmem:[#allocation6 + $0x4c0] sm:$0xff]
    %v4432 = vld [vmem:[#allocation6 + $0x4c8] sm:$0xff]
    %v4433 = vld [vmem:[#allocation6 + $0x4d0] sm:$0xff]
    %v4434 = vld [vmem:[#allocation6 + $0x4d8] sm:$0xff]
    %v4435 = vld [vmem:[#allocation6 + $0x4e0] sm:$0xff]
    %v4436 = vld [vmem:[#allocation6 + $0x4e8] sm:$0xff]
    %v4437 = vld [vmem:[#allocation6 + $0x4f0] sm:$0xff]
    %v4438 = vld [vmem:[#allocation6 + $0x4f8] sm:$0xff]
    %v4439 = vld [vmem:[#allocation6 + $0x500] sm:$0xff]
    %v4440 = vld [vmem:[#allocation6 + $0x508] sm:$0xff]
    %v4441 = vld [vmem:[#allocation6 + $0x510] sm:$0xff]
    %v4442 = vld [vmem:[#allocation6 + $0x518] sm:$0xff]
    %v4443 = vld [vmem:[#allocation6 + $0x520] sm:$0xff]
    %v4444 = vld [vmem:[#allocation6 + $0x528] sm:$0xff]
    %v4445 = vld [vmem:[#allocation6 + $0x530] sm:$0xff]
    %v4446 = vld [vmem:[#allocation6 + $0x538] sm:$0xff]
    %v4447 = vld [vmem:[#allocation6 + $0x540] sm:$0xff]
    %v4448 = vld [vmem:[#allocation6 + $0x548] sm:$0xff]
    %v4449 = vld [vmem:[#allocation6 + $0x550] sm:$0xff]
    %v4450 = vld [vmem:[#allocation6 + $0x558] sm:$0xff]
    %v4451 = vld [vmem:[#allocation6 + $0x560] sm:$0xff]
    %v4452 = vld [vmem:[#allocation6 + $0x568] sm:$0xff]
    %v4453 = vld [vmem:[#allocation6 + $0x570] sm:$0xff]
    %v4454 = vld [vmem:[#allocation6 + $0x578] sm:$0xff]
    %v4455 = vld [vmem:[#allocation6 + $0x580] sm:$0xff]
    %v4456 = vld [vmem:[#allocation6 + $0x588] sm:$0xff]
    %v4457 = vld [vmem:[#allocation6 + $0x590] sm:$0xff]
    %v4458 = vld [vmem:[#allocation6 + $0x598] sm:$0xff]
    %v4459 = vld [vmem:[#allocation6 + $0x5a0] sm:$0xff]
    %v4460 = vld [vmem:[#allocation6 + $0x5a8] sm:$0xff]
    %v4461 = vld [vmem:[#allocation6 + $0x5b0] sm:$0xff]
    %v4462 = vld [vmem:[#allocation6 + $0x5b8] sm:$0xff]
    %v4463 = vld [vmem:[#allocation6 + $0x5c0] sm:$0xff]
    %v4464 = vld [vmem:[#allocation6 + $0x5c8] sm:$0xff]
    %v4465 = vld [vmem:[#allocation6 + $0x5d0] sm:$0xff]
    %v4466 = vld [vmem:[#allocation6 + $0x5d8] sm:$0xff]
    %v4467 = vld [vmem:[#allocation6 + $0x5e0] sm:$0xff]
    %v4468 = vld [vmem:[#allocation6 + $0x5e8] sm:$0xff]
    %v4469 = vld [vmem:[#allocation6 + $0x5f0] sm:$0xff]
    %v4470 = vld [vmem:[#allocation6 + $0x5f8] sm:$0xff]
    %v4471 = vld [vmem:[#allocation6 + $0x600] sm:$0xff]
    %v4472 = vld [vmem:[#allocation6 + $0x608] sm:$0xff]
    %v4473 = vld [vmem:[#allocation6 + $0x610] sm:$0xff]
    %v4474 = vld [vmem:[#allocation6 + $0x618] sm:$0xff]
    %v4475 = vld [vmem:[#allocation6 + $0x620] sm:$0xff]
    %v4476 = vld [vmem:[#allocation6 + $0x628] sm:$0xff]
    %v4477 = vld [vmem:[#allocation6 + $0x630] sm:$0xff]
    %v4478 = vld [vmem:[#allocation6 + $0x638] sm:$0xff]
    %v4479 = vld [vmem:[#allocation6 + $0x640] sm:$0xff]
    %v4480 = vld [vmem:[#allocation6 + $0x648] sm:$0xff]
    %v4481 = vld [vmem:[#allocation6 + $0x650] sm:$0xff]
    %v4482 = vld [vmem:[#allocation6 + $0x658] sm:$0xff]
    %v4483 = vld [vmem:[#allocation6 + $0x660] sm:$0xff]
    %v4484 = vld [vmem:[#allocation6 + $0x668] sm:$0xff]
    %v4485 = vld [vmem:[#allocation6 + $0x670] sm:$0xff]
    %v4486 = vld [vmem:[#allocation6 + $0x678] sm:$0xff]
    %v4487 = vld [vmem:[#allocation6 + $0x680] sm:$0xff]
    %v4488 = vld [vmem:[#allocation6 + $0x688] sm:$0xff]
    %v4489 = vld [vmem:[#allocation6 + $0x690] sm:$0xff]
    %v4490 = vld [vmem:[#allocation6 + $0x698] sm:$0xff]
    %v4491 = vld [vmem:[#allocation6 + $0x6a0] sm:$0xff]
    %v4492 = vld [vmem:[#allocation6 + $0x6a8] sm:$0xff]
    %v4493 = vld [vmem:[#allocation6 + $0x6b0] sm:$0xff]
    %v4494 = vld [vmem:[#allocation6 + $0x6b8] sm:$0xff]
    %v4495 = vld [vmem:[#allocation6 + $0x6c0] sm:$0xff]
    %v4496 = vld [vmem:[#allocation6 + $0x6c8] sm:$0xff]
    %v4497 = vld [vmem:[#allocation6 + $0x6d0] sm:$0xff]
    %v4498 = vld [vmem:[#allocation6 + $0x6d8] sm:$0xff]
    %v4499 = vld [vmem:[#allocation6 + $0x6e0] sm:$0xff]
    %v4500 = vld [vmem:[#allocation6 + $0x6e8] sm:$0xff]
    %v4501 = vld [vmem:[#allocation6 + $0x6f0] sm:$0xff]
    %v4502 = vld [vmem:[#allocation6 + $0x6f8] sm:$0xff]
    %v4503 = vld [vmem:[#allocation6 + $0x700] sm:$0xff]
    %v4504 = vld [vmem:[#allocation6 + $0x708] sm:$0xff]
    %v4505 = vld [vmem:[#allocation6 + $0x710] sm:$0xff]
    %v4506 = vld [vmem:[#allocation6 + $0x718] sm:$0xff]
    %v4507 = vld [vmem:[#allocation6 + $0x720] sm:$0xff]
    %v4508 = vld [vmem:[#allocation6 + $0x728] sm:$0xff]
    %v4509 = vld [vmem:[#allocation6 + $0x730] sm:$0xff]
    %v4510 = vld [vmem:[#allocation6 + $0x738] sm:$0xff]
    %v4511 = vld [vmem:[#allocation6 + $0x740] sm:$0xff]
    %v4512 = vld [vmem:[#allocation6 + $0x748] sm:$0xff]
    %v4513 = vld [vmem:[#allocation6 + $0x750] sm:$0xff]
    %v4514 = vld [vmem:[#allocation6 + $0x758] sm:$0xff]
    %v4515 = vld [vmem:[#allocation6 + $0x760] sm:$0xff]
    %v4516 = vld [vmem:[#allocation6 + $0x768] sm:$0xff]
    %v4517 = vld [vmem:[#allocation6 + $0x770] sm:$0xff]
    %v4518 = vld [vmem:[#allocation6 + $0x778] sm:$0xff]
    %v4519 = vld [vmem:[#allocation6 + $0x780] sm:$0xff]
    %v4520 = vld [vmem:[#allocation6 + $0x788] sm:$0xff]
    %v4521 = vld [vmem:[#allocation6 + $0x790] sm:$0xff]
    %v4522 = vld [vmem:[#allocation6 + $0x798] sm:$0xff]
    %v4523 = vld [vmem:[#allocation6 + $0x7a0] sm:$0xff]
    %v4524 = vld [vmem:[#allocation6 + $0x7a8] sm:$0xff]
    %v4525 = vld [vmem:[#allocation6 + $0x7b0] sm:$0xff]
    %v4526 = vld [vmem:[#allocation6 + $0x7b8] sm:$0xff]
    %v4527 = vld [vmem:[#allocation6 + $0x7c0] sm:$0xff]
    %v4528 = vld [vmem:[#allocation6 + $0x7c8] sm:$0xff]
    %v4529 = vld [vmem:[#allocation6 + $0x7d0] sm:$0xff]
    %v4530 = vld [vmem:[#allocation6 + $0x7d8] sm:$0xff]
    %v4531 = vld [vmem:[#allocation6 + $0x7e0] sm:$0xff]
    %v4532 = vld [vmem:[#allocation6 + $0x7e8] sm:$0xff]
    %v4533 = vld [vmem:[#allocation6 + $0x7f0] sm:$0xff]
    %v4534 = vld [vmem:[#allocation6 + $0x7f8] sm:$0xff]
    %v4535 = vld [vmem:[#allocation6 + $0x800] sm:$0xff]
    %v4536 = vld [vmem:[#allocation6 + $0x808] sm:$0xff]
    %v4537 = vld [vmem:[#allocation6 + $0x810] sm:$0xff]
    %v4538 = vld [vmem:[#allocation6 + $0x818] sm:$0xff]
    %v4539 = vld [vmem:[#allocation6 + $0x820] sm:$0xff]
    %v4540 = vld [vmem:[#allocation6 + $0x828] sm:$0xff]
    %v4541 = vld [vmem:[#allocation6 + $0x830] sm:$0xff]
    %v4542 = vld [vmem:[#allocation6 + $0x838] sm:$0xff]
    %v4543 = vld [vmem:[#allocation6 + $0x840] sm:$0xff]
    %v4544 = vld [vmem:[#allocation6 + $0x848] sm:$0xff]
    %v4545 = vld [vmem:[#allocation6 + $0x850] sm:$0xff]
    %v4546 = vld [vmem:[#allocation6 + $0x858] sm:$0xff]
    %v4547 = vld [vmem:[#allocation6 + $0x860] sm:$0xff]
    %v4548 = vld [vmem:[#allocation6 + $0x868] sm:$0xff]
    %v4549 = vld [vmem:[#allocation6 + $0x870] sm:$0xff]
    %v4550 = vld [vmem:[#allocation6 + $0x878] sm:$0xff]
    %v4551 = vld [vmem:[#allocation6 + $0x880] sm:$0xff]
    %v4552 = vld [vmem:[#allocation6 + $0x888] sm:$0xff]
    %v4553 = vld [vmem:[#allocation6 + $0x890] sm:$0xff]
    %v4554 = vld [vmem:[#allocation6 + $0x898] sm:$0xff]
    %v4555 = vld [vmem:[#allocation6 + $0x8a0] sm:$0xff]
    %v4556 = vld [vmem:[#allocation6 + $0x8a8] sm:$0xff]
    %v4557 = vld [vmem:[#allocation6 + $0x8b0] sm:$0xff]
    %v4558 = vld [vmem:[#allocation6 + $0x8b8] sm:$0xff]
    %v4559 = vld [vmem:[#allocation6 + $0x8c0] sm:$0xff]
    %v4560 = vld [vmem:[#allocation6 + $0x8c8] sm:$0xff]
    %v4561 = vld [vmem:[#allocation6 + $0x8d0] sm:$0xff]
    %v4562 = vld [vmem:[#allocation6 + $0x8d8] sm:$0xff]
    %v4563 = vld [vmem:[#allocation6 + $0x8e0] sm:$0xff]
    %v4564 = vld [vmem:[#allocation6 + $0x8e8] sm:$0xff]
    %v4565 = vld [vmem:[#allocation6 + $0x8f0] sm:$0xff]
    %v4566 = vld [vmem:[#allocation6 + $0x8f8] sm:$0xff]
    %v4567 = vld [vmem:[#allocation6 + $0x900] sm:$0xff]
    %v4568 = vld [vmem:[#allocation6 + $0x908] sm:$0xff]
    %v4569 = vld [vmem:[#allocation6 + $0x910] sm:$0xff]
    %v4570 = vld [vmem:[#allocation6 + $0x918] sm:$0xff]
    %v4571 = vld [vmem:[#allocation6 + $0x920] sm:$0xff]
    %v4572 = vld [vmem:[#allocation6 + $0x928] sm:$0xff]
    %v4573 = vld [vmem:[#allocation6 + $0x930] sm:$0xff]
    %v4574 = vld [vmem:[#allocation6 + $0x938] sm:$0xff]
    %v4575 = vld [vmem:[#allocation6 + $0x940] sm:$0xff]
    %v4576 = vld [vmem:[#allocation6 + $0x948] sm:$0xff]
    %v4577 = vld [vmem:[#allocation6 + $0x950] sm:$0xff]
    %v4578 = vld [vmem:[#allocation6 + $0x958] sm:$0xff]
    %v4579 = vld [vmem:[#allocation6 + $0x960] sm:$0xff]
    %v4580 = vld [vmem:[#allocation6 + $0x968] sm:$0xff]
    %v4581 = vld [vmem:[#allocation6 + $0x970] sm:$0xff]
    %v4582 = vld [vmem:[#allocation6 + $0x978] sm:$0xff]
    %v4583 = vld [vmem:[#allocation6 + $0x980] sm:$0xff]
    %v4584 = vld [vmem:[#allocation6 + $0x988] sm:$0xff]
    %v4585 = vld [vmem:[#allocation6 + $0x990] sm:$0xff]
    %v4586 = vld [vmem:[#allocation6 + $0x998] sm:$0xff]
    %v4587 = vld [vmem:[#allocation6 + $0x9a0] sm:$0xff]
    %v4588 = vld [vmem:[#allocation6 + $0x9a8] sm:$0xff]
    %v4589 = vld [vmem:[#allocation6 + $0x9b0] sm:$0xff]
    %v4590 = vld [vmem:[#allocation6 + $0x9b8] sm:$0xff]
    %v4591 = vld [vmem:[#allocation6 + $0x9c0] sm:$0xff]
    %v4592 = vld [vmem:[#allocation6 + $0x9c8] sm:$0xff]
    %v4593 = vld [vmem:[#allocation6 + $0x9d0] sm:$0xff]
    %v4594 = vld [vmem:[#allocation6 + $0x9d8] sm:$0xff]
    %v4595 = vld [vmem:[#allocation6 + $0x9e0] sm:$0xff]
    %v4596 = vld [vmem:[#allocation6 + $0x9e8] sm:$0xff]
    %v4597 = vld [vmem:[#allocation6 + $0x9f0] sm:$0xff]
    %v4598 = vld [vmem:[#allocation6 + $0x9f8] sm:$0xff]
    %v4599 = vld [vmem:[#allocation6 + $0xa00] sm:$0xff]
    %v4600 = vld [vmem:[#allocation6 + $0xa08] sm:$0xff]
    %v4601 = vld [vmem:[#allocation6 + $0xa10] sm:$0xff]
    %v4602 = vld [vmem:[#allocation6 + $0xa18] sm:$0xff]
    %v4603 = vld [vmem:[#allocation6 + $0xa20] sm:$0xff]
    %v4604 = vld [vmem:[#allocation6 + $0xa28] sm:$0xff]
    %v4605 = vld [vmem:[#allocation6 + $0xa30] sm:$0xff]
    %v4606 = vld [vmem:[#allocation6 + $0xa38] sm:$0xff]
    %v4607 = vld [vmem:[#allocation6 + $0xa40] sm:$0xff]
    %v4608 = vld [vmem:[#allocation6 + $0xa48] sm:$0xff]
    %v4609 = vld [vmem:[#allocation6 + $0xa50] sm:$0xff]
    %v4610 = vld [vmem:[#allocation6 + $0xa58] sm:$0xff]
    %v4611 = vld [vmem:[#allocation6 + $0xa60] sm:$0xff]
    %v4612 = vld [vmem:[#allocation6 + $0xa68] sm:$0xff]
    %v4613 = vld [vmem:[#allocation6 + $0xa70] sm:$0xff]
    %v4614 = vld [vmem:[#allocation6 + $0xa78] sm:$0xff]
    %v4615 = vld [vmem:[#allocation6 + $0xa80] sm:$0xff]
    %v4616 = vld [vmem:[#allocation6 + $0xa88] sm:$0xff]
    %v4617 = vld [vmem:[#allocation6 + $0xa90] sm:$0xff]
    %v4618 = vld [vmem:[#allocation6 + $0xa98] sm:$0xff]
    %v4619 = vld [vmem:[#allocation6 + $0xaa0] sm:$0xff]
    %v4620 = vld [vmem:[#allocation6 + $0xaa8] sm:$0xff]
    %v4621 = vld [vmem:[#allocation6 + $0xab0] sm:$0xff]
    %v4622 = vld [vmem:[#allocation6 + $0xab8] sm:$0xff]
    %v4623 = vld [vmem:[#allocation6 + $0xac0] sm:$0xff]
    %v4624 = vld [vmem:[#allocation6 + $0xac8] sm:$0xff]
    %v4625 = vld [vmem:[#allocation6 + $0xad0] sm:$0xff]
    %v4626 = vld [vmem:[#allocation6 + $0xad8] sm:$0xff]
    %v4627 = vld [vmem:[#allocation6 + $0xae0] sm:$0xff]
    %v4628 = vld [vmem:[#allocation6 + $0xae8] sm:$0xff]
    %v4629 = vld [vmem:[#allocation6 + $0xaf0] sm:$0xff]
    %v4630 = vld [vmem:[#allocation6 + $0xaf8] sm:$0xff]
    %v4631 = vld [vmem:[#allocation6 + $0xb00] sm:$0xff]
    %v4632 = vld [vmem:[#allocation6 + $0xb08] sm:$0xff]
    %v4633 = vld [vmem:[#allocation6 + $0xb10] sm:$0xff]
    %v4634 = vld [vmem:[#allocation6 + $0xb18] sm:$0xff]
    %v4635 = vld [vmem:[#allocation6 + $0xb20] sm:$0xff]
    %v4636 = vld [vmem:[#allocation6 + $0xb28] sm:$0xff]
    %v4637 = vld [vmem:[#allocation6 + $0xb30] sm:$0xff]
    %v4638 = vld [vmem:[#allocation6 + $0xb38] sm:$0xff]
    %v4639 = vld [vmem:[#allocation6 + $0xb40] sm:$0xff]
    %v4640 = vld [vmem:[#allocation6 + $0xb48] sm:$0xff]
    %v4641 = vld [vmem:[#allocation6 + $0xb50] sm:$0xff]
    %v4642 = vld [vmem:[#allocation6 + $0xb58] sm:$0xff]
    %v4643 = vld [vmem:[#allocation6 + $0xb60] sm:$0xff]
    %v4644 = vld [vmem:[#allocation6 + $0xb68] sm:$0xff]
    %v4645 = vld [vmem:[#allocation6 + $0xb70] sm:$0xff]
    %v4646 = vld [vmem:[#allocation6 + $0xb78] sm:$0xff]
    %v4647 = vld [vmem:[#allocation6 + $0xb80] sm:$0xff]
    %v4648 = vld [vmem:[#allocation6 + $0xb88] sm:$0xff]
    %v4649 = vld [vmem:[#allocation6 + $0xb90] sm:$0xff]
    %v4650 = vld [vmem:[#allocation6 + $0xb98] sm:$0xff]
    %v4651 = vld [vmem:[#allocation6 + $0xba0] sm:$0xff]
    %v4652 = vld [vmem:[#allocation6 + $0xba8] sm:$0xff]
    %v4653 = vld [vmem:[#allocation6 + $0xbb0] sm:$0xff]
    %v4654 = vld [vmem:[#allocation6 + $0xbb8] sm:$0xff]
    %v4655 = vld [vmem:[#allocation6 + $0xbc0] sm:$0xff]
    %v4656 = vld [vmem:[#allocation6 + $0xbc8] sm:$0xff]
    %v4657 = vld [vmem:[#allocation6 + $0xbd0] sm:$0xff]
    %v4658 = vld [vmem:[#allocation6 + $0xbd8] sm:$0xff]
    %v4659 = vld [vmem:[#allocation6 + $0xbe0] sm:$0xff]
    %v4660 = vld [vmem:[#allocation6 + $0xbe8] sm:$0xff]
    %v4661 = vld [vmem:[#allocation6 + $0xbf0] sm:$0xff]
    %v4662 = vld [vmem:[#allocation6 + $0xbf8] sm:$0xff]
    %v4663 = vld [vmem:[#allocation6 + $0xc00] sm:$0xff]
    %v4664 = vld [vmem:[#allocation6 + $0xc08] sm:$0xff]
    %v4665 = vld [vmem:[#allocation6 + $0xc10] sm:$0xff]
    %v4666 = vld [vmem:[#allocation6 + $0xc18] sm:$0xff]
    %v4667 = vld [vmem:[#allocation6 + $0xc20] sm:$0xff]
    %v4668 = vld [vmem:[#allocation6 + $0xc28] sm:$0xff]
    %v4669 = vld [vmem:[#allocation6 + $0xc30] sm:$0xff]
    %v4670 = vld [vmem:[#allocation6 + $0xc38] sm:$0xff]
    %v4671 = vld [vmem:[#allocation6 + $0xc40] sm:$0xff]
    %v4672 = vld [vmem:[#allocation6 + $0xc48] sm:$0xff]
    %v4673 = vld [vmem:[#allocation6 + $0xc50] sm:$0xff]
    %v4674 = vld [vmem:[#allocation6 + $0xc58] sm:$0xff]
    %v4675 = vld [vmem:[#allocation6 + $0xc60] sm:$0xff]
    %v4676 = vld [vmem:[#allocation6 + $0xc68] sm:$0xff]
    %v4677 = vld [vmem:[#allocation6 + $0xc70] sm:$0xff]
    %v4678 = vld [vmem:[#allocation6 + $0xc78] sm:$0xff]
    %v4679 = vld [vmem:[#allocation6 + $0xc80] sm:$0xff]
    %v4680 = vld [vmem:[#allocation6 + $0xc88] sm:$0xff]
    %v4681 = vld [vmem:[#allocation6 + $0xc90] sm:$0xff]
    %v4682 = vld [vmem:[#allocation6 + $0xc98] sm:$0xff]
    %v4683 = vld [vmem:[#allocation6 + $0xca0] sm:$0xff]
    %v4684 = vld [vmem:[#allocation6 + $0xca8] sm:$0xff]
    %v4685 = vld [vmem:[#allocation6 + $0xcb0] sm:$0xff]
    %v4686 = vld [vmem:[#allocation6 + $0xcb8] sm:$0xff]
    %v4687 = vld [vmem:[#allocation6 + $0xcc0] sm:$0xff]
    %v4688 = vld [vmem:[#allocation6 + $0xcc8] sm:$0xff]
    %v4689 = vld [vmem:[#allocation6 + $0xcd0] sm:$0xff]
    %v4690 = vld [vmem:[#allocation6 + $0xcd8] sm:$0xff]
    %v4691 = vld [vmem:[#allocation6 + $0xce0] sm:$0xff]
    %v4692 = vld [vmem:[#allocation6 + $0xce8] sm:$0xff]
    %v4693 = vld [vmem:[#allocation6 + $0xcf0] sm:$0xff]
    %v4694 = vld [vmem:[#allocation6 + $0xcf8] sm:$0xff]
    %v4695 = vld [vmem:[#allocation6 + $0xd00] sm:$0xff]
    %v4696 = vld [vmem:[#allocation6 + $0xd08] sm:$0xff]
    %v4697 = vld [vmem:[#allocation6 + $0xd10] sm:$0xff]
    %v4698 = vld [vmem:[#allocation6 + $0xd18] sm:$0xff]
    %v4699 = vld [vmem:[#allocation6 + $0xd20] sm:$0xff]
    %v4700 = vld [vmem:[#allocation6 + $0xd28] sm:$0xff]
    %v4701 = vld [vmem:[#allocation6 + $0xd30] sm:$0xff]
    %v4702 = vld [vmem:[#allocation6 + $0xd38] sm:$0xff]
    %v4703 = vld [vmem:[#allocation6 + $0xd40] sm:$0xff]
    %v4704 = vld [vmem:[#allocation6 + $0xd48] sm:$0xff]
    %v4705 = vld [vmem:[#allocation6 + $0xd50] sm:$0xff]
    %v4706 = vld [vmem:[#allocation6 + $0xd58] sm:$0xff]
    %v4707 = vld [vmem:[#allocation6 + $0xd60] sm:$0xff]
    %v4708 = vld [vmem:[#allocation6 + $0xd68] sm:$0xff]
    %v4709 = vld [vmem:[#allocation6 + $0xd70] sm:$0xff]
    %v4710 = vld [vmem:[#allocation6 + $0xd78] sm:$0xff]
    %v4711 = vld [vmem:[#allocation6 + $0xd80] sm:$0xff]
    %v4712 = vld [vmem:[#allocation6 + $0xd88] sm:$0xff]
    %v4713 = vld [vmem:[#allocation6 + $0xd90] sm:$0xff]
    %v4714 = vld [vmem:[#allocation6 + $0xd98] sm:$0xff]
    %v4715 = vld [vmem:[#allocation6 + $0xda0] sm:$0xff]
    %v4716 = vld [vmem:[#allocation6 + $0xda8] sm:$0xff]
    %v4717 = vld [vmem:[#allocation6 + $0xdb0] sm:$0xff]
    %v4718 = vld [vmem:[#allocation6 + $0xdb8] sm:$0xff]
    %v4719 = vld [vmem:[#allocation6 + $0xdc0] sm:$0xff]
    %v4720 = vld [vmem:[#allocation6 + $0xdc8] sm:$0xff]
    %v4721 = vld [vmem:[#allocation6 + $0xdd0] sm:$0xff]
    %v4722 = vld [vmem:[#allocation6 + $0xdd8] sm:$0xff]
    %v4723 = vld [vmem:[#allocation6 + $0xde0] sm:$0xff]
    %v4724 = vld [vmem:[#allocation6 + $0xde8] sm:$0xff]
    %v4725 = vld [vmem:[#allocation6 + $0xdf0] sm:$0xff]
    %v4726 = vld [vmem:[#allocation6 + $0xdf8] sm:$0xff]
    %v4727 = vld [vmem:[#allocation6 + $0xe00] sm:$0xff]
    %v4728 = vld [vmem:[#allocation6 + $0xe08] sm:$0xff]
    %v4729 = vld [vmem:[#allocation6 + $0xe10] sm:$0xff]
    %v4730 = vld [vmem:[#allocation6 + $0xe18] sm:$0xff]
    %v4731 = vld [vmem:[#allocation6 + $0xe20] sm:$0xff]
    %v4732 = vld [vmem:[#allocation6 + $0xe28] sm:$0xff]
    %v4733 = vld [vmem:[#allocation6 + $0xe30] sm:$0xff]
    %v4734 = vld [vmem:[#allocation6 + $0xe38] sm:$0xff]
    %v4735 = vld [vmem:[#allocation6 + $0xe40] sm:$0xff]
    %v4736 = vld [vmem:[#allocation6 + $0xe48] sm:$0xff]
    %v4737 = vld [vmem:[#allocation6 + $0xe50] sm:$0xff]
    %v4738 = vld [vmem:[#allocation6 + $0xe58] sm:$0xff]
    %v4739 = vld [vmem:[#allocation6 + $0xe60] sm:$0xff]
    %v4740 = vld [vmem:[#allocation6 + $0xe68] sm:$0xff]
    %v4741 = vld [vmem:[#allocation6 + $0xe70] sm:$0xff]
    %v4742 = vld [vmem:[#allocation6 + $0xe78] sm:$0xff]
    %v4743 = vld [vmem:[#allocation6 + $0xe80] sm:$0xff]
    %v4744 = vld [vmem:[#allocation6 + $0xe88] sm:$0xff]
    %v4745 = vld [vmem:[#allocation6 + $0xe90] sm:$0xff]
    %v4746 = vld [vmem:[#allocation6 + $0xe98] sm:$0xff]
    %v4747 = vld [vmem:[#allocation6 + $0xea0] sm:$0xff]
    %v4748 = vld [vmem:[#allocation6 + $0xea8] sm:$0xff]
    %v4749 = vld [vmem:[#allocation6 + $0xeb0] sm:$0xff]
    %v4750 = vld [vmem:[#allocation6 + $0xeb8] sm:$0xff]
    %v4751 = vld [vmem:[#allocation6 + $0xec0] sm:$0xff]
    %v4752 = vld [vmem:[#allocation6 + $0xec8] sm:$0xff]
    %v4753 = vld [vmem:[#allocation6 + $0xed0] sm:$0xff]
    %v4754 = vld [vmem:[#allocation6 + $0xed8] sm:$0xff]
    %v4755 = vld [vmem:[#allocation6 + $0xee0] sm:$0xff]
    %v4756 = vld [vmem:[#allocation6 + $0xee8] sm:$0xff]
    %v4757 = vld [vmem:[#allocation6 + $0xef0] sm:$0xff]
    %v4758 = vld [vmem:[#allocation6 + $0xef8] sm:$0xff]
    %v4759 = vld [vmem:[#allocation6 + $0xf00] sm:$0xff]
    %v4760 = vld [vmem:[#allocation6 + $0xf08] sm:$0xff]
    %v4761 = vld [vmem:[#allocation6 + $0xf10] sm:$0xff]
    %v4762 = vld [vmem:[#allocation6 + $0xf18] sm:$0xff]
    %v4763 = vld [vmem:[#allocation6 + $0xf20] sm:$0xff]
    %v4764 = vld [vmem:[#allocation6 + $0xf28] sm:$0xff]
    %v4765 = vld [vmem:[#allocation6 + $0xf30] sm:$0xff]
    %v4766 = vld [vmem:[#allocation6 + $0xf38] sm:$0xff]
    %v4767 = vld [vmem:[#allocation6 + $0xf40] sm:$0xff]
    %v4768 = vld [vmem:[#allocation6 + $0xf48] sm:$0xff]
    %v4769 = vld [vmem:[#allocation6 + $0xf50] sm:$0xff]
    %v4770 = vld [vmem:[#allocation6 + $0xf58] sm:$0xff]
    %v4771 = vld [vmem:[#allocation6 + $0xf60] sm:$0xff]
    %v4772 = vld [vmem:[#allocation6 + $0xf68] sm:$0xff]
    %v4773 = vld [vmem:[#allocation6 + $0xf70] sm:$0xff]
    %v4774 = vld [vmem:[#allocation6 + $0xf78] sm:$0xff]
    %v4775 = vld [vmem:[#allocation6 + $0xf80] sm:$0xff]
    %v4776 = vld [vmem:[#allocation6 + $0xf88] sm:$0xff]
    %v4777 = vld [vmem:[#allocation6 + $0xf90] sm:$0xff]
    %v4778 = vld [vmem:[#allocation6 + $0xf98] sm:$0xff]
    %v4779 = vld [vmem:[#allocation6 + $0xfa0] sm:$0xff]
    %v4780 = vld [vmem:[#allocation6 + $0xfa8] sm:$0xff]
    %v4781 = vld [vmem:[#allocation6 + $0xfb0] sm:$0xff]
    %v4782 = vld [vmem:[#allocation6 + $0xfb8] sm:$0xff]
    %v4783 = vld [vmem:[#allocation6 + $0xfc0] sm:$0xff]
    %v4784 = vld [vmem:[#allocation6 + $0xfc8] sm:$0xff]
    %v4785 = vld [vmem:[#allocation6 + $0xfd0] sm:$0xff]
    %v4786 = vld [vmem:[#allocation6 + $0xfd8] sm:$0xff]
    %v4787 = vld [vmem:[#allocation6 + $0xfe0] sm:$0xff]
    %v4788 = vld [vmem:[#allocation6 + $0xfe8] sm:$0xff]
    %v4789 = vld [vmem:[#allocation6 + $0xff0] sm:$0xff]
    %v4790 = vld [vmem:[#allocation6 + $0xff8] sm:$0xff]
    %v4791 = vld [vmem:[#allocation6 + $0x1000] sm:$0xff]
    %v4792 = vld [vmem:[#allocation6 + $0x1008] sm:$0xff]
    %v4793 = vld [vmem:[#allocation6 + $0x1010] sm:$0xff]
    %v4794 = vld [vmem:[#allocation6 + $0x1018] sm:$0xff]
    %v4795 = vld [vmem:[#allocation6 + $0x1020] sm:$0xff]
    %v4796 = vld [vmem:[#allocation6 + $0x1028] sm:$0xff]
    %v4797 = vld [vmem:[#allocation6 + $0x1030] sm:$0xff]
    %v4798 = vld [vmem:[#allocation6 + $0x1038] sm:$0xff]
    %v4799 = vld [vmem:[#allocation6 + $0x1040] sm:$0xff]
    %v4800 = vld [vmem:[#allocation6 + $0x1048] sm:$0xff]
    %v4801 = vld [vmem:[#allocation6 + $0x1050] sm:$0xff]
    %v4802 = vld [vmem:[#allocation6 + $0x1058] sm:$0xff]
    %v4803 = vld [vmem:[#allocation6 + $0x1060] sm:$0xff]
    %v4804 = vld [vmem:[#allocation6 + $0x1068] sm:$0xff]
    %v4805 = vld [vmem:[#allocation6 + $0x1070] sm:$0xff]
    %v4806 = vld [vmem:[#allocation6 + $0x1078] sm:$0xff]
    %v4807 = vld [vmem:[#allocation6 + $0x1080] sm:$0xff]
    %v4808 = vld [vmem:[#allocation6 + $0x1088] sm:$0xff]
    %v4809 = vld [vmem:[#allocation6 + $0x1090] sm:$0xff]
    %v4810 = vld [vmem:[#allocation6 + $0x1098] sm:$0xff]
    %v4811 = vld [vmem:[#allocation6 + $0x10a0] sm:$0xff]
    %v4812 = vld [vmem:[#allocation6 + $0x10a8] sm:$0xff]
    %v4813 = vld [vmem:[#allocation6 + $0x10b0] sm:$0xff]
    %v4814 = vld [vmem:[#allocation6 + $0x10b8] sm:$0xff]
    %v4815 = vld [vmem:[#allocation6 + $0x10c0] sm:$0xff]
    %v4816 = vld [vmem:[#allocation6 + $0x10c8] sm:$0xff]
    %v4817 = vld [vmem:[#allocation6 + $0x10d0] sm:$0xff]
    %v4818 = vld [vmem:[#allocation6 + $0x10d8] sm:$0xff]
    %v4819 = vld [vmem:[#allocation6 + $0x10e0] sm:$0xff]
    %v4820 = vld [vmem:[#allocation6 + $0x10e8] sm:$0xff]
    %v4821 = vld [vmem:[#allocation6 + $0x10f0] sm:$0xff]
    %v4822 = vld [vmem:[#allocation6 + $0x10f8] sm:$0xff]
    %v4823 = vld [vmem:[#allocation6 + $0x1100] sm:$0xff]
    %v4824 = vld [vmem:[#allocation6 + $0x1108] sm:$0xff]
    %v4825 = vld [vmem:[#allocation6 + $0x1110] sm:$0xff]
    %v4826 = vld [vmem:[#allocation6 + $0x1118] sm:$0xff]
    %v4827 = vld [vmem:[#allocation6 + $0x1120] sm:$0xff]
    %v4828 = vld [vmem:[#allocation6 + $0x1128] sm:$0xff]
    %v4829 = vld [vmem:[#allocation6 + $0x1130] sm:$0xff]
    %v4830 = vld [vmem:[#allocation6 + $0x1138] sm:$0xff]
    %v4831 = vld [vmem:[#allocation6 + $0x1140] sm:$0xff]
    %v4832 = vld [vmem:[#allocation6 + $0x1148] sm:$0xff]
    %v4833 = vld [vmem:[#allocation6 + $0x1150] sm:$0xff]
    %v4834 = vld [vmem:[#allocation6 + $0x1158] sm:$0xff]
    %v4835 = vld [vmem:[#allocation6 + $0x1160] sm:$0xff]
    %v4836 = vld [vmem:[#allocation6 + $0x1168] sm:$0xff]
    %v4837 = vld [vmem:[#allocation6 + $0x1170] sm:$0xff]
    %v4838 = vld [vmem:[#allocation6 + $0x1178] sm:$0xff]
    %v4839 = vld [vmem:[#allocation6 + $0x1180] sm:$0xff]
    %v4840 = vld [vmem:[#allocation6 + $0x1188] sm:$0xff]
    %v4841 = vld [vmem:[#allocation6 + $0x1190] sm:$0xff]
    %v4842 = vld [vmem:[#allocation6 + $0x1198] sm:$0xff]
    %v4843 = vld [vmem:[#allocation6 + $0x11a0] sm:$0xff]
    %v4844 = vld [vmem:[#allocation6 + $0x11a8] sm:$0xff]
    %v4845 = vld [vmem:[#allocation6 + $0x11b0] sm:$0xff]
    %v4846 = vld [vmem:[#allocation6 + $0x11b8] sm:$0xff]
    %v4847 = vld [vmem:[#allocation6 + $0x11c0] sm:$0xff]
    %v4848 = vld [vmem:[#allocation6 + $0x11c8] sm:$0xff]
    %v4849 = vld [vmem:[#allocation6 + $0x11d0] sm:$0xff]
    %v4850 = vld [vmem:[#allocation6 + $0x11d8] sm:$0xff]
    %v4851 = vld [vmem:[#allocation6 + $0x11e0] sm:$0xff]
    %v4852 = vld [vmem:[#allocation6 + $0x11e8] sm:$0xff]
    %v4853 = vld [vmem:[#allocation6 + $0x11f0] sm:$0xff]
    %v4854 = vld [vmem:[#allocation6 + $0x11f8] sm:$0xff]
    %v4855 = vld [vmem:[#allocation6 + $0x1200] sm:$0xff]
    %v4856 = vld [vmem:[#allocation6 + $0x1208] sm:$0xff]
    %v4857 = vld [vmem:[#allocation6 + $0x1210] sm:$0xff]
    %v4858 = vld [vmem:[#allocation6 + $0x1218] sm:$0xff]
    %v4859 = vld [vmem:[#allocation6 + $0x1220] sm:$0xff]
    %v4860 = vld [vmem:[#allocation6 + $0x1228] sm:$0xff]
    %v4861 = vld [vmem:[#allocation6 + $0x1230] sm:$0xff]
    %v4862 = vld [vmem:[#allocation6 + $0x1238] sm:$0xff]
    %v4863 = vld [vmem:[#allocation6 + $0x1240] sm:$0xff]
    %v4864 = vld [vmem:[#allocation6 + $0x1248] sm:$0xff]
    %v4865 = vld [vmem:[#allocation6 + $0x1250] sm:$0xff]
    %v4866 = vld [vmem:[#allocation6 + $0x1258] sm:$0xff]
    %v4867 = vld [vmem:[#allocation6 + $0x1260] sm:$0xff]
    %v4868 = vld [vmem:[#allocation6 + $0x1268] sm:$0xff]
    %v4869 = vld [vmem:[#allocation6 + $0x1270] sm:$0xff]
    %v4870 = vld [vmem:[#allocation6 + $0x1278] sm:$0xff]
    %v4871 = vld [vmem:[#allocation6 + $0x1280] sm:$0xff]
    %v4872 = vld [vmem:[#allocation6 + $0x1288] sm:$0xff]
    %v4873 = vld [vmem:[#allocation6 + $0x1290] sm:$0xff]
    %v4874 = vld [vmem:[#allocation6 + $0x1298] sm:$0xff]
    %v4875 = vld [vmem:[#allocation6 + $0x12a0] sm:$0xff]
    %v4876 = vld [vmem:[#allocation6 + $0x12a8] sm:$0xff]
    %v4877 = vld [vmem:[#allocation6 + $0x12b0] sm:$0xff]
    %v4878 = vld [vmem:[#allocation6 + $0x12b8] sm:$0xff]
    %v4879 = vld [vmem:[#allocation6 + $0x12c0] sm:$0xff]
    %v4880 = vld [vmem:[#allocation6 + $0x12c8] sm:$0xff]
    %v4881 = vld [vmem:[#allocation6 + $0x12d0] sm:$0xff]
    %v4882 = vld [vmem:[#allocation6 + $0x12d8] sm:$0xff]
    %v4883 = vld [vmem:[#allocation6 + $0x12e0] sm:$0xff]
    %v4884 = vld [vmem:[#allocation6 + $0x12e8] sm:$0xff]
    %v4885 = vld [vmem:[#allocation6 + $0x12f0] sm:$0xff]
    %v4886 = vld [vmem:[#allocation6 + $0x12f8] sm:$0xff]
    %v4887 = vld [vmem:[#allocation6 + $0x1300] sm:$0xff]
    %v4888 = vld [vmem:[#allocation6 + $0x1308] sm:$0xff]
    %v4889 = vld [vmem:[#allocation6 + $0x1310] sm:$0xff]
    %v4890 = vld [vmem:[#allocation6 + $0x1318] sm:$0xff]
    %v4891 = vld [vmem:[#allocation6 + $0x1320] sm:$0xff]
    %v4892 = vld [vmem:[#allocation6 + $0x1328] sm:$0xff]
    %v4893 = vld [vmem:[#allocation6 + $0x1330] sm:$0xff]
    %v4894 = vld [vmem:[#allocation6 + $0x1338] sm:$0xff]
    %v4895 = vld [vmem:[#allocation6 + $0x1340] sm:$0xff]
    %v4896 = vld [vmem:[#allocation6 + $0x1348] sm:$0xff]
    %v4897 = vld [vmem:[#allocation6 + $0x1350] sm:$0xff]
    %v4898 = vld [vmem:[#allocation6 + $0x1358] sm:$0xff]
    %v4899 = vld [vmem:[#allocation6 + $0x1360] sm:$0xff]
    %v4900 = vld [vmem:[#allocation6 + $0x1368] sm:$0xff]
    %v4901 = vld [vmem:[#allocation6 + $0x1370] sm:$0xff]
    %v4902 = vld [vmem:[#allocation6 + $0x1378] sm:$0xff]
    %v4903 = vld [vmem:[#allocation6 + $0x1380] sm:$0xff]
    %v4904 = vld [vmem:[#allocation6 + $0x1388] sm:$0xff]
    %v4905 = vld [vmem:[#allocation6 + $0x1390] sm:$0xff]
    %v4906 = vld [vmem:[#allocation6 + $0x1398] sm:$0xff]
    %v4907 = vld [vmem:[#allocation6 + $0x13a0] sm:$0xff]
    %v4908 = vld [vmem:[#allocation6 + $0x13a8] sm:$0xff]
    %v4909 = vld [vmem:[#allocation6 + $0x13b0] sm:$0xff]
    %v4910 = vld [vmem:[#allocation6 + $0x13b8] sm:$0xff]
    %v4911 = vld [vmem:[#allocation6 + $0x13c0] sm:$0xff]
    %v4912 = vld [vmem:[#allocation6 + $0x13c8] sm:$0xff]
    %v4913 = vld [vmem:[#allocation6 + $0x13d0] sm:$0xff]
    %v4914 = vld [vmem:[#allocation6 + $0x13d8] sm:$0xff]
    %v4915 = vld [vmem:[#allocation6 + $0x13e0] sm:$0xff]
    %v4916 = vld [vmem:[#allocation6 + $0x13e8] sm:$0xff]
    %v4917 = vld [vmem:[#allocation6 + $0x13f0] sm:$0xff]
    %v4918 = vld [vmem:[#allocation6 + $0x13f8] sm:$0xff]
    %v5559 = vunpack.c.l.b16 %v4279
    %v5560 = vunpack.c.h.b16 %v4279
    %v5561 = vunpack.c.l.b16 %v4280
    %v5562 = vunpack.c.h.b16 %v4280
    %v5563 = vunpack.c.l.b16 %v4281
    %v5564 = vunpack.c.h.b16 %v4281
    %v5565 = vunpack.c.l.b16 %v4282
    %v5566 = vunpack.c.h.b16 %v4282
    %v5567 = vunpack.c.l.b16 %v4283
    %v5568 = vunpack.c.h.b16 %v4283
    %v5569 = vunpack.c.l.b16 %v4284
    %v5570 = vunpack.c.h.b16 %v4284
    %v5571 = vunpack.c.l.b16 %v4285
    %v5572 = vunpack.c.h.b16 %v4285
    %v5573 = vunpack.c.l.b16 %v4286
    %v5574 = vunpack.c.h.b16 %v4286
    %v5575 = vunpack.c.l.b16 %v4287
    %v5576 = vunpack.c.h.b16 %v4287
    %v5577 = vunpack.c.l.b16 %v4288
    %v5578 = vunpack.c.h.b16 %v4288
    %v5579 = vunpack.c.l.b16 %v4289
    %v5580 = vunpack.c.h.b16 %v4289
    %v5581 = vunpack.c.l.b16 %v4290
    %v5582 = vunpack.c.h.b16 %v4290
    %v5583 = vunpack.c.l.b16 %v4291
    %v5584 = vunpack.c.h.b16 %v4291
    %v5585 = vunpack.c.l.b16 %v4292
    %v5586 = vunpack.c.h.b16 %v4292
    %v5587 = vunpack.c.l.b16 %v4293
    %v5588 = vunpack.c.h.b16 %v4293
    %v5589 = vunpack.c.l.b16 %v4294
    %v5590 = vunpack.c.h.b16 %v4294
    %v5591 = vunpack.c.l.b16 %v4295
    %v5592 = vunpack.c.h.b16 %v4295
    %v5593 = vunpack.c.l.b16 %v4296
    %v5594 = vunpack.c.h.b16 %v4296
    %v5595 = vunpack.c.l.b16 %v4297
    %v5596 = vunpack.c.h.b16 %v4297
    %v5597 = vunpack.c.l.b16 %v4298
    %v5598 = vunpack.c.h.b16 %v4298
    %v5599 = vunpack.c.l.b16 %v4299
    %v5600 = vunpack.c.h.b16 %v4299
    %v5601 = vunpack.c.l.b16 %v4300
    %v5602 = vunpack.c.h.b16 %v4300
    %v5603 = vunpack.c.l.b16 %v4301
    %v5604 = vunpack.c.h.b16 %v4301
    %v5605 = vunpack.c.l.b16 %v4302
    %v5606 = vunpack.c.h.b16 %v4302
    %v5607 = vunpack.c.l.b16 %v4303
    %v5608 = vunpack.c.h.b16 %v4303
    %v5609 = vunpack.c.l.b16 %v4304
    %v5610 = vunpack.c.h.b16 %v4304
    %v5611 = vunpack.c.l.b16 %v4305
    %v5612 = vunpack.c.h.b16 %v4305
    %v5613 = vunpack.c.l.b16 %v4306
    %v5614 = vunpack.c.h.b16 %v4306
    %v5615 = vunpack.c.l.b16 %v4307
    %v5616 = vunpack.c.h.b16 %v4307
    %v5617 = vunpack.c.l.b16 %v4308
    %v5618 = vunpack.c.h.b16 %v4308
    %v5619 = vunpack.c.l.b16 %v4309
    %v5620 = vunpack.c.h.b16 %v4309
    %v5621 = vunpack.c.l.b16 %v4310
    %v5622 = vunpack.c.h.b16 %v4310
    %v5623 = vunpack.c.l.b16 %v4311
    %v5624 = vunpack.c.h.b16 %v4311
    %v5625 = vunpack.c.l.b16 %v4312
    %v5626 = vunpack.c.h.b16 %v4312
    %v5627 = vunpack.c.l.b16 %v4313
    %v5628 = vunpack.c.h.b16 %v4313
    %v5629 = vunpack.c.l.b16 %v4314
    %v5630 = vunpack.c.h.b16 %v4314
    %v5631 = vunpack.c.l.b16 %v4315
    %v5632 = vunpack.c.h.b16 %v4315
    %v5633 = vunpack.c.l.b16 %v4316
    %v5634 = vunpack.c.h.b16 %v4316
    %v5635 = vunpack.c.l.b16 %v4317
    %v5636 = vunpack.c.h.b16 %v4317
    %v5637 = vunpack.c.l.b16 %v4318
    %v5638 = vunpack.c.h.b16 %v4318
    %v5639 = vunpack.c.l.b16 %v4319
    %v5640 = vunpack.c.h.b16 %v4319
    %v5641 = vunpack.c.l.b16 %v4320
    %v5642 = vunpack.c.h.b16 %v4320
    %v5643 = vunpack.c.l.b16 %v4321
    %v5644 = vunpack.c.h.b16 %v4321
    %v5645 = vunpack.c.l.b16 %v4322
    %v5646 = vunpack.c.h.b16 %v4322
    %v5647 = vunpack.c.l.b16 %v4323
    %v5648 = vunpack.c.h.b16 %v4323
    %v5649 = vunpack.c.l.b16 %v4324
    %v5650 = vunpack.c.h.b16 %v4324
    %v5651 = vunpack.c.l.b16 %v4325
    %v5652 = vunpack.c.h.b16 %v4325
    %v5653 = vunpack.c.l.b16 %v4326
    %v5654 = vunpack.c.h.b16 %v4326
    %v5655 = vunpack.c.l.b16 %v4327
    %v5656 = vunpack.c.h.b16 %v4327
    %v5657 = vunpack.c.l.b16 %v4328
    %v5658 = vunpack.c.h.b16 %v4328
    %v5659 = vunpack.c.l.b16 %v4329
    %v5660 = vunpack.c.h.b16 %v4329
    %v5661 = vunpack.c.l.b16 %v4330
    %v5662 = vunpack.c.h.b16 %v4330
    %v5663 = vunpack.c.l.b16 %v4331
    %v5664 = vunpack.c.h.b16 %v4331
    %v5665 = vunpack.c.l.b16 %v4332
    %v5666 = vunpack.c.h.b16 %v4332
    %v5667 = vunpack.c.l.b16 %v4333
    %v5668 = vunpack.c.h.b16 %v4333
    %v5669 = vunpack.c.l.b16 %v4334
    %v5670 = vunpack.c.h.b16 %v4334
    %v5671 = vunpack.c.l.b16 %v4335
    %v5672 = vunpack.c.h.b16 %v4335
    %v5673 = vunpack.c.l.b16 %v4336
    %v5674 = vunpack.c.h.b16 %v4336
    %v5675 = vunpack.c.l.b16 %v4337
    %v5676 = vunpack.c.h.b16 %v4337
    %v5677 = vunpack.c.l.b16 %v4338
    %v5678 = vunpack.c.h.b16 %v4338
    %v5679 = vunpack.c.l.b16 %v4339
    %v5680 = vunpack.c.h.b16 %v4339
    %v5681 = vunpack.c.l.b16 %v4340
    %v5682 = vunpack.c.h.b16 %v4340
    %v5683 = vunpack.c.l.b16 %v4341
    %v5684 = vunpack.c.h.b16 %v4341
    %v5685 = vunpack.c.l.b16 %v4342
    %v5686 = vunpack.c.h.b16 %v4342
    %v5687 = vunpack.c.l.b16 %v4343
    %v5688 = vunpack.c.h.b16 %v4343
    %v5689 = vunpack.c.l.b16 %v4344
    %v5690 = vunpack.c.h.b16 %v4344
    %v5691 = vunpack.c.l.b16 %v4345
    %v5692 = vunpack.c.h.b16 %v4345
    %v5693 = vunpack.c.l.b16 %v4346
    %v5694 = vunpack.c.h.b16 %v4346
    %v5695 = vunpack.c.l.b16 %v4347
    %v5696 = vunpack.c.h.b16 %v4347
    %v5697 = vunpack.c.l.b16 %v4348
    %v5698 = vunpack.c.h.b16 %v4348
    %v5699 = vunpack.c.l.b16 %v4349
    %v5700 = vunpack.c.h.b16 %v4349
    %v5701 = vunpack.c.l.b16 %v4350
    %v5702 = vunpack.c.h.b16 %v4350
    %v5703 = vunpack.c.l.b16 %v4351
    %v5704 = vunpack.c.h.b16 %v4351
    %v5705 = vunpack.c.l.b16 %v4352
    %v5706 = vunpack.c.h.b16 %v4352
    %v5707 = vunpack.c.l.b16 %v4353
    %v5708 = vunpack.c.h.b16 %v4353
    %v5709 = vunpack.c.l.b16 %v4354
    %v5710 = vunpack.c.h.b16 %v4354
    %v5711 = vunpack.c.l.b16 %v4355
    %v5712 = vunpack.c.h.b16 %v4355
    %v5713 = vunpack.c.l.b16 %v4356
    %v5714 = vunpack.c.h.b16 %v4356
    %v5715 = vunpack.c.l.b16 %v4357
    %v5716 = vunpack.c.h.b16 %v4357
    %v5717 = vunpack.c.l.b16 %v4358
    %v5718 = vunpack.c.h.b16 %v4358
    %v5719 = vunpack.c.l.b16 %v4359
    %v5720 = vunpack.c.h.b16 %v4359
    %v5721 = vunpack.c.l.b16 %v4360
    %v5722 = vunpack.c.h.b16 %v4360
    %v5723 = vunpack.c.l.b16 %v4361
    %v5724 = vunpack.c.h.b16 %v4361
    %v5725 = vunpack.c.l.b16 %v4362
    %v5726 = vunpack.c.h.b16 %v4362
    %v5727 = vunpack.c.l.b16 %v4363
    %v5728 = vunpack.c.h.b16 %v4363
    %v5729 = vunpack.c.l.b16 %v4364
    %v5730 = vunpack.c.h.b16 %v4364
    %v5731 = vunpack.c.l.b16 %v4365
    %v5732 = vunpack.c.h.b16 %v4365
    %v5733 = vunpack.c.l.b16 %v4366
    %v5734 = vunpack.c.h.b16 %v4366
    %v5735 = vunpack.c.l.b16 %v4367
    %v5736 = vunpack.c.h.b16 %v4367
    %v5737 = vunpack.c.l.b16 %v4368
    %v5738 = vunpack.c.h.b16 %v4368
    %v5739 = vunpack.c.l.b16 %v4369
    %v5740 = vunpack.c.h.b16 %v4369
    %v5741 = vunpack.c.l.b16 %v4370
    %v5742 = vunpack.c.h.b16 %v4370
    %v5743 = vunpack.c.l.b16 %v4371
    %v5744 = vunpack.c.h.b16 %v4371
    %v5745 = vunpack.c.l.b16 %v4372
    %v5746 = vunpack.c.h.b16 %v4372
    %v5747 = vunpack.c.l.b16 %v4373
    %v5748 = vunpack.c.h.b16 %v4373
    %v5749 = vunpack.c.l.b16 %v4374
    %v5750 = vunpack.c.h.b16 %v4374
    %v5751 = vunpack.c.l.b16 %v4375
    %v5752 = vunpack.c.h.b16 %v4375
    %v5753 = vunpack.c.l.b16 %v4376
    %v5754 = vunpack.c.h.b16 %v4376
    %v5755 = vunpack.c.l.b16 %v4377
    %v5756 = vunpack.c.h.b16 %v4377
    %v5757 = vunpack.c.l.b16 %v4378
    %v5758 = vunpack.c.h.b16 %v4378
    %v5759 = vunpack.c.l.b16 %v4379
    %v5760 = vunpack.c.h.b16 %v4379
    %v5761 = vunpack.c.l.b16 %v4380
    %v5762 = vunpack.c.h.b16 %v4380
    %v5763 = vunpack.c.l.b16 %v4381
    %v5764 = vunpack.c.h.b16 %v4381
    %v5765 = vunpack.c.l.b16 %v4382
    %v5766 = vunpack.c.h.b16 %v4382
    %v5767 = vunpack.c.l.b16 %v4383
    %v5768 = vunpack.c.h.b16 %v4383
    %v5769 = vunpack.c.l.b16 %v4384
    %v5770 = vunpack.c.h.b16 %v4384
    %v5771 = vunpack.c.l.b16 %v4385
    %v5772 = vunpack.c.h.b16 %v4385
    %v5773 = vunpack.c.l.b16 %v4386
    %v5774 = vunpack.c.h.b16 %v4386
    %v5775 = vunpack.c.l.b16 %v4387
    %v5776 = vunpack.c.h.b16 %v4387
    %v5777 = vunpack.c.l.b16 %v4388
    %v5778 = vunpack.c.h.b16 %v4388
    %v5779 = vunpack.c.l.b16 %v4389
    %v5780 = vunpack.c.h.b16 %v4389
    %v5781 = vunpack.c.l.b16 %v4390
    %v5782 = vunpack.c.h.b16 %v4390
    %v5783 = vunpack.c.l.b16 %v4391
    %v5784 = vunpack.c.h.b16 %v4391
    %v5785 = vunpack.c.l.b16 %v4392
    %v5786 = vunpack.c.h.b16 %v4392
    %v5787 = vunpack.c.l.b16 %v4393
    %v5788 = vunpack.c.h.b16 %v4393
    %v5789 = vunpack.c.l.b16 %v4394
    %v5790 = vunpack.c.h.b16 %v4394
    %v5791 = vunpack.c.l.b16 %v4395
    %v5792 = vunpack.c.h.b16 %v4395
    %v5793 = vunpack.c.l.b16 %v4396
    %v5794 = vunpack.c.h.b16 %v4396
    %v5795 = vunpack.c.l.b16 %v4397
    %v5796 = vunpack.c.h.b16 %v4397
    %v5797 = vunpack.c.l.b16 %v4398
    %v5798 = vunpack.c.h.b16 %v4398
    %v5799 = vunpack.c.l.b16 %v4399
    %v5800 = vunpack.c.h.b16 %v4399
    %v5801 = vunpack.c.l.b16 %v4400
    %v5802 = vunpack.c.h.b16 %v4400
    %v5803 = vunpack.c.l.b16 %v4401
    %v5804 = vunpack.c.h.b16 %v4401
    %v5805 = vunpack.c.l.b16 %v4402
    %v5806 = vunpack.c.h.b16 %v4402
    %v5807 = vunpack.c.l.b16 %v4403
    %v5808 = vunpack.c.h.b16 %v4403
    %v5809 = vunpack.c.l.b16 %v4404
    %v5810 = vunpack.c.h.b16 %v4404
    %v5811 = vunpack.c.l.b16 %v4405
    %v5812 = vunpack.c.h.b16 %v4405
    %v5813 = vunpack.c.l.b16 %v4406
    %v5814 = vunpack.c.h.b16 %v4406
    %v5815 = vunpack.c.l.b16 %v4407
    %v5816 = vunpack.c.h.b16 %v4407
    %v5817 = vunpack.c.l.b16 %v4408
    %v5818 = vunpack.c.h.b16 %v4408
    %v5819 = vunpack.c.l.b16 %v4409
    %v5820 = vunpack.c.h.b16 %v4409
    %v5821 = vunpack.c.l.b16 %v4410
    %v5822 = vunpack.c.h.b16 %v4410
    %v5823 = vunpack.c.l.b16 %v4411
    %v5824 = vunpack.c.h.b16 %v4411
    %v5825 = vunpack.c.l.b16 %v4412
    %v5826 = vunpack.c.h.b16 %v4412
    %v5827 = vunpack.c.l.b16 %v4413
    %v5828 = vunpack.c.h.b16 %v4413
    %v5829 = vunpack.c.l.b16 %v4414
    %v5830 = vunpack.c.h.b16 %v4414
    %v5831 = vunpack.c.l.b16 %v4415
    %v5832 = vunpack.c.h.b16 %v4415
    %v5833 = vunpack.c.l.b16 %v4416
    %v5834 = vunpack.c.h.b16 %v4416
    %v5835 = vunpack.c.l.b16 %v4417
    %v5836 = vunpack.c.h.b16 %v4417
    %v5837 = vunpack.c.l.b16 %v4418
    %v5838 = vunpack.c.h.b16 %v4418
    %v5839 = vunpack.c.l.b16 %v4419
    %v5840 = vunpack.c.h.b16 %v4419
    %v5841 = vunpack.c.l.b16 %v4420
    %v5842 = vunpack.c.h.b16 %v4420
    %v5843 = vunpack.c.l.b16 %v4421
    %v5844 = vunpack.c.h.b16 %v4421
    %v5845 = vunpack.c.l.b16 %v4422
    %v5846 = vunpack.c.h.b16 %v4422
    %v5847 = vunpack.c.l.b16 %v4423
    %v5848 = vunpack.c.h.b16 %v4423
    %v5849 = vunpack.c.l.b16 %v4424
    %v5850 = vunpack.c.h.b16 %v4424
    %v5851 = vunpack.c.l.b16 %v4425
    %v5852 = vunpack.c.h.b16 %v4425
    %v5853 = vunpack.c.l.b16 %v4426
    %v5854 = vunpack.c.h.b16 %v4426
    %v5855 = vunpack.c.l.b16 %v4427
    %v5856 = vunpack.c.h.b16 %v4427
    %v5857 = vunpack.c.l.b16 %v4428
    %v5858 = vunpack.c.h.b16 %v4428
    %v5859 = vunpack.c.l.b16 %v4429
    %v5860 = vunpack.c.h.b16 %v4429
    %v5861 = vunpack.c.l.b16 %v4430
    %v5862 = vunpack.c.h.b16 %v4430
    %v5863 = vunpack.c.l.b16 %v4431
    %v5864 = vunpack.c.h.b16 %v4431
    %v5865 = vunpack.c.l.b16 %v4432
    %v5866 = vunpack.c.h.b16 %v4432
    %v5867 = vunpack.c.l.b16 %v4433
    %v5868 = vunpack.c.h.b16 %v4433
    %v5869 = vunpack.c.l.b16 %v4434
    %v5870 = vunpack.c.h.b16 %v4434
    %v5871 = vunpack.c.l.b16 %v4435
    %v5872 = vunpack.c.h.b16 %v4435
    %v5873 = vunpack.c.l.b16 %v4436
    %v5874 = vunpack.c.h.b16 %v4436
    %v5875 = vunpack.c.l.b16 %v4437
    %v5876 = vunpack.c.h.b16 %v4437
    %v5877 = vunpack.c.l.b16 %v4438
    %v5878 = vunpack.c.h.b16 %v4438
    %v5879 = vunpack.c.l.b16 %v4439
    %v5880 = vunpack.c.h.b16 %v4439
    %v5881 = vunpack.c.l.b16 %v4440
    %v5882 = vunpack.c.h.b16 %v4440
    %v5883 = vunpack.c.l.b16 %v4441
    %v5884 = vunpack.c.h.b16 %v4441
    %v5885 = vunpack.c.l.b16 %v4442
    %v5886 = vunpack.c.h.b16 %v4442
    %v5887 = vunpack.c.l.b16 %v4443
    %v5888 = vunpack.c.h.b16 %v4443
    %v5889 = vunpack.c.l.b16 %v4444
    %v5890 = vunpack.c.h.b16 %v4444
    %v5891 = vunpack.c.l.b16 %v4445
    %v5892 = vunpack.c.h.b16 %v4445
    %v5893 = vunpack.c.l.b16 %v4446
    %v5894 = vunpack.c.h.b16 %v4446
    %v5895 = vunpack.c.l.b16 %v4447
    %v5896 = vunpack.c.h.b16 %v4447
    %v5897 = vunpack.c.l.b16 %v4448
    %v5898 = vunpack.c.h.b16 %v4448
    %v5899 = vunpack.c.l.b16 %v4449
    %v5900 = vunpack.c.h.b16 %v4449
    %v5901 = vunpack.c.l.b16 %v4450
    %v5902 = vunpack.c.h.b16 %v4450
    %v5903 = vunpack.c.l.b16 %v4451
    %v5904 = vunpack.c.h.b16 %v4451
    %v5905 = vunpack.c.l.b16 %v4452
    %v5906 = vunpack.c.h.b16 %v4452
    %v5907 = vunpack.c.l.b16 %v4453
    %v5908 = vunpack.c.h.b16 %v4453
    %v5909 = vunpack.c.l.b16 %v4454
    %v5910 = vunpack.c.h.b16 %v4454
    %v5911 = vunpack.c.l.b16 %v4455
    %v5912 = vunpack.c.h.b16 %v4455
    %v5913 = vunpack.c.l.b16 %v4456
    %v5914 = vunpack.c.h.b16 %v4456
    %v5915 = vunpack.c.l.b16 %v4457
    %v5916 = vunpack.c.h.b16 %v4457
    %v5917 = vunpack.c.l.b16 %v4458
    %v5918 = vunpack.c.h.b16 %v4458
    %v5919 = vunpack.c.l.b16 %v4459
    %v5920 = vunpack.c.h.b16 %v4459
    %v5921 = vunpack.c.l.b16 %v4460
    %v5922 = vunpack.c.h.b16 %v4460
    %v5923 = vunpack.c.l.b16 %v4461
    %v5924 = vunpack.c.h.b16 %v4461
    %v5925 = vunpack.c.l.b16 %v4462
    %v5926 = vunpack.c.h.b16 %v4462
    %v5927 = vunpack.c.l.b16 %v4463
    %v5928 = vunpack.c.h.b16 %v4463
    %v5929 = vunpack.c.l.b16 %v4464
    %v5930 = vunpack.c.h.b16 %v4464
    %v5931 = vunpack.c.l.b16 %v4465
    %v5932 = vunpack.c.h.b16 %v4465
    %v5933 = vunpack.c.l.b16 %v4466
    %v5934 = vunpack.c.h.b16 %v4466
    %v5935 = vunpack.c.l.b16 %v4467
    %v5936 = vunpack.c.h.b16 %v4467
    %v5937 = vunpack.c.l.b16 %v4468
    %v5938 = vunpack.c.h.b16 %v4468
    %v5939 = vunpack.c.l.b16 %v4469
    %v5940 = vunpack.c.h.b16 %v4469
    %v5941 = vunpack.c.l.b16 %v4470
    %v5942 = vunpack.c.h.b16 %v4470
    %v5943 = vunpack.c.l.b16 %v4471
    %v5944 = vunpack.c.h.b16 %v4471
    %v5945 = vunpack.c.l.b16 %v4472
    %v5946 = vunpack.c.h.b16 %v4472
    %v5947 = vunpack.c.l.b16 %v4473
    %v5948 = vunpack.c.h.b16 %v4473
    %v5949 = vunpack.c.l.b16 %v4474
    %v5950 = vunpack.c.h.b16 %v4474
    %v5951 = vunpack.c.l.b16 %v4475
    %v5952 = vunpack.c.h.b16 %v4475
    %v5953 = vunpack.c.l.b16 %v4476
    %v5954 = vunpack.c.h.b16 %v4476
    %v5955 = vunpack.c.l.b16 %v4477
    %v5956 = vunpack.c.h.b16 %v4477
    %v5957 = vunpack.c.l.b16 %v4478
    %v5958 = vunpack.c.h.b16 %v4478
    %v5959 = vunpack.c.l.b16 %v4479
    %v5960 = vunpack.c.h.b16 %v4479
    %v5961 = vunpack.c.l.b16 %v4480
    %v5962 = vunpack.c.h.b16 %v4480
    %v5963 = vunpack.c.l.b16 %v4481
    %v5964 = vunpack.c.h.b16 %v4481
    %v5965 = vunpack.c.l.b16 %v4482
    %v5966 = vunpack.c.h.b16 %v4482
    %v5967 = vunpack.c.l.b16 %v4483
    %v5968 = vunpack.c.h.b16 %v4483
    %v5969 = vunpack.c.l.b16 %v4484
    %v5970 = vunpack.c.h.b16 %v4484
    %v5971 = vunpack.c.l.b16 %v4485
    %v5972 = vunpack.c.h.b16 %v4485
    %v5973 = vunpack.c.l.b16 %v4486
    %v5974 = vunpack.c.h.b16 %v4486
    %v5975 = vunpack.c.l.b16 %v4487
    %v5976 = vunpack.c.h.b16 %v4487
    %v5977 = vunpack.c.l.b16 %v4488
    %v5978 = vunpack.c.h.b16 %v4488
    %v5979 = vunpack.c.l.b16 %v4489
    %v5980 = vunpack.c.h.b16 %v4489
    %v5981 = vunpack.c.l.b16 %v4490
    %v5982 = vunpack.c.h.b16 %v4490
    %v5983 = vunpack.c.l.b16 %v4491
    %v5984 = vunpack.c.h.b16 %v4491
    %v5985 = vunpack.c.l.b16 %v4492
    %v5986 = vunpack.c.h.b16 %v4492
    %v5987 = vunpack.c.l.b16 %v4493
    %v5988 = vunpack.c.h.b16 %v4493
    %v5989 = vunpack.c.l.b16 %v4494
    %v5990 = vunpack.c.h.b16 %v4494
    %v5991 = vunpack.c.l.b16 %v4495
    %v5992 = vunpack.c.h.b16 %v4495
    %v5993 = vunpack.c.l.b16 %v4496
    %v5994 = vunpack.c.h.b16 %v4496
    %v5995 = vunpack.c.l.b16 %v4497
    %v5996 = vunpack.c.h.b16 %v4497
    %v5997 = vunpack.c.l.b16 %v4498
    %v5998 = vunpack.c.h.b16 %v4498
    %v5999 = vunpack.c.l.b16 %v4499
    %v6000 = vunpack.c.h.b16 %v4499
    %v6001 = vunpack.c.l.b16 %v4500
    %v6002 = vunpack.c.h.b16 %v4500
    %v6003 = vunpack.c.l.b16 %v4501
    %v6004 = vunpack.c.h.b16 %v4501
    %v6005 = vunpack.c.l.b16 %v4502
    %v6006 = vunpack.c.h.b16 %v4502
    %v6007 = vunpack.c.l.b16 %v4503
    %v6008 = vunpack.c.h.b16 %v4503
    %v6009 = vunpack.c.l.b16 %v4504
    %v6010 = vunpack.c.h.b16 %v4504
    %v6011 = vunpack.c.l.b16 %v4505
    %v6012 = vunpack.c.h.b16 %v4505
    %v6013 = vunpack.c.l.b16 %v4506
    %v6014 = vunpack.c.h.b16 %v4506
    %v6015 = vunpack.c.l.b16 %v4507
    %v6016 = vunpack.c.h.b16 %v4507
    %v6017 = vunpack.c.l.b16 %v4508
    %v6018 = vunpack.c.h.b16 %v4508
    %v6019 = vunpack.c.l.b16 %v4509
    %v6020 = vunpack.c.h.b16 %v4509
    %v6021 = vunpack.c.l.b16 %v4510
    %v6022 = vunpack.c.h.b16 %v4510
    %v6023 = vunpack.c.l.b16 %v4511
    %v6024 = vunpack.c.h.b16 %v4511
    %v6025 = vunpack.c.l.b16 %v4512
    %v6026 = vunpack.c.h.b16 %v4512
    %v6027 = vunpack.c.l.b16 %v4513
    %v6028 = vunpack.c.h.b16 %v4513
    %v6029 = vunpack.c.l.b16 %v4514
    %v6030 = vunpack.c.h.b16 %v4514
    %v6031 = vunpack.c.l.b16 %v4515
    %v6032 = vunpack.c.h.b16 %v4515
    %v6033 = vunpack.c.l.b16 %v4516
    %v6034 = vunpack.c.h.b16 %v4516
    %v6035 = vunpack.c.l.b16 %v4517
    %v6036 = vunpack.c.h.b16 %v4517
    %v6037 = vunpack.c.l.b16 %v4518
    %v6038 = vunpack.c.h.b16 %v4518
    %v6039 = vunpack.c.l.b16 %v4519
    %v6040 = vunpack.c.h.b16 %v4519
    %v6041 = vunpack.c.l.b16 %v4520
    %v6042 = vunpack.c.h.b16 %v4520
    %v6043 = vunpack.c.l.b16 %v4521
    %v6044 = vunpack.c.h.b16 %v4521
    %v6045 = vunpack.c.l.b16 %v4522
    %v6046 = vunpack.c.h.b16 %v4522
    %v6047 = vunpack.c.l.b16 %v4523
    %v6048 = vunpack.c.h.b16 %v4523
    %v6049 = vunpack.c.l.b16 %v4524
    %v6050 = vunpack.c.h.b16 %v4524
    %v6051 = vunpack.c.l.b16 %v4525
    %v6052 = vunpack.c.h.b16 %v4525
    %v6053 = vunpack.c.l.b16 %v4526
    %v6054 = vunpack.c.h.b16 %v4526
    %v6055 = vunpack.c.l.b16 %v4527
    %v6056 = vunpack.c.h.b16 %v4527
    %v6057 = vunpack.c.l.b16 %v4528
    %v6058 = vunpack.c.h.b16 %v4528
    %v6059 = vunpack.c.l.b16 %v4529
    %v6060 = vunpack.c.h.b16 %v4529
    %v6061 = vunpack.c.l.b16 %v4530
    %v6062 = vunpack.c.h.b16 %v4530
    %v6063 = vunpack.c.l.b16 %v4531
    %v6064 = vunpack.c.h.b16 %v4531
    %v6065 = vunpack.c.l.b16 %v4532
    %v6066 = vunpack.c.h.b16 %v4532
    %v6067 = vunpack.c.l.b16 %v4533
    %v6068 = vunpack.c.h.b16 %v4533
    %v6069 = vunpack.c.l.b16 %v4534
    %v6070 = vunpack.c.h.b16 %v4534
    %v6071 = vunpack.c.l.b16 %v4535
    %v6072 = vunpack.c.h.b16 %v4535
    %v6073 = vunpack.c.l.b16 %v4536
    %v6074 = vunpack.c.h.b16 %v4536
    %v6075 = vunpack.c.l.b16 %v4537
    %v6076 = vunpack.c.h.b16 %v4537
    %v6077 = vunpack.c.l.b16 %v4538
    %v6078 = vunpack.c.h.b16 %v4538
    %v6079 = vunpack.c.l.b16 %v4539
    %v6080 = vunpack.c.h.b16 %v4539
    %v6081 = vunpack.c.l.b16 %v4540
    %v6082 = vunpack.c.h.b16 %v4540
    %v6083 = vunpack.c.l.b16 %v4541
    %v6084 = vunpack.c.h.b16 %v4541
    %v6085 = vunpack.c.l.b16 %v4542
    %v6086 = vunpack.c.h.b16 %v4542
    %v6087 = vunpack.c.l.b16 %v4543
    %v6088 = vunpack.c.h.b16 %v4543
    %v6089 = vunpack.c.l.b16 %v4544
    %v6090 = vunpack.c.h.b16 %v4544
    %v6091 = vunpack.c.l.b16 %v4545
    %v6092 = vunpack.c.h.b16 %v4545
    %v6093 = vunpack.c.l.b16 %v4546
    %v6094 = vunpack.c.h.b16 %v4546
    %v6095 = vunpack.c.l.b16 %v4547
    %v6096 = vunpack.c.h.b16 %v4547
    %v6097 = vunpack.c.l.b16 %v4548
    %v6098 = vunpack.c.h.b16 %v4548
    %v6099 = vunpack.c.l.b16 %v4549
    %v6100 = vunpack.c.h.b16 %v4549
    %v6101 = vunpack.c.l.b16 %v4550
    %v6102 = vunpack.c.h.b16 %v4550
    %v6103 = vunpack.c.l.b16 %v4551
    %v6104 = vunpack.c.h.b16 %v4551
    %v6105 = vunpack.c.l.b16 %v4552
    %v6106 = vunpack.c.h.b16 %v4552
    %v6107 = vunpack.c.l.b16 %v4553
    %v6108 = vunpack.c.h.b16 %v4553
    %v6109 = vunpack.c.l.b16 %v4554
    %v6110 = vunpack.c.h.b16 %v4554
    %v6111 = vunpack.c.l.b16 %v4555
    %v6112 = vunpack.c.h.b16 %v4555
    %v6113 = vunpack.c.l.b16 %v4556
    %v6114 = vunpack.c.h.b16 %v4556
    %v6115 = vunpack.c.l.b16 %v4557
    %v6116 = vunpack.c.h.b16 %v4557
    %v6117 = vunpack.c.l.b16 %v4558
    %v6118 = vunpack.c.h.b16 %v4558
    %v6119 = vunpack.c.l.b16 %v4559
    %v6120 = vunpack.c.h.b16 %v4559
    %v6121 = vunpack.c.l.b16 %v4560
    %v6122 = vunpack.c.h.b16 %v4560
    %v6123 = vunpack.c.l.b16 %v4561
    %v6124 = vunpack.c.h.b16 %v4561
    %v6125 = vunpack.c.l.b16 %v4562
    %v6126 = vunpack.c.h.b16 %v4562
    %v6127 = vunpack.c.l.b16 %v4563
    %v6128 = vunpack.c.h.b16 %v4563
    %v6129 = vunpack.c.l.b16 %v4564
    %v6130 = vunpack.c.h.b16 %v4564
    %v6131 = vunpack.c.l.b16 %v4565
    %v6132 = vunpack.c.h.b16 %v4565
    %v6133 = vunpack.c.l.b16 %v4566
    %v6134 = vunpack.c.h.b16 %v4566
    %v6135 = vunpack.c.l.b16 %v4567
    %v6136 = vunpack.c.h.b16 %v4567
    %v6137 = vunpack.c.l.b16 %v4568
    %v6138 = vunpack.c.h.b16 %v4568
    %v6139 = vunpack.c.l.b16 %v4569
    %v6140 = vunpack.c.h.b16 %v4569
    %v6141 = vunpack.c.l.b16 %v4570
    %v6142 = vunpack.c.h.b16 %v4570
    %v6143 = vunpack.c.l.b16 %v4571
    %v6144 = vunpack.c.h.b16 %v4571
    %v6145 = vunpack.c.l.b16 %v4572
    %v6146 = vunpack.c.h.b16 %v4572
    %v6147 = vunpack.c.l.b16 %v4573
    %v6148 = vunpack.c.h.b16 %v4573
    %v6149 = vunpack.c.l.b16 %v4574
    %v6150 = vunpack.c.h.b16 %v4574
    %v6151 = vunpack.c.l.b16 %v4575
    %v6152 = vunpack.c.h.b16 %v4575
    %v6153 = vunpack.c.l.b16 %v4576
    %v6154 = vunpack.c.h.b16 %v4576
    %v6155 = vunpack.c.l.b16 %v4577
    %v6156 = vunpack.c.h.b16 %v4577
    %v6157 = vunpack.c.l.b16 %v4578
    %v6158 = vunpack.c.h.b16 %v4578
    %v6159 = vunpack.c.l.b16 %v4579
    %v6160 = vunpack.c.h.b16 %v4579
    %v6161 = vunpack.c.l.b16 %v4580
    %v6162 = vunpack.c.h.b16 %v4580
    %v6163 = vunpack.c.l.b16 %v4581
    %v6164 = vunpack.c.h.b16 %v4581
    %v6165 = vunpack.c.l.b16 %v4582
    %v6166 = vunpack.c.h.b16 %v4582
    %v6167 = vunpack.c.l.b16 %v4583
    %v6168 = vunpack.c.h.b16 %v4583
    %v6169 = vunpack.c.l.b16 %v4584
    %v6170 = vunpack.c.h.b16 %v4584
    %v6171 = vunpack.c.l.b16 %v4585
    %v6172 = vunpack.c.h.b16 %v4585
    %v6173 = vunpack.c.l.b16 %v4586
    %v6174 = vunpack.c.h.b16 %v4586
    %v6175 = vunpack.c.l.b16 %v4587
    %v6176 = vunpack.c.h.b16 %v4587
    %v6177 = vunpack.c.l.b16 %v4588
    %v6178 = vunpack.c.h.b16 %v4588
    %v6179 = vunpack.c.l.b16 %v4589
    %v6180 = vunpack.c.h.b16 %v4589
    %v6181 = vunpack.c.l.b16 %v4590
    %v6182 = vunpack.c.h.b16 %v4590
    %v6183 = vunpack.c.l.b16 %v4591
    %v6184 = vunpack.c.h.b16 %v4591
    %v6185 = vunpack.c.l.b16 %v4592
    %v6186 = vunpack.c.h.b16 %v4592
    %v6187 = vunpack.c.l.b16 %v4593
    %v6188 = vunpack.c.h.b16 %v4593
    %v6189 = vunpack.c.l.b16 %v4594
    %v6190 = vunpack.c.h.b16 %v4594
    %v6191 = vunpack.c.l.b16 %v4595
    %v6192 = vunpack.c.h.b16 %v4595
    %v6193 = vunpack.c.l.b16 %v4596
    %v6194 = vunpack.c.h.b16 %v4596
    %v6195 = vunpack.c.l.b16 %v4597
    %v6196 = vunpack.c.h.b16 %v4597
    %v6197 = vunpack.c.l.b16 %v4598
    %v6198 = vunpack.c.h.b16 %v4598
    %v6199 = vunpack.c.l.b16 %v4599
    %v6200 = vunpack.c.h.b16 %v4599
    %v6201 = vunpack.c.l.b16 %v4600
    %v6202 = vunpack.c.h.b16 %v4600
    %v6203 = vunpack.c.l.b16 %v4601
    %v6204 = vunpack.c.h.b16 %v4601
    %v6205 = vunpack.c.l.b16 %v4602
    %v6206 = vunpack.c.h.b16 %v4602
    %v6207 = vunpack.c.l.b16 %v4603
    %v6208 = vunpack.c.h.b16 %v4603
    %v6209 = vunpack.c.l.b16 %v4604
    %v6210 = vunpack.c.h.b16 %v4604
    %v6211 = vunpack.c.l.b16 %v4605
    %v6212 = vunpack.c.h.b16 %v4605
    %v6213 = vunpack.c.l.b16 %v4606
    %v6214 = vunpack.c.h.b16 %v4606
    %v6215 = vunpack.c.l.b16 %v4607
    %v6216 = vunpack.c.h.b16 %v4607
    %v6217 = vunpack.c.l.b16 %v4608
    %v6218 = vunpack.c.h.b16 %v4608
    %v6219 = vunpack.c.l.b16 %v4609
    %v6220 = vunpack.c.h.b16 %v4609
    %v6221 = vunpack.c.l.b16 %v4610
    %v6222 = vunpack.c.h.b16 %v4610
    %v6223 = vunpack.c.l.b16 %v4611
    %v6224 = vunpack.c.h.b16 %v4611
    %v6225 = vunpack.c.l.b16 %v4612
    %v6226 = vunpack.c.h.b16 %v4612
    %v6227 = vunpack.c.l.b16 %v4613
    %v6228 = vunpack.c.h.b16 %v4613
    %v6229 = vunpack.c.l.b16 %v4614
    %v6230 = vunpack.c.h.b16 %v4614
    %v6231 = vunpack.c.l.b16 %v4615
    %v6232 = vunpack.c.h.b16 %v4615
    %v6233 = vunpack.c.l.b16 %v4616
    %v6234 = vunpack.c.h.b16 %v4616
    %v6235 = vunpack.c.l.b16 %v4617
    %v6236 = vunpack.c.h.b16 %v4617
    %v6237 = vunpack.c.l.b16 %v4618
    %v6238 = vunpack.c.h.b16 %v4618
    %v6239 = vunpack.c.l.b16 %v4619
    %v6240 = vunpack.c.h.b16 %v4619
    %v6241 = vunpack.c.l.b16 %v4620
    %v6242 = vunpack.c.h.b16 %v4620
    %v6243 = vunpack.c.l.b16 %v4621
    %v6244 = vunpack.c.h.b16 %v4621
    %v6245 = vunpack.c.l.b16 %v4622
    %v6246 = vunpack.c.h.b16 %v4622
    %v6247 = vunpack.c.l.b16 %v4623
    %v6248 = vunpack.c.h.b16 %v4623
    %v6249 = vunpack.c.l.b16 %v4624
    %v6250 = vunpack.c.h.b16 %v4624
    %v6251 = vunpack.c.l.b16 %v4625
    %v6252 = vunpack.c.h.b16 %v4625
    %v6253 = vunpack.c.l.b16 %v4626
    %v6254 = vunpack.c.h.b16 %v4626
    %v6255 = vunpack.c.l.b16 %v4627
    %v6256 = vunpack.c.h.b16 %v4627
    %v6257 = vunpack.c.l.b16 %v4628
    %v6258 = vunpack.c.h.b16 %v4628
    %v6259 = vunpack.c.l.b16 %v4629
    %v6260 = vunpack.c.h.b16 %v4629
    %v6261 = vunpack.c.l.b16 %v4630
    %v6262 = vunpack.c.h.b16 %v4630
    %v6263 = vunpack.c.l.b16 %v4631
    %v6264 = vunpack.c.h.b16 %v4631
    %v6265 = vunpack.c.l.b16 %v4632
    %v6266 = vunpack.c.h.b16 %v4632
    %v6267 = vunpack.c.l.b16 %v4633
    %v6268 = vunpack.c.h.b16 %v4633
    %v6269 = vunpack.c.l.b16 %v4634
    %v6270 = vunpack.c.h.b16 %v4634
    %v6271 = vunpack.c.l.b16 %v4635
    %v6272 = vunpack.c.h.b16 %v4635
    %v6273 = vunpack.c.l.b16 %v4636
    %v6274 = vunpack.c.h.b16 %v4636
    %v6275 = vunpack.c.l.b16 %v4637
    %v6276 = vunpack.c.h.b16 %v4637
    %v6277 = vunpack.c.l.b16 %v4638
    %v6278 = vunpack.c.h.b16 %v4638
    %v6279 = vunpack.c.l.b16 %v4639
    %v6280 = vunpack.c.h.b16 %v4639
    %v6281 = vunpack.c.l.b16 %v4640
    %v6282 = vunpack.c.h.b16 %v4640
    %v6283 = vunpack.c.l.b16 %v4641
    %v6284 = vunpack.c.h.b16 %v4641
    %v6285 = vunpack.c.l.b16 %v4642
    %v6286 = vunpack.c.h.b16 %v4642
    %v6287 = vunpack.c.l.b16 %v4643
    %v6288 = vunpack.c.h.b16 %v4643
    %v6289 = vunpack.c.l.b16 %v4644
    %v6290 = vunpack.c.h.b16 %v4644
    %v6291 = vunpack.c.l.b16 %v4645
    %v6292 = vunpack.c.h.b16 %v4645
    %v6293 = vunpack.c.l.b16 %v4646
    %v6294 = vunpack.c.h.b16 %v4646
    %v6295 = vunpack.c.l.b16 %v4647
    %v6296 = vunpack.c.h.b16 %v4647
    %v6297 = vunpack.c.l.b16 %v4648
    %v6298 = vunpack.c.h.b16 %v4648
    %v6299 = vunpack.c.l.b16 %v4649
    %v6300 = vunpack.c.h.b16 %v4649
    %v6301 = vunpack.c.l.b16 %v4650
    %v6302 = vunpack.c.h.b16 %v4650
    %v6303 = vunpack.c.l.b16 %v4651
    %v6304 = vunpack.c.h.b16 %v4651
    %v6305 = vunpack.c.l.b16 %v4652
    %v6306 = vunpack.c.h.b16 %v4652
    %v6307 = vunpack.c.l.b16 %v4653
    %v6308 = vunpack.c.h.b16 %v4653
    %v6309 = vunpack.c.l.b16 %v4654
    %v6310 = vunpack.c.h.b16 %v4654
    %v6311 = vunpack.c.l.b16 %v4655
    %v6312 = vunpack.c.h.b16 %v4655
    %v6313 = vunpack.c.l.b16 %v4656
    %v6314 = vunpack.c.h.b16 %v4656
    %v6315 = vunpack.c.l.b16 %v4657
    %v6316 = vunpack.c.h.b16 %v4657
    %v6317 = vunpack.c.l.b16 %v4658
    %v6318 = vunpack.c.h.b16 %v4658
    %v6319 = vunpack.c.l.b16 %v4659
    %v6320 = vunpack.c.h.b16 %v4659
    %v6321 = vunpack.c.l.b16 %v4660
    %v6322 = vunpack.c.h.b16 %v4660
    %v6323 = vunpack.c.l.b16 %v4661
    %v6324 = vunpack.c.h.b16 %v4661
    %v6325 = vunpack.c.l.b16 %v4662
    %v6326 = vunpack.c.h.b16 %v4662
    %v6327 = vunpack.c.l.b16 %v4663
    %v6328 = vunpack.c.h.b16 %v4663
    %v6329 = vunpack.c.l.b16 %v4664
    %v6330 = vunpack.c.h.b16 %v4664
    %v6331 = vunpack.c.l.b16 %v4665
    %v6332 = vunpack.c.h.b16 %v4665
    %v6333 = vunpack.c.l.b16 %v4666
    %v6334 = vunpack.c.h.b16 %v4666
    %v6335 = vunpack.c.l.b16 %v4667
    %v6336 = vunpack.c.h.b16 %v4667
    %v6337 = vunpack.c.l.b16 %v4668
    %v6338 = vunpack.c.h.b16 %v4668
    %v6339 = vunpack.c.l.b16 %v4669
    %v6340 = vunpack.c.h.b16 %v4669
    %v6341 = vunpack.c.l.b16 %v4670
    %v6342 = vunpack.c.h.b16 %v4670
    %v6343 = vunpack.c.l.b16 %v4671
    %v6344 = vunpack.c.h.b16 %v4671
    %v6345 = vunpack.c.l.b16 %v4672
    %v6346 = vunpack.c.h.b16 %v4672
    %v6347 = vunpack.c.l.b16 %v4673
    %v6348 = vunpack.c.h.b16 %v4673
    %v6349 = vunpack.c.l.b16 %v4674
    %v6350 = vunpack.c.h.b16 %v4674
    %v6351 = vunpack.c.l.b16 %v4675
    %v6352 = vunpack.c.h.b16 %v4675
    %v6353 = vunpack.c.l.b16 %v4676
    %v6354 = vunpack.c.h.b16 %v4676
    %v6355 = vunpack.c.l.b16 %v4677
    %v6356 = vunpack.c.h.b16 %v4677
    %v6357 = vunpack.c.l.b16 %v4678
    %v6358 = vunpack.c.h.b16 %v4678
    %v6359 = vunpack.c.l.b16 %v4679
    %v6360 = vunpack.c.h.b16 %v4679
    %v6361 = vunpack.c.l.b16 %v4680
    %v6362 = vunpack.c.h.b16 %v4680
    %v6363 = vunpack.c.l.b16 %v4681
    %v6364 = vunpack.c.h.b16 %v4681
    %v6365 = vunpack.c.l.b16 %v4682
    %v6366 = vunpack.c.h.b16 %v4682
    %v6367 = vunpack.c.l.b16 %v4683
    %v6368 = vunpack.c.h.b16 %v4683
    %v6369 = vunpack.c.l.b16 %v4684
    %v6370 = vunpack.c.h.b16 %v4684
    %v6371 = vunpack.c.l.b16 %v4685
    %v6372 = vunpack.c.h.b16 %v4685
    %v6373 = vunpack.c.l.b16 %v4686
    %v6374 = vunpack.c.h.b16 %v4686
    %v6375 = vunpack.c.l.b16 %v4687
    %v6376 = vunpack.c.h.b16 %v4687
    %v6377 = vunpack.c.l.b16 %v4688
    %v6378 = vunpack.c.h.b16 %v4688
    %v6379 = vunpack.c.l.b16 %v4689
    %v6380 = vunpack.c.h.b16 %v4689
    %v6381 = vunpack.c.l.b16 %v4690
    %v6382 = vunpack.c.h.b16 %v4690
    %v6383 = vunpack.c.l.b16 %v4691
    %v6384 = vunpack.c.h.b16 %v4691
    %v6385 = vunpack.c.l.b16 %v4692
    %v6386 = vunpack.c.h.b16 %v4692
    %v6387 = vunpack.c.l.b16 %v4693
    %v6388 = vunpack.c.h.b16 %v4693
    %v6389 = vunpack.c.l.b16 %v4694
    %v6390 = vunpack.c.h.b16 %v4694
    %v6391 = vunpack.c.l.b16 %v4695
    %v6392 = vunpack.c.h.b16 %v4695
    %v6393 = vunpack.c.l.b16 %v4696
    %v6394 = vunpack.c.h.b16 %v4696
    %v6395 = vunpack.c.l.b16 %v4697
    %v6396 = vunpack.c.h.b16 %v4697
    %v6397 = vunpack.c.l.b16 %v4698
    %v6398 = vunpack.c.h.b16 %v4698
    %v6399 = vunpack.c.l.b16 %v4699
    %v6400 = vunpack.c.h.b16 %v4699
    %v6401 = vunpack.c.l.b16 %v4700
    %v6402 = vunpack.c.h.b16 %v4700
    %v6403 = vunpack.c.l.b16 %v4701
    %v6404 = vunpack.c.h.b16 %v4701
    %v6405 = vunpack.c.l.b16 %v4702
    %v6406 = vunpack.c.h.b16 %v4702
    %v6407 = vunpack.c.l.b16 %v4703
    %v6408 = vunpack.c.h.b16 %v4703
    %v6409 = vunpack.c.l.b16 %v4704
    %v6410 = vunpack.c.h.b16 %v4704
    %v6411 = vunpack.c.l.b16 %v4705
    %v6412 = vunpack.c.h.b16 %v4705
    %v6413 = vunpack.c.l.b16 %v4706
    %v6414 = vunpack.c.h.b16 %v4706
    %v6415 = vunpack.c.l.b16 %v4707
    %v6416 = vunpack.c.h.b16 %v4707
    %v6417 = vunpack.c.l.b16 %v4708
    %v6418 = vunpack.c.h.b16 %v4708
    %v6419 = vunpack.c.l.b16 %v4709
    %v6420 = vunpack.c.h.b16 %v4709
    %v6421 = vunpack.c.l.b16 %v4710
    %v6422 = vunpack.c.h.b16 %v4710
    %v6423 = vunpack.c.l.b16 %v4711
    %v6424 = vunpack.c.h.b16 %v4711
    %v6425 = vunpack.c.l.b16 %v4712
    %v6426 = vunpack.c.h.b16 %v4712
    %v6427 = vunpack.c.l.b16 %v4713
    %v6428 = vunpack.c.h.b16 %v4713
    %v6429 = vunpack.c.l.b16 %v4714
    %v6430 = vunpack.c.h.b16 %v4714
    %v6431 = vunpack.c.l.b16 %v4715
    %v6432 = vunpack.c.h.b16 %v4715
    %v6433 = vunpack.c.l.b16 %v4716
    %v6434 = vunpack.c.h.b16 %v4716
    %v6435 = vunpack.c.l.b16 %v4717
    %v6436 = vunpack.c.h.b16 %v4717
    %v6437 = vunpack.c.l.b16 %v4718
    %v6438 = vunpack.c.h.b16 %v4718
    %v6439 = vunpack.c.l.b16 %v4719
    %v6440 = vunpack.c.h.b16 %v4719
    %v6441 = vunpack.c.l.b16 %v4720
    %v6442 = vunpack.c.h.b16 %v4720
    %v6443 = vunpack.c.l.b16 %v4721
    %v6444 = vunpack.c.h.b16 %v4721
    %v6445 = vunpack.c.l.b16 %v4722
    %v6446 = vunpack.c.h.b16 %v4722
    %v6447 = vunpack.c.l.b16 %v4723
    %v6448 = vunpack.c.h.b16 %v4723
    %v6449 = vunpack.c.l.b16 %v4724
    %v6450 = vunpack.c.h.b16 %v4724
    %v6451 = vunpack.c.l.b16 %v4725
    %v6452 = vunpack.c.h.b16 %v4725
    %v6453 = vunpack.c.l.b16 %v4726
    %v6454 = vunpack.c.h.b16 %v4726
    %v6455 = vunpack.c.l.b16 %v4727
    %v6456 = vunpack.c.h.b16 %v4727
    %v6457 = vunpack.c.l.b16 %v4728
    %v6458 = vunpack.c.h.b16 %v4728
    %v6459 = vunpack.c.l.b16 %v4729
    %v6460 = vunpack.c.h.b16 %v4729
    %v6461 = vunpack.c.l.b16 %v4730
    %v6462 = vunpack.c.h.b16 %v4730
    %v6463 = vunpack.c.l.b16 %v4731
    %v6464 = vunpack.c.h.b16 %v4731
    %v6465 = vunpack.c.l.b16 %v4732
    %v6466 = vunpack.c.h.b16 %v4732
    %v6467 = vunpack.c.l.b16 %v4733
    %v6468 = vunpack.c.h.b16 %v4733
    %v6469 = vunpack.c.l.b16 %v4734
    %v6470 = vunpack.c.h.b16 %v4734
    %v6471 = vunpack.c.l.b16 %v4735
    %v6472 = vunpack.c.h.b16 %v4735
    %v6473 = vunpack.c.l.b16 %v4736
    %v6474 = vunpack.c.h.b16 %v4736
    %v6475 = vunpack.c.l.b16 %v4737
    %v6476 = vunpack.c.h.b16 %v4737
    %v6477 = vunpack.c.l.b16 %v4738
    %v6478 = vunpack.c.h.b16 %v4738
    %v6479 = vunpack.c.l.b16 %v4739
    %v6480 = vunpack.c.h.b16 %v4739
    %v6481 = vunpack.c.l.b16 %v4740
    %v6482 = vunpack.c.h.b16 %v4740
    %v6483 = vunpack.c.l.b16 %v4741
    %v6484 = vunpack.c.h.b16 %v4741
    %v6485 = vunpack.c.l.b16 %v4742
    %v6486 = vunpack.c.h.b16 %v4742
    %v6487 = vunpack.c.l.b16 %v4743
    %v6488 = vunpack.c.h.b16 %v4743
    %v6489 = vunpack.c.l.b16 %v4744
    %v6490 = vunpack.c.h.b16 %v4744
    %v6491 = vunpack.c.l.b16 %v4745
    %v6492 = vunpack.c.h.b16 %v4745
    %v6493 = vunpack.c.l.b16 %v4746
    %v6494 = vunpack.c.h.b16 %v4746
    %v6495 = vunpack.c.l.b16 %v4747
    %v6496 = vunpack.c.h.b16 %v4747
    %v6497 = vunpack.c.l.b16 %v4748
    %v6498 = vunpack.c.h.b16 %v4748
    %v6499 = vunpack.c.l.b16 %v4749
    %v6500 = vunpack.c.h.b16 %v4749
    %v6501 = vunpack.c.l.b16 %v4750
    %v6502 = vunpack.c.h.b16 %v4750
    %v6503 = vunpack.c.l.b16 %v4751
    %v6504 = vunpack.c.h.b16 %v4751
    %v6505 = vunpack.c.l.b16 %v4752
    %v6506 = vunpack.c.h.b16 %v4752
    %v6507 = vunpack.c.l.b16 %v4753
    %v6508 = vunpack.c.h.b16 %v4753
    %v6509 = vunpack.c.l.b16 %v4754
    %v6510 = vunpack.c.h.b16 %v4754
    %v6511 = vunpack.c.l.b16 %v4755
    %v6512 = vunpack.c.h.b16 %v4755
    %v6513 = vunpack.c.l.b16 %v4756
    %v6514 = vunpack.c.h.b16 %v4756
    %v6515 = vunpack.c.l.b16 %v4757
    %v6516 = vunpack.c.h.b16 %v4757
    %v6517 = vunpack.c.l.b16 %v4758
    %v6518 = vunpack.c.h.b16 %v4758
    %v6519 = vunpack.c.l.b16 %v4759
    %v6520 = vunpack.c.h.b16 %v4759
    %v6521 = vunpack.c.l.b16 %v4760
    %v6522 = vunpack.c.h.b16 %v4760
    %v6523 = vunpack.c.l.b16 %v4761
    %v6524 = vunpack.c.h.b16 %v4761
    %v6525 = vunpack.c.l.b16 %v4762
    %v6526 = vunpack.c.h.b16 %v4762
    %v6527 = vunpack.c.l.b16 %v4763
    %v6528 = vunpack.c.h.b16 %v4763
    %v6529 = vunpack.c.l.b16 %v4764
    %v6530 = vunpack.c.h.b16 %v4764
    %v6531 = vunpack.c.l.b16 %v4765
    %v6532 = vunpack.c.h.b16 %v4765
    %v6533 = vunpack.c.l.b16 %v4766
    %v6534 = vunpack.c.h.b16 %v4766
    %v6535 = vunpack.c.l.b16 %v4767
    %v6536 = vunpack.c.h.b16 %v4767
    %v6537 = vunpack.c.l.b16 %v4768
    %v6538 = vunpack.c.h.b16 %v4768
    %v6539 = vunpack.c.l.b16 %v4769
    %v6540 = vunpack.c.h.b16 %v4769
    %v6541 = vunpack.c.l.b16 %v4770
    %v6542 = vunpack.c.h.b16 %v4770
    %v6543 = vunpack.c.l.b16 %v4771
    %v6544 = vunpack.c.h.b16 %v4771
    %v6545 = vunpack.c.l.b16 %v4772
    %v6546 = vunpack.c.h.b16 %v4772
    %v6547 = vunpack.c.l.b16 %v4773
    %v6548 = vunpack.c.h.b16 %v4773
    %v6549 = vunpack.c.l.b16 %v4774
    %v6550 = vunpack.c.h.b16 %v4774
    %v6551 = vunpack.c.l.b16 %v4775
    %v6552 = vunpack.c.h.b16 %v4775
    %v6553 = vunpack.c.l.b16 %v4776
    %v6554 = vunpack.c.h.b16 %v4776
    %v6555 = vunpack.c.l.b16 %v4777
    %v6556 = vunpack.c.h.b16 %v4777
    %v6557 = vunpack.c.l.b16 %v4778
    %v6558 = vunpack.c.h.b16 %v4778
    %v6559 = vunpack.c.l.b16 %v4779
    %v6560 = vunpack.c.h.b16 %v4779
    %v6561 = vunpack.c.l.b16 %v4780
    %v6562 = vunpack.c.h.b16 %v4780
    %v6563 = vunpack.c.l.b16 %v4781
    %v6564 = vunpack.c.h.b16 %v4781
    %v6565 = vunpack.c.l.b16 %v4782
    %v6566 = vunpack.c.h.b16 %v4782
    %v6567 = vunpack.c.l.b16 %v4783
    %v6568 = vunpack.c.h.b16 %v4783
    %v6569 = vunpack.c.l.b16 %v4784
    %v6570 = vunpack.c.h.b16 %v4784
    %v6571 = vunpack.c.l.b16 %v4785
    %v6572 = vunpack.c.h.b16 %v4785
    %v6573 = vunpack.c.l.b16 %v4786
    %v6574 = vunpack.c.h.b16 %v4786
    %v6575 = vunpack.c.l.b16 %v4787
    %v6576 = vunpack.c.h.b16 %v4787
    %v6577 = vunpack.c.l.b16 %v4788
    %v6578 = vunpack.c.h.b16 %v4788
    %v6579 = vunpack.c.l.b16 %v4789
    %v6580 = vunpack.c.h.b16 %v4789
    %v6581 = vunpack.c.l.b16 %v4790
    %v6582 = vunpack.c.h.b16 %v4790
    %v6583 = vunpack.c.l.b16 %v4791
    %v6584 = vunpack.c.h.b16 %v4791
    %v6585 = vunpack.c.l.b16 %v4792
    %v6586 = vunpack.c.h.b16 %v4792
    %v6587 = vunpack.c.l.b16 %v4793
    %v6588 = vunpack.c.h.b16 %v4793
    %v6589 = vunpack.c.l.b16 %v4794
    %v6590 = vunpack.c.h.b16 %v4794
    %v6591 = vunpack.c.l.b16 %v4795
    %v6592 = vunpack.c.h.b16 %v4795
    %v6593 = vunpack.c.l.b16 %v4796
    %v6594 = vunpack.c.h.b16 %v4796
    %v6595 = vunpack.c.l.b16 %v4797
    %v6596 = vunpack.c.h.b16 %v4797
    %v6597 = vunpack.c.l.b16 %v4798
    %v6598 = vunpack.c.h.b16 %v4798
    %v6599 = vunpack.c.l.b16 %v4799
    %v6600 = vunpack.c.h.b16 %v4799
    %v6601 = vunpack.c.l.b16 %v4800
    %v6602 = vunpack.c.h.b16 %v4800
    %v6603 = vunpack.c.l.b16 %v4801
    %v6604 = vunpack.c.h.b16 %v4801
    %v6605 = vunpack.c.l.b16 %v4802
    %v6606 = vunpack.c.h.b16 %v4802
    %v6607 = vunpack.c.l.b16 %v4803
    %v6608 = vunpack.c.h.b16 %v4803
    %v6609 = vunpack.c.l.b16 %v4804
    %v6610 = vunpack.c.h.b16 %v4804
    %v6611 = vunpack.c.l.b16 %v4805
    %v6612 = vunpack.c.h.b16 %v4805
    %v6613 = vunpack.c.l.b16 %v4806
    %v6614 = vunpack.c.h.b16 %v4806
    %v6615 = vunpack.c.l.b16 %v4807
    %v6616 = vunpack.c.h.b16 %v4807
    %v6617 = vunpack.c.l.b16 %v4808
    %v6618 = vunpack.c.h.b16 %v4808
    %v6619 = vunpack.c.l.b16 %v4809
    %v6620 = vunpack.c.h.b16 %v4809
    %v6621 = vunpack.c.l.b16 %v4810
    %v6622 = vunpack.c.h.b16 %v4810
    %v6623 = vunpack.c.l.b16 %v4811
    %v6624 = vunpack.c.h.b16 %v4811
    %v6625 = vunpack.c.l.b16 %v4812
    %v6626 = vunpack.c.h.b16 %v4812
    %v6627 = vunpack.c.l.b16 %v4813
    %v6628 = vunpack.c.h.b16 %v4813
    %v6629 = vunpack.c.l.b16 %v4814
    %v6630 = vunpack.c.h.b16 %v4814
    %v6631 = vunpack.c.l.b16 %v4815
    %v6632 = vunpack.c.h.b16 %v4815
    %v6633 = vunpack.c.l.b16 %v4816
    %v6634 = vunpack.c.h.b16 %v4816
    %v6635 = vunpack.c.l.b16 %v4817
    %v6636 = vunpack.c.h.b16 %v4817
    %v6637 = vunpack.c.l.b16 %v4818
    %v6638 = vunpack.c.h.b16 %v4818
    %v6639 = vunpack.c.l.b16 %v4819
    %v6640 = vunpack.c.h.b16 %v4819
    %v6641 = vunpack.c.l.b16 %v4820
    %v6642 = vunpack.c.h.b16 %v4820
    %v6643 = vunpack.c.l.b16 %v4821
    %v6644 = vunpack.c.h.b16 %v4821
    %v6645 = vunpack.c.l.b16 %v4822
    %v6646 = vunpack.c.h.b16 %v4822
    %v6647 = vunpack.c.l.b16 %v4823
    %v6648 = vunpack.c.h.b16 %v4823
    %v6649 = vunpack.c.l.b16 %v4824
    %v6650 = vunpack.c.h.b16 %v4824
    %v6651 = vunpack.c.l.b16 %v4825
    %v6652 = vunpack.c.h.b16 %v4825
    %v6653 = vunpack.c.l.b16 %v4826
    %v6654 = vunpack.c.h.b16 %v4826
    %v6655 = vunpack.c.l.b16 %v4827
    %v6656 = vunpack.c.h.b16 %v4827
    %v6657 = vunpack.c.l.b16 %v4828
    %v6658 = vunpack.c.h.b16 %v4828
    %v6659 = vunpack.c.l.b16 %v4829
    %v6660 = vunpack.c.h.b16 %v4829
    %v6661 = vunpack.c.l.b16 %v4830
    %v6662 = vunpack.c.h.b16 %v4830
    %v6663 = vunpack.c.l.b16 %v4831
    %v6664 = vunpack.c.h.b16 %v4831
    %v6665 = vunpack.c.l.b16 %v4832
    %v6666 = vunpack.c.h.b16 %v4832
    %v6667 = vunpack.c.l.b16 %v4833
    %v6668 = vunpack.c.h.b16 %v4833
    %v6669 = vunpack.c.l.b16 %v4834
    %v6670 = vunpack.c.h.b16 %v4834
    %v6671 = vunpack.c.l.b16 %v4835
    %v6672 = vunpack.c.h.b16 %v4835
    %v6673 = vunpack.c.l.b16 %v4836
    %v6674 = vunpack.c.h.b16 %v4836
    %v6675 = vunpack.c.l.b16 %v4837
    %v6676 = vunpack.c.h.b16 %v4837
    %v6677 = vunpack.c.l.b16 %v4838
    %v6678 = vunpack.c.h.b16 %v4838
    %v6679 = vunpack.c.l.b16 %v4839
    %v6680 = vunpack.c.h.b16 %v4839
    %v6681 = vunpack.c.l.b16 %v4840
    %v6682 = vunpack.c.h.b16 %v4840
    %v6683 = vunpack.c.l.b16 %v4841
    %v6684 = vunpack.c.h.b16 %v4841
    %v6685 = vunpack.c.l.b16 %v4842
    %v6686 = vunpack.c.h.b16 %v4842
    %v6687 = vunpack.c.l.b16 %v4843
    %v6688 = vunpack.c.h.b16 %v4843
    %v6689 = vunpack.c.l.b16 %v4844
    %v6690 = vunpack.c.h.b16 %v4844
    %v6691 = vunpack.c.l.b16 %v4845
    %v6692 = vunpack.c.h.b16 %v4845
    %v6693 = vunpack.c.l.b16 %v4846
    %v6694 = vunpack.c.h.b16 %v4846
    %v6695 = vunpack.c.l.b16 %v4847
    %v6696 = vunpack.c.h.b16 %v4847
    %v6697 = vunpack.c.l.b16 %v4848
    %v6698 = vunpack.c.h.b16 %v4848
    %v6699 = vunpack.c.l.b16 %v4849
    %v6700 = vunpack.c.h.b16 %v4849
    %v6701 = vunpack.c.l.b16 %v4850
    %v6702 = vunpack.c.h.b16 %v4850
    %v6703 = vunpack.c.l.b16 %v4851
    %v6704 = vunpack.c.h.b16 %v4851
    %v6705 = vunpack.c.l.b16 %v4852
    %v6706 = vunpack.c.h.b16 %v4852
    %v6707 = vunpack.c.l.b16 %v4853
    %v6708 = vunpack.c.h.b16 %v4853
    %v6709 = vunpack.c.l.b16 %v4854
    %v6710 = vunpack.c.h.b16 %v4854
    %v6711 = vunpack.c.l.b16 %v4855
    %v6712 = vunpack.c.h.b16 %v4855
    %v6713 = vunpack.c.l.b16 %v4856
    %v6714 = vunpack.c.h.b16 %v4856
    %v6715 = vunpack.c.l.b16 %v4857
    %v6716 = vunpack.c.h.b16 %v4857
    %v6717 = vunpack.c.l.b16 %v4858
    %v6718 = vunpack.c.h.b16 %v4858
    %v6719 = vunpack.c.l.b16 %v4859
    %v6720 = vunpack.c.h.b16 %v4859
    %v6721 = vunpack.c.l.b16 %v4860
    %v6722 = vunpack.c.h.b16 %v4860
    %v6723 = vunpack.c.l.b16 %v4861
    %v6724 = vunpack.c.h.b16 %v4861
    %v6725 = vunpack.c.l.b16 %v4862
    %v6726 = vunpack.c.h.b16 %v4862
    %v6727 = vunpack.c.l.b16 %v4863
    %v6728 = vunpack.c.h.b16 %v4863
    %v6729 = vunpack.c.l.b16 %v4864
    %v6730 = vunpack.c.h.b16 %v4864
    %v6731 = vunpack.c.l.b16 %v4865
    %v6732 = vunpack.c.h.b16 %v4865
    %v6733 = vunpack.c.l.b16 %v4866
    %v6734 = vunpack.c.h.b16 %v4866
    %v6735 = vunpack.c.l.b16 %v4867
    %v6736 = vunpack.c.h.b16 %v4867
    %v6737 = vunpack.c.l.b16 %v4868
    %v6738 = vunpack.c.h.b16 %v4868
    %v6739 = vunpack.c.l.b16 %v4869
    %v6740 = vunpack.c.h.b16 %v4869
    %v6741 = vunpack.c.l.b16 %v4870
    %v6742 = vunpack.c.h.b16 %v4870
    %v6743 = vunpack.c.l.b16 %v4871
    %v6744 = vunpack.c.h.b16 %v4871
    %v6745 = vunpack.c.l.b16 %v4872
    %v6746 = vunpack.c.h.b16 %v4872
    %v6747 = vunpack.c.l.b16 %v4873
    %v6748 = vunpack.c.h.b16 %v4873
    %v6749 = vunpack.c.l.b16 %v4874
    %v6750 = vunpack.c.h.b16 %v4874
    %v6751 = vunpack.c.l.b16 %v4875
    %v6752 = vunpack.c.h.b16 %v4875
    %v6753 = vunpack.c.l.b16 %v4876
    %v6754 = vunpack.c.h.b16 %v4876
    %v6755 = vunpack.c.l.b16 %v4877
    %v6756 = vunpack.c.h.b16 %v4877
    %v6757 = vunpack.c.l.b16 %v4878
    %v6758 = vunpack.c.h.b16 %v4878
    %v6759 = vunpack.c.l.b16 %v4879
    %v6760 = vunpack.c.h.b16 %v4879
    %v6761 = vunpack.c.l.b16 %v4880
    %v6762 = vunpack.c.h.b16 %v4880
    %v6763 = vunpack.c.l.b16 %v4881
    %v6764 = vunpack.c.h.b16 %v4881
    %v6765 = vunpack.c.l.b16 %v4882
    %v6766 = vunpack.c.h.b16 %v4882
    %v6767 = vunpack.c.l.b16 %v4883
    %v6768 = vunpack.c.h.b16 %v4883
    %v6769 = vunpack.c.l.b16 %v4884
    %v6770 = vunpack.c.h.b16 %v4884
    %v6771 = vunpack.c.l.b16 %v4885
    %v6772 = vunpack.c.h.b16 %v4885
    %v6773 = vunpack.c.l.b16 %v4886
    %v6774 = vunpack.c.h.b16 %v4886
    %v6775 = vunpack.c.l.b16 %v4887
    %v6776 = vunpack.c.h.b16 %v4887
    %v6777 = vunpack.c.l.b16 %v4888
    %v6778 = vunpack.c.h.b16 %v4888
    %v6779 = vunpack.c.l.b16 %v4889
    %v6780 = vunpack.c.h.b16 %v4889
    %v6781 = vunpack.c.l.b16 %v4890
    %v6782 = vunpack.c.h.b16 %v4890
    %v6783 = vunpack.c.l.b16 %v4891
    %v6784 = vunpack.c.h.b16 %v4891
    %v6785 = vunpack.c.l.b16 %v4892
    %v6786 = vunpack.c.h.b16 %v4892
    %v6787 = vunpack.c.l.b16 %v4893
    %v6788 = vunpack.c.h.b16 %v4893
    %v6789 = vunpack.c.l.b16 %v4894
    %v6790 = vunpack.c.h.b16 %v4894
    %v6791 = vunpack.c.l.b16 %v4895
    %v6792 = vunpack.c.h.b16 %v4895
    %v6793 = vunpack.c.l.b16 %v4896
    %v6794 = vunpack.c.h.b16 %v4896
    %v6795 = vunpack.c.l.b16 %v4897
    %v6796 = vunpack.c.h.b16 %v4897
    %v6797 = vunpack.c.l.b16 %v4898
    %v6798 = vunpack.c.h.b16 %v4898
    %v6799 = vunpack.c.l.b16 %v4899
    %v6800 = vunpack.c.h.b16 %v4899
    %v6801 = vunpack.c.l.b16 %v4900
    %v6802 = vunpack.c.h.b16 %v4900
    %v6803 = vunpack.c.l.b16 %v4901
    %v6804 = vunpack.c.h.b16 %v4901
    %v6805 = vunpack.c.l.b16 %v4902
    %v6806 = vunpack.c.h.b16 %v4902
    %v6807 = vunpack.c.l.b16 %v4903
    %v6808 = vunpack.c.h.b16 %v4903
    %v6809 = vunpack.c.l.b16 %v4904
    %v6810 = vunpack.c.h.b16 %v4904
    %v6811 = vunpack.c.l.b16 %v4905
    %v6812 = vunpack.c.h.b16 %v4905
    %v6813 = vunpack.c.l.b16 %v4906
    %v6814 = vunpack.c.h.b16 %v4906
    %v6815 = vunpack.c.l.b16 %v4907
    %v6816 = vunpack.c.h.b16 %v4907
    %v6817 = vunpack.c.l.b16 %v4908
    %v6818 = vunpack.c.h.b16 %v4908
    %v6819 = vunpack.c.l.b16 %v4909
    %v6820 = vunpack.c.h.b16 %v4909
    %v6821 = vunpack.c.l.b16 %v4910
    %v6822 = vunpack.c.h.b16 %v4910
    %v6823 = vunpack.c.l.b16 %v4911
    %v6824 = vunpack.c.h.b16 %v4911
    %v6825 = vunpack.c.l.b16 %v4912
    %v6826 = vunpack.c.h.b16 %v4912
    %v6827 = vunpack.c.l.b16 %v4913
    %v6828 = vunpack.c.h.b16 %v4913
    %v6829 = vunpack.c.l.b16 %v4914
    %v6830 = vunpack.c.h.b16 %v4914
    %v6831 = vunpack.c.l.b16 %v4915
    %v6832 = vunpack.c.h.b16 %v4915
    %v6833 = vunpack.c.l.b16 %v4916
    %v6834 = vunpack.c.h.b16 %v4916
    %v6835 = vunpack.c.l.b16 %v4917
    %v6836 = vunpack.c.h.b16 %v4917
    %v6837 = vunpack.c.l.b16 %v4918
    %v6838 = vunpack.c.h.b16 %v4918
    %v6839 = vpack.c.b16 %v5575, %v5559
    %v6840 = vpack.c.b16 %v5576, %v5560
    %v6841 = vpack.c.b16 %v5577, %v5561
    %v6842 = vpack.c.b16 %v5578, %v5562
    %v6843 = vpack.c.b16 %v5579, %v5563
    %v6844 = vpack.c.b16 %v5580, %v5564
    %v6845 = vpack.c.b16 %v5581, %v5565
    %v6846 = vpack.c.b16 %v5582, %v5566
    %v6847 = vpack.c.b16 %v5583, %v5567
    %v6848 = vpack.c.b16 %v5584, %v5568
    %v6849 = vpack.c.b16 %v5585, %v5569
    %v6850 = vpack.c.b16 %v5586, %v5570
    %v6851 = vpack.c.b16 %v5587, %v5571
    %v6852 = vpack.c.b16 %v5588, %v5572
    %v6853 = vpack.c.b16 %v5589, %v5573
    %v6854 = vpack.c.b16 %v5590, %v5574
    %v6855 = vpack.c.b16 %v5607, %v5591
    %v6856 = vpack.c.b16 %v5608, %v5592
    %v6857 = vpack.c.b16 %v5609, %v5593
    %v6858 = vpack.c.b16 %v5610, %v5594
    %v6859 = vpack.c.b16 %v5611, %v5595
    %v6860 = vpack.c.b16 %v5612, %v5596
    %v6861 = vpack.c.b16 %v5613, %v5597
    %v6862 = vpack.c.b16 %v5614, %v5598
    %v6863 = vpack.c.b16 %v5615, %v5599
    %v6864 = vpack.c.b16 %v5616, %v5600
    %v6865 = vpack.c.b16 %v5617, %v5601
    %v6866 = vpack.c.b16 %v5618, %v5602
    %v6867 = vpack.c.b16 %v5619, %v5603
    %v6868 = vpack.c.b16 %v5620, %v5604
    %v6869 = vpack.c.b16 %v5621, %v5605
    %v6870 = vpack.c.b16 %v5622, %v5606
    %v6871 = vpack.c.b16 %v5639, %v5623
    %v6872 = vpack.c.b16 %v5640, %v5624
    %v6873 = vpack.c.b16 %v5641, %v5625
    %v6874 = vpack.c.b16 %v5642, %v5626
    %v6875 = vpack.c.b16 %v5643, %v5627
    %v6876 = vpack.c.b16 %v5644, %v5628
    %v6877 = vpack.c.b16 %v5645, %v5629
    %v6878 = vpack.c.b16 %v5646, %v5630
    %v6879 = vpack.c.b16 %v5647, %v5631
    %v6880 = vpack.c.b16 %v5648, %v5632
    %v6881 = vpack.c.b16 %v5649, %v5633
    %v6882 = vpack.c.b16 %v5650, %v5634
    %v6883 = vpack.c.b16 %v5651, %v5635
    %v6884 = vpack.c.b16 %v5652, %v5636
    %v6885 = vpack.c.b16 %v5653, %v5637
    %v6886 = vpack.c.b16 %v5654, %v5638
    %v6887 = vpack.c.b16 %v5671, %v5655
    %v6888 = vpack.c.b16 %v5672, %v5656
    %v6889 = vpack.c.b16 %v5673, %v5657
    %v6890 = vpack.c.b16 %v5674, %v5658
    %v6891 = vpack.c.b16 %v5675, %v5659
    %v6892 = vpack.c.b16 %v5676, %v5660
    %v6893 = vpack.c.b16 %v5677, %v5661
    %v6894 = vpack.c.b16 %v5678, %v5662
    %v6895 = vpack.c.b16 %v5679, %v5663
    %v6896 = vpack.c.b16 %v5680, %v5664
    %v6897 = vpack.c.b16 %v5681, %v5665
    %v6898 = vpack.c.b16 %v5682, %v5666
    %v6899 = vpack.c.b16 %v5683, %v5667
    %v6900 = vpack.c.b16 %v5684, %v5668
    %v6901 = vpack.c.b16 %v5685, %v5669
    %v6902 = vpack.c.b16 %v5686, %v5670
    %v6903 = vpack.c.b16 %v5703, %v5687
    %v6904 = vpack.c.b16 %v5704, %v5688
    %v6905 = vpack.c.b16 %v5705, %v5689
    %v6906 = vpack.c.b16 %v5706, %v5690
    %v6907 = vpack.c.b16 %v5707, %v5691
    %v6908 = vpack.c.b16 %v5708, %v5692
    %v6909 = vpack.c.b16 %v5709, %v5693
    %v6910 = vpack.c.b16 %v5710, %v5694
    %v6911 = vpack.c.b16 %v5711, %v5695
    %v6912 = vpack.c.b16 %v5712, %v5696
    %v6913 = vpack.c.b16 %v5713, %v5697
    %v6914 = vpack.c.b16 %v5714, %v5698
    %v6915 = vpack.c.b16 %v5715, %v5699
    %v6916 = vpack.c.b16 %v5716, %v5700
    %v6917 = vpack.c.b16 %v5717, %v5701
    %v6918 = vpack.c.b16 %v5718, %v5702
    %v6919 = vpack.c.b16 %v5735, %v5719
    %v6920 = vpack.c.b16 %v5736, %v5720
    %v6921 = vpack.c.b16 %v5737, %v5721
    %v6922 = vpack.c.b16 %v5738, %v5722
    %v6923 = vpack.c.b16 %v5739, %v5723
    %v6924 = vpack.c.b16 %v5740, %v5724
    %v6925 = vpack.c.b16 %v5741, %v5725
    %v6926 = vpack.c.b16 %v5742, %v5726
    %v6927 = vpack.c.b16 %v5743, %v5727
    %v6928 = vpack.c.b16 %v5744, %v5728
    %v6929 = vpack.c.b16 %v5745, %v5729
    %v6930 = vpack.c.b16 %v5746, %v5730
    %v6931 = vpack.c.b16 %v5747, %v5731
    %v6932 = vpack.c.b16 %v5748, %v5732
    %v6933 = vpack.c.b16 %v5749, %v5733
    %v6934 = vpack.c.b16 %v5750, %v5734
    %v6935 = vpack.c.b16 %v5767, %v5751
    %v6936 = vpack.c.b16 %v5768, %v5752
    %v6937 = vpack.c.b16 %v5769, %v5753
    %v6938 = vpack.c.b16 %v5770, %v5754
    %v6939 = vpack.c.b16 %v5771, %v5755
    %v6940 = vpack.c.b16 %v5772, %v5756
    %v6941 = vpack.c.b16 %v5773, %v5757
    %v6942 = vpack.c.b16 %v5774, %v5758
    %v6943 = vpack.c.b16 %v5775, %v5759
    %v6944 = vpack.c.b16 %v5776, %v5760
    %v6945 = vpack.c.b16 %v5777, %v5761
    %v6946 = vpack.c.b16 %v5778, %v5762
    %v6947 = vpack.c.b16 %v5779, %v5763
    %v6948 = vpack.c.b16 %v5780, %v5764
    %v6949 = vpack.c.b16 %v5781, %v5765
    %v6950 = vpack.c.b16 %v5782, %v5766
    %v6951 = vpack.c.b16 %v5799, %v5783
    %v6952 = vpack.c.b16 %v5800, %v5784
    %v6953 = vpack.c.b16 %v5801, %v5785
    %v6954 = vpack.c.b16 %v5802, %v5786
    %v6955 = vpack.c.b16 %v5803, %v5787
    %v6956 = vpack.c.b16 %v5804, %v5788
    %v6957 = vpack.c.b16 %v5805, %v5789
    %v6958 = vpack.c.b16 %v5806, %v5790
    %v6959 = vpack.c.b16 %v5807, %v5791
    %v6960 = vpack.c.b16 %v5808, %v5792
    %v6961 = vpack.c.b16 %v5809, %v5793
    %v6962 = vpack.c.b16 %v5810, %v5794
    %v6963 = vpack.c.b16 %v5811, %v5795
    %v6964 = vpack.c.b16 %v5812, %v5796
    %v6965 = vpack.c.b16 %v5813, %v5797
    %v6966 = vpack.c.b16 %v5814, %v5798
    %v6967 = vpack.c.b16 %v5831, %v5815
    %v6968 = vpack.c.b16 %v5832, %v5816
    %v6969 = vpack.c.b16 %v5833, %v5817
    %v6970 = vpack.c.b16 %v5834, %v5818
    %v6971 = vpack.c.b16 %v5835, %v5819
    %v6972 = vpack.c.b16 %v5836, %v5820
    %v6973 = vpack.c.b16 %v5837, %v5821
    %v6974 = vpack.c.b16 %v5838, %v5822
    %v6975 = vpack.c.b16 %v5839, %v5823
    %v6976 = vpack.c.b16 %v5840, %v5824
    %v6977 = vpack.c.b16 %v5841, %v5825
    %v6978 = vpack.c.b16 %v5842, %v5826
    %v6979 = vpack.c.b16 %v5843, %v5827
    %v6980 = vpack.c.b16 %v5844, %v5828
    %v6981 = vpack.c.b16 %v5845, %v5829
    %v6982 = vpack.c.b16 %v5846, %v5830
    %v6983 = vpack.c.b16 %v5863, %v5847
    %v6984 = vpack.c.b16 %v5864, %v5848
    %v6985 = vpack.c.b16 %v5865, %v5849
    %v6986 = vpack.c.b16 %v5866, %v5850
    %v6987 = vpack.c.b16 %v5867, %v5851
    %v6988 = vpack.c.b16 %v5868, %v5852
    %v6989 = vpack.c.b16 %v5869, %v5853
    %v6990 = vpack.c.b16 %v5870, %v5854
    %v6991 = vpack.c.b16 %v5871, %v5855
    %v6992 = vpack.c.b16 %v5872, %v5856
    %v6993 = vpack.c.b16 %v5873, %v5857
    %v6994 = vpack.c.b16 %v5874, %v5858
    %v6995 = vpack.c.b16 %v5875, %v5859
    %v6996 = vpack.c.b16 %v5876, %v5860
    %v6997 = vpack.c.b16 %v5877, %v5861
    %v6998 = vpack.c.b16 %v5878, %v5862
    %v6999 = vpack.c.b16 %v5895, %v5879
    %v7000 = vpack.c.b16 %v5896, %v5880
    %v7001 = vpack.c.b16 %v5897, %v5881
    %v7002 = vpack.c.b16 %v5898, %v5882
    %v7003 = vpack.c.b16 %v5899, %v5883
    %v7004 = vpack.c.b16 %v5900, %v5884
    %v7005 = vpack.c.b16 %v5901, %v5885
    %v7006 = vpack.c.b16 %v5902, %v5886
    %v7007 = vpack.c.b16 %v5903, %v5887
    %v7008 = vpack.c.b16 %v5904, %v5888
    %v7009 = vpack.c.b16 %v5905, %v5889
    %v7010 = vpack.c.b16 %v5906, %v5890
    %v7011 = vpack.c.b16 %v5907, %v5891
    %v7012 = vpack.c.b16 %v5908, %v5892
    %v7013 = vpack.c.b16 %v5909, %v5893
    %v7014 = vpack.c.b16 %v5910, %v5894
    %v7015 = vpack.c.b16 %v5927, %v5911
    %v7016 = vpack.c.b16 %v5928, %v5912
    %v7017 = vpack.c.b16 %v5929, %v5913
    %v7018 = vpack.c.b16 %v5930, %v5914
    %v7019 = vpack.c.b16 %v5931, %v5915
    %v7020 = vpack.c.b16 %v5932, %v5916
    %v7021 = vpack.c.b16 %v5933, %v5917
    %v7022 = vpack.c.b16 %v5934, %v5918
    %v7023 = vpack.c.b16 %v5935, %v5919
    %v7024 = vpack.c.b16 %v5936, %v5920
    %v7025 = vpack.c.b16 %v5937, %v5921
    %v7026 = vpack.c.b16 %v5938, %v5922
    %v7027 = vpack.c.b16 %v5939, %v5923
    %v7028 = vpack.c.b16 %v5940, %v5924
    %v7029 = vpack.c.b16 %v5941, %v5925
    %v7030 = vpack.c.b16 %v5942, %v5926
    %v7031 = vpack.c.b16 %v5959, %v5943
    %v7032 = vpack.c.b16 %v5960, %v5944
    %v7033 = vpack.c.b16 %v5961, %v5945
    %v7034 = vpack.c.b16 %v5962, %v5946
    %v7035 = vpack.c.b16 %v5963, %v5947
    %v7036 = vpack.c.b16 %v5964, %v5948
    %v7037 = vpack.c.b16 %v5965, %v5949
    %v7038 = vpack.c.b16 %v5966, %v5950
    %v7039 = vpack.c.b16 %v5967, %v5951
    %v7040 = vpack.c.b16 %v5968, %v5952
    %v7041 = vpack.c.b16 %v5969, %v5953
    %v7042 = vpack.c.b16 %v5970, %v5954
    %v7043 = vpack.c.b16 %v5971, %v5955
    %v7044 = vpack.c.b16 %v5972, %v5956
    %v7045 = vpack.c.b16 %v5973, %v5957
    %v7046 = vpack.c.b16 %v5974, %v5958
    %v7047 = vpack.c.b16 %v5991, %v5975
    %v7048 = vpack.c.b16 %v5992, %v5976
    %v7049 = vpack.c.b16 %v5993, %v5977
    %v7050 = vpack.c.b16 %v5994, %v5978
    %v7051 = vpack.c.b16 %v5995, %v5979
    %v7052 = vpack.c.b16 %v5996, %v5980
    %v7053 = vpack.c.b16 %v5997, %v5981
    %v7054 = vpack.c.b16 %v5998, %v5982
    %v7055 = vpack.c.b16 %v5999, %v5983
    %v7056 = vpack.c.b16 %v6000, %v5984
    %v7057 = vpack.c.b16 %v6001, %v5985
    %v7058 = vpack.c.b16 %v6002, %v5986
    %v7059 = vpack.c.b16 %v6003, %v5987
    %v7060 = vpack.c.b16 %v6004, %v5988
    %v7061 = vpack.c.b16 %v6005, %v5989
    %v7062 = vpack.c.b16 %v6006, %v5990
    %v7063 = vpack.c.b16 %v6023, %v6007
    %v7064 = vpack.c.b16 %v6024, %v6008
    %v7065 = vpack.c.b16 %v6025, %v6009
    %v7066 = vpack.c.b16 %v6026, %v6010
    %v7067 = vpack.c.b16 %v6027, %v6011
    %v7068 = vpack.c.b16 %v6028, %v6012
    %v7069 = vpack.c.b16 %v6029, %v6013
    %v7070 = vpack.c.b16 %v6030, %v6014
    %v7071 = vpack.c.b16 %v6031, %v6015
    %v7072 = vpack.c.b16 %v6032, %v6016
    %v7073 = vpack.c.b16 %v6033, %v6017
    %v7074 = vpack.c.b16 %v6034, %v6018
    %v7075 = vpack.c.b16 %v6035, %v6019
    %v7076 = vpack.c.b16 %v6036, %v6020
    %v7077 = vpack.c.b16 %v6037, %v6021
    %v7078 = vpack.c.b16 %v6038, %v6022
    %v7079 = vpack.c.b16 %v6055, %v6039
    %v7080 = vpack.c.b16 %v6056, %v6040
    %v7081 = vpack.c.b16 %v6057, %v6041
    %v7082 = vpack.c.b16 %v6058, %v6042
    %v7083 = vpack.c.b16 %v6059, %v6043
    %v7084 = vpack.c.b16 %v6060, %v6044
    %v7085 = vpack.c.b16 %v6061, %v6045
    %v7086 = vpack.c.b16 %v6062, %v6046
    %v7087 = vpack.c.b16 %v6063, %v6047
    %v7088 = vpack.c.b16 %v6064, %v6048
    %v7089 = vpack.c.b16 %v6065, %v6049
    %v7090 = vpack.c.b16 %v6066, %v6050
    %v7091 = vpack.c.b16 %v6067, %v6051
    %v7092 = vpack.c.b16 %v6068, %v6052
    %v7093 = vpack.c.b16 %v6069, %v6053
    %v7094 = vpack.c.b16 %v6070, %v6054
    %v7095 = vpack.c.b16 %v6087, %v6071
    %v7096 = vpack.c.b16 %v6088, %v6072
    %v7097 = vpack.c.b16 %v6089, %v6073
    %v7098 = vpack.c.b16 %v6090, %v6074
    %v7099 = vpack.c.b16 %v6091, %v6075
    %v7100 = vpack.c.b16 %v6092, %v6076
    %v7101 = vpack.c.b16 %v6093, %v6077
    %v7102 = vpack.c.b16 %v6094, %v6078
    %v7103 = vpack.c.b16 %v6095, %v6079
    %v7104 = vpack.c.b16 %v6096, %v6080
    %v7105 = vpack.c.b16 %v6097, %v6081
    %v7106 = vpack.c.b16 %v6098, %v6082
    %v7107 = vpack.c.b16 %v6099, %v6083
    %v7108 = vpack.c.b16 %v6100, %v6084
    %v7109 = vpack.c.b16 %v6101, %v6085
    %v7110 = vpack.c.b16 %v6102, %v6086
    %v7111 = vpack.c.b16 %v6119, %v6103
    %v7112 = vpack.c.b16 %v6120, %v6104
    %v7113 = vpack.c.b16 %v6121, %v6105
    %v7114 = vpack.c.b16 %v6122, %v6106
    %v7115 = vpack.c.b16 %v6123, %v6107
    %v7116 = vpack.c.b16 %v6124, %v6108
    %v7117 = vpack.c.b16 %v6125, %v6109
    %v7118 = vpack.c.b16 %v6126, %v6110
    %v7119 = vpack.c.b16 %v6127, %v6111
    %v7120 = vpack.c.b16 %v6128, %v6112
    %v7121 = vpack.c.b16 %v6129, %v6113
    %v7122 = vpack.c.b16 %v6130, %v6114
    %v7123 = vpack.c.b16 %v6131, %v6115
    %v7124 = vpack.c.b16 %v6132, %v6116
    %v7125 = vpack.c.b16 %v6133, %v6117
    %v7126 = vpack.c.b16 %v6134, %v6118
    %v7127 = vpack.c.b16 %v6151, %v6135
    %v7128 = vpack.c.b16 %v6152, %v6136
    %v7129 = vpack.c.b16 %v6153, %v6137
    %v7130 = vpack.c.b16 %v6154, %v6138
    %v7131 = vpack.c.b16 %v6155, %v6139
    %v7132 = vpack.c.b16 %v6156, %v6140
    %v7133 = vpack.c.b16 %v6157, %v6141
    %v7134 = vpack.c.b16 %v6158, %v6142
    %v7135 = vpack.c.b16 %v6159, %v6143
    %v7136 = vpack.c.b16 %v6160, %v6144
    %v7137 = vpack.c.b16 %v6161, %v6145
    %v7138 = vpack.c.b16 %v6162, %v6146
    %v7139 = vpack.c.b16 %v6163, %v6147
    %v7140 = vpack.c.b16 %v6164, %v6148
    %v7141 = vpack.c.b16 %v6165, %v6149
    %v7142 = vpack.c.b16 %v6166, %v6150
    %v7143 = vpack.c.b16 %v6183, %v6167
    %v7144 = vpack.c.b16 %v6184, %v6168
    %v7145 = vpack.c.b16 %v6185, %v6169
    %v7146 = vpack.c.b16 %v6186, %v6170
    %v7147 = vpack.c.b16 %v6187, %v6171
    %v7148 = vpack.c.b16 %v6188, %v6172
    %v7149 = vpack.c.b16 %v6189, %v6173
    %v7150 = vpack.c.b16 %v6190, %v6174
    %v7151 = vpack.c.b16 %v6191, %v6175
    %v7152 = vpack.c.b16 %v6192, %v6176
    %v7153 = vpack.c.b16 %v6193, %v6177
    %v7154 = vpack.c.b16 %v6194, %v6178
    %v7155 = vpack.c.b16 %v6195, %v6179
    %v7156 = vpack.c.b16 %v6196, %v6180
    %v7157 = vpack.c.b16 %v6197, %v6181
    %v7158 = vpack.c.b16 %v6198, %v6182
    %v7159 = vpack.c.b16 %v6215, %v6199
    %v7160 = vpack.c.b16 %v6216, %v6200
    %v7161 = vpack.c.b16 %v6217, %v6201
    %v7162 = vpack.c.b16 %v6218, %v6202
    %v7163 = vpack.c.b16 %v6219, %v6203
    %v7164 = vpack.c.b16 %v6220, %v6204
    %v7165 = vpack.c.b16 %v6221, %v6205
    %v7166 = vpack.c.b16 %v6222, %v6206
    %v7167 = vpack.c.b16 %v6223, %v6207
    %v7168 = vpack.c.b16 %v6224, %v6208
    %v7169 = vpack.c.b16 %v6225, %v6209
    %v7170 = vpack.c.b16 %v6226, %v6210
    %v7171 = vpack.c.b16 %v6227, %v6211
    %v7172 = vpack.c.b16 %v6228, %v6212
    %v7173 = vpack.c.b16 %v6229, %v6213
    %v7174 = vpack.c.b16 %v6230, %v6214
    %v7175 = vpack.c.b16 %v6247, %v6231
    %v7176 = vpack.c.b16 %v6248, %v6232
    %v7177 = vpack.c.b16 %v6249, %v6233
    %v7178 = vpack.c.b16 %v6250, %v6234
    %v7179 = vpack.c.b16 %v6251, %v6235
    %v7180 = vpack.c.b16 %v6252, %v6236
    %v7181 = vpack.c.b16 %v6253, %v6237
    %v7182 = vpack.c.b16 %v6254, %v6238
    %v7183 = vpack.c.b16 %v6255, %v6239
    %v7184 = vpack.c.b16 %v6256, %v6240
    %v7185 = vpack.c.b16 %v6257, %v6241
    %v7186 = vpack.c.b16 %v6258, %v6242
    %v7187 = vpack.c.b16 %v6259, %v6243
    %v7188 = vpack.c.b16 %v6260, %v6244
    %v7189 = vpack.c.b16 %v6261, %v6245
    %v7190 = vpack.c.b16 %v6262, %v6246
    %v7191 = vpack.c.b16 %v6279, %v6263
    %v7192 = vpack.c.b16 %v6280, %v6264
    %v7193 = vpack.c.b16 %v6281, %v6265
    %v7194 = vpack.c.b16 %v6282, %v6266
    %v7195 = vpack.c.b16 %v6283, %v6267
    %v7196 = vpack.c.b16 %v6284, %v6268
    %v7197 = vpack.c.b16 %v6285, %v6269
    %v7198 = vpack.c.b16 %v6286, %v6270
    %v7199 = vpack.c.b16 %v6287, %v6271
    %v7200 = vpack.c.b16 %v6288, %v6272
    %v7201 = vpack.c.b16 %v6289, %v6273
    %v7202 = vpack.c.b16 %v6290, %v6274
    %v7203 = vpack.c.b16 %v6291, %v6275
    %v7204 = vpack.c.b16 %v6292, %v6276
    %v7205 = vpack.c.b16 %v6293, %v6277
    %v7206 = vpack.c.b16 %v6294, %v6278
    %v7207 = vpack.c.b16 %v6311, %v6295
    %v7208 = vpack.c.b16 %v6312, %v6296
    %v7209 = vpack.c.b16 %v6313, %v6297
    %v7210 = vpack.c.b16 %v6314, %v6298
    %v7211 = vpack.c.b16 %v6315, %v6299
    %v7212 = vpack.c.b16 %v6316, %v6300
    %v7213 = vpack.c.b16 %v6317, %v6301
    %v7214 = vpack.c.b16 %v6318, %v6302
    %v7215 = vpack.c.b16 %v6319, %v6303
    %v7216 = vpack.c.b16 %v6320, %v6304
    %v7217 = vpack.c.b16 %v6321, %v6305
    %v7218 = vpack.c.b16 %v6322, %v6306
    %v7219 = vpack.c.b16 %v6323, %v6307
    %v7220 = vpack.c.b16 %v6324, %v6308
    %v7221 = vpack.c.b16 %v6325, %v6309
    %v7222 = vpack.c.b16 %v6326, %v6310
    %v7223 = vpack.c.b16 %v6343, %v6327
    %v7224 = vpack.c.b16 %v6344, %v6328
    %v7225 = vpack.c.b16 %v6345, %v6329
    %v7226 = vpack.c.b16 %v6346, %v6330
    %v7227 = vpack.c.b16 %v6347, %v6331
    %v7228 = vpack.c.b16 %v6348, %v6332
    %v7229 = vpack.c.b16 %v6349, %v6333
    %v7230 = vpack.c.b16 %v6350, %v6334
    %v7231 = vpack.c.b16 %v6351, %v6335
    %v7232 = vpack.c.b16 %v6352, %v6336
    %v7233 = vpack.c.b16 %v6353, %v6337
    %v7234 = vpack.c.b16 %v6354, %v6338
    %v7235 = vpack.c.b16 %v6355, %v6339
    %v7236 = vpack.c.b16 %v6356, %v6340
    %v7237 = vpack.c.b16 %v6357, %v6341
    %v7238 = vpack.c.b16 %v6358, %v6342
    %v7239 = vpack.c.b16 %v6375, %v6359
    %v7240 = vpack.c.b16 %v6376, %v6360
    %v7241 = vpack.c.b16 %v6377, %v6361
    %v7242 = vpack.c.b16 %v6378, %v6362
    %v7243 = vpack.c.b16 %v6379, %v6363
    %v7244 = vpack.c.b16 %v6380, %v6364
    %v7245 = vpack.c.b16 %v6381, %v6365
    %v7246 = vpack.c.b16 %v6382, %v6366
    %v7247 = vpack.c.b16 %v6383, %v6367
    %v7248 = vpack.c.b16 %v6384, %v6368
    %v7249 = vpack.c.b16 %v6385, %v6369
    %v7250 = vpack.c.b16 %v6386, %v6370
    %v7251 = vpack.c.b16 %v6387, %v6371
    %v7252 = vpack.c.b16 %v6388, %v6372
    %v7253 = vpack.c.b16 %v6389, %v6373
    %v7254 = vpack.c.b16 %v6390, %v6374
    %v7255 = vpack.c.b16 %v6407, %v6391
    %v7256 = vpack.c.b16 %v6408, %v6392
    %v7257 = vpack.c.b16 %v6409, %v6393
    %v7258 = vpack.c.b16 %v6410, %v6394
    %v7259 = vpack.c.b16 %v6411, %v6395
    %v7260 = vpack.c.b16 %v6412, %v6396
    %v7261 = vpack.c.b16 %v6413, %v6397
    %v7262 = vpack.c.b16 %v6414, %v6398
    %v7263 = vpack.c.b16 %v6415, %v6399
    %v7264 = vpack.c.b16 %v6416, %v6400
    %v7265 = vpack.c.b16 %v6417, %v6401
    %v7266 = vpack.c.b16 %v6418, %v6402
    %v7267 = vpack.c.b16 %v6419, %v6403
    %v7268 = vpack.c.b16 %v6420, %v6404
    %v7269 = vpack.c.b16 %v6421, %v6405
    %v7270 = vpack.c.b16 %v6422, %v6406
    %v7271 = vpack.c.b16 %v6439, %v6423
    %v7272 = vpack.c.b16 %v6440, %v6424
    %v7273 = vpack.c.b16 %v6441, %v6425
    %v7274 = vpack.c.b16 %v6442, %v6426
    %v7275 = vpack.c.b16 %v6443, %v6427
    %v7276 = vpack.c.b16 %v6444, %v6428
    %v7277 = vpack.c.b16 %v6445, %v6429
    %v7278 = vpack.c.b16 %v6446, %v6430
    %v7279 = vpack.c.b16 %v6447, %v6431
    %v7280 = vpack.c.b16 %v6448, %v6432
    %v7281 = vpack.c.b16 %v6449, %v6433
    %v7282 = vpack.c.b16 %v6450, %v6434
    %v7283 = vpack.c.b16 %v6451, %v6435
    %v7284 = vpack.c.b16 %v6452, %v6436
    %v7285 = vpack.c.b16 %v6453, %v6437
    %v7286 = vpack.c.b16 %v6454, %v6438
    %v7287 = vpack.c.b16 %v6471, %v6455
    %v7288 = vpack.c.b16 %v6472, %v6456
    %v7289 = vpack.c.b16 %v6473, %v6457
    %v7290 = vpack.c.b16 %v6474, %v6458
    %v7291 = vpack.c.b16 %v6475, %v6459
    %v7292 = vpack.c.b16 %v6476, %v6460
    %v7293 = vpack.c.b16 %v6477, %v6461
    %v7294 = vpack.c.b16 %v6478, %v6462
    %v7295 = vpack.c.b16 %v6479, %v6463
    %v7296 = vpack.c.b16 %v6480, %v6464
    %v7297 = vpack.c.b16 %v6481, %v6465
    %v7298 = vpack.c.b16 %v6482, %v6466
    %v7299 = vpack.c.b16 %v6483, %v6467
    %v7300 = vpack.c.b16 %v6484, %v6468
    %v7301 = vpack.c.b16 %v6485, %v6469
    %v7302 = vpack.c.b16 %v6486, %v6470
    %v7303 = vpack.c.b16 %v6503, %v6487
    %v7304 = vpack.c.b16 %v6504, %v6488
    %v7305 = vpack.c.b16 %v6505, %v6489
    %v7306 = vpack.c.b16 %v6506, %v6490
    %v7307 = vpack.c.b16 %v6507, %v6491
    %v7308 = vpack.c.b16 %v6508, %v6492
    %v7309 = vpack.c.b16 %v6509, %v6493
    %v7310 = vpack.c.b16 %v6510, %v6494
    %v7311 = vpack.c.b16 %v6511, %v6495
    %v7312 = vpack.c.b16 %v6512, %v6496
    %v7313 = vpack.c.b16 %v6513, %v6497
    %v7314 = vpack.c.b16 %v6514, %v6498
    %v7315 = vpack.c.b16 %v6515, %v6499
    %v7316 = vpack.c.b16 %v6516, %v6500
    %v7317 = vpack.c.b16 %v6517, %v6501
    %v7318 = vpack.c.b16 %v6518, %v6502
    %v7319 = vpack.c.b16 %v6535, %v6519
    %v7320 = vpack.c.b16 %v6536, %v6520
    %v7321 = vpack.c.b16 %v6537, %v6521
    %v7322 = vpack.c.b16 %v6538, %v6522
    %v7323 = vpack.c.b16 %v6539, %v6523
    %v7324 = vpack.c.b16 %v6540, %v6524
    %v7325 = vpack.c.b16 %v6541, %v6525
    %v7326 = vpack.c.b16 %v6542, %v6526
    %v7327 = vpack.c.b16 %v6543, %v6527
    %v7328 = vpack.c.b16 %v6544, %v6528
    %v7329 = vpack.c.b16 %v6545, %v6529
    %v7330 = vpack.c.b16 %v6546, %v6530
    %v7331 = vpack.c.b16 %v6547, %v6531
    %v7332 = vpack.c.b16 %v6548, %v6532
    %v7333 = vpack.c.b16 %v6549, %v6533
    %v7334 = vpack.c.b16 %v6550, %v6534
    %v7335 = vpack.c.b16 %v6567, %v6551
    %v7336 = vpack.c.b16 %v6568, %v6552
    %v7337 = vpack.c.b16 %v6569, %v6553
    %v7338 = vpack.c.b16 %v6570, %v6554
    %v7339 = vpack.c.b16 %v6571, %v6555
    %v7340 = vpack.c.b16 %v6572, %v6556
    %v7341 = vpack.c.b16 %v6573, %v6557
    %v7342 = vpack.c.b16 %v6574, %v6558
    %v7343 = vpack.c.b16 %v6575, %v6559
    %v7344 = vpack.c.b16 %v6576, %v6560
    %v7345 = vpack.c.b16 %v6577, %v6561
    %v7346 = vpack.c.b16 %v6578, %v6562
    %v7347 = vpack.c.b16 %v6579, %v6563
    %v7348 = vpack.c.b16 %v6580, %v6564
    %v7349 = vpack.c.b16 %v6581, %v6565
    %v7350 = vpack.c.b16 %v6582, %v6566
    %v7351 = vpack.c.b16 %v6599, %v6583
    %v7352 = vpack.c.b16 %v6600, %v6584
    %v7353 = vpack.c.b16 %v6601, %v6585
    %v7354 = vpack.c.b16 %v6602, %v6586
    %v7355 = vpack.c.b16 %v6603, %v6587
    %v7356 = vpack.c.b16 %v6604, %v6588
    %v7357 = vpack.c.b16 %v6605, %v6589
    %v7358 = vpack.c.b16 %v6606, %v6590
    %v7359 = vpack.c.b16 %v6607, %v6591
    %v7360 = vpack.c.b16 %v6608, %v6592
    %v7361 = vpack.c.b16 %v6609, %v6593
    %v7362 = vpack.c.b16 %v6610, %v6594
    %v7363 = vpack.c.b16 %v6611, %v6595
    %v7364 = vpack.c.b16 %v6612, %v6596
    %v7365 = vpack.c.b16 %v6613, %v6597
    %v7366 = vpack.c.b16 %v6614, %v6598
    %v7367 = vpack.c.b16 %v6631, %v6615
    %v7368 = vpack.c.b16 %v6632, %v6616
    %v7369 = vpack.c.b16 %v6633, %v6617
    %v7370 = vpack.c.b16 %v6634, %v6618
    %v7371 = vpack.c.b16 %v6635, %v6619
    %v7372 = vpack.c.b16 %v6636, %v6620
    %v7373 = vpack.c.b16 %v6637, %v6621
    %v7374 = vpack.c.b16 %v6638, %v6622
    %v7375 = vpack.c.b16 %v6639, %v6623
    %v7376 = vpack.c.b16 %v6640, %v6624
    %v7377 = vpack.c.b16 %v6641, %v6625
    %v7378 = vpack.c.b16 %v6642, %v6626
    %v7379 = vpack.c.b16 %v6643, %v6627
    %v7380 = vpack.c.b16 %v6644, %v6628
    %v7381 = vpack.c.b16 %v6645, %v6629
    %v7382 = vpack.c.b16 %v6646, %v6630
    %v7383 = vpack.c.b16 %v6663, %v6647
    %v7384 = vpack.c.b16 %v6664, %v6648
    %v7385 = vpack.c.b16 %v6665, %v6649
    %v7386 = vpack.c.b16 %v6666, %v6650
    %v7387 = vpack.c.b16 %v6667, %v6651
    %v7388 = vpack.c.b16 %v6668, %v6652
    %v7389 = vpack.c.b16 %v6669, %v6653
    %v7390 = vpack.c.b16 %v6670, %v6654
    %v7391 = vpack.c.b16 %v6671, %v6655
    %v7392 = vpack.c.b16 %v6672, %v6656
    %v7393 = vpack.c.b16 %v6673, %v6657
    %v7394 = vpack.c.b16 %v6674, %v6658
    %v7395 = vpack.c.b16 %v6675, %v6659
    %v7396 = vpack.c.b16 %v6676, %v6660
    %v7397 = vpack.c.b16 %v6677, %v6661
    %v7398 = vpack.c.b16 %v6678, %v6662
    %v7399 = vpack.c.b16 %v6695, %v6679
    %v7400 = vpack.c.b16 %v6696, %v6680
    %v7401 = vpack.c.b16 %v6697, %v6681
    %v7402 = vpack.c.b16 %v6698, %v6682
    %v7403 = vpack.c.b16 %v6699, %v6683
    %v7404 = vpack.c.b16 %v6700, %v6684
    %v7405 = vpack.c.b16 %v6701, %v6685
    %v7406 = vpack.c.b16 %v6702, %v6686
    %v7407 = vpack.c.b16 %v6703, %v6687
    %v7408 = vpack.c.b16 %v6704, %v6688
    %v7409 = vpack.c.b16 %v6705, %v6689
    %v7410 = vpack.c.b16 %v6706, %v6690
    %v7411 = vpack.c.b16 %v6707, %v6691
    %v7412 = vpack.c.b16 %v6708, %v6692
    %v7413 = vpack.c.b16 %v6709, %v6693
    %v7414 = vpack.c.b16 %v6710, %v6694
    %v7415 = vpack.c.b16 %v6727, %v6711
    %v7416 = vpack.c.b16 %v6728, %v6712
    %v7417 = vpack.c.b16 %v6729, %v6713
    %v7418 = vpack.c.b16 %v6730, %v6714
    %v7419 = vpack.c.b16 %v6731, %v6715
    %v7420 = vpack.c.b16 %v6732, %v6716
    %v7421 = vpack.c.b16 %v6733, %v6717
    %v7422 = vpack.c.b16 %v6734, %v6718
    %v7423 = vpack.c.b16 %v6735, %v6719
    %v7424 = vpack.c.b16 %v6736, %v6720
    %v7425 = vpack.c.b16 %v6737, %v6721
    %v7426 = vpack.c.b16 %v6738, %v6722
    %v7427 = vpack.c.b16 %v6739, %v6723
    %v7428 = vpack.c.b16 %v6740, %v6724
    %v7429 = vpack.c.b16 %v6741, %v6725
    %v7430 = vpack.c.b16 %v6742, %v6726
    %v7431 = vpack.c.b16 %v6759, %v6743
    %v7432 = vpack.c.b16 %v6760, %v6744
    %v7433 = vpack.c.b16 %v6761, %v6745
    %v7434 = vpack.c.b16 %v6762, %v6746
    %v7435 = vpack.c.b16 %v6763, %v6747
    %v7436 = vpack.c.b16 %v6764, %v6748
    %v7437 = vpack.c.b16 %v6765, %v6749
    %v7438 = vpack.c.b16 %v6766, %v6750
    %v7439 = vpack.c.b16 %v6767, %v6751
    %v7440 = vpack.c.b16 %v6768, %v6752
    %v7441 = vpack.c.b16 %v6769, %v6753
    %v7442 = vpack.c.b16 %v6770, %v6754
    %v7443 = vpack.c.b16 %v6771, %v6755
    %v7444 = vpack.c.b16 %v6772, %v6756
    %v7445 = vpack.c.b16 %v6773, %v6757
    %v7446 = vpack.c.b16 %v6774, %v6758
    %v7447 = vpack.c.b16 %v6791, %v6775
    %v7448 = vpack.c.b16 %v6792, %v6776
    %v7449 = vpack.c.b16 %v6793, %v6777
    %v7450 = vpack.c.b16 %v6794, %v6778
    %v7451 = vpack.c.b16 %v6795, %v6779
    %v7452 = vpack.c.b16 %v6796, %v6780
    %v7453 = vpack.c.b16 %v6797, %v6781
    %v7454 = vpack.c.b16 %v6798, %v6782
    %v7455 = vpack.c.b16 %v6799, %v6783
    %v7456 = vpack.c.b16 %v6800, %v6784
    %v7457 = vpack.c.b16 %v6801, %v6785
    %v7458 = vpack.c.b16 %v6802, %v6786
    %v7459 = vpack.c.b16 %v6803, %v6787
    %v7460 = vpack.c.b16 %v6804, %v6788
    %v7461 = vpack.c.b16 %v6805, %v6789
    %v7462 = vpack.c.b16 %v6806, %v6790
    %v7463 = vpack.c.b16 %v6823, %v6807
    %v7464 = vpack.c.b16 %v6824, %v6808
    %v7465 = vpack.c.b16 %v6825, %v6809
    %v7466 = vpack.c.b16 %v6826, %v6810
    %v7467 = vpack.c.b16 %v6827, %v6811
    %v7468 = vpack.c.b16 %v6828, %v6812
    %v7469 = vpack.c.b16 %v6829, %v6813
    %v7470 = vpack.c.b16 %v6830, %v6814
    %v7471 = vpack.c.b16 %v6831, %v6815
    %v7472 = vpack.c.b16 %v6832, %v6816
    %v7473 = vpack.c.b16 %v6833, %v6817
    %v7474 = vpack.c.b16 %v6834, %v6818
    %v7475 = vpack.c.b16 %v6835, %v6819
    %v7476 = vpack.c.b16 %v6836, %v6820
    %v7477 = vpack.c.b16 %v6837, %v6821
    %v7478 = vpack.c.b16 %v6838, %v6822
    %8119 = vmatpush.bf16.msra.mxu0 %v6951
    %8120 = vmatpush.bf16.msra.mxu0 %v6935
    %8121 = vmatpush.bf16.msra.mxu0 %v6919
    %8122 = vmatpush.bf16.msra.mxu0 %v6903
    %8123 = vmatpush.bf16.msra.mxu0 %v6887
    %8124 = vmatpush.bf16.msra.mxu0 %v6871
    %8125 = vmatpush.bf16.msra.mxu0 %v6855
    %8126 = vmatpush.bf16.msra.mxu0 %v6839
    %8127 = vmatmul.bf16.gmra.mxu0 %v4274
    %v8128 = vpop.f32.mrf.mxu0
    %v8129 = vadd.f32 0.0, %v8128
    %v8130 = vpop.f32.mrf.mxu0
    %8131 = vdwg.mxu0
    %8132 = vmatpush.bf16.msra.mxu0 %v7079
    %8133 = vmatpush.bf16.msra.mxu0 %v7063
    %8134 = vmatpush.bf16.msra.mxu0 %v7047
    %8135 = vmatpush.bf16.msra.mxu0 %v7031
    %8136 = vmatpush.bf16.msra.mxu0 %v7015
    %8137 = vmatpush.bf16.msra.mxu0 %v6999
    %8138 = vmatpush.bf16.msra.mxu0 %v6983
    %8139 = vmatpush.bf16.msra.mxu0 %v6967
    %8140 = vmatmul.bf16.gmra.mxu0 %v4275
    %v8141 = vpop.f32.mrf.mxu0
    %v8142 = vadd.f32 %v8129, %v8141
    %v8143 = vpop.f32.mrf.mxu0
    %8144 = vdwg.mxu0
    %8145 = vmatpush.bf16.msra.mxu0 %v7207
    %8146 = vmatpush.bf16.msra.mxu0 %v7191
    %8147 = vmatpush.bf16.msra.mxu0 %v7175
    %8148 = vmatpush.bf16.msra.mxu0 %v7159
    %8149 = vmatpush.bf16.msra.mxu0 %v7143
    %8150 = vmatpush.bf16.msra.mxu0 %v7127
    %8151 = vmatpush.bf16.msra.mxu0 %v7111
    %8152 = vmatpush.bf16.msra.mxu0 %v7095
    %8153 = vmatmul.bf16.gmra.mxu0 %v4276
    %v8154 = vpop.f32.mrf.mxu0
    %v8155 = vadd.f32 %v8142, %v8154
    %v8156 = vpop.f32.mrf.mxu0
    %8157 = vdwg.mxu0
    %8158 = vmatpush.bf16.msra.mxu0 %v7335
    %8159 = vmatpush.bf16.msra.mxu0 %v7319
    %8160 = vmatpush.bf16.msra.mxu0 %v7303
    %8161 = vmatpush.bf16.msra.mxu0 %v7287
    %8162 = vmatpush.bf16.msra.mxu0 %v7271
    %8163 = vmatpush.bf16.msra.mxu0 %v7255
    %8164 = vmatpush.bf16.msra.mxu0 %v7239
    %8165 = vmatpush.bf16.msra.mxu0 %v7223
    %8166 = vmatmul.bf16.gmra.mxu0 %v4277
    %v8167 = vpop.f32.mrf.mxu0
    %v8168 = vadd.f32 %v8155, %v8167
    %v8169 = vpop.f32.mrf.mxu0
    %8170 = vdwg.mxu0
    %8171 = vmatpush.bf16.msra.mxu0 %v7463
    %8172 = vmatpush.bf16.msra.mxu0 %v7447
    %8173 = vmatpush.bf16.msra.mxu0 %v7431
    %8174 = vmatpush.bf16.msra.mxu0 %v7415
    %8175 = vmatpush.bf16.msra.mxu0 %v7399
    %8176 = vmatpush.bf16.msra.mxu0 %v7383
    %8177 = vmatpush.bf16.msra.mxu0 %v7367
    %8178 = vmatpush.bf16.msra.mxu0 %v7351
    %8179 = vmatmul.bf16.gmra.mxu0 %v4278
    %v8180 = vpop.f32.mrf.mxu0
    %v8181 = vadd.f32 %v8168, %v8180
    %v8182 = vpop.f32.mrf.mxu0
    %8183 = vdwg.mxu0
    %8184 = vmatpush.bf16.msra.mxu0 %v6952
    %8185 = vmatpush.bf16.msra.mxu0 %v6936
    %8186 = vmatpush.bf16.msra.mxu0 %v6920
    %8187 = vmatpush.bf16.msra.mxu0 %v6904
    %8188 = vmatpush.bf16.msra.mxu0 %v6888
    %8189 = vmatpush.bf16.msra.mxu0 %v6872
    %8190 = vmatpush.bf16.msra.mxu0 %v6856
    %8191 = vmatpush.bf16.msra.mxu0 %v6840
    %8192 = vmatmul.bf16.gmra.mxu0 %v4274
    %v8193 = vpop.f32.mrf.mxu0
    %v8194 = vadd.f32 0.0, %v8193
    %v8195 = vpop.f32.mrf.mxu0
    %8196 = vdwg.mxu0
    %8197 = vmatpush.bf16.msra.mxu0 %v7080
    %8198 = vmatpush.bf16.msra.mxu0 %v7064
    %8199 = vmatpush.bf16.msra.mxu0 %v7048
    %8200 = vmatpush.bf16.msra.mxu0 %v7032
    %8201 = vmatpush.bf16.msra.mxu0 %v7016
    %8202 = vmatpush.bf16.msra.mxu0 %v7000
    %8203 = vmatpush.bf16.msra.mxu0 %v6984
    %8204 = vmatpush.bf16.msra.mxu0 %v6968
    %8205 = vmatmul.bf16.gmra.mxu0 %v4275
    %v8206 = vpop.f32.mrf.mxu0
    %v8207 = vadd.f32 %v8194, %v8206
    %v8208 = vpop.f32.mrf.mxu0
    %8209 = vdwg.mxu0
    %8210 = vmatpush.bf16.msra.mxu0 %v7208
    %8211 = vmatpush.bf16.msra.mxu0 %v7192
    %8212 = vmatpush.bf16.msra.mxu0 %v7176
    %8213 = vmatpush.bf16.msra.mxu0 %v7160
    %8214 = vmatpush.bf16.msra.mxu0 %v7144
    %8215 = vmatpush.bf16.msra.mxu0 %v7128
    %8216 = vmatpush.bf16.msra.mxu0 %v7112
    %8217 = vmatpush.bf16.msra.mxu0 %v7096
    %8218 = vmatmul.bf16.gmra.mxu0 %v4276
    %v8219 = vpop.f32.mrf.mxu0
    %v8220 = vadd.f32 %v8207, %v8219
    %v8221 = vpop.f32.mrf.mxu0
    %8222 = vdwg.mxu0
    %8223 = vmatpush.bf16.msra.mxu0 %v7336
    %8224 = vmatpush.bf16.msra.mxu0 %v7320
    %8225 = vmatpush.bf16.msra.mxu0 %v7304
    %8226 = vmatpush.bf16.msra.mxu0 %v7288
    %8227 = vmatpush.bf16.msra.mxu0 %v7272
    %8228 = vmatpush.bf16.msra.mxu0 %v7256
    %8229 = vmatpush.bf16.msra.mxu0 %v7240
    %8230 = vmatpush.bf16.msra.mxu0 %v7224
    %8231 = vmatmul.bf16.gmra.mxu0 %v4277
    %v8232 = vpop.f32.mrf.mxu0
    %v8233 = vadd.f32 %v8220, %v8232
    %v8234 = vpop.f32.mrf.mxu0
    %8235 = vdwg.mxu0
    %8236 = vmatpush.bf16.msra.mxu0 %v7464
    %8237 = vmatpush.bf16.msra.mxu0 %v7448
    %8238 = vmatpush.bf16.msra.mxu0 %v7432
    %8239 = vmatpush.bf16.msra.mxu0 %v7416
    %8240 = vmatpush.bf16.msra.mxu0 %v7400
    %8241 = vmatpush.bf16.msra.mxu0 %v7384
    %8242 = vmatpush.bf16.msra.mxu0 %v7368
    %8243 = vmatpush.bf16.msra.mxu0 %v7352
    %8244 = vmatmul.bf16.gmra.mxu0 %v4278
    %v8245 = vpop.f32.mrf.mxu0
    %v8246 = vadd.f32 %v8233, %v8245
    %v8247 = vpop.f32.mrf.mxu0
    %8248 = vdwg.mxu0
    %8249 = vmatpush.bf16.msra.mxu0 %v6953
    %8250 = vmatpush.bf16.msra.mxu0 %v6937
    %8251 = vmatpush.bf16.msra.mxu0 %v6921
    %8252 = vmatpush.bf16.msra.mxu0 %v6905
    %8253 = vmatpush.bf16.msra.mxu0 %v6889
    %8254 = vmatpush.bf16.msra.mxu0 %v6873
    %8255 = vmatpush.bf16.msra.mxu0 %v6857
    %8256 = vmatpush.bf16.msra.mxu0 %v6841
    %8257 = vmatmul.bf16.gmra.mxu0 %v4274
    %v8258 = vpop.f32.mrf.mxu0
    %v8259 = vadd.f32 0.0, %v8258
    %v8260 = vpop.f32.mrf.mxu0
    %8261 = vdwg.mxu0
    %8262 = vmatpush.bf16.msra.mxu0 %v7081
    %8263 = vmatpush.bf16.msra.mxu0 %v7065
    %8264 = vmatpush.bf16.msra.mxu0 %v7049
    %8265 = vmatpush.bf16.msra.mxu0 %v7033
    %8266 = vmatpush.bf16.msra.mxu0 %v7017
    %8267 = vmatpush.bf16.msra.mxu0 %v7001
    %8268 = vmatpush.bf16.msra.mxu0 %v6985
    %8269 = vmatpush.bf16.msra.mxu0 %v6969
    %8270 = vmatmul.bf16.gmra.mxu0 %v4275
    %v8271 = vpop.f32.mrf.mxu0
    %v8272 = vadd.f32 %v8259, %v8271
    %v8273 = vpop.f32.mrf.mxu0
    %8274 = vdwg.mxu0
    %8275 = vmatpush.bf16.msra.mxu0 %v7209
    %8276 = vmatpush.bf16.msra.mxu0 %v7193
    %8277 = vmatpush.bf16.msra.mxu0 %v7177
    %8278 = vmatpush.bf16.msra.mxu0 %v7161
    %8279 = vmatpush.bf16.msra.mxu0 %v7145
    %8280 = vmatpush.bf16.msra.mxu0 %v7129
    %8281 = vmatpush.bf16.msra.mxu0 %v7113
    %8282 = vmatpush.bf16.msra.mxu0 %v7097
    %8283 = vmatmul.bf16.gmra.mxu0 %v4276
    %v8284 = vpop.f32.mrf.mxu0
    %v8285 = vadd.f32 %v8272, %v8284
    %v8286 = vpop.f32.mrf.mxu0
    %8287 = vdwg.mxu0
    %8288 = vmatpush.bf16.msra.mxu0 %v7337
    %8289 = vmatpush.bf16.msra.mxu0 %v7321
    %8290 = vmatpush.bf16.msra.mxu0 %v7305
    %8291 = vmatpush.bf16.msra.mxu0 %v7289
    %8292 = vmatpush.bf16.msra.mxu0 %v7273
    %8293 = vmatpush.bf16.msra.mxu0 %v7257
    %8294 = vmatpush.bf16.msra.mxu0 %v7241
    %8295 = vmatpush.bf16.msra.mxu0 %v7225
    %8296 = vmatmul.bf16.gmra.mxu0 %v4277
    %v8297 = vpop.f32.mrf.mxu0
    %v8298 = vadd.f32 %v8285, %v8297
    %v8299 = vpop.f32.mrf.mxu0
    %8300 = vdwg.mxu0
    %8301 = vmatpush.bf16.msra.mxu0 %v7465
    %8302 = vmatpush.bf16.msra.mxu0 %v7449
    %8303 = vmatpush.bf16.msra.mxu0 %v7433
    %8304 = vmatpush.bf16.msra.mxu0 %v7417
    %8305 = vmatpush.bf16.msra.mxu0 %v7401
    %8306 = vmatpush.bf16.msra.mxu0 %v7385
    %8307 = vmatpush.bf16.msra.mxu0 %v7369
    %8308 = vmatpush.bf16.msra.mxu0 %v7353
    %8309 = vmatmul.bf16.gmra.mxu0 %v4278
    %v8310 = vpop.f32.mrf.mxu0
    %v8311 = vadd.f32 %v8298, %v8310
    %v8312 = vpop.f32.mrf.mxu0
    %8313 = vdwg.mxu0
    %8314 = vmatpush.bf16.msra.mxu0 %v6954
    %8315 = vmatpush.bf16.msra.mxu0 %v6938
    %8316 = vmatpush.bf16.msra.mxu0 %v6922
    %8317 = vmatpush.bf16.msra.mxu0 %v6906
    %8318 = vmatpush.bf16.msra.mxu0 %v6890
    %8319 = vmatpush.bf16.msra.mxu0 %v6874
    %8320 = vmatpush.bf16.msra.mxu0 %v6858
    %8321 = vmatpush.bf16.msra.mxu0 %v6842
    %8322 = vmatmul.bf16.gmra.mxu0 %v4274
    %v8323 = vpop.f32.mrf.mxu0
    %v8324 = vadd.f32 0.0, %v8323
    %v8325 = vpop.f32.mrf.mxu0
    %8326 = vdwg.mxu0
    %8327 = vmatpush.bf16.msra.mxu0 %v7082
    %8328 = vmatpush.bf16.msra.mxu0 %v7066
    %8329 = vmatpush.bf16.msra.mxu0 %v7050
    %8330 = vmatpush.bf16.msra.mxu0 %v7034
    %8331 = vmatpush.bf16.msra.mxu0 %v7018
    %8332 = vmatpush.bf16.msra.mxu0 %v7002
    %8333 = vmatpush.bf16.msra.mxu0 %v6986
    %8334 = vmatpush.bf16.msra.mxu0 %v6970
    %8335 = vmatmul.bf16.gmra.mxu0 %v4275
    %v8336 = vpop.f32.mrf.mxu0
    %v8337 = vadd.f32 %v8324, %v8336
    %v8338 = vpop.f32.mrf.mxu0
    %8339 = vdwg.mxu0
    %8340 = vmatpush.bf16.msra.mxu0 %v7210
    %8341 = vmatpush.bf16.msra.mxu0 %v7194
    %8342 = vmatpush.bf16.msra.mxu0 %v7178
    %8343 = vmatpush.bf16.msra.mxu0 %v7162
    %8344 = vmatpush.bf16.msra.mxu0 %v7146
    %8345 = vmatpush.bf16.msra.mxu0 %v7130
    %8346 = vmatpush.bf16.msra.mxu0 %v7114
    %8347 = vmatpush.bf16.msra.mxu0 %v7098
    %8348 = vmatmul.bf16.gmra.mxu0 %v4276
    %v8349 = vpop.f32.mrf.mxu0
    %v8350 = vadd.f32 %v8337, %v8349
    %v8351 = vpop.f32.mrf.mxu0
    %8352 = vdwg.mxu0
    %8353 = vmatpush.bf16.msra.mxu0 %v7338
    %8354 = vmatpush.bf16.msra.mxu0 %v7322
    %8355 = vmatpush.bf16.msra.mxu0 %v7306
    %8356 = vmatpush.bf16.msra.mxu0 %v7290
    %8357 = vmatpush.bf16.msra.mxu0 %v7274
    %8358 = vmatpush.bf16.msra.mxu0 %v7258
    %8359 = vmatpush.bf16.msra.mxu0 %v7242
    %8360 = vmatpush.bf16.msra.mxu0 %v7226
    %8361 = vmatmul.bf16.gmra.mxu0 %v4277
    %v8362 = vpop.f32.mrf.mxu0
    %v8363 = vadd.f32 %v8350, %v8362
    %v8364 = vpop.f32.mrf.mxu0
    %8365 = vdwg.mxu0
    %8366 = vmatpush.bf16.msra.mxu0 %v7466
    %8367 = vmatpush.bf16.msra.mxu0 %v7450
    %8368 = vmatpush.bf16.msra.mxu0 %v7434
    %8369 = vmatpush.bf16.msra.mxu0 %v7418
    %8370 = vmatpush.bf16.msra.mxu0 %v7402
    %8371 = vmatpush.bf16.msra.mxu0 %v7386
    %8372 = vmatpush.bf16.msra.mxu0 %v7370
    %8373 = vmatpush.bf16.msra.mxu0 %v7354
    %8374 = vmatmul.bf16.gmra.mxu0 %v4278
    %v8375 = vpop.f32.mrf.mxu0
    %v8376 = vadd.f32 %v8363, %v8375
    %v8377 = vpop.f32.mrf.mxu0
    %8378 = vdwg.mxu0
    %8379 = vmatpush.bf16.msra.mxu0 %v6955
    %8380 = vmatpush.bf16.msra.mxu0 %v6939
    %8381 = vmatpush.bf16.msra.mxu0 %v6923
    %8382 = vmatpush.bf16.msra.mxu0 %v6907
    %8383 = vmatpush.bf16.msra.mxu0 %v6891
    %8384 = vmatpush.bf16.msra.mxu0 %v6875
    %8385 = vmatpush.bf16.msra.mxu0 %v6859
    %8386 = vmatpush.bf16.msra.mxu0 %v6843
    %8387 = vmatmul.bf16.gmra.mxu0 %v4274
    %v8388 = vpop.f32.mrf.mxu0
    %v8389 = vadd.f32 0.0, %v8388
    %v8390 = vpop.f32.mrf.mxu0
    %8391 = vdwg.mxu0
    %8392 = vmatpush.bf16.msra.mxu0 %v7083
    %8393 = vmatpush.bf16.msra.mxu0 %v7067
    %8394 = vmatpush.bf16.msra.mxu0 %v7051
    %8395 = vmatpush.bf16.msra.mxu0 %v7035
    %8396 = vmatpush.bf16.msra.mxu0 %v7019
    %8397 = vmatpush.bf16.msra.mxu0 %v7003
    %8398 = vmatpush.bf16.msra.mxu0 %v6987
    %8399 = vmatpush.bf16.msra.mxu0 %v6971
    %8400 = vmatmul.bf16.gmra.mxu0 %v4275
    %v8401 = vpop.f32.mrf.mxu0
    %v8402 = vadd.f32 %v8389, %v8401
    %v8403 = vpop.f32.mrf.mxu0
    %8404 = vdwg.mxu0
    %8405 = vmatpush.bf16.msra.mxu0 %v7211
    %8406 = vmatpush.bf16.msra.mxu0 %v7195
    %8407 = vmatpush.bf16.msra.mxu0 %v7179
    %8408 = vmatpush.bf16.msra.mxu0 %v7163
    %8409 = vmatpush.bf16.msra.mxu0 %v7147
    %8410 = vmatpush.bf16.msra.mxu0 %v7131
    %8411 = vmatpush.bf16.msra.mxu0 %v7115
    %8412 = vmatpush.bf16.msra.mxu0 %v7099
    %8413 = vmatmul.bf16.gmra.mxu0 %v4276
    %v8414 = vpop.f32.mrf.mxu0
    %v8415 = vadd.f32 %v8402, %v8414
    %v8416 = vpop.f32.mrf.mxu0
    %8417 = vdwg.mxu0
    %8418 = vmatpush.bf16.msra.mxu0 %v7339
    %8419 = vmatpush.bf16.msra.mxu0 %v7323
    %8420 = vmatpush.bf16.msra.mxu0 %v7307
    %8421 = vmatpush.bf16.msra.mxu0 %v7291
    %8422 = vmatpush.bf16.msra.mxu0 %v7275
    %8423 = vmatpush.bf16.msra.mxu0 %v7259
    %8424 = vmatpush.bf16.msra.mxu0 %v7243
    %8425 = vmatpush.bf16.msra.mxu0 %v7227
    %8426 = vmatmul.bf16.gmra.mxu0 %v4277
    %v8427 = vpop.f32.mrf.mxu0
    %v8428 = vadd.f32 %v8415, %v8427
    %v8429 = vpop.f32.mrf.mxu0
    %8430 = vdwg.mxu0
    %8431 = vmatpush.bf16.msra.mxu0 %v7467
    %8432 = vmatpush.bf16.msra.mxu0 %v7451
    %8433 = vmatpush.bf16.msra.mxu0 %v7435
    %8434 = vmatpush.bf16.msra.mxu0 %v7419
    %8435 = vmatpush.bf16.msra.mxu0 %v7403
    %8436 = vmatpush.bf16.msra.mxu0 %v7387
    %8437 = vmatpush.bf16.msra.mxu0 %v7371
    %8438 = vmatpush.bf16.msra.mxu0 %v7355
    %8439 = vmatmul.bf16.gmra.mxu0 %v4278
    %v8440 = vpop.f32.mrf.mxu0
    %v8441 = vadd.f32 %v8428, %v8440
    %v8442 = vpop.f32.mrf.mxu0
    %8443 = vdwg.mxu0
    %8444 = vmatpush.bf16.msra.mxu0 %v6956
    %8445 = vmatpush.bf16.msra.mxu0 %v6940
    %8446 = vmatpush.bf16.msra.mxu0 %v6924
    %8447 = vmatpush.bf16.msra.mxu0 %v6908
    %8448 = vmatpush.bf16.msra.mxu0 %v6892
    %8449 = vmatpush.bf16.msra.mxu0 %v6876
    %8450 = vmatpush.bf16.msra.mxu0 %v6860
    %8451 = vmatpush.bf16.msra.mxu0 %v6844
    %8452 = vmatmul.bf16.gmra.mxu0 %v4274
    %v8453 = vpop.f32.mrf.mxu0
    %v8454 = vadd.f32 0.0, %v8453
    %v8455 = vpop.f32.mrf.mxu0
    %8456 = vdwg.mxu0
    %8457 = vmatpush.bf16.msra.mxu0 %v7084
    %8458 = vmatpush.bf16.msra.mxu0 %v7068
    %8459 = vmatpush.bf16.msra.mxu0 %v7052
    %8460 = vmatpush.bf16.msra.mxu0 %v7036
    %8461 = vmatpush.bf16.msra.mxu0 %v7020
    %8462 = vmatpush.bf16.msra.mxu0 %v7004
    %8463 = vmatpush.bf16.msra.mxu0 %v6988
    %8464 = vmatpush.bf16.msra.mxu0 %v6972
    %8465 = vmatmul.bf16.gmra.mxu0 %v4275
    %v8466 = vpop.f32.mrf.mxu0
    %v8467 = vadd.f32 %v8454, %v8466
    %v8468 = vpop.f32.mrf.mxu0
    %8469 = vdwg.mxu0
    %8470 = vmatpush.bf16.msra.mxu0 %v7212
    %8471 = vmatpush.bf16.msra.mxu0 %v7196
    %8472 = vmatpush.bf16.msra.mxu0 %v7180
    %8473 = vmatpush.bf16.msra.mxu0 %v7164
    %8474 = vmatpush.bf16.msra.mxu0 %v7148
    %8475 = vmatpush.bf16.msra.mxu0 %v7132
    %8476 = vmatpush.bf16.msra.mxu0 %v7116
    %8477 = vmatpush.bf16.msra.mxu0 %v7100
    %8478 = vmatmul.bf16.gmra.mxu0 %v4276
    %v8479 = vpop.f32.mrf.mxu0
    %v8480 = vadd.f32 %v8467, %v8479
    %v8481 = vpop.f32.mrf.mxu0
    %8482 = vdwg.mxu0
    %8483 = vmatpush.bf16.msra.mxu0 %v7340
    %8484 = vmatpush.bf16.msra.mxu0 %v7324
    %8485 = vmatpush.bf16.msra.mxu0 %v7308
    %8486 = vmatpush.bf16.msra.mxu0 %v7292
    %8487 = vmatpush.bf16.msra.mxu0 %v7276
    %8488 = vmatpush.bf16.msra.mxu0 %v7260
    %8489 = vmatpush.bf16.msra.mxu0 %v7244
    %8490 = vmatpush.bf16.msra.mxu0 %v7228
    %8491 = vmatmul.bf16.gmra.mxu0 %v4277
    %v8492 = vpop.f32.mrf.mxu0
    %v8493 = vadd.f32 %v8480, %v8492
    %v8494 = vpop.f32.mrf.mxu0
    %8495 = vdwg.mxu0
    %8496 = vmatpush.bf16.msra.mxu0 %v7468
    %8497 = vmatpush.bf16.msra.mxu0 %v7452
    %8498 = vmatpush.bf16.msra.mxu0 %v7436
    %8499 = vmatpush.bf16.msra.mxu0 %v7420
    %8500 = vmatpush.bf16.msra.mxu0 %v7404
    %8501 = vmatpush.bf16.msra.mxu0 %v7388
    %8502 = vmatpush.bf16.msra.mxu0 %v7372
    %8503 = vmatpush.bf16.msra.mxu0 %v7356
    %8504 = vmatmul.bf16.gmra.mxu0 %v4278
    %v8505 = vpop.f32.mrf.mxu0
    %v8506 = vadd.f32 %v8493, %v8505
    %v8507 = vpop.f32.mrf.mxu0
    %8508 = vdwg.mxu0
    %8509 = vmatpush.bf16.msra.mxu0 %v6957
    %8510 = vmatpush.bf16.msra.mxu0 %v6941
    %8511 = vmatpush.bf16.msra.mxu0 %v6925
    %8512 = vmatpush.bf16.msra.mxu0 %v6909
    %8513 = vmatpush.bf16.msra.mxu0 %v6893
    %8514 = vmatpush.bf16.msra.mxu0 %v6877
    %8515 = vmatpush.bf16.msra.mxu0 %v6861
    %8516 = vmatpush.bf16.msra.mxu0 %v6845
    %8517 = vmatmul.bf16.gmra.mxu0 %v4274
    %v8518 = vpop.f32.mrf.mxu0
    %v8519 = vadd.f32 0.0, %v8518
    %v8520 = vpop.f32.mrf.mxu0
    %8521 = vdwg.mxu0
    %8522 = vmatpush.bf16.msra.mxu0 %v7085
    %8523 = vmatpush.bf16.msra.mxu0 %v7069
    %8524 = vmatpush.bf16.msra.mxu0 %v7053
    %8525 = vmatpush.bf16.msra.mxu0 %v7037
    %8526 = vmatpush.bf16.msra.mxu0 %v7021
    %8527 = vmatpush.bf16.msra.mxu0 %v7005
    %8528 = vmatpush.bf16.msra.mxu0 %v6989
    %8529 = vmatpush.bf16.msra.mxu0 %v6973
    %8530 = vmatmul.bf16.gmra.mxu0 %v4275
    %v8531 = vpop.f32.mrf.mxu0
    %v8532 = vadd.f32 %v8519, %v8531
    %v8533 = vpop.f32.mrf.mxu0
    %8534 = vdwg.mxu0
    %8535 = vmatpush.bf16.msra.mxu0 %v7213
    %8536 = vmatpush.bf16.msra.mxu0 %v7197
    %8537 = vmatpush.bf16.msra.mxu0 %v7181
    %8538 = vmatpush.bf16.msra.mxu0 %v7165
    %8539 = vmatpush.bf16.msra.mxu0 %v7149
    %8540 = vmatpush.bf16.msra.mxu0 %v7133
    %8541 = vmatpush.bf16.msra.mxu0 %v7117
    %8542 = vmatpush.bf16.msra.mxu0 %v7101
    %8543 = vmatmul.bf16.gmra.mxu0 %v4276
    %v8544 = vpop.f32.mrf.mxu0
    %v8545 = vadd.f32 %v8532, %v8544
    %v8546 = vpop.f32.mrf.mxu0
    %8547 = vdwg.mxu0
    %8548 = vmatpush.bf16.msra.mxu0 %v7341
    %8549 = vmatpush.bf16.msra.mxu0 %v7325
    %8550 = vmatpush.bf16.msra.mxu0 %v7309
    %8551 = vmatpush.bf16.msra.mxu0 %v7293
    %8552 = vmatpush.bf16.msra.mxu0 %v7277
    %8553 = vmatpush.bf16.msra.mxu0 %v7261
    %8554 = vmatpush.bf16.msra.mxu0 %v7245
    %8555 = vmatpush.bf16.msra.mxu0 %v7229
    %8556 = vmatmul.bf16.gmra.mxu0 %v4277
    %v8557 = vpop.f32.mrf.mxu0
    %v8558 = vadd.f32 %v8545, %v8557
    %v8559 = vpop.f32.mrf.mxu0
    %8560 = vdwg.mxu0
    %8561 = vmatpush.bf16.msra.mxu0 %v7469
    %8562 = vmatpush.bf16.msra.mxu0 %v7453
    %8563 = vmatpush.bf16.msra.mxu0 %v7437
    %8564 = vmatpush.bf16.msra.mxu0 %v7421
    %8565 = vmatpush.bf16.msra.mxu0 %v7405
    %8566 = vmatpush.bf16.msra.mxu0 %v7389
    %8567 = vmatpush.bf16.msra.mxu0 %v7373
    %8568 = vmatpush.bf16.msra.mxu0 %v7357
    %8569 = vmatmul.bf16.gmra.mxu0 %v4278
    %v8570 = vpop.f32.mrf.mxu0
    %v8571 = vadd.f32 %v8558, %v8570
    %v8572 = vpop.f32.mrf.mxu0
    %8573 = vdwg.mxu0
    %8574 = vmatpush.bf16.msra.mxu0 %v6958
    %8575 = vmatpush.bf16.msra.mxu0 %v6942
    %8576 = vmatpush.bf16.msra.mxu0 %v6926
    %8577 = vmatpush.bf16.msra.mxu0 %v6910
    %8578 = vmatpush.bf16.msra.mxu0 %v6894
    %8579 = vmatpush.bf16.msra.mxu0 %v6878
    %8580 = vmatpush.bf16.msra.mxu0 %v6862
    %8581 = vmatpush.bf16.msra.mxu0 %v6846
    %8582 = vmatmul.bf16.gmra.mxu0 %v4274
    %v8583 = vpop.f32.mrf.mxu0
    %v8584 = vadd.f32 0.0, %v8583
    %v8585 = vpop.f32.mrf.mxu0
    %8586 = vdwg.mxu0
    %8587 = vmatpush.bf16.msra.mxu0 %v7086
    %8588 = vmatpush.bf16.msra.mxu0 %v7070
    %8589 = vmatpush.bf16.msra.mxu0 %v7054
    %8590 = vmatpush.bf16.msra.mxu0 %v7038
    %8591 = vmatpush.bf16.msra.mxu0 %v7022
    %8592 = vmatpush.bf16.msra.mxu0 %v7006
    %8593 = vmatpush.bf16.msra.mxu0 %v6990
    %8594 = vmatpush.bf16.msra.mxu0 %v6974
    %8595 = vmatmul.bf16.gmra.mxu0 %v4275
    %v8596 = vpop.f32.mrf.mxu0
    %v8597 = vadd.f32 %v8584, %v8596
    %v8598 = vpop.f32.mrf.mxu0
    %8599 = vdwg.mxu0
    %8600 = vmatpush.bf16.msra.mxu0 %v7214
    %8601 = vmatpush.bf16.msra.mxu0 %v7198
    %8602 = vmatpush.bf16.msra.mxu0 %v7182
    %8603 = vmatpush.bf16.msra.mxu0 %v7166
    %8604 = vmatpush.bf16.msra.mxu0 %v7150
    %8605 = vmatpush.bf16.msra.mxu0 %v7134
    %8606 = vmatpush.bf16.msra.mxu0 %v7118
    %8607 = vmatpush.bf16.msra.mxu0 %v7102
    %8608 = vmatmul.bf16.gmra.mxu0 %v4276
    %v8609 = vpop.f32.mrf.mxu0
    %v8610 = vadd.f32 %v8597, %v8609
    %v8611 = vpop.f32.mrf.mxu0
    %8612 = vdwg.mxu0
    %8613 = vmatpush.bf16.msra.mxu0 %v7342
    %8614 = vmatpush.bf16.msra.mxu0 %v7326
    %8615 = vmatpush.bf16.msra.mxu0 %v7310
    %8616 = vmatpush.bf16.msra.mxu0 %v7294
    %8617 = vmatpush.bf16.msra.mxu0 %v7278
    %8618 = vmatpush.bf16.msra.mxu0 %v7262
    %8619 = vmatpush.bf16.msra.mxu0 %v7246
    %8620 = vmatpush.bf16.msra.mxu0 %v7230
    %8621 = vmatmul.bf16.gmra.mxu0 %v4277
    %v8622 = vpop.f32.mrf.mxu0
    %v8623 = vadd.f32 %v8610, %v8622
    %v8624 = vpop.f32.mrf.mxu0
    %8625 = vdwg.mxu0
    %8626 = vmatpush.bf16.msra.mxu0 %v7470
    %8627 = vmatpush.bf16.msra.mxu0 %v7454
    %8628 = vmatpush.bf16.msra.mxu0 %v7438
    %8629 = vmatpush.bf16.msra.mxu0 %v7422
    %8630 = vmatpush.bf16.msra.mxu0 %v7406
    %8631 = vmatpush.bf16.msra.mxu0 %v7390
    %8632 = vmatpush.bf16.msra.mxu0 %v7374
    %8633 = vmatpush.bf16.msra.mxu0 %v7358
    %8634 = vmatmul.bf16.gmra.mxu0 %v4278
    %v8635 = vpop.f32.mrf.mxu0
    %v8636 = vadd.f32 %v8623, %v8635
    %v8637 = vpop.f32.mrf.mxu0
    %8638 = vdwg.mxu0
    %8639 = vmatpush.bf16.msra.mxu0 %v6959
    %8640 = vmatpush.bf16.msra.mxu0 %v6943
    %8641 = vmatpush.bf16.msra.mxu0 %v6927
    %8642 = vmatpush.bf16.msra.mxu0 %v6911
    %8643 = vmatpush.bf16.msra.mxu0 %v6895
    %8644 = vmatpush.bf16.msra.mxu0 %v6879
    %8645 = vmatpush.bf16.msra.mxu0 %v6863
    %8646 = vmatpush.bf16.msra.mxu0 %v6847
    %8647 = vmatmul.bf16.gmra.mxu0 %v4274
    %v8648 = vpop.f32.mrf.mxu0
    %v8649 = vadd.f32 0.0, %v8648
    %v8650 = vpop.f32.mrf.mxu0
    %8651 = vdwg.mxu0
    %8652 = vmatpush.bf16.msra.mxu0 %v7087
    %8653 = vmatpush.bf16.msra.mxu0 %v7071
    %8654 = vmatpush.bf16.msra.mxu0 %v7055
    %8655 = vmatpush.bf16.msra.mxu0 %v7039
    %8656 = vmatpush.bf16.msra.mxu0 %v7023
    %8657 = vmatpush.bf16.msra.mxu0 %v7007
    %8658 = vmatpush.bf16.msra.mxu0 %v6991
    %8659 = vmatpush.bf16.msra.mxu0 %v6975
    %8660 = vmatmul.bf16.gmra.mxu0 %v4275
    %v8661 = vpop.f32.mrf.mxu0
    %v8662 = vadd.f32 %v8649, %v8661
    %v8663 = vpop.f32.mrf.mxu0
    %8664 = vdwg.mxu0
    %8665 = vmatpush.bf16.msra.mxu0 %v7215
    %8666 = vmatpush.bf16.msra.mxu0 %v7199
    %8667 = vmatpush.bf16.msra.mxu0 %v7183
    %8668 = vmatpush.bf16.msra.mxu0 %v7167
    %8669 = vmatpush.bf16.msra.mxu0 %v7151
    %8670 = vmatpush.bf16.msra.mxu0 %v7135
    %8671 = vmatpush.bf16.msra.mxu0 %v7119
    %8672 = vmatpush.bf16.msra.mxu0 %v7103
    %8673 = vmatmul.bf16.gmra.mxu0 %v4276
    %v8674 = vpop.f32.mrf.mxu0
    %v8675 = vadd.f32 %v8662, %v8674
    %v8676 = vpop.f32.mrf.mxu0
    %8677 = vdwg.mxu0
    %8678 = vmatpush.bf16.msra.mxu0 %v7343
    %8679 = vmatpush.bf16.msra.mxu0 %v7327
    %8680 = vmatpush.bf16.msra.mxu0 %v7311
    %8681 = vmatpush.bf16.msra.mxu0 %v7295
    %8682 = vmatpush.bf16.msra.mxu0 %v7279
    %8683 = vmatpush.bf16.msra.mxu0 %v7263
    %8684 = vmatpush.bf16.msra.mxu0 %v7247
    %8685 = vmatpush.bf16.msra.mxu0 %v7231
    %8686 = vmatmul.bf16.gmra.mxu0 %v4277
    %v8687 = vpop.f32.mrf.mxu0
    %v8688 = vadd.f32 %v8675, %v8687
    %v8689 = vpop.f32.mrf.mxu0
    %8690 = vdwg.mxu0
    %8691 = vmatpush.bf16.msra.mxu0 %v7471
    %8692 = vmatpush.bf16.msra.mxu0 %v7455
    %8693 = vmatpush.bf16.msra.mxu0 %v7439
    %8694 = vmatpush.bf16.msra.mxu0 %v7423
    %8695 = vmatpush.bf16.msra.mxu0 %v7407
    %8696 = vmatpush.bf16.msra.mxu0 %v7391
    %8697 = vmatpush.bf16.msra.mxu0 %v7375
    %8698 = vmatpush.bf16.msra.mxu0 %v7359
    %8699 = vmatmul.bf16.gmra.mxu0 %v4278
    %v8700 = vpop.f32.mrf.mxu0
    %v8701 = vadd.f32 %v8688, %v8700
    %v8702 = vpop.f32.mrf.mxu0
    %8703 = vdwg.mxu0
    %8704 = vmatpush.bf16.msra.mxu0 %v6960
    %8705 = vmatpush.bf16.msra.mxu0 %v6944
    %8706 = vmatpush.bf16.msra.mxu0 %v6928
    %8707 = vmatpush.bf16.msra.mxu0 %v6912
    %8708 = vmatpush.bf16.msra.mxu0 %v6896
    %8709 = vmatpush.bf16.msra.mxu0 %v6880
    %8710 = vmatpush.bf16.msra.mxu0 %v6864
    %8711 = vmatpush.bf16.msra.mxu0 %v6848
    %8712 = vmatmul.bf16.gmra.mxu0 %v4274
    %v8713 = vpop.f32.mrf.mxu0
    %v8714 = vadd.f32 0.0, %v8713
    %v8715 = vpop.f32.mrf.mxu0
    %8716 = vdwg.mxu0
    %8717 = vmatpush.bf16.msra.mxu0 %v7088
    %8718 = vmatpush.bf16.msra.mxu0 %v7072
    %8719 = vmatpush.bf16.msra.mxu0 %v7056
    %8720 = vmatpush.bf16.msra.mxu0 %v7040
    %8721 = vmatpush.bf16.msra.mxu0 %v7024
    %8722 = vmatpush.bf16.msra.mxu0 %v7008
    %8723 = vmatpush.bf16.msra.mxu0 %v6992
    %8724 = vmatpush.bf16.msra.mxu0 %v6976
    %8725 = vmatmul.bf16.gmra.mxu0 %v4275
    %v8726 = vpop.f32.mrf.mxu0
    %v8727 = vadd.f32 %v8714, %v8726
    %v8728 = vpop.f32.mrf.mxu0
    %8729 = vdwg.mxu0
    %8730 = vmatpush.bf16.msra.mxu0 %v7216
    %8731 = vmatpush.bf16.msra.mxu0 %v7200
    %8732 = vmatpush.bf16.msra.mxu0 %v7184
    %8733 = vmatpush.bf16.msra.mxu0 %v7168
    %8734 = vmatpush.bf16.msra.mxu0 %v7152
    %8735 = vmatpush.bf16.msra.mxu0 %v7136
    %8736 = vmatpush.bf16.msra.mxu0 %v7120
    %8737 = vmatpush.bf16.msra.mxu0 %v7104
    %8738 = vmatmul.bf16.gmra.mxu0 %v4276
    %v8739 = vpop.f32.mrf.mxu0
    %v8740 = vadd.f32 %v8727, %v8739
    %v8741 = vpop.f32.mrf.mxu0
    %8742 = vdwg.mxu0
    %8743 = vmatpush.bf16.msra.mxu0 %v7344
    %8744 = vmatpush.bf16.msra.mxu0 %v7328
    %8745 = vmatpush.bf16.msra.mxu0 %v7312
    %8746 = vmatpush.bf16.msra.mxu0 %v7296
    %8747 = vmatpush.bf16.msra.mxu0 %v7280
    %8748 = vmatpush.bf16.msra.mxu0 %v7264
    %8749 = vmatpush.bf16.msra.mxu0 %v7248
    %8750 = vmatpush.bf16.msra.mxu0 %v7232
    %8751 = vmatmul.bf16.gmra.mxu0 %v4277
    %v8752 = vpop.f32.mrf.mxu0
    %v8753 = vadd.f32 %v8740, %v8752
    %v8754 = vpop.f32.mrf.mxu0
    %8755 = vdwg.mxu0
    %8756 = vmatpush.bf16.msra.mxu0 %v7472
    %8757 = vmatpush.bf16.msra.mxu0 %v7456
    %8758 = vmatpush.bf16.msra.mxu0 %v7440
    %8759 = vmatpush.bf16.msra.mxu0 %v7424
    %8760 = vmatpush.bf16.msra.mxu0 %v7408
    %8761 = vmatpush.bf16.msra.mxu0 %v7392
    %8762 = vmatpush.bf16.msra.mxu0 %v7376
    %8763 = vmatpush.bf16.msra.mxu0 %v7360
    %8764 = vmatmul.bf16.gmra.mxu0 %v4278
    %v8765 = vpop.f32.mrf.mxu0
    %v8766 = vadd.f32 %v8753, %v8765
    %v8767 = vpop.f32.mrf.mxu0
    %8768 = vdwg.mxu0
    %8769 = vmatpush.bf16.msra.mxu0 %v6961
    %8770 = vmatpush.bf16.msra.mxu0 %v6945
    %8771 = vmatpush.bf16.msra.mxu0 %v6929
    %8772 = vmatpush.bf16.msra.mxu0 %v6913
    %8773 = vmatpush.bf16.msra.mxu0 %v6897
    %8774 = vmatpush.bf16.msra.mxu0 %v6881
    %8775 = vmatpush.bf16.msra.mxu0 %v6865
    %8776 = vmatpush.bf16.msra.mxu0 %v6849
    %8777 = vmatmul.bf16.gmra.mxu0 %v4274
    %v8778 = vpop.f32.mrf.mxu0
    %v8779 = vadd.f32 0.0, %v8778
    %v8780 = vpop.f32.mrf.mxu0
    %8781 = vdwg.mxu0
    %8782 = vmatpush.bf16.msra.mxu0 %v7089
    %8783 = vmatpush.bf16.msra.mxu0 %v7073
    %8784 = vmatpush.bf16.msra.mxu0 %v7057
    %8785 = vmatpush.bf16.msra.mxu0 %v7041
    %8786 = vmatpush.bf16.msra.mxu0 %v7025
    %8787 = vmatpush.bf16.msra.mxu0 %v7009
    %8788 = vmatpush.bf16.msra.mxu0 %v6993
    %8789 = vmatpush.bf16.msra.mxu0 %v6977
    %8790 = vmatmul.bf16.gmra.mxu0 %v4275
    %v8791 = vpop.f32.mrf.mxu0
    %v8792 = vadd.f32 %v8779, %v8791
    %v8793 = vpop.f32.mrf.mxu0
    %8794 = vdwg.mxu0
    %8795 = vmatpush.bf16.msra.mxu0 %v7217
    %8796 = vmatpush.bf16.msra.mxu0 %v7201
    %8797 = vmatpush.bf16.msra.mxu0 %v7185
    %8798 = vmatpush.bf16.msra.mxu0 %v7169
    %8799 = vmatpush.bf16.msra.mxu0 %v7153
    %8800 = vmatpush.bf16.msra.mxu0 %v7137
    %8801 = vmatpush.bf16.msra.mxu0 %v7121
    %8802 = vmatpush.bf16.msra.mxu0 %v7105
    %8803 = vmatmul.bf16.gmra.mxu0 %v4276
    %v8804 = vpop.f32.mrf.mxu0
    %v8805 = vadd.f32 %v8792, %v8804
    %v8806 = vpop.f32.mrf.mxu0
    %8807 = vdwg.mxu0
    %8808 = vmatpush.bf16.msra.mxu0 %v7345
    %8809 = vmatpush.bf16.msra.mxu0 %v7329
    %8810 = vmatpush.bf16.msra.mxu0 %v7313
    %8811 = vmatpush.bf16.msra.mxu0 %v7297
    %8812 = vmatpush.bf16.msra.mxu0 %v7281
    %8813 = vmatpush.bf16.msra.mxu0 %v7265
    %8814 = vmatpush.bf16.msra.mxu0 %v7249
    %8815 = vmatpush.bf16.msra.mxu0 %v7233
    %8816 = vmatmul.bf16.gmra.mxu0 %v4277
    %v8817 = vpop.f32.mrf.mxu0
    %v8818 = vadd.f32 %v8805, %v8817
    %v8819 = vpop.f32.mrf.mxu0
    %8820 = vdwg.mxu0
    %8821 = vmatpush.bf16.msra.mxu0 %v7473
    %8822 = vmatpush.bf16.msra.mxu0 %v7457
    %8823 = vmatpush.bf16.msra.mxu0 %v7441
    %8824 = vmatpush.bf16.msra.mxu0 %v7425
    %8825 = vmatpush.bf16.msra.mxu0 %v7409
    %8826 = vmatpush.bf16.msra.mxu0 %v7393
    %8827 = vmatpush.bf16.msra.mxu0 %v7377
    %8828 = vmatpush.bf16.msra.mxu0 %v7361
    %8829 = vmatmul.bf16.gmra.mxu0 %v4278
    %v8830 = vpop.f32.mrf.mxu0
    %v8831 = vadd.f32 %v8818, %v8830
    %v8832 = vpop.f32.mrf.mxu0
    %8833 = vdwg.mxu0
    %8834 = vmatpush.bf16.msra.mxu0 %v6962
    %8835 = vmatpush.bf16.msra.mxu0 %v6946
    %8836 = vmatpush.bf16.msra.mxu0 %v6930
    %8837 = vmatpush.bf16.msra.mxu0 %v6914
    %8838 = vmatpush.bf16.msra.mxu0 %v6898
    %8839 = vmatpush.bf16.msra.mxu0 %v6882
    %8840 = vmatpush.bf16.msra.mxu0 %v6866
    %8841 = vmatpush.bf16.msra.mxu0 %v6850
    %8842 = vmatmul.bf16.gmra.mxu0 %v4274
    %v8843 = vpop.f32.mrf.mxu0
    %v8844 = vadd.f32 0.0, %v8843
    %v8845 = vpop.f32.mrf.mxu0
    %8846 = vdwg.mxu0
    %8847 = vmatpush.bf16.msra.mxu0 %v7090
    %8848 = vmatpush.bf16.msra.mxu0 %v7074
    %8849 = vmatpush.bf16.msra.mxu0 %v7058
    %8850 = vmatpush.bf16.msra.mxu0 %v7042
    %8851 = vmatpush.bf16.msra.mxu0 %v7026
    %8852 = vmatpush.bf16.msra.mxu0 %v7010
    %8853 = vmatpush.bf16.msra.mxu0 %v6994
    %8854 = vmatpush.bf16.msra.mxu0 %v6978
    %8855 = vmatmul.bf16.gmra.mxu0 %v4275
    %v8856 = vpop.f32.mrf.mxu0
    %v8857 = vadd.f32 %v8844, %v8856
    %v8858 = vpop.f32.mrf.mxu0
    %8859 = vdwg.mxu0
    %8860 = vmatpush.bf16.msra.mxu0 %v7218
    %8861 = vmatpush.bf16.msra.mxu0 %v7202
    %8862 = vmatpush.bf16.msra.mxu0 %v7186
    %8863 = vmatpush.bf16.msra.mxu0 %v7170
    %8864 = vmatpush.bf16.msra.mxu0 %v7154
    %8865 = vmatpush.bf16.msra.mxu0 %v7138
    %8866 = vmatpush.bf16.msra.mxu0 %v7122
    %8867 = vmatpush.bf16.msra.mxu0 %v7106
    %8868 = vmatmul.bf16.gmra.mxu0 %v4276
    %v8869 = vpop.f32.mrf.mxu0
    %v8870 = vadd.f32 %v8857, %v8869
    %v8871 = vpop.f32.mrf.mxu0
    %8872 = vdwg.mxu0
    %8873 = vmatpush.bf16.msra.mxu0 %v7346
    %8874 = vmatpush.bf16.msra.mxu0 %v7330
    %8875 = vmatpush.bf16.msra.mxu0 %v7314
    %8876 = vmatpush.bf16.msra.mxu0 %v7298
    %8877 = vmatpush.bf16.msra.mxu0 %v7282
    %8878 = vmatpush.bf16.msra.mxu0 %v7266
    %8879 = vmatpush.bf16.msra.mxu0 %v7250
    %8880 = vmatpush.bf16.msra.mxu0 %v7234
    %8881 = vmatmul.bf16.gmra.mxu0 %v4277
    %v8882 = vpop.f32.mrf.mxu0
    %v8883 = vadd.f32 %v8870, %v8882
    %v8884 = vpop.f32.mrf.mxu0
    %8885 = vdwg.mxu0
    %8886 = vmatpush.bf16.msra.mxu0 %v7474
    %8887 = vmatpush.bf16.msra.mxu0 %v7458
    %8888 = vmatpush.bf16.msra.mxu0 %v7442
    %8889 = vmatpush.bf16.msra.mxu0 %v7426
    %8890 = vmatpush.bf16.msra.mxu0 %v7410
    %8891 = vmatpush.bf16.msra.mxu0 %v7394
    %8892 = vmatpush.bf16.msra.mxu0 %v7378
    %8893 = vmatpush.bf16.msra.mxu0 %v7362
    %8894 = vmatmul.bf16.gmra.mxu0 %v4278
    %v8895 = vpop.f32.mrf.mxu0
    %v8896 = vadd.f32 %v8883, %v8895
    %v8897 = vpop.f32.mrf.mxu0
    %8898 = vdwg.mxu0
    %8899 = vmatpush.bf16.msra.mxu0 %v6963
    %8900 = vmatpush.bf16.msra.mxu0 %v6947
    %8901 = vmatpush.bf16.msra.mxu0 %v6931
    %8902 = vmatpush.bf16.msra.mxu0 %v6915
    %8903 = vmatpush.bf16.msra.mxu0 %v6899
    %8904 = vmatpush.bf16.msra.mxu0 %v6883
    %8905 = vmatpush.bf16.msra.mxu0 %v6867
    %8906 = vmatpush.bf16.msra.mxu0 %v6851
    %8907 = vmatmul.bf16.gmra.mxu0 %v4274
    %v8908 = vpop.f32.mrf.mxu0
    %v8909 = vadd.f32 0.0, %v8908
    %v8910 = vpop.f32.mrf.mxu0
    %8911 = vdwg.mxu0
    %8912 = vmatpush.bf16.msra.mxu0 %v7091
    %8913 = vmatpush.bf16.msra.mxu0 %v7075
    %8914 = vmatpush.bf16.msra.mxu0 %v7059
    %8915 = vmatpush.bf16.msra.mxu0 %v7043
    %8916 = vmatpush.bf16.msra.mxu0 %v7027
    %8917 = vmatpush.bf16.msra.mxu0 %v7011
    %8918 = vmatpush.bf16.msra.mxu0 %v6995
    %8919 = vmatpush.bf16.msra.mxu0 %v6979
    %8920 = vmatmul.bf16.gmra.mxu0 %v4275
    %v8921 = vpop.f32.mrf.mxu0
    %v8922 = vadd.f32 %v8909, %v8921
    %v8923 = vpop.f32.mrf.mxu0
    %8924 = vdwg.mxu0
    %8925 = vmatpush.bf16.msra.mxu0 %v7219
    %8926 = vmatpush.bf16.msra.mxu0 %v7203
    %8927 = vmatpush.bf16.msra.mxu0 %v7187
    %8928 = vmatpush.bf16.msra.mxu0 %v7171
    %8929 = vmatpush.bf16.msra.mxu0 %v7155
    %8930 = vmatpush.bf16.msra.mxu0 %v7139
    %8931 = vmatpush.bf16.msra.mxu0 %v7123
    %8932 = vmatpush.bf16.msra.mxu0 %v7107
    %8933 = vmatmul.bf16.gmra.mxu0 %v4276
    %v8934 = vpop.f32.mrf.mxu0
    %v8935 = vadd.f32 %v8922, %v8934
    %v8936 = vpop.f32.mrf.mxu0
    %8937 = vdwg.mxu0
    %8938 = vmatpush.bf16.msra.mxu0 %v7347
    %8939 = vmatpush.bf16.msra.mxu0 %v7331
    %8940 = vmatpush.bf16.msra.mxu0 %v7315
    %8941 = vmatpush.bf16.msra.mxu0 %v7299
    %8942 = vmatpush.bf16.msra.mxu0 %v7283
    %8943 = vmatpush.bf16.msra.mxu0 %v7267
    %8944 = vmatpush.bf16.msra.mxu0 %v7251
    %8945 = vmatpush.bf16.msra.mxu0 %v7235
    %8946 = vmatmul.bf16.gmra.mxu0 %v4277
    %v8947 = vpop.f32.mrf.mxu0
    %v8948 = vadd.f32 %v8935, %v8947
    %v8949 = vpop.f32.mrf.mxu0
    %8950 = vdwg.mxu0
    %8951 = vmatpush.bf16.msra.mxu0 %v7475
    %8952 = vmatpush.bf16.msra.mxu0 %v7459
    %8953 = vmatpush.bf16.msra.mxu0 %v7443
    %8954 = vmatpush.bf16.msra.mxu0 %v7427
    %8955 = vmatpush.bf16.msra.mxu0 %v7411
    %8956 = vmatpush.bf16.msra.mxu0 %v7395
    %8957 = vmatpush.bf16.msra.mxu0 %v7379
    %8958 = vmatpush.bf16.msra.mxu0 %v7363
    %8959 = vmatmul.bf16.gmra.mxu0 %v4278
    %v8960 = vpop.f32.mrf.mxu0
    %v8961 = vadd.f32 %v8948, %v8960
    %v8962 = vpop.f32.mrf.mxu0
    %8963 = vdwg.mxu0
    %8964 = vmatpush.bf16.msra.mxu0 %v6964
    %8965 = vmatpush.bf16.msra.mxu0 %v6948
    %8966 = vmatpush.bf16.msra.mxu0 %v6932
    %8967 = vmatpush.bf16.msra.mxu0 %v6916
    %8968 = vmatpush.bf16.msra.mxu0 %v6900
    %8969 = vmatpush.bf16.msra.mxu0 %v6884
    %8970 = vmatpush.bf16.msra.mxu0 %v6868
    %8971 = vmatpush.bf16.msra.mxu0 %v6852
    %8972 = vmatmul.bf16.gmra.mxu0 %v4274
    %v8973 = vpop.f32.mrf.mxu0
    %v8974 = vadd.f32 0.0, %v8973
    %v8975 = vpop.f32.mrf.mxu0
    %8976 = vdwg.mxu0
    %8977 = vmatpush.bf16.msra.mxu0 %v7092
    %8978 = vmatpush.bf16.msra.mxu0 %v7076
    %8979 = vmatpush.bf16.msra.mxu0 %v7060
    %8980 = vmatpush.bf16.msra.mxu0 %v7044
    %8981 = vmatpush.bf16.msra.mxu0 %v7028
    %8982 = vmatpush.bf16.msra.mxu0 %v7012
    %8983 = vmatpush.bf16.msra.mxu0 %v6996
    %8984 = vmatpush.bf16.msra.mxu0 %v6980
    %8985 = vmatmul.bf16.gmra.mxu0 %v4275
    %v8986 = vpop.f32.mrf.mxu0
    %v8987 = vadd.f32 %v8974, %v8986
    %v8988 = vpop.f32.mrf.mxu0
    %8989 = vdwg.mxu0
    %8990 = vmatpush.bf16.msra.mxu0 %v7220
    %8991 = vmatpush.bf16.msra.mxu0 %v7204
    %8992 = vmatpush.bf16.msra.mxu0 %v7188
    %8993 = vmatpush.bf16.msra.mxu0 %v7172
    %8994 = vmatpush.bf16.msra.mxu0 %v7156
    %8995 = vmatpush.bf16.msra.mxu0 %v7140
    %8996 = vmatpush.bf16.msra.mxu0 %v7124
    %8997 = vmatpush.bf16.msra.mxu0 %v7108
    %8998 = vmatmul.bf16.gmra.mxu0 %v4276
    %v8999 = vpop.f32.mrf.mxu0
    %v9000 = vadd.f32 %v8987, %v8999
    %v9001 = vpop.f32.mrf.mxu0
    %9002 = vdwg.mxu0
    %9003 = vmatpush.bf16.msra.mxu0 %v7348
    %9004 = vmatpush.bf16.msra.mxu0 %v7332
    %9005 = vmatpush.bf16.msra.mxu0 %v7316
    %9006 = vmatpush.bf16.msra.mxu0 %v7300
    %9007 = vmatpush.bf16.msra.mxu0 %v7284
    %9008 = vmatpush.bf16.msra.mxu0 %v7268
    %9009 = vmatpush.bf16.msra.mxu0 %v7252
    %9010 = vmatpush.bf16.msra.mxu0 %v7236
    %9011 = vmatmul.bf16.gmra.mxu0 %v4277
    %v9012 = vpop.f32.mrf.mxu0
    %v9013 = vadd.f32 %v9000, %v9012
    %v9014 = vpop.f32.mrf.mxu0
    %9015 = vdwg.mxu0
    %9016 = vmatpush.bf16.msra.mxu0 %v7476
    %9017 = vmatpush.bf16.msra.mxu0 %v7460
    %9018 = vmatpush.bf16.msra.mxu0 %v7444
    %9019 = vmatpush.bf16.msra.mxu0 %v7428
    %9020 = vmatpush.bf16.msra.mxu0 %v7412
    %9021 = vmatpush.bf16.msra.mxu0 %v7396
    %9022 = vmatpush.bf16.msra.mxu0 %v7380
    %9023 = vmatpush.bf16.msra.mxu0 %v7364
    %9024 = vmatmul.bf16.gmra.mxu0 %v4278
    %v9025 = vpop.f32.mrf.mxu0
    %v9026 = vadd.f32 %v9013, %v9025
    %v9027 = vpop.f32.mrf.mxu0
    %9028 = vdwg.mxu0
    %9029 = vmatpush.bf16.msra.mxu0 %v6965
    %9030 = vmatpush.bf16.msra.mxu0 %v6949
    %9031 = vmatpush.bf16.msra.mxu0 %v6933
    %9032 = vmatpush.bf16.msra.mxu0 %v6917
    %9033 = vmatpush.bf16.msra.mxu0 %v6901
    %9034 = vmatpush.bf16.msra.mxu0 %v6885
    %9035 = vmatpush.bf16.msra.mxu0 %v6869
    %9036 = vmatpush.bf16.msra.mxu0 %v6853
    %9037 = vmatmul.bf16.gmra.mxu0 %v4274
    %v9038 = vpop.f32.mrf.mxu0
    %v9039 = vadd.f32 0.0, %v9038
    %v9040 = vpop.f32.mrf.mxu0
    %9041 = vdwg.mxu0
    %9042 = vmatpush.bf16.msra.mxu0 %v7093
    %9043 = vmatpush.bf16.msra.mxu0 %v7077
    %9044 = vmatpush.bf16.msra.mxu0 %v7061
    %9045 = vmatpush.bf16.msra.mxu0 %v7045
    %9046 = vmatpush.bf16.msra.mxu0 %v7029
    %9047 = vmatpush.bf16.msra.mxu0 %v7013
    %9048 = vmatpush.bf16.msra.mxu0 %v6997
    %9049 = vmatpush.bf16.msra.mxu0 %v6981
    %9050 = vmatmul.bf16.gmra.mxu0 %v4275
    %v9051 = vpop.f32.mrf.mxu0
    %v9052 = vadd.f32 %v9039, %v9051
    %v9053 = vpop.f32.mrf.mxu0
    %9054 = vdwg.mxu0
    %9055 = vmatpush.bf16.msra.mxu0 %v7221
    %9056 = vmatpush.bf16.msra.mxu0 %v7205
    %9057 = vmatpush.bf16.msra.mxu0 %v7189
    %9058 = vmatpush.bf16.msra.mxu0 %v7173
    %9059 = vmatpush.bf16.msra.mxu0 %v7157
    %9060 = vmatpush.bf16.msra.mxu0 %v7141
    %9061 = vmatpush.bf16.msra.mxu0 %v7125
    %9062 = vmatpush.bf16.msra.mxu0 %v7109
    %9063 = vmatmul.bf16.gmra.mxu0 %v4276
    %v9064 = vpop.f32.mrf.mxu0
    %v9065 = vadd.f32 %v9052, %v9064
    %v9066 = vpop.f32.mrf.mxu0
    %9067 = vdwg.mxu0
    %9068 = vmatpush.bf16.msra.mxu0 %v7349
    %9069 = vmatpush.bf16.msra.mxu0 %v7333
    %9070 = vmatpush.bf16.msra.mxu0 %v7317
    %9071 = vmatpush.bf16.msra.mxu0 %v7301
    %9072 = vmatpush.bf16.msra.mxu0 %v7285
    %9073 = vmatpush.bf16.msra.mxu0 %v7269
    %9074 = vmatpush.bf16.msra.mxu0 %v7253
    %9075 = vmatpush.bf16.msra.mxu0 %v7237
    %9076 = vmatmul.bf16.gmra.mxu0 %v4277
    %v9077 = vpop.f32.mrf.mxu0
    %v9078 = vadd.f32 %v9065, %v9077
    %v9079 = vpop.f32.mrf.mxu0
    %9080 = vdwg.mxu0
    %9081 = vmatpush.bf16.msra.mxu0 %v7477
    %9082 = vmatpush.bf16.msra.mxu0 %v7461
    %9083 = vmatpush.bf16.msra.mxu0 %v7445
    %9084 = vmatpush.bf16.msra.mxu0 %v7429
    %9085 = vmatpush.bf16.msra.mxu0 %v7413
    %9086 = vmatpush.bf16.msra.mxu0 %v7397
    %9087 = vmatpush.bf16.msra.mxu0 %v7381
    %9088 = vmatpush.bf16.msra.mxu0 %v7365
    %9089 = vmatmul.bf16.gmra.mxu0 %v4278
    %v9090 = vpop.f32.mrf.mxu0
    %v9091 = vadd.f32 %v9078, %v9090
    %v9092 = vpop.f32.mrf.mxu0
    %9093 = vdwg.mxu0
    %9094 = vmatpush.bf16.msra.mxu0 %v6966
    %9095 = vmatpush.bf16.msra.mxu0 %v6950
    %9096 = vmatpush.bf16.msra.mxu0 %v6934
    %9097 = vmatpush.bf16.msra.mxu0 %v6918
    %9098 = vmatpush.bf16.msra.mxu0 %v6902
    %9099 = vmatpush.bf16.msra.mxu0 %v6886
    %9100 = vmatpush.bf16.msra.mxu0 %v6870
    %9101 = vmatpush.bf16.msra.mxu0 %v6854
    %9102 = vmatmul.bf16.gmra.mxu0 %v4274
    %v9103 = vpop.f32.mrf.mxu0
    %v9104 = vadd.f32 0.0, %v9103
    %v9105 = vpop.f32.mrf.mxu0
    %9106 = vdwg.mxu0
    %9107 = vmatpush.bf16.msra.mxu0 %v7094
    %9108 = vmatpush.bf16.msra.mxu0 %v7078
    %9109 = vmatpush.bf16.msra.mxu0 %v7062
    %9110 = vmatpush.bf16.msra.mxu0 %v7046
    %9111 = vmatpush.bf16.msra.mxu0 %v7030
    %9112 = vmatpush.bf16.msra.mxu0 %v7014
    %9113 = vmatpush.bf16.msra.mxu0 %v6998
    %9114 = vmatpush.bf16.msra.mxu0 %v6982
    %9115 = vmatmul.bf16.gmra.mxu0 %v4275
    %v9116 = vpop.f32.mrf.mxu0
    %v9117 = vadd.f32 %v9104, %v9116
    %v9118 = vpop.f32.mrf.mxu0
    %9119 = vdwg.mxu0
    %9120 = vmatpush.bf16.msra.mxu0 %v7222
    %9121 = vmatpush.bf16.msra.mxu0 %v7206
    %9122 = vmatpush.bf16.msra.mxu0 %v7190
    %9123 = vmatpush.bf16.msra.mxu0 %v7174
    %9124 = vmatpush.bf16.msra.mxu0 %v7158
    %9125 = vmatpush.bf16.msra.mxu0 %v7142
    %9126 = vmatpush.bf16.msra.mxu0 %v7126
    %9127 = vmatpush.bf16.msra.mxu0 %v7110
    %9128 = vmatmul.bf16.gmra.mxu0 %v4276
    %v9129 = vpop.f32.mrf.mxu0
    %v9130 = vadd.f32 %v9117, %v9129
    %v9131 = vpop.f32.mrf.mxu0
    %9132 = vdwg.mxu0
    %9133 = vmatpush.bf16.msra.mxu0 %v7350
    %9134 = vmatpush.bf16.msra.mxu0 %v7334
    %9135 = vmatpush.bf16.msra.mxu0 %v7318
    %9136 = vmatpush.bf16.msra.mxu0 %v7302
    %9137 = vmatpush.bf16.msra.mxu0 %v7286
    %9138 = vmatpush.bf16.msra.mxu0 %v7270
    %9139 = vmatpush.bf16.msra.mxu0 %v7254
    %9140 = vmatpush.bf16.msra.mxu0 %v7238
    %9141 = vmatmul.bf16.gmra.mxu0 %v4277
    %v9142 = vpop.f32.mrf.mxu0
    %v9143 = vadd.f32 %v9130, %v9142
    %v9144 = vpop.f32.mrf.mxu0
    %9145 = vdwg.mxu0
    %9146 = vmatpush.bf16.msra.mxu0 %v7478
    %9147 = vmatpush.bf16.msra.mxu0 %v7462
    %9148 = vmatpush.bf16.msra.mxu0 %v7446
    %9149 = vmatpush.bf16.msra.mxu0 %v7430
    %9150 = vmatpush.bf16.msra.mxu0 %v7414
    %9151 = vmatpush.bf16.msra.mxu0 %v7398
    %9152 = vmatpush.bf16.msra.mxu0 %v7382
    %9153 = vmatpush.bf16.msra.mxu0 %v7366
    %9154 = vmatmul.bf16.gmra.mxu0 %v4278
    %v9155 = vpop.f32.mrf.mxu0
    %v9156 = vadd.f32 %v9143, %v9155
    %v9157 = vpop.f32.mrf.mxu0
    %9158 = vdwg.mxu0
    %v9159 = vmax.f32 %v8181, %v8441
    %v9160 = vmax.f32 %v8246, %v8506
    %v9161 = vmax.f32 %v8311, %v8571
    %v9162 = vmax.f32 %v8376, %v8636
    %v9163 = vmax.f32 %v8701, %v8961
    %v9164 = vmax.f32 %v8766, %v9026
    %v9165 = vmax.f32 %v8831, %v9091
    %v9166 = vmax.f32 %v8896, %v9156
    %v9167 = vmax.f32 %v9159, %v9163
    %v9168 = vmax.f32 %v9160, %v9164
    %v9169 = vmax.f32 %v9161, %v9165
    %v9170 = vmax.f32 %v9162, %v9166
    %v9171 = vld [vmem:[#allocation7] sm:$0xf]
    %v9173 = vperm.slane %v9171, 0
    %v9174 = vperm.slane %v9171, 1
    %v9175 = vperm.slane %v9171, 2
    %v9176 = vperm.slane %v9171, 3
    %v9181 = vadd.f32 %v9167, %v9173
    %v9182 = vadd.f32 %v9168, %v9174
    %v9183 = vadd.f32 %v9169, %v9175
    %v9184 = vadd.f32 %v9170, %v9176
    %v9185 = vmax.f32 %v9181, 0.0
    %v9186 = vmax.f32 %v9182, 0.0
    %v9187 = vmax.f32 %v9183, 0.0
    %v9188 = vmax.f32 %v9184, 0.0
    %v9189 = vpack.c.bf16 %v9185, %v9185
    %v9190 = vpack.c.bf16 %v9186, %v9186
    %v9191 = vpack.c.bf16 %v9187, %v9187
    %v9192 = vpack.c.bf16 %v9188, %v9188
    %v9193 = vld [vmem:[#allocation9] sm:$0xf]
    %v9194 = vld [vmem:[#allocation9 + $0x4] sm:$0xf]
    %v9195 = vld [vmem:[#allocation9 + $0x8] sm:$0xf]
    %v9196 = vld [vmem:[#allocation9 + $0xc] sm:$0xf]
    %v9197 = vld [vmem:[#allocation9 + $0x10] sm:$0xf]
    %v9198 = vld [vmem:[#allocation9 + $0x14] sm:$0xf]
    %v9199 = vld [vmem:[#allocation9 + $0x18] sm:$0xf]
    %v9200 = vld [vmem:[#allocation9 + $0x1c] sm:$0xf]
    %v9201 = vld [vmem:[#allocation9 + $0x20] sm:$0xf]
    %v9202 = vld [vmem:[#allocation9 + $0x24] sm:$0xf]
    %v9203 = vld [vmem:[#allocation9 + $0x28] sm:$0xf]
    %v9204 = vld [vmem:[#allocation9 + $0x2c] sm:$0xf]
    %v9205 = vld [vmem:[#allocation9 + $0x30] sm:$0xf]
    %v9206 = vld [vmem:[#allocation9 + $0x34] sm:$0xf]
    %v9207 = vld [vmem:[#allocation9 + $0x38] sm:$0xf]
    %v9208 = vld [vmem:[#allocation9 + $0x3c] sm:$0xf]
    %v9209 = vld [vmem:[#allocation9 + $0x40] sm:$0xf]
    %v9210 = vld [vmem:[#allocation9 + $0x44] sm:$0xf]
    %v9211 = vld [vmem:[#allocation9 + $0x48] sm:$0xf]
    %v9212 = vld [vmem:[#allocation9 + $0x4c] sm:$0xf]
    %v9213 = vld [vmem:[#allocation9 + $0x50] sm:$0xf]
    %v9214 = vld [vmem:[#allocation9 + $0x54] sm:$0xf]
    %v9215 = vld [vmem:[#allocation9 + $0x58] sm:$0xf]
    %v9216 = vld [vmem:[#allocation9 + $0x5c] sm:$0xf]
    %v9217 = vld [vmem:[#allocation9 + $0x60] sm:$0xf]
    %v9218 = vld [vmem:[#allocation9 + $0x64] sm:$0xf]
    %v9219 = vld [vmem:[#allocation9 + $0x68] sm:$0xf]
    %v9220 = vld [vmem:[#allocation9 + $0x6c] sm:$0xf]
    %v9221 = vld [vmem:[#allocation9 + $0x70] sm:$0xf]
    %v9222 = vld [vmem:[#allocation9 + $0x74] sm:$0xf]
    %v9223 = vld [vmem:[#allocation9 + $0x78] sm:$0xf]
    %v9224 = vld [vmem:[#allocation9 + $0x7c] sm:$0xf]
    %v9225 = vld [vmem:[#allocation9 + $0x80] sm:$0xf]
    %v9226 = vld [vmem:[#allocation9 + $0x84] sm:$0xf]
    %v9227 = vld [vmem:[#allocation9 + $0x88] sm:$0xf]
    %v9228 = vld [vmem:[#allocation9 + $0x8c] sm:$0xf]
    %v9229 = vld [vmem:[#allocation9 + $0x90] sm:$0xf]
    %v9230 = vld [vmem:[#allocation9 + $0x94] sm:$0xf]
    %v9231 = vld [vmem:[#allocation9 + $0x98] sm:$0xf]
    %v9232 = vld [vmem:[#allocation9 + $0x9c] sm:$0xf]
    %v9233 = vld [vmem:[#allocation9 + $0xa0] sm:$0xf]
    %v9234 = vld [vmem:[#allocation9 + $0xa4] sm:$0xf]
    %v9235 = vld [vmem:[#allocation9 + $0xa8] sm:$0xf]
    %v9236 = vld [vmem:[#allocation9 + $0xac] sm:$0xf]
    %v9237 = vld [vmem:[#allocation9 + $0xb0] sm:$0xf]
    %v9238 = vld [vmem:[#allocation9 + $0xb4] sm:$0xf]
    %v9239 = vld [vmem:[#allocation9 + $0xb8] sm:$0xf]
    %v9240 = vld [vmem:[#allocation9 + $0xbc] sm:$0xf]
    %v9241 = vld [vmem:[#allocation9 + $0xc0] sm:$0xf]
    %v9242 = vld [vmem:[#allocation9 + $0xc4] sm:$0xf]
    %v9243 = vld [vmem:[#allocation9 + $0xc8] sm:$0xf]
    %v9244 = vld [vmem:[#allocation9 + $0xcc] sm:$0xf]
    %v9245 = vld [vmem:[#allocation9 + $0xd0] sm:$0xf]
    %v9246 = vld [vmem:[#allocation9 + $0xd4] sm:$0xf]
    %v9247 = vld [vmem:[#allocation9 + $0xd8] sm:$0xf]
    %v9248 = vld [vmem:[#allocation9 + $0xdc] sm:$0xf]
    %v9249 = vld [vmem:[#allocation9 + $0xe0] sm:$0xf]
    %v9250 = vld [vmem:[#allocation9 + $0xe4] sm:$0xf]
    %v9251 = vld [vmem:[#allocation9 + $0xe8] sm:$0xf]
    %v9252 = vld [vmem:[#allocation9 + $0xec] sm:$0xf]
    %v9253 = vld [vmem:[#allocation9 + $0xf0] sm:$0xf]
    %v9254 = vld [vmem:[#allocation9 + $0xf4] sm:$0xf]
    %v9255 = vld [vmem:[#allocation9 + $0xf8] sm:$0xf]
    %v9256 = vld [vmem:[#allocation9 + $0xfc] sm:$0xf]
    %v9257 = vld [vmem:[#allocation10] sm:$0x1]
    %v9259 = vperm.slane %v9257, 0
    %v9325 = vunpack.c.l.b16 %v9193
    %v9326 = vunpack.c.l.b16 %v9194
    %v9327 = vunpack.c.l.b16 %v9195
    %v9328 = vunpack.c.l.b16 %v9196
    %v9329 = vunpack.c.l.b16 %v9197
    %v9330 = vunpack.c.l.b16 %v9198
    %v9331 = vunpack.c.l.b16 %v9199
    %v9332 = vunpack.c.l.b16 %v9200
    %v9333 = vunpack.c.l.b16 %v9201
    %v9334 = vunpack.c.l.b16 %v9202
    %v9335 = vunpack.c.l.b16 %v9203
    %v9336 = vunpack.c.l.b16 %v9204
    %v9337 = vunpack.c.l.b16 %v9205
    %v9338 = vunpack.c.l.b16 %v9206
    %v9339 = vunpack.c.l.b16 %v9207
    %v9340 = vunpack.c.l.b16 %v9208
    %v9341 = vunpack.c.l.b16 %v9209
    %v9342 = vunpack.c.l.b16 %v9210
    %v9343 = vunpack.c.l.b16 %v9211
    %v9344 = vunpack.c.l.b16 %v9212
    %v9345 = vunpack.c.l.b16 %v9213
    %v9346 = vunpack.c.l.b16 %v9214
    %v9347 = vunpack.c.l.b16 %v9215
    %v9348 = vunpack.c.l.b16 %v9216
    %v9349 = vunpack.c.l.b16 %v9217
    %v9350 = vunpack.c.l.b16 %v9218
    %v9351 = vunpack.c.l.b16 %v9219
    %v9352 = vunpack.c.l.b16 %v9220
    %v9353 = vunpack.c.l.b16 %v9221
    %v9354 = vunpack.c.l.b16 %v9222
    %v9355 = vunpack.c.l.b16 %v9223
    %v9356 = vunpack.c.l.b16 %v9224
    %v9357 = vunpack.c.l.b16 %v9225
    %v9358 = vunpack.c.l.b16 %v9226
    %v9359 = vunpack.c.l.b16 %v9227
    %v9360 = vunpack.c.l.b16 %v9228
    %v9361 = vunpack.c.l.b16 %v9229
    %v9362 = vunpack.c.l.b16 %v9230
    %v9363 = vunpack.c.l.b16 %v9231
    %v9364 = vunpack.c.l.b16 %v9232
    %v9365 = vunpack.c.l.b16 %v9233
    %v9366 = vunpack.c.l.b16 %v9234
    %v9367 = vunpack.c.l.b16 %v9235
    %v9368 = vunpack.c.l.b16 %v9236
    %v9369 = vunpack.c.l.b16 %v9237
    %v9370 = vunpack.c.l.b16 %v9238
    %v9371 = vunpack.c.l.b16 %v9239
    %v9372 = vunpack.c.l.b16 %v9240
    %v9373 = vunpack.c.l.b16 %v9241
    %v9374 = vunpack.c.l.b16 %v9242
    %v9375 = vunpack.c.l.b16 %v9243
    %v9376 = vunpack.c.l.b16 %v9244
    %v9377 = vunpack.c.l.b16 %v9245
    %v9378 = vunpack.c.l.b16 %v9246
    %v9379 = vunpack.c.l.b16 %v9247
    %v9380 = vunpack.c.l.b16 %v9248
    %v9381 = vunpack.c.l.b16 %v9249
    %v9382 = vunpack.c.l.b16 %v9250
    %v9383 = vunpack.c.l.b16 %v9251
    %v9384 = vunpack.c.l.b16 %v9252
    %v9385 = vunpack.c.l.b16 %v9253
    %v9386 = vunpack.c.l.b16 %v9254
    %v9387 = vunpack.c.l.b16 %v9255
    %v9388 = vunpack.c.l.b16 %v9256
    %v9389 = vpack.c.b16 %v9326, %v9325
    %v9390 = vpack.c.b16 %v9328, %v9327
    %v9391 = vpack.c.b16 %v9330, %v9329
    %v9392 = vpack.c.b16 %v9332, %v9331
    %v9393 = vpack.c.b16 %v9334, %v9333
    %v9394 = vpack.c.b16 %v9336, %v9335
    %v9395 = vpack.c.b16 %v9338, %v9337
    %v9396 = vpack.c.b16 %v9340, %v9339
    %v9397 = vpack.c.b16 %v9342, %v9341
    %v9398 = vpack.c.b16 %v9344, %v9343
    %v9399 = vpack.c.b16 %v9346, %v9345
    %v9400 = vpack.c.b16 %v9348, %v9347
    %v9401 = vpack.c.b16 %v9350, %v9349
    %v9402 = vpack.c.b16 %v9352, %v9351
    %v9403 = vpack.c.b16 %v9354, %v9353
    %v9404 = vpack.c.b16 %v9356, %v9355
    %v9405 = vpack.c.b16 %v9358, %v9357
    %v9406 = vpack.c.b16 %v9360, %v9359
    %v9407 = vpack.c.b16 %v9362, %v9361
    %v9408 = vpack.c.b16 %v9364, %v9363
    %v9409 = vpack.c.b16 %v9366, %v9365
    %v9410 = vpack.c.b16 %v9368, %v9367
    %v9411 = vpack.c.b16 %v9370, %v9369
    %v9412 = vpack.c.b16 %v9372, %v9371
    %v9413 = vpack.c.b16 %v9374, %v9373
    %v9414 = vpack.c.b16 %v9376, %v9375
    %v9415 = vpack.c.b16 %v9378, %v9377
    %v9416 = vpack.c.b16 %v9380, %v9379
    %v9417 = vpack.c.b16 %v9382, %v9381
    %v9418 = vpack.c.b16 %v9384, %v9383
    %v9419 = vpack.c.b16 %v9386, %v9385
    %v9420 = vpack.c.b16 %v9388, %v9387
    %9453 = vmatpush.bf16.msra.mxu0 %v9396
    %9454 = vmatpush.bf16.msra.mxu0 %v9395
    %9455 = vmatpush.bf16.msra.mxu0 %v9394
    %9456 = vmatpush.bf16.msra.mxu0 %v9393
    %9457 = vmatpush.bf16.msra.mxu0 %v9392
    %9458 = vmatpush.bf16.msra.mxu0 %v9391
    %9459 = vmatpush.bf16.msra.mxu0 %v9390
    %9460 = vmatpush.bf16.msra.mxu0 %v9389
    %9461 = vmatmul.bf16.gmra.mxu0 %v9189
    %v9462 = vpop.f32.mrf.mxu0
    %v9463 = vadd.f32 %v9259, %v9462
    %v9464 = vpop.f32.mrf.mxu0
    %9465 = vdwg.mxu0
    %9466 = vmatpush.bf16.msra.mxu0 %v9404
    %9467 = vmatpush.bf16.msra.mxu0 %v9403
    %9468 = vmatpush.bf16.msra.mxu0 %v9402
    %9469 = vmatpush.bf16.msra.mxu0 %v9401
    %9470 = vmatpush.bf16.msra.mxu0 %v9400
    %9471 = vmatpush.bf16.msra.mxu0 %v9399
    %9472 = vmatpush.bf16.msra.mxu0 %v9398
    %9473 = vmatpush.bf16.msra.mxu0 %v9397
    %9474 = vmatmul.bf16.gmra.mxu0 %v9190
    %v9475 = vpop.f32.mrf.mxu0
    %v9476 = vadd.f32 %v9463, %v9475
    %v9477 = vpop.f32.mrf.mxu0
    %9478 = vdwg.mxu0
    %9479 = vmatpush.bf16.msra.mxu0 %v9412
    %9480 = vmatpush.bf16.msra.mxu0 %v9411
    %9481 = vmatpush.bf16.msra.mxu0 %v9410
    %9482 = vmatpush.bf16.msra.mxu0 %v9409
    %9483 = vmatpush.bf16.msra.mxu0 %v9408
    %9484 = vmatpush.bf16.msra.mxu0 %v9407
    %9485 = vmatpush.bf16.msra.mxu0 %v9406
    %9486 = vmatpush.bf16.msra.mxu0 %v9405
    %9487 = vmatmul.bf16.gmra.mxu0 %v9191
    %v9488 = vpop.f32.mrf.mxu0
    %v9489 = vadd.f32 %v9476, %v9488
    %v9490 = vpop.f32.mrf.mxu0
    %9491 = vdwg.mxu0
    %9492 = vmatpush.bf16.msra.mxu0 %v9420
    %9493 = vmatpush.bf16.msra.mxu0 %v9419
    %9494 = vmatpush.bf16.msra.mxu0 %v9418
    %9495 = vmatpush.bf16.msra.mxu0 %v9417
    %9496 = vmatpush.bf16.msra.mxu0 %v9416
    %9497 = vmatpush.bf16.msra.mxu0 %v9415
    %9498 = vmatpush.bf16.msra.mxu0 %v9414
    %9499 = vmatpush.bf16.msra.mxu0 %v9413
    %9500 = vmatmul.bf16.gmra.mxu0 %v9192
    %v9501 = vpop.f32.mrf.mxu0
    %v9502 = vadd.f32 %v9489, %v9501
    %v9503 = vpop.f32.mrf.mxu0
    %9504 = vdwg.mxu0
    %v9505 = vmax.f32 %v9502, 0.0
    %v9506 = vpack.c.bf16 %v9505, %v9505
    %v9507 = vld [vmem:[#allocation12] sm:$0xf]
    %v9508 = vld [vmem:[#allocation12 + $0x4] sm:$0xf]
    %v9509 = vld [vmem:[#allocation12 + $0x8] sm:$0xf]
    %v9510 = vld [vmem:[#allocation12 + $0xc] sm:$0xf]
    %v9511 = vld [vmem:[#allocation12 + $0x10] sm:$0xf]
    %v9512 = vld [vmem:[#allocation12 + $0x14] sm:$0xf]
    %v9513 = vld [vmem:[#allocation12 + $0x18] sm:$0xf]
    %v9514 = vld [vmem:[#allocation12 + $0x1c] sm:$0xf]
    %v9515 = vld [vmem:[#allocation12 + $0x20] sm:$0xf]
    %v9516 = vld [vmem:[#allocation12 + $0x24] sm:$0xf]
    %v9517 = vld [vmem:[#allocation12 + $0x28] sm:$0xf]
    %v9518 = vld [vmem:[#allocation12 + $0x2c] sm:$0xf]
    %v9519 = vld [vmem:[#allocation12 + $0x30] sm:$0xf]
    %v9520 = vld [vmem:[#allocation12 + $0x34] sm:$0xf]
    %v9521 = vld [vmem:[#allocation12 + $0x38] sm:$0xf]
    %v9522 = vld [vmem:[#allocation12 + $0x3c] sm:$0xf]
    %v9523 = vld [vmem:[#allocation13] sm:$0x1]
    %v9525 = vperm.slane %v9523, 0
    %v9543 = vunpack.c.l.b16 %v9507
    %v9544 = vunpack.c.l.b16 %v9508
    %v9545 = vunpack.c.l.b16 %v9509
    %v9546 = vunpack.c.l.b16 %v9510
    %v9547 = vunpack.c.l.b16 %v9511
    %v9548 = vunpack.c.l.b16 %v9512
    %v9549 = vunpack.c.l.b16 %v9513
    %v9550 = vunpack.c.l.b16 %v9514
    %v9551 = vunpack.c.l.b16 %v9515
    %v9552 = vunpack.c.l.b16 %v9516
    %v9553 = vunpack.c.l.b16 %v9517
    %v9554 = vunpack.c.l.b16 %v9518
    %v9555 = vunpack.c.l.b16 %v9519
    %v9556 = vunpack.c.l.b16 %v9520
    %v9557 = vunpack.c.l.b16 %v9521
    %v9558 = vunpack.c.l.b16 %v9522
    %v9559 = vpack.c.b16 %v9544, %v9543
    %v9560 = vpack.c.b16 %v9546, %v9545
    %v9561 = vpack.c.b16 %v9548, %v9547
    %v9562 = vpack.c.b16 %v9550, %v9549
    %v9563 = vpack.c.b16 %v9552, %v9551
    %v9564 = vpack.c.b16 %v9554, %v9553
    %v9565 = vpack.c.b16 %v9556, %v9555
    %v9566 = vpack.c.b16 %v9558, %v9557
    %9575 = vmatpush.bf16.msra.mxu0 %v9566
    %9576 = vmatpush.bf16.msra.mxu0 %v9565
    %9577 = vmatpush.bf16.msra.mxu0 %v9564
    %9578 = vmatpush.bf16.msra.mxu0 %v9563
    %9579 = vmatpush.bf16.msra.mxu0 %v9562
    %9580 = vmatpush.bf16.msra.mxu0 %v9561
    %9581 = vmatpush.bf16.msra.mxu0 %v9560
    %9582 = vmatpush.bf16.msra.mxu0 %v9559
    %9583 = vmatmul.bf16.gmra.mxu0 %v9506
    %v9584 = vpop.f32.mrf.mxu0
    %v9585 = vadd.f32 %v9525, %v9584
    %v9586 = vpop.f32.mrf.mxu0
    %9587 = vdwg.mxu0
    %v9588 = vmax.f32 %v9585, 0.0
    %v9589 = vpack.c.bf16 %v9588, %v9588
    %v9590 = vld [vmem:[#allocation15] sm:$0xf]
    %v9591 = vld [vmem:[#allocation15 + $0x4] sm:$0xf]
    %v9592 = vld [vmem:[#allocation15 + $0x8] sm:$0xf]
    %v9593 = vld [vmem:[#allocation15 + $0xc] sm:$0xf]
    %v9594 = vld [vmem:[#allocation15 + $0x10] sm:$0xf]
    %v9595 = vld [vmem:[#allocation15 + $0x14] sm:$0xf]
    %v9596 = vld [vmem:[#allocation15 + $0x18] sm:$0xf]
    %v9597 = vld [vmem:[#allocation15 + $0x1c] sm:$0xf]
    %v9598 = vld [vmem:[#allocation15 + $0x20] sm:$0xf]
    %v9599 = vld [vmem:[#allocation15 + $0x24] sm:$0xf]
    %v9600 = vld [vmem:[#allocation15 + $0x28] sm:$0xf]
    %v9601 = vld [vmem:[#allocation15 + $0x2c] sm:$0xf]
    %v9602 = vld [vmem:[#allocation15 + $0x30] sm:$0xf]
    %v9603 = vld [vmem:[#allocation15 + $0x34] sm:$0xf]
    %v9604 = vld [vmem:[#allocation15 + $0x38] sm:$0xf]
    %v9605 = vld [vmem:[#allocation15 + $0x3c] sm:$0xf]
    %v9606 = vld [vmem:[#allocation16] sm:$0x1]
    %v9608 = vperm.slane %v9606, 0
    %v9626 = vunpack.c.l.b16 %v9590
    %v9627 = vunpack.c.l.b16 %v9591
    %v9628 = vunpack.c.l.b16 %v9592
    %v9629 = vunpack.c.l.b16 %v9593
    %v9630 = vunpack.c.l.b16 %v9594
    %v9631 = vunpack.c.l.b16 %v9595
    %v9632 = vunpack.c.l.b16 %v9596
    %v9633 = vunpack.c.l.b16 %v9597
    %v9634 = vunpack.c.l.b16 %v9598
    %v9635 = vunpack.c.l.b16 %v9599
    %v9636 = vunpack.c.l.b16 %v9600
    %v9637 = vunpack.c.l.b16 %v9601
    %v9638 = vunpack.c.l.b16 %v9602
    %v9639 = vunpack.c.l.b16 %v9603
    %v9640 = vunpack.c.l.b16 %v9604
    %v9641 = vunpack.c.l.b16 %v9605
    %v9642 = vpack.c.b16 %v9627, %v9626
    %v9643 = vpack.c.b16 %v9629, %v9628
    %v9644 = vpack.c.b16 %v9631, %v9630
    %v9645 = vpack.c.b16 %v9633, %v9632
    %v9646 = vpack.c.b16 %v9635, %v9634
    %v9647 = vpack.c.b16 %v9637, %v9636
    %v9648 = vpack.c.b16 %v9639, %v9638
    %v9649 = vpack.c.b16 %v9641, %v9640
    %9658 = vmatpush.bf16.msra.mxu0 %v9649
    %9659 = vmatpush.bf16.msra.mxu0 %v9648
    %9660 = vmatpush.bf16.msra.mxu0 %v9647
    %9661 = vmatpush.bf16.msra.mxu0 %v9646
    %9662 = vmatpush.bf16.msra.mxu0 %v9645
    %9663 = vmatpush.bf16.msra.mxu0 %v9644
    %9664 = vmatpush.bf16.msra.mxu0 %v9643
    %9665 = vmatpush.bf16.msra.mxu0 %v9642
    %9666 = vmatmul.bf16.gmra.mxu0 %v9589
    %v9667 = vpop.f32.mrf.mxu0
    %v9668 = vadd.f32 %v9608, %v9667
    %v9669 = vpop.f32.mrf.mxu0
    %9670 = vdwg.mxu0
    %9671 = vmax.xlane.f32.xlu0 %v9668
    %v9672 = vpop.xlane.xlu0 %9671
    %v9673 = vsub.f32 %v9668, %v9672
    %v9674 = vmul.f32 %v9673, 1.442695
    %v9675 = vpow.pop %v9674
    %9676 = vadd.xlane.f32.xlu0 %v9675
    %v9677 = vpop.xlane.xlu0 %9676
    %v9678 = vrcp.pop %v9677
    %v9679 = vmul.f32 %v9675, %v9678
    %9680 = vst [vmem:[%s11] sm:$0xff] %v9679
    // Predicated region
    $region86: #{lenet_forward.1} parent=1 // pred_check
      _
    $region87: #{lenet_forward.1} parent=1 // pred_check_branch
      %9682 = sbr.rel (0) target = $region89
    $region88: #{lenet_forward.1} parent=1 // pred_region
      _
    $region89: #{lenet_forward.1} parent=1 // pred_fallthru
      _
    // Predicated region
    $region90: #{lenet_forward.1} parent=1 // pred_check
      _
    $region91: #{lenet_forward.1} parent=1 // pred_check_branch
      %9684 = sbr.rel (0) target = $region93
    $region92: #{lenet_forward.1} parent=1 // pred_region
      _
    $region93: #{lenet_forward.1} parent=1 // pred_fallthru
      _
    %9685 = vsyncpa [#allocation3], 1
    %9686 = vsyncpa [#allocation5], 1
    %9687 = vsyncpa [#allocation8], 1
    %9688 = vsyncpa [#allocation11], 1
    %9689 = vsyncpa [#allocation14], 1
    %9690 = vsyncpa [#allocation17], 1

</llo_original>
